<compile_context>
chip_gen: v7x
topology: tpu7x:2x2x1
jax: 0.10.0
libtpu: 0.0.40
codegen_flags: <defaults>
</compile_context>

<pallas_src>
import functools

import jax
import jax.numpy as jnp
from jax import lax
from jax.experimental import pallas as pl
from jax.experimental.pallas import tpu as pltpu

NUM_CLASSES = 25
C_FEAT = 2048            # backbone output channels (ResNet-50)
C_CONV = 256             # object-head conv output channels
H_BIN = 512              # binary-head hidden size
H_OBJ = 128              # object-head hidden size
KH = KW = 3              # conv kernel size
N_HEADS = 9              # 3x3 grid of object heads
K_IM2COL = C_FEAT * KH * KW   # 18432
N_K_CHUNKS = 4           # in-kernel dequant/matmul chunking (bounds VMEM temporaries)


# --------------------------------------------------------------------------
# Fused Pallas kernel: 9 object heads (one per grid step) + binary head
# --------------------------------------------------------------------------
def fused_heads_kernel(patch_ref, wq_ref, scale_ref, bc_ref, w1o_ref, b1o_ref,
                       w2o_ref, b2o_ref, pooled_ref, w1b_ref, b1b_ref, w2b_ref,
                       b2b_ref, obj_ref, bin_ref, *, batch, hw):
    h = pl.program_id(0)
    m, k = patch_ref.shape
    k_chunk = k // N_K_CHUNKS

    # ---- object head for grid cell h: Conv2d(2048,256,3,p=1) as im2col matmul ----
    # int8 weights are dequantized on the VPU chunk-by-chunk (int8 -> f32); the
    # per-output-channel scale is applied to the f32 accumulator afterwards.
    def kbody(c, acc):
        k0 = pl.multiple_of(c * k_chunk, 512)
        w = wq_ref[pl.ds(k0, k_chunk), :].astype(jnp.float32)      # (k_chunk, 256)
        p = patch_ref[:, pl.ds(k0, k_chunk)].astype(jnp.float32)   # (M, k_chunk)
        return acc + jnp.dot(p, w, preferred_element_type=jnp.float32)

    conv = lax.fori_loop(0, N_K_CHUNKS, kbody,
                         jnp.zeros((m, C_CONV), jnp.float32))       # (M, 256)
    conv = conv * scale_ref[h]                                      # per-channel dequant scale
    conv = jnp.maximum(conv + bc_ref[h], 0.0)                       # conv bias + ReLU

    # AdaptiveAvgPool2d((1,1)): mean over the hw rows of each batch element
    # (static slice + mean; avoids an (M,256)->(B,hw,256) reshape / relayout).
    pooled = jnp.concatenate(
        [jnp.mean(conv[b * hw:(b + 1) * hw, :], axis=0, keepdims=True)
         for b in range(batch)], axis=0)                            # (B, 256)

    hid = jnp.dot(pooled, w1o_ref[h],
                  preferred_element_type=jnp.float32) + b1o_ref[h]  # Linear 256->128
    hid = jnp.maximum(hid, 0.0)                                     # ReLU
    logits = jnp.dot(hid, w2o_ref[h],
                     preferred_element_type=jnp.float32) + b2o_ref[h]  # Linear 128->25
    mmax = jnp.max(logits, axis=-1, keepdims=True)                  # Softmax(dim=1)
    e = jnp.exp(logits - mmax)
    obj_ref[...] = e / jnp.sum(e, axis=-1, keepdims=True)

    # ---- binary head (recomputed every step; ~2 MFLOP, fully hidden under the
    #      4.7 MB/step weight DMA; written to its own per-step block so the grid
    #      axis remains safely "parallel" for megacore) ----
    hb = jnp.dot(pooled_ref[...], w1b_ref[...],
                 preferred_element_type=jnp.float32) + b1b_ref[...]   # Linear 2048->512
    hb = jnp.maximum(hb, 0.0)                                         # ReLU
    logit = jnp.dot(hb, w2b_ref[...],
                    preferred_element_type=jnp.float32) + b2b_ref[...]  # Linear 512->1
    bin_ref[...] = jax.nn.sigmoid(logit)                              # Sigmoid


# --------------------------------------------------------------------------
# Wrapper
# --------------------------------------------------------------------------
def fused_heads(patches, wq, scale, bc, w1o, b1o, w2o, b2o,
                pooled_bin, w1b, b1b, w2b, b2b, *, batch, hw):
    n_heads, M, K = patches.shape
    kernel = functools.partial(fused_heads_kernel, batch=batch, hw=hw)
    return pl.pallas_call(
        kernel,
        out_shape=(jax.ShapeDtypeStruct((n_heads, batch, NUM_CLASSES), jnp.float32),
                   jax.ShapeDtypeStruct((n_heads, batch, 1), jnp.float32)),
        grid=(n_heads,),
        in_specs=[
            # per-head streamed blocks
            pl.BlockSpec((None, M, K), lambda h: (h, 0, 0)),            # bf16 im2col patches
            pl.BlockSpec((None, K, C_CONV), lambda h: (h, 0, 0)),       # int8 conv weights
            # small per-head operands: resident (constant index map => one DMA total),
            # indexed with pl.program_id(0) inside the kernel
            pl.BlockSpec((N_HEADS, 1, C_CONV), lambda h: (0, 0, 0)),    # f32 dequant scales
            pl.BlockSpec((N_HEADS, 1, C_CONV), lambda h: (0, 0, 0)),    # f32 conv bias
            pl.BlockSpec((N_HEADS, C_CONV, H_OBJ), lambda h: (0, 0, 0)),
            pl.BlockSpec((N_HEADS, 1, H_OBJ), lambda h: (0, 0, 0)),
            pl.BlockSpec((N_HEADS, H_OBJ, NUM_CLASSES), lambda h: (0, 0, 0)),
            pl.BlockSpec((N_HEADS, 1, NUM_CLASSES), lambda h: (0, 0, 0)),
            # binary-head operands: resident
            pl.BlockSpec((batch, C_FEAT), lambda h: (0, 0)),            # bf16 pooled features
            pl.BlockSpec((C_FEAT, H_BIN), lambda h: (0, 0)),            # bf16 Linear W1
            pl.BlockSpec((1, H_BIN), lambda h: (0, 0)),
            pl.BlockSpec((H_BIN, 1), lambda h: (0, 0)),
            pl.BlockSpec((1, 1), lambda h: (0, 0)),
        ],
        out_specs=[
            pl.BlockSpec((None, batch, NUM_CLASSES), lambda h: (h, 0, 0)),
            pl.BlockSpec((None, batch, 1), lambda h: (h, 0, 0)),
        ],
        compiler_params=pltpu.CompilerParams(
            # Head axis "parallel": lets v7x megacore shard the 9 heads across its 2 TCs.
            # If profiling shows it stays on one core, switch to pltpu.CORE_PARALLEL
            # (or pl.core_map over create_tensorcore_mesh).
            dimension_semantics=("parallel",),
            # Actual VMEM use ~25 MiB (int8 weight double-buffer 9.4 MiB + chunked dequant
            # temps + ~3 MiB resident); 48 MiB cap fits v5e/v6e/v7x.
            vmem_limit_bytes=48 * 1024 * 1024,
        ),
    )(patches, wq, scale, bc, w1o, b1o, w2o, b2o, pooled_bin, w1b, b1b, w2b, b2b)


def im2col_grid_cells(features):
    """(B, C, Hf, Wf) NCHW -> (9, B*Hc*Wc, 3*3*C) bf16 im2col rows, one slab per 3x3
    grid cell.  Each cell is sliced first and zero-padded independently (padding=1),
    matching the module's slice-then-conv order.  Single NCHW->NHWC transpose up front;
    taps are lane-preserving slices concatenated along lanes; K row order is (kh, kw, c),
    matching the packed conv weight."""
    B, C, Hf, Wf = features.shape
    Hc, Wc = Hf // 3, Wf // 3
    feats = jnp.transpose(features, (0, 2, 3, 1))                     # NHWC, once
    slabs = []
    for i in range(3):
        for j in range(3):
            cell = feats[:, i * Hc:(i + 1) * Hc, j * Wc:(j + 1) * Wc, :]
            cp = jnp.pad(cell, ((0, 0), (1, 1), (1, 1), (0, 0)))      # padding=1
            taps = [cp[:, kh:kh + Hc, kw:kw + Wc, :]                  # lane-preserving
                    for kh in range(KH) for kw in range(KW)]
            pats = jnp.concatenate(taps, axis=-1)                     # (B, Hc, Wc, 9*C)
            slabs.append(pats.reshape(B * Hc * Wc, KH * KW * C))
    return jnp.stack(slabs, axis=0).astype(jnp.bfloat16), Hc * Wc


def prepare_params(raw):
    """One-time weight packing / quantization — call ONCE, outside the per-call forward.
    Conv2d weights (9, 256, 2048, 3, 3) -> (9, 3*3*2048, 256) in (kh, kw, c) K-order,
    symmetric per-output-channel int8 with f32 scales (halves the dominant HBM weight
    stream vs bf16).  Binary-head Linear(2048, 512) weight -> bf16 (f32 accumulation)."""
    packed = {key: v for key, v in raw.items() if key not in ("conv_w", "w1b")}
    wc = jnp.transpose(raw["conv_w"], (0, 3, 4, 2, 1)).reshape(
        N_HEADS, K_IM2COL, C_CONV)                                    # (9, 18432, 256)
    scale = jnp.maximum(jnp.max(jnp.abs(wc), axis=1, keepdims=True), 1e-12) / 127.0
    packed["conv_w_q"] = jnp.clip(jnp.round(wc / scale), -127, 127).astype(jnp.int8)
    packed["conv_scale"] = scale.astype(jnp.float32)                  # (9, 1, 256)
    packed["w1b"] = raw["w1b"].astype(jnp.bfloat16)
    return packed


@jax.jit
def multitask_forward(features, params):
    """features: (B, 2048, Hf, Wf) NCHW backbone output; params from prepare_params."""
    B = features.shape[0]

    # Binary head input: AdaptiveAvgPool2d((1,1)) == mean over H,W — pre-pooled here so
    # no NCHW->NHWC transpose copy of the feature map is needed for this head.
    pooled_bin = jnp.mean(features, axis=(2, 3)).astype(jnp.bfloat16)     # (B, 2048)

    # 3x3 grid of object heads: im2col slabs, one per grid cell.
    patches, hw = im2col_grid_cells(features)                 # (9, B*hw, 18432) bf16

    obj, bin_all = fused_heads(
        patches, params["conv_w_q"], params["conv_scale"], params["conv_b"],
        params["w1o"], params["b1o"], params["w2o"], params["b2o"],
        pooled_bin, params["w1b"], params["b1b"], params["w2b"], params["b2b"],
        batch=B, hw=hw)

    binary_out = bin_all[0]                                   # identical across steps
    object_outs = [obj[h] for h in range(N_HEADS)]
    return binary_out, object_outs


# --------------------------------------------------------------------------
if __name__ == "__main__":
    key = jax.random.PRNGKey(0)
    keys = jax.random.split(key, 11)

    B, Hf, Wf = 2, 6, 6   # e.g. 192x192 image -> ResNet-50 stride-32 features 6x6

    # backbone features (the module's forward input x would be (B, 3, 192, 192))
    features = jax.random.normal(keys[0], (B, C_FEAT, Hf, Wf), jnp.float32)

    raw_params = {
        # binary head: Linear(2048,512), Linear(512,1)
        "w1b": jax.random.normal(keys[1], (C_FEAT, H_BIN), jnp.float32) * 0.02,
        "b1b": jax.random.normal(keys[2], (1, H_BIN), jnp.float32) * 0.02,
        "w2b": jax.random.normal(keys[3], (H_BIN, 1), jnp.float32) * 0.02,
        "b2b": jax.random.normal(keys[4], (1, 1), jnp.float32) * 0.02,
        # 9 object heads: Conv2d(2048,256,3,p=1), Linear(256,128), Linear(128,25)
        "conv_w": jax.random.normal(keys[5], (N_HEADS, C_CONV, C_FEAT, KH, KW),
                                    jnp.float32) * 0.01,
        "conv_b": jax.random.normal(keys[6], (N_HEADS, 1, C_CONV), jnp.float32) * 0.01,
        "w1o": jax.random.normal(keys[7], (N_HEADS, C_CONV, H_OBJ), jnp.float32) * 0.02,
        "b1o": jax.random.normal(keys[8], (N_HEADS, 1, H_OBJ), jnp.float32) * 0.02,
        "w2o": jax.random.normal(keys[9], (N_HEADS, H_OBJ, NUM_CLASSES),
                                 jnp.float32) * 0.02,
        "b2o": jax.random.normal(keys[10], (N_HEADS, 1, NUM_CLASSES),
                                 jnp.float32) * 0.02,
    }

    params = prepare_params(raw_params)   # one-time packing / int8 quantization
    jax.block_until_ready(params["conv_w_q"])

    binary_out, object_outs = multitask_forward(features, params)
    jax.block_until_ready(binary_out)
    for o in object_outs:
        jax.block_until_ready(o)

    assert binary_out.shape == (B, 1)
    assert len(object_outs) == 9
    assert all(o.shape == (B, NUM_CLASSES) for o in object_outs)
    print("KERNEL_OK")
</pallas_src>

<mosaic_0001>
module attributes {stable_mosaic.version = 11 : i64} {
  func.func @fused_heads_kernel(%arg0: i32, %arg1: memref<1x8x18432xbf16, #tpu.memory_space<vmem>>, %arg2: memref<1x18432x256xi8, #tpu.memory_space<vmem>>, %arg3: memref<9x1x256xf32, #tpu.memory_space<vmem>>, %arg4: memref<9x1x256xf32, #tpu.memory_space<vmem>>, %arg5: memref<9x256x128xf32, #tpu.memory_space<vmem>>, %arg6: memref<9x1x128xf32, #tpu.memory_space<vmem>>, %arg7: memref<9x128x25xf32, #tpu.memory_space<vmem>>, %arg8: memref<9x1x25xf32, #tpu.memory_space<vmem>>, %arg9: memref<2x2048xbf16, #tpu.memory_space<vmem>>, %arg10: memref<2048x512xbf16, #tpu.memory_space<vmem>>, %arg11: memref<1x512xf32, #tpu.memory_space<vmem>>, %arg12: memref<512x1xf32, #tpu.memory_space<vmem>>, %arg13: memref<1x1xf32, #tpu.memory_space<vmem>>, %arg14: memref<1x2x25xf32, #tpu.memory_space<vmem>>, %arg15: memref<1x2x1xf32, #tpu.memory_space<vmem>>) attributes {dimension_semantics = [#tpu.dimension_semantics<parallel>], iteration_bounds = array<i64: 9>, scalar_prefetch = 0 : i64, scratch_operands = 0 : i64, tpu.core_type = #tpu.core_type<tc>, window_params = [{transform_indices = @transform_0, window_bounds = array<i64: 1, 8, 18432>}, {transform_indices = @transform_1, window_bounds = array<i64: 1, 18432, 256>}, {pipeline_mode = #tpu.pipeline_mode<synchronous>, transform_indices = @transform_2, window_bounds = array<i64: 9, 1, 256>}, {pipeline_mode = #tpu.pipeline_mode<synchronous>, transform_indices = @transform_3, window_bounds = array<i64: 9, 1, 256>}, {pipeline_mode = #tpu.pipeline_mode<synchronous>, transform_indices = @transform_4, window_bounds = array<i64: 9, 256, 128>}, {pipeline_mode = #tpu.pipeline_mode<synchronous>, transform_indices = @transform_5, window_bounds = array<i64: 9, 1, 128>}, {pipeline_mode = #tpu.pipeline_mode<synchronous>, transform_indices = @transform_6, window_bounds = array<i64: 9, 128, 25>}, {pipeline_mode = #tpu.pipeline_mode<synchronous>, transform_indices = @transform_7, window_bounds = array<i64: 9, 1, 25>}, {pipeline_mode = #tpu.pipeline_mode<synchronous>, transform_indices = @transform_8, window_bounds = array<i64: 2, 2048>}, {pipeline_mode = #tpu.pipeline_mode<synchronous>, transform_indices = @transform_9, window_bounds = array<i64: 2048, 512>}, {pipeline_mode = #tpu.pipeline_mode<synchronous>, transform_indices = @transform_10, window_bounds = array<i64: 1, 512>}, {pipeline_mode = #tpu.pipeline_mode<synchronous>, transform_indices = @transform_11, window_bounds = array<i64: 512, 1>}, {pipeline_mode = #tpu.pipeline_mode<synchronous>, transform_indices = @transform_12, window_bounds = array<i64: 1, 1>}, {transform_indices = @transform_13, window_bounds = array<i64: 1, 2, 25>}, {transform_indices = @transform_14, window_bounds = array<i64: 1, 2, 1>}]} {
    %cst = arith.constant 0.000000e+00 : f32
    %0 = vector.broadcast %cst : f32 to vector<8x256xf32>
    %c0_i32 = arith.constant 0 : i32
    %c4_i32 = arith.constant 4 : i32
    %1 = arith.addi %c0_i32, %c4_i32 : i32
    %c1_i32 = arith.constant 1 : i32
    %2 = scf.for %arg16 = %c0_i32 to %1 step %c1_i32 iter_args(%arg17 = %0) -> (vector<8x256xf32>)  : i32 {
      %c4608_i32 = arith.constant 4608 : i32
      %79 = arith.muli %arg16, %c4608_i32 : i32
      %80 = tpu.assume_multiple %79, 512 : i32
      %c0_42 = arith.constant 0 : index
      %81 = arith.index_cast %80 : i32 to index
      %c0_43 = arith.constant 0 : index
      %82 = vector.load %arg2[%c0_42, %81, %c0_43] : memref<1x18432x256xi8, #tpu.memory_space<vmem>>, vector<1x4608x256xi8>
      %83 = vector.shape_cast %82 : vector<1x4608x256xi8> to vector<4608x256xi8>
      %84 = arith.sitofp %83 : vector<4608x256xi8> to vector<4608x256xf32>
      %c0_44 = arith.constant 0 : index
      %c0_45 = arith.constant 0 : index
      %85 = arith.index_cast %80 : i32 to index
      %86 = vector.load %arg1[%c0_44, %c0_45, %85] : memref<1x8x18432xbf16, #tpu.memory_space<vmem>>, vector<1x8x4608xbf16>
      %87 = vector.shape_cast %86 : vector<1x8x4608xbf16> to vector<8x4608xbf16>
      %88 = arith.extf %87 : vector<8x4608xbf16> to vector<8x4608xf32>
      %cst_46 = arith.constant dense<0.000000e+00> : vector<8x256xf32>
      %89 = tpu.matmul %88, %84, %cst_46 {dimension_numbers = #tpu.dot_dimension_numbers<[1], [0], [0], [1], [0, 0, 1, 1], [], []>} : vector<8x4608xf32>, vector<4608x256xf32>, vector<8x256xf32> -> vector<8x256xf32>
      %90 = arith.addf %arg17, %89 : vector<8x256xf32>
      scf.yield %90 : vector<8x256xf32>
    }
    %c4_i32_0 = arith.constant 4 : i32
    %3 = arith.index_cast %arg0 : i32 to index
    %c0 = arith.constant 0 : index
    %c0_1 = arith.constant 0 : index
    %4 = vector.load %arg3[%3, %c0, %c0_1] : memref<9x1x256xf32, #tpu.memory_space<vmem>>, vector<1x1x256xf32>
    %5 = vector.shape_cast %4 : vector<1x1x256xf32> to vector<1x256xf32>
    %6 = vector.broadcast %5 : vector<1x256xf32> to vector<8x256xf32>
    %7 = arith.mulf %2, %6 : vector<8x256xf32>
    %8 = arith.index_cast %arg0 : i32 to index
    %c0_2 = arith.constant 0 : index
    %c0_3 = arith.constant 0 : index
    %9 = vector.load %arg4[%8, %c0_2, %c0_3] : memref<9x1x256xf32, #tpu.memory_space<vmem>>, vector<1x1x256xf32>
    %10 = vector.shape_cast %9 : vector<1x1x256xf32> to vector<1x256xf32>
    %11 = vector.broadcast %10 : vector<1x256xf32> to vector<8x256xf32>
    %12 = arith.addf %7, %11 : vector<8x256xf32>
    %cst_4 = arith.constant 0.000000e+00 : f32
    %13 = vector.broadcast %cst_4 : f32 to vector<8x256xf32>
    %14 = arith.maximumf %12, %13 : vector<8x256xf32>
    %15 = vector.extract_strided_slice %14 {offsets = [0, 0], sizes = [4, 256], strides = [1, 1]} : vector<8x256xf32> to vector<4x256xf32>
    %cst_5 = arith.constant dense<0.000000e+00> : vector<256xf32>
    %16 = vector.multi_reduction <add>, %15, %cst_5 [0] : vector<4x256xf32> to vector<256xf32>
    %17 = vector.shape_cast %16 : vector<256xf32> to vector<1x256xf32>
    %cst_6 = arith.constant 4.000000e+00 : f32
    %18 = vector.broadcast %cst_6 : f32 to vector<1x256xf32>
    %19 = arith.divf %17, %18 : vector<1x256xf32>
    %20 = vector.extract_strided_slice %14 {offsets = [4, 0], sizes = [4, 256], strides = [1, 1]} : vector<8x256xf32> to vector<4x256xf32>
    %cst_7 = arith.constant dense<0.000000e+00> : vector<256xf32>
    %21 = vector.multi_reduction <add>, %20, %cst_7 [0] : vector<4x256xf32> to vector<256xf32>
    %22 = vector.shape_cast %21 : vector<256xf32> to vector<1x256xf32>
    %cst_8 = arith.constant 4.000000e+00 : f32
    %23 = vector.broadcast %cst_8 : f32 to vector<1x256xf32>
    %24 = arith.divf %22, %23 : vector<1x256xf32>
    %25 = tpu.concatenate %19, %24 in 0 : vector<1x256xf32>, vector<1x256xf32> -> vector<2x256xf32>
    %26 = arith.index_cast %arg0 : i32 to index
    %c0_9 = arith.constant 0 : index
    %c0_10 = arith.constant 0 : index
    %27 = vector.load %arg5[%26, %c0_9, %c0_10] : memref<9x256x128xf32, #tpu.memory_space<vmem>>, vector<1x256x128xf32>
    %28 = vector.shape_cast %27 : vector<1x256x128xf32> to vector<256x128xf32>
    %cst_11 = arith.constant dense<0.000000e+00> : vector<2x128xf32>
    %29 = tpu.matmul %25, %28, %cst_11 {dimension_numbers = #tpu.dot_dimension_numbers<[1], [0], [0], [1], [0, 0, 1, 1], [], []>} : vector<2x256xf32>, vector<256x128xf32>, vector<2x128xf32> -> vector<2x128xf32>
    %30 = arith.index_cast %arg0 : i32 to index
    %c0_12 = arith.constant 0 : index
    %c0_13 = arith.constant 0 : index
    %31 = vector.load %arg6[%30, %c0_12, %c0_13] : memref<9x1x128xf32, #tpu.memory_space<vmem>>, vector<1x1x128xf32>
    %32 = vector.shape_cast %31 : vector<1x1x128xf32> to vector<1x128xf32>
    %33 = vector.broadcast %32 : vector<1x128xf32> to vector<2x128xf32>
    %34 = arith.addf %29, %33 : vector<2x128xf32>
    %cst_14 = arith.constant 0.000000e+00 : f32
    %35 = vector.broadcast %cst_14 : f32 to vector<2x128xf32>
    %36 = arith.maximumf %34, %35 : vector<2x128xf32>
    %37 = arith.index_cast %arg0 : i32 to index
    %c0_15 = arith.constant 0 : index
    %c0_16 = arith.constant 0 : index
    %38 = vector.load %arg7[%37, %c0_15, %c0_16] : memref<9x128x25xf32, #tpu.memory_space<vmem>>, vector<1x128x25xf32>
    %39 = vector.shape_cast %38 : vector<1x128x25xf32> to vector<128x25xf32>
    %cst_17 = arith.constant dense<0.000000e+00> : vector<2x25xf32>
    %40 = tpu.matmul %36, %39, %cst_17 {dimension_numbers = #tpu.dot_dimension_numbers<[1], [0], [0], [1], [0, 0, 1, 1], [], []>} : vector<2x128xf32>, vector<128x25xf32>, vector<2x25xf32> -> vector<2x25xf32>
    %41 = arith.index_cast %arg0 : i32 to index
    %c0_18 = arith.constant 0 : index
    %c0_19 = arith.constant 0 : index
    %42 = vector.load %arg8[%41, %c0_18, %c0_19] : memref<9x1x25xf32, #tpu.memory_space<vmem>>, vector<1x1x25xf32>
    %43 = vector.shape_cast %42 : vector<1x1x25xf32> to vector<1x25xf32>
    %44 = vector.broadcast %43 : vector<1x25xf32> to vector<2x25xf32>
    %45 = arith.addf %40, %44 : vector<2x25xf32>
    %cst_20 = arith.constant dense<0xFF800000> : vector<2xf32>
    %46 = vector.multi_reduction <maximumf>, %45, %cst_20 [1] : vector<2x25xf32> to vector<2xf32>
    %47 = vector.shape_cast %46 : vector<2xf32> to vector<2x1xf32>
    %48 = vector.broadcast %47 : vector<2x1xf32> to vector<2x25xf32>
    %49 = arith.subf %45, %48 : vector<2x25xf32>
    %50 = math.exp %49 : vector<2x25xf32>
    %cst_21 = arith.constant dense<0.000000e+00> : vector<2xf32>
    %51 = vector.multi_reduction <add>, %50, %cst_21 [1] : vector<2x25xf32> to vector<2xf32>
    %52 = vector.shape_cast %51 : vector<2xf32> to vector<2x1xf32>
    %53 = vector.broadcast %52 : vector<2x1xf32> to vector<2x25xf32>
    %54 = arith.divf %50, %53 : vector<2x25xf32>
    %c0_22 = arith.constant 0 : index
    %c0_23 = arith.constant 0 : index
    %c0_24 = arith.constant 0 : index
    %55 = vector.load %arg14[%c0_22, %c0_23, %c0_24] : memref<1x2x25xf32, #tpu.memory_space<vmem>>, vector<1x2x25xf32>
    %56 = vector.shape_cast %55 : vector<1x2x25xf32> to vector<2x25xf32>
    %57 = vector.shape_cast %54 : vector<2x25xf32> to vector<1x2x25xf32>
    tpu.vector_store %arg14[%c0_22, %c0_23, %c0_24], %57 {strides = array<i32>} : memref<1x2x25xf32, #tpu.memory_space<vmem>>, vector<1x2x25xf32>,
    %c0_25 = arith.constant 0 : index
    %c0_26 = arith.constant 0 : index
    %58 = vector.load %arg9[%c0_25, %c0_26] : memref<2x2048xbf16, #tpu.memory_space<vmem>>, vector<2x2048xbf16>
    %c0_27 = arith.constant 0 : index
    %c0_28 = arith.constant 0 : index
    %59 = vector.load %arg10[%c0_27, %c0_28] : memref<2048x512xbf16, #tpu.memory_space<vmem>>, vector<2048x512xbf16>
    %cst_29 = arith.constant dense<0.000000e+00> : vector<2x512xf32>
    %60 = tpu.matmul %58, %59, %cst_29 {dimension_numbers = #tpu.dot_dimension_numbers<[1], [0], [0], [1], [0, 0, 1, 1], [], []>} : vector<2x2048xbf16>, vector<2048x512xbf16>, vector<2x512xf32> -> vector<2x512xf32>
    %c0_30 = arith.constant 0 : index
    %c0_31 = arith.constant 0 : index
    %61 = vector.load %arg11[%c0_30, %c0_31] : memref<1x512xf32, #tpu.memory_space<vmem>>, vector<1x512xf32>
    %62 = vector.broadcast %61 : vector<1x512xf32> to vector<2x512xf32>
    %63 = arith.addf %60, %62 : vector<2x512xf32>
    %cst_32 = arith.constant 0.000000e+00 : f32
    %64 = vector.broadcast %cst_32 : f32 to vector<2x512xf32>
    %65 = arith.maximumf %63, %64 : vector<2x512xf32>
    %c0_33 = arith.constant 0 : index
    %c0_34 = arith.constant 0 : index
    %66 = vector.load %arg12[%c0_33, %c0_34] : memref<512x1xf32, #tpu.memory_space<vmem>>, vector<512x1xf32>
    %cst_35 = arith.constant dense<0.000000e+00> : vector<2x1xf32>
    %67 = tpu.matmul %65, %66, %cst_35 {dimension_numbers = #tpu.dot_dimension_numbers<[1], [0], [0], [1], [0, 0, 1, 1], [], []>} : vector<2x512xf32>, vector<512x1xf32>, vector<2x1xf32> -> vector<2x1xf32>
    %c0_36 = arith.constant 0 : index
    %c0_37 = arith.constant 0 : index
    %68 = vector.load %arg13[%c0_36, %c0_37] : memref<1x1xf32, #tpu.memory_space<vmem>>, vector<1x1xf32>
    %69 = vector.broadcast %68 : vector<1x1xf32> to vector<2x1xf32>
    %70 = arith.addf %67, %69 : vector<2x1xf32>
    %71 = arith.negf %70 : vector<2x1xf32>
    %72 = math.exp %71 : vector<2x1xf32>
    %cst_38 = arith.constant 1.000000e+00 : f32
    %73 = vector.broadcast %cst_38 : f32 to vector<2x1xf32>
    %74 = arith.addf %73, %72 : vector<2x1xf32>
    %75 = arith.divf %73, %74 : vector<2x1xf32>
    %c0_39 = arith.constant 0 : index
    %c0_40 = arith.constant 0 : index
    %c0_41 = arith.constant 0 : index
    %76 = vector.load %arg15[%c0_39, %c0_40, %c0_41] : memref<1x2x1xf32, #tpu.memory_space<vmem>>, vector<1x2x1xf32>
    %77 = vector.shape_cast %76 : vector<1x2x1xf32> to vector<2x1xf32>
    %78 = vector.shape_cast %75 : vector<2x1xf32> to vector<1x2x1xf32>
    tpu.vector_store %arg15[%c0_39, %c0_40, %c0_41], %78 {strides = array<i32>} : memref<1x2x1xf32, #tpu.memory_space<vmem>>, vector<1x2x1xf32>,
    return
  }
  func.func @transform_0(%arg0: i32) -> (i32, i32, i32) {
    %c0_i32 = arith.constant 0 : i32
    %c0_i32_0 = arith.constant 0 : i32
    %c0_i32_1 = arith.constant 0 : i32
    return %arg0, %c0_i32, %c0_i32_0 : i32, i32, i32
  }
  func.func @transform_1(%arg0: i32) -> (i32, i32, i32) {
    %c0_i32 = arith.constant 0 : i32
    %c0_i32_0 = arith.constant 0 : i32
    %c0_i32_1 = arith.constant 0 : i32
    return %arg0, %c0_i32, %c0_i32_0 : i32, i32, i32
  }
  func.func @transform_2(%arg0: i32) -> (i32, i32, i32) {
    %c0_i32 = arith.constant 0 : i32
    %c0_i32_0 = arith.constant 0 : i32
    %c0_i32_1 = arith.constant 0 : i32
    %c0_i32_2 = arith.constant 0 : i32
    return %c0_i32, %c0_i32_0, %c0_i32_1 : i32, i32, i32
  }
  func.func @transform_3(%arg0: i32) -> (i32, i32, i32) {
    %c0_i32 = arith.constant 0 : i32
    %c0_i32_0 = arith.constant 0 : i32
    %c0_i32_1 = arith.constant 0 : i32
    %c0_i32_2 = arith.constant 0 : i32
    return %c0_i32, %c0_i32_0, %c0_i32_1 : i32, i32, i32
  }
  func.func @transform_4(%arg0: i32) -> (i32, i32, i32) {
    %c0_i32 = arith.constant 0 : i32
    %c0_i32_0 = arith.constant 0 : i32
    %c0_i32_1 = arith.constant 0 : i32
    %c0_i32_2 = arith.constant 0 : i32
    return %c0_i32, %c0_i32_0, %c0_i32_1 : i32, i32, i32
  }
  func.func @transform_5(%arg0: i32) -> (i32, i32, i32) {
    %c0_i32 = arith.constant 0 : i32
    %c0_i32_0 = arith.constant 0 : i32
    %c0_i32_1 = arith.constant 0 : i32
    %c0_i32_2 = arith.constant 0 : i32
    return %c0_i32, %c0_i32_0, %c0_i32_1 : i32, i32, i32
  }
  func.func @transform_6(%arg0: i32) -> (i32, i32, i32) {
    %c0_i32 = arith.constant 0 : i32
    %c0_i32_0 = arith.constant 0 : i32
    %c0_i32_1 = arith.constant 0 : i32
    %c0_i32_2 = arith.constant 0 : i32
    return %c0_i32, %c0_i32_0, %c0_i32_1 : i32, i32, i32
  }
  func.func @transform_7(%arg0: i32) -> (i32, i32, i32) {
    %c0_i32 = arith.constant 0 : i32
    %c0_i32_0 = arith.constant 0 : i32
    %c0_i32_1 = arith.constant 0 : i32
    %c0_i32_2 = arith.constant 0 : i32
    return %c0_i32, %c0_i32_0, %c0_i32_1 : i32, i32, i32
  }
  func.func @transform_8(%arg0: i32) -> (i32, i32) {
    %c0_i32 = arith.constant 0 : i32
    %c0_i32_0 = arith.constant 0 : i32
    %c0_i32_1 = arith.constant 0 : i32
    return %c0_i32, %c0_i32_0 : i32, i32
  }
  func.func @transform_9(%arg0: i32) -> (i32, i32) {
    %c0_i32 = arith.constant 0 : i32
    %c0_i32_0 = arith.constant 0 : i32
    %c0_i32_1 = arith.constant 0 : i32
    return %c0_i32, %c0_i32_0 : i32, i32
  }
  func.func @transform_10(%arg0: i32) -> (i32, i32) {
    %c0_i32 = arith.constant 0 : i32
    %c0_i32_0 = arith.constant 0 : i32
    %c0_i32_1 = arith.constant 0 : i32
    return %c0_i32, %c0_i32_0 : i32, i32
  }
  func.func @transform_11(%arg0: i32) -> (i32, i32) {
    %c0_i32 = arith.constant 0 : i32
    %c0_i32_0 = arith.constant 0 : i32
    %c0_i32_1 = arith.constant 0 : i32
    return %c0_i32, %c0_i32_0 : i32, i32
  }
  func.func @transform_12(%arg0: i32) -> (i32, i32) {
    %c0_i32 = arith.constant 0 : i32
    %c0_i32_0 = arith.constant 0 : i32
    %c0_i32_1 = arith.constant 0 : i32
    return %c0_i32, %c0_i32_0 : i32, i32
  }
  func.func @transform_13(%arg0: i32) -> (i32, i32, i32) {
    %c0_i32 = arith.constant 0 : i32
    %c0_i32_0 = arith.constant 0 : i32
    %c0_i32_1 = arith.constant 0 : i32
    return %arg0, %c0_i32, %c0_i32_0 : i32, i32, i32
  }
  func.func @transform_14(%arg0: i32) -> (i32, i32, i32) {
    %c0_i32 = arith.constant 0 : i32
    %c0_i32_0 = arith.constant 0 : i32
    %c0_i32_1 = arith.constant 0 : i32
    return %arg0, %c0_i32, %c0_i32_0 : i32, i32, i32
  }
}

</mosaic_0001>

<llo_original>
// kernel: multitask_forward.1
$region0: #{multitask_forward.1}
  #allocation0 [shape = 'u32[]', space=smem, size = 0x4, offset = 0x4, fixed_abs, tag = 'smem constant byte address 0x4 - core index']
  #allocation1 [shape = 'u32[144,128]{1,0:T(1,128)}', space=vmem, size = 0x12000, scoped, tag = 'internal scratch']
  #allocation2 [shape = 'f32[1,1]{1,0:T(1,128)S(1)}', space=vmem, size = 0x200, scoped, tag = 'scoped memory for multitask_forward.1']
  %s0 = inlined_call_operand.vmem [shape: bf16[9,8,18432], index: 0, kind: input, shape index: {}]
  %s1 = inlined_call_operand.hbm [shape: s8[9,18432,256], index: 1, kind: input, shape index: {}]
  %s2 = inlined_call_operand.vmem [shape: f32[9,1,256], index: 2, kind: input, shape index: {}]
  %s3 = inlined_call_operand.vmem [shape: f32[9,1,256], index: 3, kind: input, shape index: {}]
  %s4 = inlined_call_operand.vmem [shape: f32[9,256,128], index: 4, kind: input, shape index: {}]
  %s5 = inlined_call_operand.vmem [shape: f32[9,1,128], index: 5, kind: input, shape index: {}]
  %s6 = inlined_call_operand.vmem [shape: f32[9,128,25], index: 6, kind: input, shape index: {}]
  %s7 = inlined_call_operand.vmem [shape: f32[9,1,25], index: 7, kind: input, shape index: {}]
  %s8 = inlined_call_operand.vmem [shape: bf16[2,2048], index: 8, kind: input, shape index: {}]
  %s9 = inlined_call_operand.vmem [shape: bf16[2048,512], index: 9, kind: input, shape index: {}]
  %s10 = inlined_call_operand.vmem [shape: f32[1,512], index: 10, kind: input, shape index: {}]
  %s11 = inlined_call_operand.vmem [shape: f32[512,1], index: 11, kind: input, shape index: {}]
  %s12 = inlined_call_operand.<no memory space> [shape: f32[1,1], index: 12, kind: input, shape index: {}]
  %s13 = inlined_call_operand.vmem [shape: f32[9,2,25], index: 13, kind: output, shape index: {0}]
  %s14 = inlined_call_operand.vmem [shape: f32[9,2,1], index: 14, kind: output, shape index: {1}]
  %15 = xla_tuple %s13, %s14
  %s16 = sld [smem:[#allocation0]]
  $region104: #{multitask_forward.1} parent=0
    _
  %s18 = ssub.s32 1, %s16
  %s19 = scalar_select 0, %s18, %s16
  %v20 = vstv %s12
  %21 = vst [vmem:[#allocation2] sm:$0x1] %v20
  $region1: #{multitask_forward.1} parent=0
    #allocation3 [shape = 'u8[9437184]{0}', space=vmem, size = 0x900000, scoped, tag = 'input window, operand 1']
    #allocation4 [shape = 's32[2]{0}', space=sflag, size = 0x8, scoped, tag = 'scoped memory for multitask_forward.1']
    %22 = vsyncpa [#allocation4], 0
    %s23 = scalar_lea.sflag [#allocation4], 1
    %24 = vsyncpa %s23, 0
    loop: start=0, step=1, limit=11
    $region2: #{multitask_forward.1} parent=1 // loop_pre_header
      _
    $region3: #{multitask_forward.1} parent=1 // loop_header
      %s26 = sphi 0, %s30
      %p27 = scmp.ge.s32.totalorder %s26, 11
      %s36 = sphi 0, %s38
      %s39 = sphi 0, %s36
      %s40 = sphi 0, %s39
      %s56 = sphi 0, %s40
      %s62 = sphi 0, %s64
      %s65 = sphi 0, %s62
      %s66 = sphi 0, %s65
      %s82 = sphi 0, %s66
      %s86 = sphi 0, %s86
      %s88 = sphi 0, %s86
      %s89 = sphi 0, %s88
      %s103 = sphi 0, %s89
      %s107 = sphi 0, %s107
      %s109 = sphi 0, %s107
      %s110 = sphi 0, %s109
      %s124 = sphi 0, %s110
      %s128 = sphi 0, %s128
      %s130 = sphi 0, %s128
      %s131 = sphi 0, %s130
      %s145 = sphi 0, %s131
      %s149 = sphi 0, %s149
      %s151 = sphi 0, %s149
      %s152 = sphi 0, %s151
      %s166 = sphi 0, %s152
      %s170 = sphi 0, %s170
      %s172 = sphi 0, %s170
      %s173 = sphi 0, %s172
      %s187 = sphi 0, %s173
      %s191 = sphi 0, %s191
      %s193 = sphi 0, %s191
      %s194 = sphi 0, %s193
      %s208 = sphi 0, %s194
      %s212 = sphi 0, %s212
      %s214 = sphi 0, %s212
      %s215 = sphi 0, %s214
      %s229 = sphi 0, %s215
      %s233 = sphi 0, %s233
      %s235 = sphi 0, %s233
      %s236 = sphi 0, %s235
      %s250 = sphi 0, %s236
      %s254 = sphi 0, %s254
      %s256 = sphi 0, %s254
      %s257 = sphi 0, %s256
      %s271 = sphi 0, %s257
      %s275 = sphi 0, %s275
      %s277 = sphi 0, %s275
      %s278 = sphi 0, %s277
      %s292 = sphi 0, %s278
      %s296 = sphi 0, %s296
      %s298 = sphi 0, %s296
      %s299 = sphi 0, %s298
      %s313 = sphi 0, %s299
      %s319 = sphi 0, %s321
      %s322 = sphi 0, %s319
      %s323 = sphi 0, %s322
      %s339 = sphi 0, %s323
      %s345 = sphi 0, %s347
      %s348 = sphi 0, %s345
      %s349 = sphi 0, %s348
      %s365 = sphi 0, %s349
    $region4: #{multitask_forward.1} parent=1 // loop_header_branch
      %29 = sbr.rel (%p27) target = $region8
    $region5: #{multitask_forward.1} parent=1 // loop_body
      %s31 = ssub.s32 %s26, 1
      %s32 = ssub.s32 %s26, 2
      %s33 = sadd.s32 %s26, 1
      %s34 = ssub.s32 %s26, %s33
      %p35 = scmp.eq.s32.totalorder %s34, 0
      %s37 = sadd.s32 %s36, 1
      %s38 = scalar_select %p35, %s36, %s37
      %p41 = pneg %p35
      %p42 = scmp.eq.s32.totalorder %s26, 8
      %p43 = por %p41, %p42
      %p44 = scmp.ne.s32.totalorder %s36, %s39
      %p45 = scmp.eq.s32.totalorder %s26, 0
      %p46 = por %p44, %p45
      %p47 = scmp.ne.s32.totalorder %s36, %s39
      %p48 = scmp.eq.s32.totalorder %s31, 8
      %p49 = por %p47, %p48
      %p50 = scmp.ne.s32.totalorder %s39, %s40
      %p51 = scmp.eq.s32.totalorder %s31, 0
      %p52 = por %p50, %p51
      %p53 = scmp.ne.s32.totalorder %s39, %s40
      %p54 = scmp.eq.s32.totalorder %s32, 8
      %p55 = por %p53, %p54
      %p57 = scmp.ne.s32.totalorder %s40, %s56
      %p58 = scmp.eq.s32.totalorder %s32, 0
      %p59 = por %p57, %p58
      %s60 = ssub.s32 %s26, %s33
      %p61 = scmp.eq.s32.totalorder %s60, 0
      %s63 = sadd.s32 %s62, 1
      %s64 = scalar_select %p61, %s62, %s63
      %p67 = pneg %p61
      %p68 = scmp.eq.s32.totalorder %s26, 8
      %p69 = por %p67, %p68
      %p70 = scmp.ne.s32.totalorder %s62, %s65
      %p71 = scmp.eq.s32.totalorder %s26, 0
      %p72 = por %p70, %p71
      %p73 = scmp.ne.s32.totalorder %s62, %s65
      %p74 = scmp.eq.s32.totalorder %s31, 8
      %p75 = por %p73, %p74
      %p76 = scmp.ne.s32.totalorder %s65, %s66
      %p77 = scmp.eq.s32.totalorder %s31, 0
      %p78 = por %p76, %p77
      %p79 = scmp.ne.s32.totalorder %s65, %s66
      %p80 = scmp.eq.s32.totalorder %s32, 8
      %p81 = por %p79, %p80
      %p83 = scmp.ne.s32.totalorder %s66, %s82
      %p84 = scmp.eq.s32.totalorder %s32, 0
      %p85 = por %p83, %p84
      %s87 = sadd.s32 %s86, 1
      %p90 = scmp.eq.s32.totalorder %s26, 8
      %p91 = scmp.ne.s32.totalorder %s86, %s88
      %p92 = scmp.eq.s32.totalorder %s26, 0
      %p93 = por %p91, %p92
      %p94 = scmp.ne.s32.totalorder %s86, %s88
      %p95 = scmp.eq.s32.totalorder %s31, 8
      %p96 = por %p94, %p95
      %p97 = scmp.ne.s32.totalorder %s88, %s89
      %p98 = scmp.eq.s32.totalorder %s31, 0
      %p99 = por %p97, %p98
      %p100 = scmp.ne.s32.totalorder %s88, %s89
      %p101 = scmp.eq.s32.totalorder %s32, 8
      %p102 = por %p100, %p101
      %p104 = scmp.ne.s32.totalorder %s89, %s103
      %p105 = scmp.eq.s32.totalorder %s32, 0
      %p106 = por %p104, %p105
      %s108 = sadd.s32 %s107, 1
      %p111 = scmp.eq.s32.totalorder %s26, 8
      %p112 = scmp.ne.s32.totalorder %s107, %s109
      %p113 = scmp.eq.s32.totalorder %s26, 0
      %p114 = por %p112, %p113
      %p115 = scmp.ne.s32.totalorder %s107, %s109
      %p116 = scmp.eq.s32.totalorder %s31, 8
      %p117 = por %p115, %p116
      %p118 = scmp.ne.s32.totalorder %s109, %s110
      %p119 = scmp.eq.s32.totalorder %s31, 0
      %p120 = por %p118, %p119
      %p121 = scmp.ne.s32.totalorder %s109, %s110
      %p122 = scmp.eq.s32.totalorder %s32, 8
      %p123 = por %p121, %p122
      %p125 = scmp.ne.s32.totalorder %s110, %s124
      %p126 = scmp.eq.s32.totalorder %s32, 0
      %p127 = por %p125, %p126
      %s129 = sadd.s32 %s128, 1
      %p132 = scmp.eq.s32.totalorder %s26, 8
      %p133 = scmp.ne.s32.totalorder %s128, %s130
      %p134 = scmp.eq.s32.totalorder %s26, 0
      %p135 = por %p133, %p134
      %p136 = scmp.ne.s32.totalorder %s128, %s130
      %p137 = scmp.eq.s32.totalorder %s31, 8
      %p138 = por %p136, %p137
      %p139 = scmp.ne.s32.totalorder %s130, %s131
      %p140 = scmp.eq.s32.totalorder %s31, 0
      %p141 = por %p139, %p140
      %p142 = scmp.ne.s32.totalorder %s130, %s131
      %p143 = scmp.eq.s32.totalorder %s32, 8
      %p144 = por %p142, %p143
      %p146 = scmp.ne.s32.totalorder %s131, %s145
      %p147 = scmp.eq.s32.totalorder %s32, 0
      %p148 = por %p146, %p147
      %s150 = sadd.s32 %s149, 1
      %p153 = scmp.eq.s32.totalorder %s26, 8
      %p154 = scmp.ne.s32.totalorder %s149, %s151
      %p155 = scmp.eq.s32.totalorder %s26, 0
      %p156 = por %p154, %p155
      %p157 = scmp.ne.s32.totalorder %s149, %s151
      %p158 = scmp.eq.s32.totalorder %s31, 8
      %p159 = por %p157, %p158
      %p160 = scmp.ne.s32.totalorder %s151, %s152
      %p161 = scmp.eq.s32.totalorder %s31, 0
      %p162 = por %p160, %p161
      %p163 = scmp.ne.s32.totalorder %s151, %s152
      %p164 = scmp.eq.s32.totalorder %s32, 8
      %p165 = por %p163, %p164
      %p167 = scmp.ne.s32.totalorder %s152, %s166
      %p168 = scmp.eq.s32.totalorder %s32, 0
      %p169 = por %p167, %p168
      %s171 = sadd.s32 %s170, 1
      %p174 = scmp.eq.s32.totalorder %s26, 8
      %p175 = scmp.ne.s32.totalorder %s170, %s172
      %p176 = scmp.eq.s32.totalorder %s26, 0
      %p177 = por %p175, %p176
      %p178 = scmp.ne.s32.totalorder %s170, %s172
      %p179 = scmp.eq.s32.totalorder %s31, 8
      %p180 = por %p178, %p179
      %p181 = scmp.ne.s32.totalorder %s172, %s173
      %p182 = scmp.eq.s32.totalorder %s31, 0
      %p183 = por %p181, %p182
      %p184 = scmp.ne.s32.totalorder %s172, %s173
      %p185 = scmp.eq.s32.totalorder %s32, 8
      %p186 = por %p184, %p185
      %p188 = scmp.ne.s32.totalorder %s173, %s187
      %p189 = scmp.eq.s32.totalorder %s32, 0
      %p190 = por %p188, %p189
      %s192 = sadd.s32 %s191, 1
      %p195 = scmp.eq.s32.totalorder %s26, 8
      %p196 = scmp.ne.s32.totalorder %s191, %s193
      %p197 = scmp.eq.s32.totalorder %s26, 0
      %p198 = por %p196, %p197
      %p199 = scmp.ne.s32.totalorder %s191, %s193
      %p200 = scmp.eq.s32.totalorder %s31, 8
      %p201 = por %p199, %p200
      %p202 = scmp.ne.s32.totalorder %s193, %s194
      %p203 = scmp.eq.s32.totalorder %s31, 0
      %p204 = por %p202, %p203
      %p205 = scmp.ne.s32.totalorder %s193, %s194
      %p206 = scmp.eq.s32.totalorder %s32, 8
      %p207 = por %p205, %p206
      %p209 = scmp.ne.s32.totalorder %s194, %s208
      %p210 = scmp.eq.s32.totalorder %s32, 0
      %p211 = por %p209, %p210
      %s213 = sadd.s32 %s212, 1
      %p216 = scmp.eq.s32.totalorder %s26, 8
      %p217 = scmp.ne.s32.totalorder %s212, %s214
      %p218 = scmp.eq.s32.totalorder %s26, 0
      %p219 = por %p217, %p218
      %p220 = scmp.ne.s32.totalorder %s212, %s214
      %p221 = scmp.eq.s32.totalorder %s31, 8
      %p222 = por %p220, %p221
      %p223 = scmp.ne.s32.totalorder %s214, %s215
      %p224 = scmp.eq.s32.totalorder %s31, 0
      %p225 = por %p223, %p224
      %p226 = scmp.ne.s32.totalorder %s214, %s215
      %p227 = scmp.eq.s32.totalorder %s32, 8
      %p228 = por %p226, %p227
      %p230 = scmp.ne.s32.totalorder %s215, %s229
      %p231 = scmp.eq.s32.totalorder %s32, 0
      %p232 = por %p230, %p231
      %s234 = sadd.s32 %s233, 1
      %p237 = scmp.eq.s32.totalorder %s26, 8
      %p238 = scmp.ne.s32.totalorder %s233, %s235
      %p239 = scmp.eq.s32.totalorder %s26, 0
      %p240 = por %p238, %p239
      %p241 = scmp.ne.s32.totalorder %s233, %s235
      %p242 = scmp.eq.s32.totalorder %s31, 8
      %p243 = por %p241, %p242
      %p244 = scmp.ne.s32.totalorder %s235, %s236
      %p245 = scmp.eq.s32.totalorder %s31, 0
      %p246 = por %p244, %p245
      %p247 = scmp.ne.s32.totalorder %s235, %s236
      %p248 = scmp.eq.s32.totalorder %s32, 8
      %p249 = por %p247, %p248
      %p251 = scmp.ne.s32.totalorder %s236, %s250
      %p252 = scmp.eq.s32.totalorder %s32, 0
      %p253 = por %p251, %p252
      %s255 = sadd.s32 %s254, 1
      %p258 = scmp.eq.s32.totalorder %s26, 8
      %p259 = scmp.ne.s32.totalorder %s254, %s256
      %p260 = scmp.eq.s32.totalorder %s26, 0
      %p261 = por %p259, %p260
      %p262 = scmp.ne.s32.totalorder %s254, %s256
      %p263 = scmp.eq.s32.totalorder %s31, 8
      %p264 = por %p262, %p263
      %p265 = scmp.ne.s32.totalorder %s256, %s257
      %p266 = scmp.eq.s32.totalorder %s31, 0
      %p267 = por %p265, %p266
      %p268 = scmp.ne.s32.totalorder %s256, %s257
      %p269 = scmp.eq.s32.totalorder %s32, 8
      %p270 = por %p268, %p269
      %p272 = scmp.ne.s32.totalorder %s257, %s271
      %p273 = scmp.eq.s32.totalorder %s32, 0
      %p274 = por %p272, %p273
      %s276 = sadd.s32 %s275, 1
      %p279 = scmp.eq.s32.totalorder %s26, 8
      %p280 = scmp.ne.s32.totalorder %s275, %s277
      %p281 = scmp.eq.s32.totalorder %s26, 0
      %p282 = por %p280, %p281
      %p283 = scmp.ne.s32.totalorder %s275, %s277
      %p284 = scmp.eq.s32.totalorder %s31, 8
      %p285 = por %p283, %p284
      %p286 = scmp.ne.s32.totalorder %s277, %s278
      %p287 = scmp.eq.s32.totalorder %s31, 0
      %p288 = por %p286, %p287
      %p289 = scmp.ne.s32.totalorder %s277, %s278
      %p290 = scmp.eq.s32.totalorder %s32, 8
      %p291 = por %p289, %p290
      %p293 = scmp.ne.s32.totalorder %s278, %s292
      %p294 = scmp.eq.s32.totalorder %s32, 0
      %p295 = por %p293, %p294
      %s297 = sadd.s32 %s296, 1
      %p300 = scmp.eq.s32.totalorder %s26, 8
      %p301 = scmp.ne.s32.totalorder %s296, %s298
      %p302 = scmp.eq.s32.totalorder %s26, 0
      %p303 = por %p301, %p302
      %p304 = scmp.ne.s32.totalorder %s296, %s298
      %p305 = scmp.eq.s32.totalorder %s31, 8
      %p306 = por %p304, %p305
      %p307 = scmp.ne.s32.totalorder %s298, %s299
      %p308 = scmp.eq.s32.totalorder %s31, 0
      %p309 = por %p307, %p308
      %p310 = scmp.ne.s32.totalorder %s298, %s299
      %p311 = scmp.eq.s32.totalorder %s32, 8
      %p312 = por %p310, %p311
      %p314 = scmp.ne.s32.totalorder %s299, %s313
      %p315 = scmp.eq.s32.totalorder %s32, 0
      %p316 = por %p314, %p315
      %s317 = ssub.s32 %s26, %s33
      %p318 = scmp.eq.s32.totalorder %s317, 0
      %s320 = sadd.s32 %s319, 1
      %s321 = scalar_select %p318, %s319, %s320
      %p324 = pneg %p318
      %p325 = scmp.eq.s32.totalorder %s26, 8
      %p326 = por %p324, %p325
      %p327 = scmp.ne.s32.totalorder %s319, %s322
      %p328 = scmp.eq.s32.totalorder %s26, 0
      %p329 = por %p327, %p328
      %p330 = scmp.ne.s32.totalorder %s319, %s322
      %p331 = scmp.eq.s32.totalorder %s31, 8
      %p332 = por %p330, %p331
      %p333 = scmp.ne.s32.totalorder %s322, %s323
      %p334 = scmp.eq.s32.totalorder %s31, 0
      %p335 = por %p333, %p334
      %p336 = scmp.ne.s32.totalorder %s322, %s323
      %p337 = scmp.eq.s32.totalorder %s32, 8
      %p338 = por %p336, %p337
      %p340 = scmp.ne.s32.totalorder %s323, %s339
      %p341 = scmp.eq.s32.totalorder %s32, 0
      %p342 = por %p340, %p341
      %s343 = ssub.s32 %s26, %s33
      %p344 = scmp.eq.s32.totalorder %s343, 0
      %s346 = sadd.s32 %s345, 1
      %s347 = scalar_select %p344, %s345, %s346
      %p350 = pneg %p344
      %p351 = scmp.eq.s32.totalorder %s26, 8
      %p352 = por %p350, %p351
      %p353 = scmp.ne.s32.totalorder %s345, %s348
      %p354 = scmp.eq.s32.totalorder %s26, 0
      %p355 = por %p353, %p354
      %p356 = scmp.ne.s32.totalorder %s345, %s348
      %p357 = scmp.eq.s32.totalorder %s31, 8
      %p358 = por %p356, %p357
      %p359 = scmp.ne.s32.totalorder %s348, %s349
      %p360 = scmp.eq.s32.totalorder %s31, 0
      %p361 = por %p359, %p360
      %p362 = scmp.ne.s32.totalorder %s348, %s349
      %p363 = scmp.eq.s32.totalorder %s32, 8
      %p364 = por %p362, %p363
      %p366 = scmp.ne.s32.totalorder %s349, %s365
      %p367 = scmp.eq.s32.totalorder %s32, 0
      %p368 = por %p366, %p367
      %p369 = scmp.le.s32.totalorder 1, %s26
      %p370 = scmp.lt.s32.totalorder %s26, 10
      %p371 = pnand %p369, %p370
      %p372 = pneg %p371
      // Predicated region
      $region9: #{multitask_forward.1} parent=5 // pred_check
        _
      $region10: #{multitask_forward.1} parent=5 // pred_check_branch
        %374 = sbr.rel (%p371) target = $region12
      $region11: #{multitask_forward.1} parent=5 // pred_region
        %s375 = ssub.s32 %s26, 1
        // Predicated region
        $region13: #{multitask_forward.1} parent=11 // pred_check
          %p376 = pneg %p99
        $region14: #{multitask_forward.1} parent=11 // pred_check_branch
          %378 = sbr.rel (%p376) target = $region16
        $region15: #{multitask_forward.1} parent=11 // pred_region
          _
        $region16: #{multitask_forward.1} parent=11 // pred_fallthru
          _
        // Predicated region
        $region17: #{multitask_forward.1} parent=11 // pred_check
          %p379 = pneg %p120
        $region18: #{multitask_forward.1} parent=11 // pred_check_branch
          %381 = sbr.rel (%p379) target = $region20
        $region19: #{multitask_forward.1} parent=11 // pred_region
          _
        $region20: #{multitask_forward.1} parent=11 // pred_fallthru
          _
        // Predicated region
        $region21: #{multitask_forward.1} parent=11 // pred_check
          %p382 = pneg %p141
        $region22: #{multitask_forward.1} parent=11 // pred_check_branch
          %384 = sbr.rel (%p382) target = $region24
        $region23: #{multitask_forward.1} parent=11 // pred_region
          _
        $region24: #{multitask_forward.1} parent=11 // pred_fallthru
          _
        // Predicated region
        $region25: #{multitask_forward.1} parent=11 // pred_check
          %p385 = pneg %p162
        $region26: #{multitask_forward.1} parent=11 // pred_check_branch
          %387 = sbr.rel (%p385) target = $region28
        $region27: #{multitask_forward.1} parent=11 // pred_region
          _
        $region28: #{multitask_forward.1} parent=11 // pred_fallthru
          _
        // Predicated region
        $region29: #{multitask_forward.1} parent=11 // pred_check
          %p388 = pneg %p183
        $region30: #{multitask_forward.1} parent=11 // pred_check_branch
          %390 = sbr.rel (%p388) target = $region32
        $region31: #{multitask_forward.1} parent=11 // pred_region
          _
        $region32: #{multitask_forward.1} parent=11 // pred_fallthru
          _
        // Predicated region
        $region33: #{multitask_forward.1} parent=11 // pred_check
          %p391 = pneg %p204
        $region34: #{multitask_forward.1} parent=11 // pred_check_branch
          %393 = sbr.rel (%p391) target = $region36
        $region35: #{multitask_forward.1} parent=11 // pred_region
          _
        $region36: #{multitask_forward.1} parent=11 // pred_fallthru
          _
        // Predicated region
        $region37: #{multitask_forward.1} parent=11 // pred_check
          %p394 = pneg %p225
        $region38: #{multitask_forward.1} parent=11 // pred_check_branch
          %396 = sbr.rel (%p394) target = $region40
        $region39: #{multitask_forward.1} parent=11 // pred_region
          _
        $region40: #{multitask_forward.1} parent=11 // pred_fallthru
          _
        // Predicated region
        $region41: #{multitask_forward.1} parent=11 // pred_check
          %p397 = pneg %p246
        $region42: #{multitask_forward.1} parent=11 // pred_check_branch
          %399 = sbr.rel (%p397) target = $region44
        $region43: #{multitask_forward.1} parent=11 // pred_region
          _
        $region44: #{multitask_forward.1} parent=11 // pred_fallthru
          _
        // Predicated region
        $region45: #{multitask_forward.1} parent=11 // pred_check
          %p400 = pneg %p267
        $region46: #{multitask_forward.1} parent=11 // pred_check_branch
          %402 = sbr.rel (%p400) target = $region48
        $region47: #{multitask_forward.1} parent=11 // pred_region
          _
        $region48: #{multitask_forward.1} parent=11 // pred_fallthru
          _
        // Predicated region
        $region49: #{multitask_forward.1} parent=11 // pred_check
          %p403 = pneg %p288
        $region50: #{multitask_forward.1} parent=11 // pred_check_branch
          %405 = sbr.rel (%p403) target = $region52
        $region51: #{multitask_forward.1} parent=11 // pred_region
          _
        $region52: #{multitask_forward.1} parent=11 // pred_fallthru
          _
        // Predicated region
        $region53: #{multitask_forward.1} parent=11 // pred_check
          %p406 = pneg %p309
        $region54: #{multitask_forward.1} parent=11 // pred_check_branch
          %408 = sbr.rel (%p406) target = $region56
        $region55: #{multitask_forward.1} parent=11 // pred_region
          _
        $region56: #{multitask_forward.1} parent=11 // pred_fallthru
          _
      $region12: #{multitask_forward.1} parent=5 // pred_fallthru
        _
      %p409 = scmp.lt.s32.totalorder %s26, 9
      // Predicated region
      $region57: #{multitask_forward.1} parent=5 // pred_check
        %p410 = pneg %p409
      $region58: #{multitask_forward.1} parent=5 // pred_check_branch
        %412 = sbr.rel (%p410) target = $region60
      $region59: #{multitask_forward.1} parent=5 // pred_region
        // Predicated region
        $region61: #{multitask_forward.1} parent=59 // pred_check
          %p413 = pneg %p46
        $region62: #{multitask_forward.1} parent=59 // pred_check_branch
          %415 = sbr.rel (%p413) target = $region64
        $region63: #{multitask_forward.1} parent=59 // pred_region
          %p416 = scmp.lt.s32.totalorder %s26, 8
          %s417 = scalar_select %p416, %s26, 8
          %s418 = smul.addr %s417, 144
          %s419 = smul.addr %s418, 4
          %s420 = scalar_lea.vmem %s0, %s419
        $region64: #{multitask_forward.1} parent=59 // pred_fallthru
          _
        // Predicated region
        $region65: #{multitask_forward.1} parent=59 // pred_check
          %p421 = pneg %p72
        $region66: #{multitask_forward.1} parent=59 // pred_check_branch
          %423 = sbr.rel (%p421) target = $region68
        $region67: #{multitask_forward.1} parent=59 // pred_region
          %s424 = sand.u32 %s62, 1
          %s425 = scalar_lea.sflag [#allocation4], %s424
          %s426 = sand.u32 %s62, 1
          %s427 = smul.addr %s426, 9216
          %s428 = scalar_lea.vmem [#allocation3], %s427
          %s430 = ssub.s32 147456, 147456
          %431 = vsyncadd %s425, %s430
          %s432 = smul.addr %s26, 1152
          %s433 = smul.addr %s432, 128
          %s434 = scalar_lea.hbm %s1, %s433
          %s435 = sshll.u32 %s428, 4
          %s436 = int_to_ptr.vmem [resolvable:$true] %s435
          %441 = dma.hbm_to_vmem [thread:$0]  %s434, 147456, %s436, %s425, 256, 256, 16
        $region68: #{multitask_forward.1} parent=59 // pred_fallthru
          _
      $region60: #{multitask_forward.1} parent=5 // pred_fallthru
        _
      %p442 = scmp.le.s32.totalorder 1, %s26
      %p443 = scmp.lt.s32.totalorder %s26, 10
      %p444 = pnand %p442, %p443
      %p445 = pneg %p444
      // Predicated region
      $region69: #{multitask_forward.1} parent=5 // pred_check
        _
      $region70: #{multitask_forward.1} parent=5 // pred_check_branch
        %447 = sbr.rel (%p444) target = $region72
      $region71: #{multitask_forward.1} parent=5 // pred_region
        %s448 = ssub.s32 %s26, 1
        %s449 = sand.u32 %s65, 1
        %s450 = scalar_lea.sflag [#allocation4], %s449
        %s451 = sand.u32 %s65, 1
        %s452 = smul.addr %s451, 9216
        %s453 = scalar_lea.vmem [#allocation3], %s452
        // Predicated region
        $region73: #{multitask_forward.1} parent=71 // pred_check
          %p454 = pneg %p78
        $region74: #{multitask_forward.1} parent=71 // pred_check_branch
          %456 = sbr.rel (%p454) target = $region76
        $region75: #{multitask_forward.1} parent=71 // pred_region
          %457 = dma.done %s450, 147456
        $region76: #{multitask_forward.1} parent=71 // pred_fallthru
          _
        %p458 = scmp.lt.s32.totalorder %s31, 8
        %s459 = scalar_select %p458, %s31, 8
        %s460 = smul.addr %s459, 144
        %s461 = smul.addr %s460, 4
        %s462 = scalar_lea.vmem %s0, %s461
        %p463 = pneg %p52
        %p464 = pneg %p49
        %s465 = sand.u32 %s65, 1
        %s466 = scalar_lea.sflag [#allocation4], %s465
        %s467 = sand.u32 %s65, 1
        %s468 = smul.addr %s467, 9216
        %s469 = scalar_lea.vmem [#allocation3], %s468
        %p470 = pneg %p78
        %p471 = pneg %p75
        %p472 = pneg %p99
        %p473 = pneg %p96
        %p474 = pneg %p120
        %p475 = pneg %p117
        %p476 = pneg %p141
        %p477 = pneg %p138
        %p478 = pneg %p162
        %p479 = pneg %p159
        %p480 = pneg %p183
        %p481 = pneg %p180
        %p482 = pneg %p204
        %p483 = pneg %p201
        %p484 = pneg %p225
        %p485 = pneg %p222
        %p486 = pneg %p246
        %p487 = pneg %p243
        %p488 = pneg %p267
        %p489 = pneg %p264
        %p490 = pneg %p288
        %p491 = pneg %p285
        %p492 = pneg %p309
        %p493 = pneg %p306
        %p494 = pneg %p335
        %p495 = pneg %p332
        %p496 = scmp.lt.s32.totalorder %s31, 8
        %s497 = scalar_select %p496, %s31, 8
        %s498 = smul.addr %s497, 2
        %s499 = scalar_lea.vmem %s13, %s498
        %p500 = pneg %p361
        %p501 = pneg %p358
        %p502 = scmp.lt.s32.totalorder %s31, 8
        %s503 = scalar_select %p502, %s31, 8
        %s504 = smul.addr %s503, 2
        %s505 = scalar_lea.vmem %s14, %s504
        %p506 = scmp.lt.s32.totalorder %s31, 8
        %s507 = scalar_select %p506, %s31, 8
        %s508 = smul.addr %s507, 144
        %s509 = smul.addr %s508, 4
        %s510 = scalar_lea.vmem %s0, %s509
        %p511 = scmp.lt.s32.totalorder %s31, 8
        %s512 = scalar_select %p511, %s31, 8
        %s513 = smul.addr %s512, 2
        %s514 = scalar_lea.vmem %s13, %s513
        %p515 = scmp.lt.s32.totalorder %s31, 8
        %s516 = scalar_select %p515, %s31, 8
        %s517 = smul.addr %s516, 2
        %s518 = scalar_lea.vmem %s14, %s517
        loop: start=0, step=1, limit=4
        $region77: #{multitask_forward.1} parent=71 // loop_pre_header
          _
        $region78: #{multitask_forward.1} parent=71 // loop_header
          %s520 = sphi 0, %s524
          %p521 = scmp.ge.s32.totalorder %s520, 4
          %v525 = vphi 0.0, %v4461
          %v526 = vphi 0.0, %v4462
        $region79: #{multitask_forward.1} parent=71 // loop_header_branch
          %523 = sbr.rel (%p521) target = $region83
        $region80: #{multitask_forward.1} parent=71 // loop_body
          %s527 = smul.u32 %s520, 4608
          %s528 = sshra.s32 %s527, 5
          %s529 = sand.u32 %s527, 31
          %s530 = smul.u32 %s528, 2
          %s531 = smul.addr %s530, 8
          %s532 = scalar_lea.vmem %s453, %s531 [#allocation3]
          %v533 = vld [vmem:[%s532] sm:$0xff]
          %v534 = vld [vmem:[%s532 + $0x8] sm:$0xff]
          %v535 = vld [vmem:[%s532 + $0x10] sm:$0xff]
          %v536 = vld [vmem:[%s532 + $0x18] sm:$0xff]
          %v537 = vld [vmem:[%s532 + $0x20] sm:$0xff]
          %v538 = vld [vmem:[%s532 + $0x28] sm:$0xff]
          %v539 = vld [vmem:[%s532 + $0x30] sm:$0xff]
          %v540 = vld [vmem:[%s532 + $0x38] sm:$0xff]
          %v541 = vld [vmem:[%s532 + $0x40] sm:$0xff]
          %v542 = vld [vmem:[%s532 + $0x48] sm:$0xff]
          %v543 = vld [vmem:[%s532 + $0x50] sm:$0xff]
          %v544 = vld [vmem:[%s532 + $0x58] sm:$0xff]
          %v545 = vld [vmem:[%s532 + $0x60] sm:$0xff]
          %v546 = vld [vmem:[%s532 + $0x68] sm:$0xff]
          %v547 = vld [vmem:[%s532 + $0x70] sm:$0xff]
          %v548 = vld [vmem:[%s532 + $0x78] sm:$0xff]
          %v549 = vld [vmem:[%s532 + $0x80] sm:$0xff]
          %v550 = vld [vmem:[%s532 + $0x88] sm:$0xff]
          %v551 = vld [vmem:[%s532 + $0x90] sm:$0xff]
          %v552 = vld [vmem:[%s532 + $0x98] sm:$0xff]
          %v553 = vld [vmem:[%s532 + $0xa0] sm:$0xff]
          %v554 = vld [vmem:[%s532 + $0xa8] sm:$0xff]
          %v555 = vld [vmem:[%s532 + $0xb0] sm:$0xff]
          %v556 = vld [vmem:[%s532 + $0xb8] sm:$0xff]
          %v557 = vld [vmem:[%s532 + $0xc0] sm:$0xff]
          %v558 = vld [vmem:[%s532 + $0xc8] sm:$0xff]
          %v559 = vld [vmem:[%s532 + $0xd0] sm:$0xff]
          %v560 = vld [vmem:[%s532 + $0xd8] sm:$0xff]
          %v561 = vld [vmem:[%s532 + $0xe0] sm:$0xff]
          %v562 = vld [vmem:[%s532 + $0xe8] sm:$0xff]
          %v563 = vld [vmem:[%s532 + $0xf0] sm:$0xff]
          %v564 = vld [vmem:[%s532 + $0xf8] sm:$0xff]
          %v565 = vld [vmem:[%s532 + $0x100] sm:$0xff]
          %v566 = vld [vmem:[%s532 + $0x108] sm:$0xff]
          %v567 = vld [vmem:[%s532 + $0x110] sm:$0xff]
          %v568 = vld [vmem:[%s532 + $0x118] sm:$0xff]
          %v569 = vld [vmem:[%s532 + $0x120] sm:$0xff]
          %v570 = vld [vmem:[%s532 + $0x128] sm:$0xff]
          %v571 = vld [vmem:[%s532 + $0x130] sm:$0xff]
          %v572 = vld [vmem:[%s532 + $0x138] sm:$0xff]
          %v573 = vld [vmem:[%s532 + $0x140] sm:$0xff]
          %v574 = vld [vmem:[%s532 + $0x148] sm:$0xff]
          %v575 = vld [vmem:[%s532 + $0x150] sm:$0xff]
          %v576 = vld [vmem:[%s532 + $0x158] sm:$0xff]
          %v577 = vld [vmem:[%s532 + $0x160] sm:$0xff]
          %v578 = vld [vmem:[%s532 + $0x168] sm:$0xff]
          %v579 = vld [vmem:[%s532 + $0x170] sm:$0xff]
          %v580 = vld [vmem:[%s532 + $0x178] sm:$0xff]
          %v581 = vld [vmem:[%s532 + $0x180] sm:$0xff]
          %v582 = vld [vmem:[%s532 + $0x188] sm:$0xff]
          %v583 = vld [vmem:[%s532 + $0x190] sm:$0xff]
          %v584 = vld [vmem:[%s532 + $0x198] sm:$0xff]
          %v585 = vld [vmem:[%s532 + $0x1a0] sm:$0xff]
          %v586 = vld [vmem:[%s532 + $0x1a8] sm:$0xff]
          %v587 = vld [vmem:[%s532 + $0x1b0] sm:$0xff]
          %v588 = vld [vmem:[%s532 + $0x1b8] sm:$0xff]
          %v589 = vld [vmem:[%s532 + $0x1c0] sm:$0xff]
          %v590 = vld [vmem:[%s532 + $0x1c8] sm:$0xff]
          %v591 = vld [vmem:[%s532 + $0x1d0] sm:$0xff]
          %v592 = vld [vmem:[%s532 + $0x1d8] sm:$0xff]
          %v593 = vld [vmem:[%s532 + $0x1e0] sm:$0xff]
          %v594 = vld [vmem:[%s532 + $0x1e8] sm:$0xff]
          %v595 = vld [vmem:[%s532 + $0x1f0] sm:$0xff]
          %v596 = vld [vmem:[%s532 + $0x1f8] sm:$0xff]
          %v597 = vld [vmem:[%s532 + $0x200] sm:$0xff]
          %v598 = vld [vmem:[%s532 + $0x208] sm:$0xff]
          %v599 = vld [vmem:[%s532 + $0x210] sm:$0xff]
          %v600 = vld [vmem:[%s532 + $0x218] sm:$0xff]
          %v601 = vld [vmem:[%s532 + $0x220] sm:$0xff]
          %v602 = vld [vmem:[%s532 + $0x228] sm:$0xff]
          %v603 = vld [vmem:[%s532 + $0x230] sm:$0xff]
          %v604 = vld [vmem:[%s532 + $0x238] sm:$0xff]
          %v605 = vld [vmem:[%s532 + $0x240] sm:$0xff]
          %v606 = vld [vmem:[%s532 + $0x248] sm:$0xff]
          %v607 = vld [vmem:[%s532 + $0x250] sm:$0xff]
          %v608 = vld [vmem:[%s532 + $0x258] sm:$0xff]
          %v609 = vld [vmem:[%s532 + $0x260] sm:$0xff]
          %v610 = vld [vmem:[%s532 + $0x268] sm:$0xff]
          %v611 = vld [vmem:[%s532 + $0x270] sm:$0xff]
          %v612 = vld [vmem:[%s532 + $0x278] sm:$0xff]
          %v613 = vld [vmem:[%s532 + $0x280] sm:$0xff]
          %v614 = vld [vmem:[%s532 + $0x288] sm:$0xff]
          %v615 = vld [vmem:[%s532 + $0x290] sm:$0xff]
          %v616 = vld [vmem:[%s532 + $0x298] sm:$0xff]
          %v617 = vld [vmem:[%s532 + $0x2a0] sm:$0xff]
          %v618 = vld [vmem:[%s532 + $0x2a8] sm:$0xff]
          %v619 = vld [vmem:[%s532 + $0x2b0] sm:$0xff]
          %v620 = vld [vmem:[%s532 + $0x2b8] sm:$0xff]
          %v621 = vld [vmem:[%s532 + $0x2c0] sm:$0xff]
          %v622 = vld [vmem:[%s532 + $0x2c8] sm:$0xff]
          %v623 = vld [vmem:[%s532 + $0x2d0] sm:$0xff]
          %v624 = vld [vmem:[%s532 + $0x2d8] sm:$0xff]
          %v625 = vld [vmem:[%s532 + $0x2e0] sm:$0xff]
          %v626 = vld [vmem:[%s532 + $0x2e8] sm:$0xff]
          %v627 = vld [vmem:[%s532 + $0x2f0] sm:$0xff]
          %v628 = vld [vmem:[%s532 + $0x2f8] sm:$0xff]
          %v629 = vld [vmem:[%s532 + $0x300] sm:$0xff]
          %v630 = vld [vmem:[%s532 + $0x308] sm:$0xff]
          %v631 = vld [vmem:[%s532 + $0x310] sm:$0xff]
          %v632 = vld [vmem:[%s532 + $0x318] sm:$0xff]
          %v633 = vld [vmem:[%s532 + $0x320] sm:$0xff]
          %v634 = vld [vmem:[%s532 + $0x328] sm:$0xff]
          %v635 = vld [vmem:[%s532 + $0x330] sm:$0xff]
          %v636 = vld [vmem:[%s532 + $0x338] sm:$0xff]
          %v637 = vld [vmem:[%s532 + $0x340] sm:$0xff]
          %v638 = vld [vmem:[%s532 + $0x348] sm:$0xff]
          %v639 = vld [vmem:[%s532 + $0x350] sm:$0xff]
          %v640 = vld [vmem:[%s532 + $0x358] sm:$0xff]
          %v641 = vld [vmem:[%s532 + $0x360] sm:$0xff]
          %v642 = vld [vmem:[%s532 + $0x368] sm:$0xff]
          %v643 = vld [vmem:[%s532 + $0x370] sm:$0xff]
          %v644 = vld [vmem:[%s532 + $0x378] sm:$0xff]
          %v645 = vld [vmem:[%s532 + $0x380] sm:$0xff]
          %v646 = vld [vmem:[%s532 + $0x388] sm:$0xff]
          %v647 = vld [vmem:[%s532 + $0x390] sm:$0xff]
          %v648 = vld [vmem:[%s532 + $0x398] sm:$0xff]
          %v649 = vld [vmem:[%s532 + $0x3a0] sm:$0xff]
          %v650 = vld [vmem:[%s532 + $0x3a8] sm:$0xff]
          %v651 = vld [vmem:[%s532 + $0x3b0] sm:$0xff]
          %v652 = vld [vmem:[%s532 + $0x3b8] sm:$0xff]
          %v653 = vld [vmem:[%s532 + $0x3c0] sm:$0xff]
          %v654 = vld [vmem:[%s532 + $0x3c8] sm:$0xff]
          %v655 = vld [vmem:[%s532 + $0x3d0] sm:$0xff]
          %v656 = vld [vmem:[%s532 + $0x3d8] sm:$0xff]
          %v657 = vld [vmem:[%s532 + $0x3e0] sm:$0xff]
          %v658 = vld [vmem:[%s532 + $0x3e8] sm:$0xff]
          %v659 = vld [vmem:[%s532 + $0x3f0] sm:$0xff]
          %v660 = vld [vmem:[%s532 + $0x3f8] sm:$0xff]
          %v661 = vld [vmem:[%s532 + $0x400] sm:$0xff]
          %v662 = vld [vmem:[%s532 + $0x408] sm:$0xff]
          %v663 = vld [vmem:[%s532 + $0x410] sm:$0xff]
          %v664 = vld [vmem:[%s532 + $0x418] sm:$0xff]
          %v665 = vld [vmem:[%s532 + $0x420] sm:$0xff]
          %v666 = vld [vmem:[%s532 + $0x428] sm:$0xff]
          %v667 = vld [vmem:[%s532 + $0x430] sm:$0xff]
          %v668 = vld [vmem:[%s532 + $0x438] sm:$0xff]
          %v669 = vld [vmem:[%s532 + $0x440] sm:$0xff]
          %v670 = vld [vmem:[%s532 + $0x448] sm:$0xff]
          %v671 = vld [vmem:[%s532 + $0x450] sm:$0xff]
          %v672 = vld [vmem:[%s532 + $0x458] sm:$0xff]
          %v673 = vld [vmem:[%s532 + $0x460] sm:$0xff]
          %v674 = vld [vmem:[%s532 + $0x468] sm:$0xff]
          %v675 = vld [vmem:[%s532 + $0x470] sm:$0xff]
          %v676 = vld [vmem:[%s532 + $0x478] sm:$0xff]
          %v677 = vld [vmem:[%s532 + $0x480] sm:$0xff]
          %v678 = vld [vmem:[%s532 + $0x488] sm:$0xff]
          %v679 = vld [vmem:[%s532 + $0x490] sm:$0xff]
          %v680 = vld [vmem:[%s532 + $0x498] sm:$0xff]
          %v681 = vld [vmem:[%s532 + $0x4a0] sm:$0xff]
          %v682 = vld [vmem:[%s532 + $0x4a8] sm:$0xff]
          %v683 = vld [vmem:[%s532 + $0x4b0] sm:$0xff]
          %v684 = vld [vmem:[%s532 + $0x4b8] sm:$0xff]
          %v685 = vld [vmem:[%s532 + $0x4c0] sm:$0xff]
          %v686 = vld [vmem:[%s532 + $0x4c8] sm:$0xff]
          %v687 = vld [vmem:[%s532 + $0x4d0] sm:$0xff]
          %v688 = vld [vmem:[%s532 + $0x4d8] sm:$0xff]
          %v689 = vld [vmem:[%s532 + $0x4e0] sm:$0xff]
          %v690 = vld [vmem:[%s532 + $0x4e8] sm:$0xff]
          %v691 = vld [vmem:[%s532 + $0x4f0] sm:$0xff]
          %v692 = vld [vmem:[%s532 + $0x4f8] sm:$0xff]
          %v693 = vld [vmem:[%s532 + $0x500] sm:$0xff]
          %v694 = vld [vmem:[%s532 + $0x508] sm:$0xff]
          %v695 = vld [vmem:[%s532 + $0x510] sm:$0xff]
          %v696 = vld [vmem:[%s532 + $0x518] sm:$0xff]
          %v697 = vld [vmem:[%s532 + $0x520] sm:$0xff]
          %v698 = vld [vmem:[%s532 + $0x528] sm:$0xff]
          %v699 = vld [vmem:[%s532 + $0x530] sm:$0xff]
          %v700 = vld [vmem:[%s532 + $0x538] sm:$0xff]
          %v701 = vld [vmem:[%s532 + $0x540] sm:$0xff]
          %v702 = vld [vmem:[%s532 + $0x548] sm:$0xff]
          %v703 = vld [vmem:[%s532 + $0x550] sm:$0xff]
          %v704 = vld [vmem:[%s532 + $0x558] sm:$0xff]
          %v705 = vld [vmem:[%s532 + $0x560] sm:$0xff]
          %v706 = vld [vmem:[%s532 + $0x568] sm:$0xff]
          %v707 = vld [vmem:[%s532 + $0x570] sm:$0xff]
          %v708 = vld [vmem:[%s532 + $0x578] sm:$0xff]
          %v709 = vld [vmem:[%s532 + $0x580] sm:$0xff]
          %v710 = vld [vmem:[%s532 + $0x588] sm:$0xff]
          %v711 = vld [vmem:[%s532 + $0x590] sm:$0xff]
          %v712 = vld [vmem:[%s532 + $0x598] sm:$0xff]
          %v713 = vld [vmem:[%s532 + $0x5a0] sm:$0xff]
          %v714 = vld [vmem:[%s532 + $0x5a8] sm:$0xff]
          %v715 = vld [vmem:[%s532 + $0x5b0] sm:$0xff]
          %v716 = vld [vmem:[%s532 + $0x5b8] sm:$0xff]
          %v717 = vld [vmem:[%s532 + $0x5c0] sm:$0xff]
          %v718 = vld [vmem:[%s532 + $0x5c8] sm:$0xff]
          %v719 = vld [vmem:[%s532 + $0x5d0] sm:$0xff]
          %v720 = vld [vmem:[%s532 + $0x5d8] sm:$0xff]
          %v721 = vld [vmem:[%s532 + $0x5e0] sm:$0xff]
          %v722 = vld [vmem:[%s532 + $0x5e8] sm:$0xff]
          %v723 = vld [vmem:[%s532 + $0x5f0] sm:$0xff]
          %v724 = vld [vmem:[%s532 + $0x5f8] sm:$0xff]
          %v725 = vld [vmem:[%s532 + $0x600] sm:$0xff]
          %v726 = vld [vmem:[%s532 + $0x608] sm:$0xff]
          %v727 = vld [vmem:[%s532 + $0x610] sm:$0xff]
          %v728 = vld [vmem:[%s532 + $0x618] sm:$0xff]
          %v729 = vld [vmem:[%s532 + $0x620] sm:$0xff]
          %v730 = vld [vmem:[%s532 + $0x628] sm:$0xff]
          %v731 = vld [vmem:[%s532 + $0x630] sm:$0xff]
          %v732 = vld [vmem:[%s532 + $0x638] sm:$0xff]
          %v733 = vld [vmem:[%s532 + $0x640] sm:$0xff]
          %v734 = vld [vmem:[%s532 + $0x648] sm:$0xff]
          %v735 = vld [vmem:[%s532 + $0x650] sm:$0xff]
          %v736 = vld [vmem:[%s532 + $0x658] sm:$0xff]
          %v737 = vld [vmem:[%s532 + $0x660] sm:$0xff]
          %v738 = vld [vmem:[%s532 + $0x668] sm:$0xff]
          %v739 = vld [vmem:[%s532 + $0x670] sm:$0xff]
          %v740 = vld [vmem:[%s532 + $0x678] sm:$0xff]
          %v741 = vld [vmem:[%s532 + $0x680] sm:$0xff]
          %v742 = vld [vmem:[%s532 + $0x688] sm:$0xff]
          %v743 = vld [vmem:[%s532 + $0x690] sm:$0xff]
          %v744 = vld [vmem:[%s532 + $0x698] sm:$0xff]
          %v745 = vld [vmem:[%s532 + $0x6a0] sm:$0xff]
          %v746 = vld [vmem:[%s532 + $0x6a8] sm:$0xff]
          %v747 = vld [vmem:[%s532 + $0x6b0] sm:$0xff]
          %v748 = vld [vmem:[%s532 + $0x6b8] sm:$0xff]
          %v749 = vld [vmem:[%s532 + $0x6c0] sm:$0xff]
          %v750 = vld [vmem:[%s532 + $0x6c8] sm:$0xff]
          %v751 = vld [vmem:[%s532 + $0x6d0] sm:$0xff]
          %v752 = vld [vmem:[%s532 + $0x6d8] sm:$0xff]
          %v753 = vld [vmem:[%s532 + $0x6e0] sm:$0xff]
          %v754 = vld [vmem:[%s532 + $0x6e8] sm:$0xff]
          %v755 = vld [vmem:[%s532 + $0x6f0] sm:$0xff]
          %v756 = vld [vmem:[%s532 + $0x6f8] sm:$0xff]
          %v757 = vld [vmem:[%s532 + $0x700] sm:$0xff]
          %v758 = vld [vmem:[%s532 + $0x708] sm:$0xff]
          %v759 = vld [vmem:[%s532 + $0x710] sm:$0xff]
          %v760 = vld [vmem:[%s532 + $0x718] sm:$0xff]
          %v761 = vld [vmem:[%s532 + $0x720] sm:$0xff]
          %v762 = vld [vmem:[%s532 + $0x728] sm:$0xff]
          %v763 = vld [vmem:[%s532 + $0x730] sm:$0xff]
          %v764 = vld [vmem:[%s532 + $0x738] sm:$0xff]
          %v765 = vld [vmem:[%s532 + $0x740] sm:$0xff]
          %v766 = vld [vmem:[%s532 + $0x748] sm:$0xff]
          %v767 = vld [vmem:[%s532 + $0x750] sm:$0xff]
          %v768 = vld [vmem:[%s532 + $0x758] sm:$0xff]
          %v769 = vld [vmem:[%s532 + $0x760] sm:$0xff]
          %v770 = vld [vmem:[%s532 + $0x768] sm:$0xff]
          %v771 = vld [vmem:[%s532 + $0x770] sm:$0xff]
          %v772 = vld [vmem:[%s532 + $0x778] sm:$0xff]
          %v773 = vld [vmem:[%s532 + $0x780] sm:$0xff]
          %v774 = vld [vmem:[%s532 + $0x788] sm:$0xff]
          %v775 = vld [vmem:[%s532 + $0x790] sm:$0xff]
          %v776 = vld [vmem:[%s532 + $0x798] sm:$0xff]
          %v777 = vld [vmem:[%s532 + $0x7a0] sm:$0xff]
          %v778 = vld [vmem:[%s532 + $0x7a8] sm:$0xff]
          %v779 = vld [vmem:[%s532 + $0x7b0] sm:$0xff]
          %v780 = vld [vmem:[%s532 + $0x7b8] sm:$0xff]
          %v781 = vld [vmem:[%s532 + $0x7c0] sm:$0xff]
          %v782 = vld [vmem:[%s532 + $0x7c8] sm:$0xff]
          %v783 = vld [vmem:[%s532 + $0x7d0] sm:$0xff]
          %v784 = vld [vmem:[%s532 + $0x7d8] sm:$0xff]
          %v785 = vld [vmem:[%s532 + $0x7e0] sm:$0xff]
          %v786 = vld [vmem:[%s532 + $0x7e8] sm:$0xff]
          %v787 = vld [vmem:[%s532 + $0x7f0] sm:$0xff]
          %v788 = vld [vmem:[%s532 + $0x7f8] sm:$0xff]
          %v789 = vld [vmem:[%s532 + $0x800] sm:$0xff]
          %v790 = vld [vmem:[%s532 + $0x808] sm:$0xff]
          %v791 = vld [vmem:[%s532 + $0x810] sm:$0xff]
          %v792 = vld [vmem:[%s532 + $0x818] sm:$0xff]
          %v793 = vld [vmem:[%s532 + $0x820] sm:$0xff]
          %v794 = vld [vmem:[%s532 + $0x828] sm:$0xff]
          %v795 = vld [vmem:[%s532 + $0x830] sm:$0xff]
          %v796 = vld [vmem:[%s532 + $0x838] sm:$0xff]
          %v797 = vld [vmem:[%s532 + $0x840] sm:$0xff]
          %v798 = vld [vmem:[%s532 + $0x848] sm:$0xff]
          %v799 = vld [vmem:[%s532 + $0x850] sm:$0xff]
          %v800 = vld [vmem:[%s532 + $0x858] sm:$0xff]
          %v801 = vld [vmem:[%s532 + $0x860] sm:$0xff]
          %v802 = vld [vmem:[%s532 + $0x868] sm:$0xff]
          %v803 = vld [vmem:[%s532 + $0x870] sm:$0xff]
          %v804 = vld [vmem:[%s532 + $0x878] sm:$0xff]
          %v805 = vld [vmem:[%s532 + $0x880] sm:$0xff]
          %v806 = vld [vmem:[%s532 + $0x888] sm:$0xff]
          %v807 = vld [vmem:[%s532 + $0x890] sm:$0xff]
          %v808 = vld [vmem:[%s532 + $0x898] sm:$0xff]
          %v809 = vld [vmem:[%s532 + $0x8a0] sm:$0xff]
          %v810 = vld [vmem:[%s532 + $0x8a8] sm:$0xff]
          %v811 = vld [vmem:[%s532 + $0x8b0] sm:$0xff]
          %v812 = vld [vmem:[%s532 + $0x8b8] sm:$0xff]
          %v813 = vld [vmem:[%s532 + $0x8c0] sm:$0xff]
          %v814 = vld [vmem:[%s532 + $0x8c8] sm:$0xff]
          %v815 = vld [vmem:[%s532 + $0x8d0] sm:$0xff]
          %v816 = vld [vmem:[%s532 + $0x8d8] sm:$0xff]
          %v817 = vld [vmem:[%s532 + $0x8e0] sm:$0xff]
          %v818 = vld [vmem:[%s532 + $0x8e8] sm:$0xff]
          %v819 = vld [vmem:[%s532 + $0x8f0] sm:$0xff]
          %v820 = vld [vmem:[%s532 + $0x8f8] sm:$0xff]
          %v821 = vunpack.c.0.s8 %v533
          %v822 = vunpack.c.0.s8 %v534
          %v823 = vunpack.c.1.s8 %v533
          %v824 = vunpack.c.1.s8 %v534
          %v825 = vunpack.c.2.s8 %v533
          %v826 = vunpack.c.2.s8 %v534
          %v827 = vunpack.c.3.s8 %v533
          %v828 = vunpack.c.3.s8 %v534
          %v829 = vunpack.c.0.s8 %v535
          %v830 = vunpack.c.0.s8 %v536
          %v831 = vunpack.c.1.s8 %v535
          %v832 = vunpack.c.1.s8 %v536
          %v833 = vunpack.c.2.s8 %v535
          %v834 = vunpack.c.2.s8 %v536
          %v835 = vunpack.c.3.s8 %v535
          %v836 = vunpack.c.3.s8 %v536
          %v837 = vunpack.c.0.s8 %v537
          %v838 = vunpack.c.0.s8 %v538
          %v839 = vunpack.c.1.s8 %v537
          %v840 = vunpack.c.1.s8 %v538
          %v841 = vunpack.c.2.s8 %v537
          %v842 = vunpack.c.2.s8 %v538
          %v843 = vunpack.c.3.s8 %v537
          %v844 = vunpack.c.3.s8 %v538
          %v845 = vunpack.c.0.s8 %v539
          %v846 = vunpack.c.0.s8 %v540
          %v847 = vunpack.c.1.s8 %v539
          %v848 = vunpack.c.1.s8 %v540
          %v849 = vunpack.c.2.s8 %v539
          %v850 = vunpack.c.2.s8 %v540
          %v851 = vunpack.c.3.s8 %v539
          %v852 = vunpack.c.3.s8 %v540
          %v853 = vunpack.c.0.s8 %v541
          %v854 = vunpack.c.0.s8 %v542
          %v855 = vunpack.c.1.s8 %v541
          %v856 = vunpack.c.1.s8 %v542
          %v857 = vunpack.c.2.s8 %v541
          %v858 = vunpack.c.2.s8 %v542
          %v859 = vunpack.c.3.s8 %v541
          %v860 = vunpack.c.3.s8 %v542
          %v861 = vunpack.c.0.s8 %v543
          %v862 = vunpack.c.0.s8 %v544
          %v863 = vunpack.c.1.s8 %v543
          %v864 = vunpack.c.1.s8 %v544
          %v865 = vunpack.c.2.s8 %v543
          %v866 = vunpack.c.2.s8 %v544
          %v867 = vunpack.c.3.s8 %v543
          %v868 = vunpack.c.3.s8 %v544
          %v869 = vunpack.c.0.s8 %v545
          %v870 = vunpack.c.0.s8 %v546
          %v871 = vunpack.c.1.s8 %v545
          %v872 = vunpack.c.1.s8 %v546
          %v873 = vunpack.c.2.s8 %v545
          %v874 = vunpack.c.2.s8 %v546
          %v875 = vunpack.c.3.s8 %v545
          %v876 = vunpack.c.3.s8 %v546
          %v877 = vunpack.c.0.s8 %v547
          %v878 = vunpack.c.0.s8 %v548
          %v879 = vunpack.c.1.s8 %v547
          %v880 = vunpack.c.1.s8 %v548
          %v881 = vunpack.c.2.s8 %v547
          %v882 = vunpack.c.2.s8 %v548
          %v883 = vunpack.c.3.s8 %v547
          %v884 = vunpack.c.3.s8 %v548
          %v885 = vunpack.c.0.s8 %v549
          %v886 = vunpack.c.0.s8 %v550
          %v887 = vunpack.c.1.s8 %v549
          %v888 = vunpack.c.1.s8 %v550
          %v889 = vunpack.c.2.s8 %v549
          %v890 = vunpack.c.2.s8 %v550
          %v891 = vunpack.c.3.s8 %v549
          %v892 = vunpack.c.3.s8 %v550
          %v893 = vunpack.c.0.s8 %v551
          %v894 = vunpack.c.0.s8 %v552
          %v895 = vunpack.c.1.s8 %v551
          %v896 = vunpack.c.1.s8 %v552
          %v897 = vunpack.c.2.s8 %v551
          %v898 = vunpack.c.2.s8 %v552
          %v899 = vunpack.c.3.s8 %v551
          %v900 = vunpack.c.3.s8 %v552
          %v901 = vunpack.c.0.s8 %v553
          %v902 = vunpack.c.0.s8 %v554
          %v903 = vunpack.c.1.s8 %v553
          %v904 = vunpack.c.1.s8 %v554
          %v905 = vunpack.c.2.s8 %v553
          %v906 = vunpack.c.2.s8 %v554
          %v907 = vunpack.c.3.s8 %v553
          %v908 = vunpack.c.3.s8 %v554
          %v909 = vunpack.c.0.s8 %v555
          %v910 = vunpack.c.0.s8 %v556
          %v911 = vunpack.c.1.s8 %v555
          %v912 = vunpack.c.1.s8 %v556
          %v913 = vunpack.c.2.s8 %v555
          %v914 = vunpack.c.2.s8 %v556
          %v915 = vunpack.c.3.s8 %v555
          %v916 = vunpack.c.3.s8 %v556
          %v917 = vunpack.c.0.s8 %v557
          %v918 = vunpack.c.0.s8 %v558
          %v919 = vunpack.c.1.s8 %v557
          %v920 = vunpack.c.1.s8 %v558
          %v921 = vunpack.c.2.s8 %v557
          %v922 = vunpack.c.2.s8 %v558
          %v923 = vunpack.c.3.s8 %v557
          %v924 = vunpack.c.3.s8 %v558
          %v925 = vunpack.c.0.s8 %v559
          %v926 = vunpack.c.0.s8 %v560
          %v927 = vunpack.c.1.s8 %v559
          %v928 = vunpack.c.1.s8 %v560
          %v929 = vunpack.c.2.s8 %v559
          %v930 = vunpack.c.2.s8 %v560
          %v931 = vunpack.c.3.s8 %v559
          %v932 = vunpack.c.3.s8 %v560
          %v933 = vunpack.c.0.s8 %v561
          %v934 = vunpack.c.0.s8 %v562
          %v935 = vunpack.c.1.s8 %v561
          %v936 = vunpack.c.1.s8 %v562
          %v937 = vunpack.c.2.s8 %v561
          %v938 = vunpack.c.2.s8 %v562
          %v939 = vunpack.c.3.s8 %v561
          %v940 = vunpack.c.3.s8 %v562
          %v941 = vunpack.c.0.s8 %v563
          %v942 = vunpack.c.0.s8 %v564
          %v943 = vunpack.c.1.s8 %v563
          %v944 = vunpack.c.1.s8 %v564
          %v945 = vunpack.c.2.s8 %v563
          %v946 = vunpack.c.2.s8 %v564
          %v947 = vunpack.c.3.s8 %v563
          %v948 = vunpack.c.3.s8 %v564
          %v949 = vunpack.c.0.s8 %v565
          %v950 = vunpack.c.0.s8 %v566
          %v951 = vunpack.c.1.s8 %v565
          %v952 = vunpack.c.1.s8 %v566
          %v953 = vunpack.c.2.s8 %v565
          %v954 = vunpack.c.2.s8 %v566
          %v955 = vunpack.c.3.s8 %v565
          %v956 = vunpack.c.3.s8 %v566
          %v957 = vunpack.c.0.s8 %v567
          %v958 = vunpack.c.0.s8 %v568
          %v959 = vunpack.c.1.s8 %v567
          %v960 = vunpack.c.1.s8 %v568
          %v961 = vunpack.c.2.s8 %v567
          %v962 = vunpack.c.2.s8 %v568
          %v963 = vunpack.c.3.s8 %v567
          %v964 = vunpack.c.3.s8 %v568
          %v965 = vunpack.c.0.s8 %v569
          %v966 = vunpack.c.0.s8 %v570
          %v967 = vunpack.c.1.s8 %v569
          %v968 = vunpack.c.1.s8 %v570
          %v969 = vunpack.c.2.s8 %v569
          %v970 = vunpack.c.2.s8 %v570
          %v971 = vunpack.c.3.s8 %v569
          %v972 = vunpack.c.3.s8 %v570
          %v973 = vunpack.c.0.s8 %v571
          %v974 = vunpack.c.0.s8 %v572
          %v975 = vunpack.c.1.s8 %v571
          %v976 = vunpack.c.1.s8 %v572
          %v977 = vunpack.c.2.s8 %v571
          %v978 = vunpack.c.2.s8 %v572
          %v979 = vunpack.c.3.s8 %v571
          %v980 = vunpack.c.3.s8 %v572
          %v981 = vunpack.c.0.s8 %v573
          %v982 = vunpack.c.0.s8 %v574
          %v983 = vunpack.c.1.s8 %v573
          %v984 = vunpack.c.1.s8 %v574
          %v985 = vunpack.c.2.s8 %v573
          %v986 = vunpack.c.2.s8 %v574
          %v987 = vunpack.c.3.s8 %v573
          %v988 = vunpack.c.3.s8 %v574
          %v989 = vunpack.c.0.s8 %v575
          %v990 = vunpack.c.0.s8 %v576
          %v991 = vunpack.c.1.s8 %v575
          %v992 = vunpack.c.1.s8 %v576
          %v993 = vunpack.c.2.s8 %v575
          %v994 = vunpack.c.2.s8 %v576
          %v995 = vunpack.c.3.s8 %v575
          %v996 = vunpack.c.3.s8 %v576
          %v997 = vunpack.c.0.s8 %v577
          %v998 = vunpack.c.0.s8 %v578
          %v999 = vunpack.c.1.s8 %v577
          %v1000 = vunpack.c.1.s8 %v578
          %v1001 = vunpack.c.2.s8 %v577
          %v1002 = vunpack.c.2.s8 %v578
          %v1003 = vunpack.c.3.s8 %v577
          %v1004 = vunpack.c.3.s8 %v578
          %v1005 = vunpack.c.0.s8 %v579
          %v1006 = vunpack.c.0.s8 %v580
          %v1007 = vunpack.c.1.s8 %v579
          %v1008 = vunpack.c.1.s8 %v580
          %v1009 = vunpack.c.2.s8 %v579
          %v1010 = vunpack.c.2.s8 %v580
          %v1011 = vunpack.c.3.s8 %v579
          %v1012 = vunpack.c.3.s8 %v580
          %v1013 = vunpack.c.0.s8 %v581
          %v1014 = vunpack.c.0.s8 %v582
          %v1015 = vunpack.c.1.s8 %v581
          %v1016 = vunpack.c.1.s8 %v582
          %v1017 = vunpack.c.2.s8 %v581
          %v1018 = vunpack.c.2.s8 %v582
          %v1019 = vunpack.c.3.s8 %v581
          %v1020 = vunpack.c.3.s8 %v582
          %v1021 = vunpack.c.0.s8 %v583
          %v1022 = vunpack.c.0.s8 %v584
          %v1023 = vunpack.c.1.s8 %v583
          %v1024 = vunpack.c.1.s8 %v584
          %v1025 = vunpack.c.2.s8 %v583
          %v1026 = vunpack.c.2.s8 %v584
          %v1027 = vunpack.c.3.s8 %v583
          %v1028 = vunpack.c.3.s8 %v584
          %v1029 = vunpack.c.0.s8 %v585
          %v1030 = vunpack.c.0.s8 %v586
          %v1031 = vunpack.c.1.s8 %v585
          %v1032 = vunpack.c.1.s8 %v586
          %v1033 = vunpack.c.2.s8 %v585
          %v1034 = vunpack.c.2.s8 %v586
          %v1035 = vunpack.c.3.s8 %v585
          %v1036 = vunpack.c.3.s8 %v586
          %v1037 = vunpack.c.0.s8 %v587
          %v1038 = vunpack.c.0.s8 %v588
          %v1039 = vunpack.c.1.s8 %v587
          %v1040 = vunpack.c.1.s8 %v588
          %v1041 = vunpack.c.2.s8 %v587
          %v1042 = vunpack.c.2.s8 %v588
          %v1043 = vunpack.c.3.s8 %v587
          %v1044 = vunpack.c.3.s8 %v588
          %v1045 = vunpack.c.0.s8 %v589
          %v1046 = vunpack.c.0.s8 %v590
          %v1047 = vunpack.c.1.s8 %v589
          %v1048 = vunpack.c.1.s8 %v590
          %v1049 = vunpack.c.2.s8 %v589
          %v1050 = vunpack.c.2.s8 %v590
          %v1051 = vunpack.c.3.s8 %v589
          %v1052 = vunpack.c.3.s8 %v590
          %v1053 = vunpack.c.0.s8 %v591
          %v1054 = vunpack.c.0.s8 %v592
          %v1055 = vunpack.c.1.s8 %v591
          %v1056 = vunpack.c.1.s8 %v592
          %v1057 = vunpack.c.2.s8 %v591
          %v1058 = vunpack.c.2.s8 %v592
          %v1059 = vunpack.c.3.s8 %v591
          %v1060 = vunpack.c.3.s8 %v592
          %v1061 = vunpack.c.0.s8 %v593
          %v1062 = vunpack.c.0.s8 %v594
          %v1063 = vunpack.c.1.s8 %v593
          %v1064 = vunpack.c.1.s8 %v594
          %v1065 = vunpack.c.2.s8 %v593
          %v1066 = vunpack.c.2.s8 %v594
          %v1067 = vunpack.c.3.s8 %v593
          %v1068 = vunpack.c.3.s8 %v594
          %v1069 = vunpack.c.0.s8 %v595
          %v1070 = vunpack.c.0.s8 %v596
          %v1071 = vunpack.c.1.s8 %v595
          %v1072 = vunpack.c.1.s8 %v596
          %v1073 = vunpack.c.2.s8 %v595
          %v1074 = vunpack.c.2.s8 %v596
          %v1075 = vunpack.c.3.s8 %v595
          %v1076 = vunpack.c.3.s8 %v596
          %v1077 = vunpack.c.0.s8 %v597
          %v1078 = vunpack.c.0.s8 %v598
          %v1079 = vunpack.c.1.s8 %v597
          %v1080 = vunpack.c.1.s8 %v598
          %v1081 = vunpack.c.2.s8 %v597
          %v1082 = vunpack.c.2.s8 %v598
          %v1083 = vunpack.c.3.s8 %v597
          %v1084 = vunpack.c.3.s8 %v598
          %v1085 = vunpack.c.0.s8 %v599
          %v1086 = vunpack.c.0.s8 %v600
          %v1087 = vunpack.c.1.s8 %v599
          %v1088 = vunpack.c.1.s8 %v600
          %v1089 = vunpack.c.2.s8 %v599
          %v1090 = vunpack.c.2.s8 %v600
          %v1091 = vunpack.c.3.s8 %v599
          %v1092 = vunpack.c.3.s8 %v600
          %v1093 = vunpack.c.0.s8 %v601
          %v1094 = vunpack.c.0.s8 %v602
          %v1095 = vunpack.c.1.s8 %v601
          %v1096 = vunpack.c.1.s8 %v602
          %v1097 = vunpack.c.2.s8 %v601
          %v1098 = vunpack.c.2.s8 %v602
          %v1099 = vunpack.c.3.s8 %v601
          %v1100 = vunpack.c.3.s8 %v602
          %v1101 = vunpack.c.0.s8 %v603
          %v1102 = vunpack.c.0.s8 %v604
          %v1103 = vunpack.c.1.s8 %v603
          %v1104 = vunpack.c.1.s8 %v604
          %v1105 = vunpack.c.2.s8 %v603
          %v1106 = vunpack.c.2.s8 %v604
          %v1107 = vunpack.c.3.s8 %v603
          %v1108 = vunpack.c.3.s8 %v604
          %v1109 = vunpack.c.0.s8 %v605
          %v1110 = vunpack.c.0.s8 %v606
          %v1111 = vunpack.c.1.s8 %v605
          %v1112 = vunpack.c.1.s8 %v606
          %v1113 = vunpack.c.2.s8 %v605
          %v1114 = vunpack.c.2.s8 %v606
          %v1115 = vunpack.c.3.s8 %v605
          %v1116 = vunpack.c.3.s8 %v606
          %v1117 = vunpack.c.0.s8 %v607
          %v1118 = vunpack.c.0.s8 %v608
          %v1119 = vunpack.c.1.s8 %v607
          %v1120 = vunpack.c.1.s8 %v608
          %v1121 = vunpack.c.2.s8 %v607
          %v1122 = vunpack.c.2.s8 %v608
          %v1123 = vunpack.c.3.s8 %v607
          %v1124 = vunpack.c.3.s8 %v608
          %v1125 = vunpack.c.0.s8 %v609
          %v1126 = vunpack.c.0.s8 %v610
          %v1127 = vunpack.c.1.s8 %v609
          %v1128 = vunpack.c.1.s8 %v610
          %v1129 = vunpack.c.2.s8 %v609
          %v1130 = vunpack.c.2.s8 %v610
          %v1131 = vunpack.c.3.s8 %v609
          %v1132 = vunpack.c.3.s8 %v610
          %v1133 = vunpack.c.0.s8 %v611
          %v1134 = vunpack.c.0.s8 %v612
          %v1135 = vunpack.c.1.s8 %v611
          %v1136 = vunpack.c.1.s8 %v612
          %v1137 = vunpack.c.2.s8 %v611
          %v1138 = vunpack.c.2.s8 %v612
          %v1139 = vunpack.c.3.s8 %v611
          %v1140 = vunpack.c.3.s8 %v612
          %v1141 = vunpack.c.0.s8 %v613
          %v1142 = vunpack.c.0.s8 %v614
          %v1143 = vunpack.c.1.s8 %v613
          %v1144 = vunpack.c.1.s8 %v614
          %v1145 = vunpack.c.2.s8 %v613
          %v1146 = vunpack.c.2.s8 %v614
          %v1147 = vunpack.c.3.s8 %v613
          %v1148 = vunpack.c.3.s8 %v614
          %v1149 = vunpack.c.0.s8 %v615
          %v1150 = vunpack.c.0.s8 %v616
          %v1151 = vunpack.c.1.s8 %v615
          %v1152 = vunpack.c.1.s8 %v616
          %v1153 = vunpack.c.2.s8 %v615
          %v1154 = vunpack.c.2.s8 %v616
          %v1155 = vunpack.c.3.s8 %v615
          %v1156 = vunpack.c.3.s8 %v616
          %v1157 = vunpack.c.0.s8 %v617
          %v1158 = vunpack.c.0.s8 %v618
          %v1159 = vunpack.c.1.s8 %v617
          %v1160 = vunpack.c.1.s8 %v618
          %v1161 = vunpack.c.2.s8 %v617
          %v1162 = vunpack.c.2.s8 %v618
          %v1163 = vunpack.c.3.s8 %v617
          %v1164 = vunpack.c.3.s8 %v618
          %v1165 = vunpack.c.0.s8 %v619
          %v1166 = vunpack.c.0.s8 %v620
          %v1167 = vunpack.c.1.s8 %v619
          %v1168 = vunpack.c.1.s8 %v620
          %v1169 = vunpack.c.2.s8 %v619
          %v1170 = vunpack.c.2.s8 %v620
          %v1171 = vunpack.c.3.s8 %v619
          %v1172 = vunpack.c.3.s8 %v620
          %v1173 = vunpack.c.0.s8 %v621
          %v1174 = vunpack.c.0.s8 %v622
          %v1175 = vunpack.c.1.s8 %v621
          %v1176 = vunpack.c.1.s8 %v622
          %v1177 = vunpack.c.2.s8 %v621
          %v1178 = vunpack.c.2.s8 %v622
          %v1179 = vunpack.c.3.s8 %v621
          %v1180 = vunpack.c.3.s8 %v622
          %v1181 = vunpack.c.0.s8 %v623
          %v1182 = vunpack.c.0.s8 %v624
          %v1183 = vunpack.c.1.s8 %v623
          %v1184 = vunpack.c.1.s8 %v624
          %v1185 = vunpack.c.2.s8 %v623
          %v1186 = vunpack.c.2.s8 %v624
          %v1187 = vunpack.c.3.s8 %v623
          %v1188 = vunpack.c.3.s8 %v624
          %v1189 = vunpack.c.0.s8 %v625
          %v1190 = vunpack.c.0.s8 %v626
          %v1191 = vunpack.c.1.s8 %v625
          %v1192 = vunpack.c.1.s8 %v626
          %v1193 = vunpack.c.2.s8 %v625
          %v1194 = vunpack.c.2.s8 %v626
          %v1195 = vunpack.c.3.s8 %v625
          %v1196 = vunpack.c.3.s8 %v626
          %v1197 = vunpack.c.0.s8 %v627
          %v1198 = vunpack.c.0.s8 %v628
          %v1199 = vunpack.c.1.s8 %v627
          %v1200 = vunpack.c.1.s8 %v628
          %v1201 = vunpack.c.2.s8 %v627
          %v1202 = vunpack.c.2.s8 %v628
          %v1203 = vunpack.c.3.s8 %v627
          %v1204 = vunpack.c.3.s8 %v628
          %v1205 = vunpack.c.0.s8 %v629
          %v1206 = vunpack.c.0.s8 %v630
          %v1207 = vunpack.c.1.s8 %v629
          %v1208 = vunpack.c.1.s8 %v630
          %v1209 = vunpack.c.2.s8 %v629
          %v1210 = vunpack.c.2.s8 %v630
          %v1211 = vunpack.c.3.s8 %v629
          %v1212 = vunpack.c.3.s8 %v630
          %v1213 = vunpack.c.0.s8 %v631
          %v1214 = vunpack.c.0.s8 %v632
          %v1215 = vunpack.c.1.s8 %v631
          %v1216 = vunpack.c.1.s8 %v632
          %v1217 = vunpack.c.2.s8 %v631
          %v1218 = vunpack.c.2.s8 %v632
          %v1219 = vunpack.c.3.s8 %v631
          %v1220 = vunpack.c.3.s8 %v632
          %v1221 = vunpack.c.0.s8 %v633
          %v1222 = vunpack.c.0.s8 %v634
          %v1223 = vunpack.c.1.s8 %v633
          %v1224 = vunpack.c.1.s8 %v634
          %v1225 = vunpack.c.2.s8 %v633
          %v1226 = vunpack.c.2.s8 %v634
          %v1227 = vunpack.c.3.s8 %v633
          %v1228 = vunpack.c.3.s8 %v634
          %v1229 = vunpack.c.0.s8 %v635
          %v1230 = vunpack.c.0.s8 %v636
          %v1231 = vunpack.c.1.s8 %v635
          %v1232 = vunpack.c.1.s8 %v636
          %v1233 = vunpack.c.2.s8 %v635
          %v1234 = vunpack.c.2.s8 %v636
          %v1235 = vunpack.c.3.s8 %v635
          %v1236 = vunpack.c.3.s8 %v636
          %v1237 = vunpack.c.0.s8 %v637
          %v1238 = vunpack.c.0.s8 %v638
          %v1239 = vunpack.c.1.s8 %v637
          %v1240 = vunpack.c.1.s8 %v638
          %v1241 = vunpack.c.2.s8 %v637
          %v1242 = vunpack.c.2.s8 %v638
          %v1243 = vunpack.c.3.s8 %v637
          %v1244 = vunpack.c.3.s8 %v638
          %v1245 = vunpack.c.0.s8 %v639
          %v1246 = vunpack.c.0.s8 %v640
          %v1247 = vunpack.c.1.s8 %v639
          %v1248 = vunpack.c.1.s8 %v640
          %v1249 = vunpack.c.2.s8 %v639
          %v1250 = vunpack.c.2.s8 %v640
          %v1251 = vunpack.c.3.s8 %v639
          %v1252 = vunpack.c.3.s8 %v640
          %v1253 = vunpack.c.0.s8 %v641
          %v1254 = vunpack.c.0.s8 %v642
          %v1255 = vunpack.c.1.s8 %v641
          %v1256 = vunpack.c.1.s8 %v642
          %v1257 = vunpack.c.2.s8 %v641
          %v1258 = vunpack.c.2.s8 %v642
          %v1259 = vunpack.c.3.s8 %v641
          %v1260 = vunpack.c.3.s8 %v642
          %v1261 = vunpack.c.0.s8 %v643
          %v1262 = vunpack.c.0.s8 %v644
          %v1263 = vunpack.c.1.s8 %v643
          %v1264 = vunpack.c.1.s8 %v644
          %v1265 = vunpack.c.2.s8 %v643
          %v1266 = vunpack.c.2.s8 %v644
          %v1267 = vunpack.c.3.s8 %v643
          %v1268 = vunpack.c.3.s8 %v644
          %v1269 = vunpack.c.0.s8 %v645
          %v1270 = vunpack.c.0.s8 %v646
          %v1271 = vunpack.c.1.s8 %v645
          %v1272 = vunpack.c.1.s8 %v646
          %v1273 = vunpack.c.2.s8 %v645
          %v1274 = vunpack.c.2.s8 %v646
          %v1275 = vunpack.c.3.s8 %v645
          %v1276 = vunpack.c.3.s8 %v646
          %v1277 = vunpack.c.0.s8 %v647
          %v1278 = vunpack.c.0.s8 %v648
          %v1279 = vunpack.c.1.s8 %v647
          %v1280 = vunpack.c.1.s8 %v648
          %v1281 = vunpack.c.2.s8 %v647
          %v1282 = vunpack.c.2.s8 %v648
          %v1283 = vunpack.c.3.s8 %v647
          %v1284 = vunpack.c.3.s8 %v648
          %v1285 = vunpack.c.0.s8 %v649
          %v1286 = vunpack.c.0.s8 %v650
          %v1287 = vunpack.c.1.s8 %v649
          %v1288 = vunpack.c.1.s8 %v650
          %v1289 = vunpack.c.2.s8 %v649
          %v1290 = vunpack.c.2.s8 %v650
          %v1291 = vunpack.c.3.s8 %v649
          %v1292 = vunpack.c.3.s8 %v650
          %v1293 = vunpack.c.0.s8 %v651
          %v1294 = vunpack.c.0.s8 %v652
          %v1295 = vunpack.c.1.s8 %v651
          %v1296 = vunpack.c.1.s8 %v652
          %v1297 = vunpack.c.2.s8 %v651
          %v1298 = vunpack.c.2.s8 %v652
          %v1299 = vunpack.c.3.s8 %v651
          %v1300 = vunpack.c.3.s8 %v652
          %v1301 = vunpack.c.0.s8 %v653
          %v1302 = vunpack.c.0.s8 %v654
          %v1303 = vunpack.c.1.s8 %v653
          %v1304 = vunpack.c.1.s8 %v654
          %v1305 = vunpack.c.2.s8 %v653
          %v1306 = vunpack.c.2.s8 %v654
          %v1307 = vunpack.c.3.s8 %v653
          %v1308 = vunpack.c.3.s8 %v654
          %v1309 = vunpack.c.0.s8 %v655
          %v1310 = vunpack.c.0.s8 %v656
          %v1311 = vunpack.c.1.s8 %v655
          %v1312 = vunpack.c.1.s8 %v656
          %v1313 = vunpack.c.2.s8 %v655
          %v1314 = vunpack.c.2.s8 %v656
          %v1315 = vunpack.c.3.s8 %v655
          %v1316 = vunpack.c.3.s8 %v656
          %v1317 = vunpack.c.0.s8 %v657
          %v1318 = vunpack.c.0.s8 %v658
          %v1319 = vunpack.c.1.s8 %v657
          %v1320 = vunpack.c.1.s8 %v658
          %v1321 = vunpack.c.2.s8 %v657
          %v1322 = vunpack.c.2.s8 %v658
          %v1323 = vunpack.c.3.s8 %v657
          %v1324 = vunpack.c.3.s8 %v658
          %v1325 = vunpack.c.0.s8 %v659
          %v1326 = vunpack.c.0.s8 %v660
          %v1327 = vunpack.c.1.s8 %v659
          %v1328 = vunpack.c.1.s8 %v660
          %v1329 = vunpack.c.2.s8 %v659
          %v1330 = vunpack.c.2.s8 %v660
          %v1331 = vunpack.c.3.s8 %v659
          %v1332 = vunpack.c.3.s8 %v660
          %v1333 = vunpack.c.0.s8 %v661
          %v1334 = vunpack.c.0.s8 %v662
          %v1335 = vunpack.c.1.s8 %v661
          %v1336 = vunpack.c.1.s8 %v662
          %v1337 = vunpack.c.2.s8 %v661
          %v1338 = vunpack.c.2.s8 %v662
          %v1339 = vunpack.c.3.s8 %v661
          %v1340 = vunpack.c.3.s8 %v662
          %v1341 = vunpack.c.0.s8 %v663
          %v1342 = vunpack.c.0.s8 %v664
          %v1343 = vunpack.c.1.s8 %v663
          %v1344 = vunpack.c.1.s8 %v664
          %v1345 = vunpack.c.2.s8 %v663
          %v1346 = vunpack.c.2.s8 %v664
          %v1347 = vunpack.c.3.s8 %v663
          %v1348 = vunpack.c.3.s8 %v664
          %v1349 = vunpack.c.0.s8 %v665
          %v1350 = vunpack.c.0.s8 %v666
          %v1351 = vunpack.c.1.s8 %v665
          %v1352 = vunpack.c.1.s8 %v666
          %v1353 = vunpack.c.2.s8 %v665
          %v1354 = vunpack.c.2.s8 %v666
          %v1355 = vunpack.c.3.s8 %v665
          %v1356 = vunpack.c.3.s8 %v666
          %v1357 = vunpack.c.0.s8 %v667
          %v1358 = vunpack.c.0.s8 %v668
          %v1359 = vunpack.c.1.s8 %v667
          %v1360 = vunpack.c.1.s8 %v668
          %v1361 = vunpack.c.2.s8 %v667
          %v1362 = vunpack.c.2.s8 %v668
          %v1363 = vunpack.c.3.s8 %v667
          %v1364 = vunpack.c.3.s8 %v668
          %v1365 = vunpack.c.0.s8 %v669
          %v1366 = vunpack.c.0.s8 %v670
          %v1367 = vunpack.c.1.s8 %v669
          %v1368 = vunpack.c.1.s8 %v670
          %v1369 = vunpack.c.2.s8 %v669
          %v1370 = vunpack.c.2.s8 %v670
          %v1371 = vunpack.c.3.s8 %v669
          %v1372 = vunpack.c.3.s8 %v670
          %v1373 = vunpack.c.0.s8 %v671
          %v1374 = vunpack.c.0.s8 %v672
          %v1375 = vunpack.c.1.s8 %v671
          %v1376 = vunpack.c.1.s8 %v672
          %v1377 = vunpack.c.2.s8 %v671
          %v1378 = vunpack.c.2.s8 %v672
          %v1379 = vunpack.c.3.s8 %v671
          %v1380 = vunpack.c.3.s8 %v672
          %v1381 = vunpack.c.0.s8 %v673
          %v1382 = vunpack.c.0.s8 %v674
          %v1383 = vunpack.c.1.s8 %v673
          %v1384 = vunpack.c.1.s8 %v674
          %v1385 = vunpack.c.2.s8 %v673
          %v1386 = vunpack.c.2.s8 %v674
          %v1387 = vunpack.c.3.s8 %v673
          %v1388 = vunpack.c.3.s8 %v674
          %v1389 = vunpack.c.0.s8 %v675
          %v1390 = vunpack.c.0.s8 %v676
          %v1391 = vunpack.c.1.s8 %v675
          %v1392 = vunpack.c.1.s8 %v676
          %v1393 = vunpack.c.2.s8 %v675
          %v1394 = vunpack.c.2.s8 %v676
          %v1395 = vunpack.c.3.s8 %v675
          %v1396 = vunpack.c.3.s8 %v676
          %v1397 = vunpack.c.0.s8 %v677
          %v1398 = vunpack.c.0.s8 %v678
          %v1399 = vunpack.c.1.s8 %v677
          %v1400 = vunpack.c.1.s8 %v678
          %v1401 = vunpack.c.2.s8 %v677
          %v1402 = vunpack.c.2.s8 %v678
          %v1403 = vunpack.c.3.s8 %v677
          %v1404 = vunpack.c.3.s8 %v678
          %v1405 = vunpack.c.0.s8 %v679
          %v1406 = vunpack.c.0.s8 %v680
          %v1407 = vunpack.c.1.s8 %v679
          %v1408 = vunpack.c.1.s8 %v680
          %v1409 = vunpack.c.2.s8 %v679
          %v1410 = vunpack.c.2.s8 %v680
          %v1411 = vunpack.c.3.s8 %v679
          %v1412 = vunpack.c.3.s8 %v680
          %v1413 = vunpack.c.0.s8 %v681
          %v1414 = vunpack.c.0.s8 %v682
          %v1415 = vunpack.c.1.s8 %v681
          %v1416 = vunpack.c.1.s8 %v682
          %v1417 = vunpack.c.2.s8 %v681
          %v1418 = vunpack.c.2.s8 %v682
          %v1419 = vunpack.c.3.s8 %v681
          %v1420 = vunpack.c.3.s8 %v682
          %v1421 = vunpack.c.0.s8 %v683
          %v1422 = vunpack.c.0.s8 %v684
          %v1423 = vunpack.c.1.s8 %v683
          %v1424 = vunpack.c.1.s8 %v684
          %v1425 = vunpack.c.2.s8 %v683
          %v1426 = vunpack.c.2.s8 %v684
          %v1427 = vunpack.c.3.s8 %v683
          %v1428 = vunpack.c.3.s8 %v684
          %v1429 = vunpack.c.0.s8 %v685
          %v1430 = vunpack.c.0.s8 %v686
          %v1431 = vunpack.c.1.s8 %v685
          %v1432 = vunpack.c.1.s8 %v686
          %v1433 = vunpack.c.2.s8 %v685
          %v1434 = vunpack.c.2.s8 %v686
          %v1435 = vunpack.c.3.s8 %v685
          %v1436 = vunpack.c.3.s8 %v686
          %v1437 = vunpack.c.0.s8 %v687
          %v1438 = vunpack.c.0.s8 %v688
          %v1439 = vunpack.c.1.s8 %v687
          %v1440 = vunpack.c.1.s8 %v688
          %v1441 = vunpack.c.2.s8 %v687
          %v1442 = vunpack.c.2.s8 %v688
          %v1443 = vunpack.c.3.s8 %v687
          %v1444 = vunpack.c.3.s8 %v688
          %v1445 = vunpack.c.0.s8 %v689
          %v1446 = vunpack.c.0.s8 %v690
          %v1447 = vunpack.c.1.s8 %v689
          %v1448 = vunpack.c.1.s8 %v690
          %v1449 = vunpack.c.2.s8 %v689
          %v1450 = vunpack.c.2.s8 %v690
          %v1451 = vunpack.c.3.s8 %v689
          %v1452 = vunpack.c.3.s8 %v690
          %v1453 = vunpack.c.0.s8 %v691
          %v1454 = vunpack.c.0.s8 %v692
          %v1455 = vunpack.c.1.s8 %v691
          %v1456 = vunpack.c.1.s8 %v692
          %v1457 = vunpack.c.2.s8 %v691
          %v1458 = vunpack.c.2.s8 %v692
          %v1459 = vunpack.c.3.s8 %v691
          %v1460 = vunpack.c.3.s8 %v692
          %v1461 = vunpack.c.0.s8 %v693
          %v1462 = vunpack.c.0.s8 %v694
          %v1463 = vunpack.c.1.s8 %v693
          %v1464 = vunpack.c.1.s8 %v694
          %v1465 = vunpack.c.2.s8 %v693
          %v1466 = vunpack.c.2.s8 %v694
          %v1467 = vunpack.c.3.s8 %v693
          %v1468 = vunpack.c.3.s8 %v694
          %v1469 = vunpack.c.0.s8 %v695
          %v1470 = vunpack.c.0.s8 %v696
          %v1471 = vunpack.c.1.s8 %v695
          %v1472 = vunpack.c.1.s8 %v696
          %v1473 = vunpack.c.2.s8 %v695
          %v1474 = vunpack.c.2.s8 %v696
          %v1475 = vunpack.c.3.s8 %v695
          %v1476 = vunpack.c.3.s8 %v696
          %v1477 = vunpack.c.0.s8 %v697
          %v1478 = vunpack.c.0.s8 %v698
          %v1479 = vunpack.c.1.s8 %v697
          %v1480 = vunpack.c.1.s8 %v698
          %v1481 = vunpack.c.2.s8 %v697
          %v1482 = vunpack.c.2.s8 %v698
          %v1483 = vunpack.c.3.s8 %v697
          %v1484 = vunpack.c.3.s8 %v698
          %v1485 = vunpack.c.0.s8 %v699
          %v1486 = vunpack.c.0.s8 %v700
          %v1487 = vunpack.c.1.s8 %v699
          %v1488 = vunpack.c.1.s8 %v700
          %v1489 = vunpack.c.2.s8 %v699
          %v1490 = vunpack.c.2.s8 %v700
          %v1491 = vunpack.c.3.s8 %v699
          %v1492 = vunpack.c.3.s8 %v700
          %v1493 = vunpack.c.0.s8 %v701
          %v1494 = vunpack.c.0.s8 %v702
          %v1495 = vunpack.c.1.s8 %v701
          %v1496 = vunpack.c.1.s8 %v702
          %v1497 = vunpack.c.2.s8 %v701
          %v1498 = vunpack.c.2.s8 %v702
          %v1499 = vunpack.c.3.s8 %v701
          %v1500 = vunpack.c.3.s8 %v702
          %v1501 = vunpack.c.0.s8 %v703
          %v1502 = vunpack.c.0.s8 %v704
          %v1503 = vunpack.c.1.s8 %v703
          %v1504 = vunpack.c.1.s8 %v704
          %v1505 = vunpack.c.2.s8 %v703
          %v1506 = vunpack.c.2.s8 %v704
          %v1507 = vunpack.c.3.s8 %v703
          %v1508 = vunpack.c.3.s8 %v704
          %v1509 = vunpack.c.0.s8 %v705
          %v1510 = vunpack.c.0.s8 %v706
          %v1511 = vunpack.c.1.s8 %v705
          %v1512 = vunpack.c.1.s8 %v706
          %v1513 = vunpack.c.2.s8 %v705
          %v1514 = vunpack.c.2.s8 %v706
          %v1515 = vunpack.c.3.s8 %v705
          %v1516 = vunpack.c.3.s8 %v706
          %v1517 = vunpack.c.0.s8 %v707
          %v1518 = vunpack.c.0.s8 %v708
          %v1519 = vunpack.c.1.s8 %v707
          %v1520 = vunpack.c.1.s8 %v708
          %v1521 = vunpack.c.2.s8 %v707
          %v1522 = vunpack.c.2.s8 %v708
          %v1523 = vunpack.c.3.s8 %v707
          %v1524 = vunpack.c.3.s8 %v708
          %v1525 = vunpack.c.0.s8 %v709
          %v1526 = vunpack.c.0.s8 %v710
          %v1527 = vunpack.c.1.s8 %v709
          %v1528 = vunpack.c.1.s8 %v710
          %v1529 = vunpack.c.2.s8 %v709
          %v1530 = vunpack.c.2.s8 %v710
          %v1531 = vunpack.c.3.s8 %v709
          %v1532 = vunpack.c.3.s8 %v710
          %v1533 = vunpack.c.0.s8 %v711
          %v1534 = vunpack.c.0.s8 %v712
          %v1535 = vunpack.c.1.s8 %v711
          %v1536 = vunpack.c.1.s8 %v712
          %v1537 = vunpack.c.2.s8 %v711
          %v1538 = vunpack.c.2.s8 %v712
          %v1539 = vunpack.c.3.s8 %v711
          %v1540 = vunpack.c.3.s8 %v712
          %v1541 = vunpack.c.0.s8 %v713
          %v1542 = vunpack.c.0.s8 %v714
          %v1543 = vunpack.c.1.s8 %v713
          %v1544 = vunpack.c.1.s8 %v714
          %v1545 = vunpack.c.2.s8 %v713
          %v1546 = vunpack.c.2.s8 %v714
          %v1547 = vunpack.c.3.s8 %v713
          %v1548 = vunpack.c.3.s8 %v714
          %v1549 = vunpack.c.0.s8 %v715
          %v1550 = vunpack.c.0.s8 %v716
          %v1551 = vunpack.c.1.s8 %v715
          %v1552 = vunpack.c.1.s8 %v716
          %v1553 = vunpack.c.2.s8 %v715
          %v1554 = vunpack.c.2.s8 %v716
          %v1555 = vunpack.c.3.s8 %v715
          %v1556 = vunpack.c.3.s8 %v716
          %v1557 = vunpack.c.0.s8 %v717
          %v1558 = vunpack.c.0.s8 %v718
          %v1559 = vunpack.c.1.s8 %v717
          %v1560 = vunpack.c.1.s8 %v718
          %v1561 = vunpack.c.2.s8 %v717
          %v1562 = vunpack.c.2.s8 %v718
          %v1563 = vunpack.c.3.s8 %v717
          %v1564 = vunpack.c.3.s8 %v718
          %v1565 = vunpack.c.0.s8 %v719
          %v1566 = vunpack.c.0.s8 %v720
          %v1567 = vunpack.c.1.s8 %v719
          %v1568 = vunpack.c.1.s8 %v720
          %v1569 = vunpack.c.2.s8 %v719
          %v1570 = vunpack.c.2.s8 %v720
          %v1571 = vunpack.c.3.s8 %v719
          %v1572 = vunpack.c.3.s8 %v720
          %v1573 = vunpack.c.0.s8 %v721
          %v1574 = vunpack.c.0.s8 %v722
          %v1575 = vunpack.c.1.s8 %v721
          %v1576 = vunpack.c.1.s8 %v722
          %v1577 = vunpack.c.2.s8 %v721
          %v1578 = vunpack.c.2.s8 %v722
          %v1579 = vunpack.c.3.s8 %v721
          %v1580 = vunpack.c.3.s8 %v722
          %v1581 = vunpack.c.0.s8 %v723
          %v1582 = vunpack.c.0.s8 %v724
          %v1583 = vunpack.c.1.s8 %v723
          %v1584 = vunpack.c.1.s8 %v724
          %v1585 = vunpack.c.2.s8 %v723
          %v1586 = vunpack.c.2.s8 %v724
          %v1587 = vunpack.c.3.s8 %v723
          %v1588 = vunpack.c.3.s8 %v724
          %v1589 = vunpack.c.0.s8 %v725
          %v1590 = vunpack.c.0.s8 %v726
          %v1591 = vunpack.c.1.s8 %v725
          %v1592 = vunpack.c.1.s8 %v726
          %v1593 = vunpack.c.2.s8 %v725
          %v1594 = vunpack.c.2.s8 %v726
          %v1595 = vunpack.c.3.s8 %v725
          %v1596 = vunpack.c.3.s8 %v726
          %v1597 = vunpack.c.0.s8 %v727
          %v1598 = vunpack.c.0.s8 %v728
          %v1599 = vunpack.c.1.s8 %v727
          %v1600 = vunpack.c.1.s8 %v728
          %v1601 = vunpack.c.2.s8 %v727
          %v1602 = vunpack.c.2.s8 %v728
          %v1603 = vunpack.c.3.s8 %v727
          %v1604 = vunpack.c.3.s8 %v728
          %v1605 = vunpack.c.0.s8 %v729
          %v1606 = vunpack.c.0.s8 %v730
          %v1607 = vunpack.c.1.s8 %v729
          %v1608 = vunpack.c.1.s8 %v730
          %v1609 = vunpack.c.2.s8 %v729
          %v1610 = vunpack.c.2.s8 %v730
          %v1611 = vunpack.c.3.s8 %v729
          %v1612 = vunpack.c.3.s8 %v730
          %v1613 = vunpack.c.0.s8 %v731
          %v1614 = vunpack.c.0.s8 %v732
          %v1615 = vunpack.c.1.s8 %v731
          %v1616 = vunpack.c.1.s8 %v732
          %v1617 = vunpack.c.2.s8 %v731
          %v1618 = vunpack.c.2.s8 %v732
          %v1619 = vunpack.c.3.s8 %v731
          %v1620 = vunpack.c.3.s8 %v732
          %v1621 = vunpack.c.0.s8 %v733
          %v1622 = vunpack.c.0.s8 %v734
          %v1623 = vunpack.c.1.s8 %v733
          %v1624 = vunpack.c.1.s8 %v734
          %v1625 = vunpack.c.2.s8 %v733
          %v1626 = vunpack.c.2.s8 %v734
          %v1627 = vunpack.c.3.s8 %v733
          %v1628 = vunpack.c.3.s8 %v734
          %v1629 = vunpack.c.0.s8 %v735
          %v1630 = vunpack.c.0.s8 %v736
          %v1631 = vunpack.c.1.s8 %v735
          %v1632 = vunpack.c.1.s8 %v736
          %v1633 = vunpack.c.2.s8 %v735
          %v1634 = vunpack.c.2.s8 %v736
          %v1635 = vunpack.c.3.s8 %v735
          %v1636 = vunpack.c.3.s8 %v736
          %v1637 = vunpack.c.0.s8 %v737
          %v1638 = vunpack.c.0.s8 %v738
          %v1639 = vunpack.c.1.s8 %v737
          %v1640 = vunpack.c.1.s8 %v738
          %v1641 = vunpack.c.2.s8 %v737
          %v1642 = vunpack.c.2.s8 %v738
          %v1643 = vunpack.c.3.s8 %v737
          %v1644 = vunpack.c.3.s8 %v738
          %v1645 = vunpack.c.0.s8 %v739
          %v1646 = vunpack.c.0.s8 %v740
          %v1647 = vunpack.c.1.s8 %v739
          %v1648 = vunpack.c.1.s8 %v740
          %v1649 = vunpack.c.2.s8 %v739
          %v1650 = vunpack.c.2.s8 %v740
          %v1651 = vunpack.c.3.s8 %v739
          %v1652 = vunpack.c.3.s8 %v740
          %v1653 = vunpack.c.0.s8 %v741
          %v1654 = vunpack.c.0.s8 %v742
          %v1655 = vunpack.c.1.s8 %v741
          %v1656 = vunpack.c.1.s8 %v742
          %v1657 = vunpack.c.2.s8 %v741
          %v1658 = vunpack.c.2.s8 %v742
          %v1659 = vunpack.c.3.s8 %v741
          %v1660 = vunpack.c.3.s8 %v742
          %v1661 = vunpack.c.0.s8 %v743
          %v1662 = vunpack.c.0.s8 %v744
          %v1663 = vunpack.c.1.s8 %v743
          %v1664 = vunpack.c.1.s8 %v744
          %v1665 = vunpack.c.2.s8 %v743
          %v1666 = vunpack.c.2.s8 %v744
          %v1667 = vunpack.c.3.s8 %v743
          %v1668 = vunpack.c.3.s8 %v744
          %v1669 = vunpack.c.0.s8 %v745
          %v1670 = vunpack.c.0.s8 %v746
          %v1671 = vunpack.c.1.s8 %v745
          %v1672 = vunpack.c.1.s8 %v746
          %v1673 = vunpack.c.2.s8 %v745
          %v1674 = vunpack.c.2.s8 %v746
          %v1675 = vunpack.c.3.s8 %v745
          %v1676 = vunpack.c.3.s8 %v746
          %v1677 = vunpack.c.0.s8 %v747
          %v1678 = vunpack.c.0.s8 %v748
          %v1679 = vunpack.c.1.s8 %v747
          %v1680 = vunpack.c.1.s8 %v748
          %v1681 = vunpack.c.2.s8 %v747
          %v1682 = vunpack.c.2.s8 %v748
          %v1683 = vunpack.c.3.s8 %v747
          %v1684 = vunpack.c.3.s8 %v748
          %v1685 = vunpack.c.0.s8 %v749
          %v1686 = vunpack.c.0.s8 %v750
          %v1687 = vunpack.c.1.s8 %v749
          %v1688 = vunpack.c.1.s8 %v750
          %v1689 = vunpack.c.2.s8 %v749
          %v1690 = vunpack.c.2.s8 %v750
          %v1691 = vunpack.c.3.s8 %v749
          %v1692 = vunpack.c.3.s8 %v750
          %v1693 = vunpack.c.0.s8 %v751
          %v1694 = vunpack.c.0.s8 %v752
          %v1695 = vunpack.c.1.s8 %v751
          %v1696 = vunpack.c.1.s8 %v752
          %v1697 = vunpack.c.2.s8 %v751
          %v1698 = vunpack.c.2.s8 %v752
          %v1699 = vunpack.c.3.s8 %v751
          %v1700 = vunpack.c.3.s8 %v752
          %v1701 = vunpack.c.0.s8 %v753
          %v1702 = vunpack.c.0.s8 %v754
          %v1703 = vunpack.c.1.s8 %v753
          %v1704 = vunpack.c.1.s8 %v754
          %v1705 = vunpack.c.2.s8 %v753
          %v1706 = vunpack.c.2.s8 %v754
          %v1707 = vunpack.c.3.s8 %v753
          %v1708 = vunpack.c.3.s8 %v754
          %v1709 = vunpack.c.0.s8 %v755
          %v1710 = vunpack.c.0.s8 %v756
          %v1711 = vunpack.c.1.s8 %v755
          %v1712 = vunpack.c.1.s8 %v756
          %v1713 = vunpack.c.2.s8 %v755
          %v1714 = vunpack.c.2.s8 %v756
          %v1715 = vunpack.c.3.s8 %v755
          %v1716 = vunpack.c.3.s8 %v756
          %v1717 = vunpack.c.0.s8 %v757
          %v1718 = vunpack.c.0.s8 %v758
          %v1719 = vunpack.c.1.s8 %v757
          %v1720 = vunpack.c.1.s8 %v758
          %v1721 = vunpack.c.2.s8 %v757
          %v1722 = vunpack.c.2.s8 %v758
          %v1723 = vunpack.c.3.s8 %v757
          %v1724 = vunpack.c.3.s8 %v758
          %v1725 = vunpack.c.0.s8 %v759
          %v1726 = vunpack.c.0.s8 %v760
          %v1727 = vunpack.c.1.s8 %v759
          %v1728 = vunpack.c.1.s8 %v760
          %v1729 = vunpack.c.2.s8 %v759
          %v1730 = vunpack.c.2.s8 %v760
          %v1731 = vunpack.c.3.s8 %v759
          %v1732 = vunpack.c.3.s8 %v760
          %v1733 = vunpack.c.0.s8 %v761
          %v1734 = vunpack.c.0.s8 %v762
          %v1735 = vunpack.c.1.s8 %v761
          %v1736 = vunpack.c.1.s8 %v762
          %v1737 = vunpack.c.2.s8 %v761
          %v1738 = vunpack.c.2.s8 %v762
          %v1739 = vunpack.c.3.s8 %v761
          %v1740 = vunpack.c.3.s8 %v762
          %v1741 = vunpack.c.0.s8 %v763
          %v1742 = vunpack.c.0.s8 %v764
          %v1743 = vunpack.c.1.s8 %v763
          %v1744 = vunpack.c.1.s8 %v764
          %v1745 = vunpack.c.2.s8 %v763
          %v1746 = vunpack.c.2.s8 %v764
          %v1747 = vunpack.c.3.s8 %v763
          %v1748 = vunpack.c.3.s8 %v764
          %v1749 = vunpack.c.0.s8 %v765
          %v1750 = vunpack.c.0.s8 %v766
          %v1751 = vunpack.c.1.s8 %v765
          %v1752 = vunpack.c.1.s8 %v766
          %v1753 = vunpack.c.2.s8 %v765
          %v1754 = vunpack.c.2.s8 %v766
          %v1755 = vunpack.c.3.s8 %v765
          %v1756 = vunpack.c.3.s8 %v766
          %v1757 = vunpack.c.0.s8 %v767
          %v1758 = vunpack.c.0.s8 %v768
          %v1759 = vunpack.c.1.s8 %v767
          %v1760 = vunpack.c.1.s8 %v768
          %v1761 = vunpack.c.2.s8 %v767
          %v1762 = vunpack.c.2.s8 %v768
          %v1763 = vunpack.c.3.s8 %v767
          %v1764 = vunpack.c.3.s8 %v768
          %v1765 = vunpack.c.0.s8 %v769
          %v1766 = vunpack.c.0.s8 %v770
          %v1767 = vunpack.c.1.s8 %v769
          %v1768 = vunpack.c.1.s8 %v770
          %v1769 = vunpack.c.2.s8 %v769
          %v1770 = vunpack.c.2.s8 %v770
          %v1771 = vunpack.c.3.s8 %v769
          %v1772 = vunpack.c.3.s8 %v770
          %v1773 = vunpack.c.0.s8 %v771
          %v1774 = vunpack.c.0.s8 %v772
          %v1775 = vunpack.c.1.s8 %v771
          %v1776 = vunpack.c.1.s8 %v772
          %v1777 = vunpack.c.2.s8 %v771
          %v1778 = vunpack.c.2.s8 %v772
          %v1779 = vunpack.c.3.s8 %v771
          %v1780 = vunpack.c.3.s8 %v772
          %v1781 = vunpack.c.0.s8 %v773
          %v1782 = vunpack.c.0.s8 %v774
          %v1783 = vunpack.c.1.s8 %v773
          %v1784 = vunpack.c.1.s8 %v774
          %v1785 = vunpack.c.2.s8 %v773
          %v1786 = vunpack.c.2.s8 %v774
          %v1787 = vunpack.c.3.s8 %v773
          %v1788 = vunpack.c.3.s8 %v774
          %v1789 = vunpack.c.0.s8 %v775
          %v1790 = vunpack.c.0.s8 %v776
          %v1791 = vunpack.c.1.s8 %v775
          %v1792 = vunpack.c.1.s8 %v776
          %v1793 = vunpack.c.2.s8 %v775
          %v1794 = vunpack.c.2.s8 %v776
          %v1795 = vunpack.c.3.s8 %v775
          %v1796 = vunpack.c.3.s8 %v776
          %v1797 = vunpack.c.0.s8 %v777
          %v1798 = vunpack.c.0.s8 %v778
          %v1799 = vunpack.c.1.s8 %v777
          %v1800 = vunpack.c.1.s8 %v778
          %v1801 = vunpack.c.2.s8 %v777
          %v1802 = vunpack.c.2.s8 %v778
          %v1803 = vunpack.c.3.s8 %v777
          %v1804 = vunpack.c.3.s8 %v778
          %v1805 = vunpack.c.0.s8 %v779
          %v1806 = vunpack.c.0.s8 %v780
          %v1807 = vunpack.c.1.s8 %v779
          %v1808 = vunpack.c.1.s8 %v780
          %v1809 = vunpack.c.2.s8 %v779
          %v1810 = vunpack.c.2.s8 %v780
          %v1811 = vunpack.c.3.s8 %v779
          %v1812 = vunpack.c.3.s8 %v780
          %v1813 = vunpack.c.0.s8 %v781
          %v1814 = vunpack.c.0.s8 %v782
          %v1815 = vunpack.c.1.s8 %v781
          %v1816 = vunpack.c.1.s8 %v782
          %v1817 = vunpack.c.2.s8 %v781
          %v1818 = vunpack.c.2.s8 %v782
          %v1819 = vunpack.c.3.s8 %v781
          %v1820 = vunpack.c.3.s8 %v782
          %v1821 = vunpack.c.0.s8 %v783
          %v1822 = vunpack.c.0.s8 %v784
          %v1823 = vunpack.c.1.s8 %v783
          %v1824 = vunpack.c.1.s8 %v784
          %v1825 = vunpack.c.2.s8 %v783
          %v1826 = vunpack.c.2.s8 %v784
          %v1827 = vunpack.c.3.s8 %v783
          %v1828 = vunpack.c.3.s8 %v784
          %v1829 = vunpack.c.0.s8 %v785
          %v1830 = vunpack.c.0.s8 %v786
          %v1831 = vunpack.c.1.s8 %v785
          %v1832 = vunpack.c.1.s8 %v786
          %v1833 = vunpack.c.2.s8 %v785
          %v1834 = vunpack.c.2.s8 %v786
          %v1835 = vunpack.c.3.s8 %v785
          %v1836 = vunpack.c.3.s8 %v786
          %v1837 = vunpack.c.0.s8 %v787
          %v1838 = vunpack.c.0.s8 %v788
          %v1839 = vunpack.c.1.s8 %v787
          %v1840 = vunpack.c.1.s8 %v788
          %v1841 = vunpack.c.2.s8 %v787
          %v1842 = vunpack.c.2.s8 %v788
          %v1843 = vunpack.c.3.s8 %v787
          %v1844 = vunpack.c.3.s8 %v788
          %v1845 = vunpack.c.0.s8 %v789
          %v1846 = vunpack.c.0.s8 %v790
          %v1847 = vunpack.c.1.s8 %v789
          %v1848 = vunpack.c.1.s8 %v790
          %v1849 = vunpack.c.2.s8 %v789
          %v1850 = vunpack.c.2.s8 %v790
          %v1851 = vunpack.c.3.s8 %v789
          %v1852 = vunpack.c.3.s8 %v790
          %v1853 = vunpack.c.0.s8 %v791
          %v1854 = vunpack.c.0.s8 %v792
          %v1855 = vunpack.c.1.s8 %v791
          %v1856 = vunpack.c.1.s8 %v792
          %v1857 = vunpack.c.2.s8 %v791
          %v1858 = vunpack.c.2.s8 %v792
          %v1859 = vunpack.c.3.s8 %v791
          %v1860 = vunpack.c.3.s8 %v792
          %v1861 = vunpack.c.0.s8 %v793
          %v1862 = vunpack.c.0.s8 %v794
          %v1863 = vunpack.c.1.s8 %v793
          %v1864 = vunpack.c.1.s8 %v794
          %v1865 = vunpack.c.2.s8 %v793
          %v1866 = vunpack.c.2.s8 %v794
          %v1867 = vunpack.c.3.s8 %v793
          %v1868 = vunpack.c.3.s8 %v794
          %v1869 = vunpack.c.0.s8 %v795
          %v1870 = vunpack.c.0.s8 %v796
          %v1871 = vunpack.c.1.s8 %v795
          %v1872 = vunpack.c.1.s8 %v796
          %v1873 = vunpack.c.2.s8 %v795
          %v1874 = vunpack.c.2.s8 %v796
          %v1875 = vunpack.c.3.s8 %v795
          %v1876 = vunpack.c.3.s8 %v796
          %v1877 = vunpack.c.0.s8 %v797
          %v1878 = vunpack.c.0.s8 %v798
          %v1879 = vunpack.c.1.s8 %v797
          %v1880 = vunpack.c.1.s8 %v798
          %v1881 = vunpack.c.2.s8 %v797
          %v1882 = vunpack.c.2.s8 %v798
          %v1883 = vunpack.c.3.s8 %v797
          %v1884 = vunpack.c.3.s8 %v798
          %v1885 = vunpack.c.0.s8 %v799
          %v1886 = vunpack.c.0.s8 %v800
          %v1887 = vunpack.c.1.s8 %v799
          %v1888 = vunpack.c.1.s8 %v800
          %v1889 = vunpack.c.2.s8 %v799
          %v1890 = vunpack.c.2.s8 %v800
          %v1891 = vunpack.c.3.s8 %v799
          %v1892 = vunpack.c.3.s8 %v800
          %v1893 = vunpack.c.0.s8 %v801
          %v1894 = vunpack.c.0.s8 %v802
          %v1895 = vunpack.c.1.s8 %v801
          %v1896 = vunpack.c.1.s8 %v802
          %v1897 = vunpack.c.2.s8 %v801
          %v1898 = vunpack.c.2.s8 %v802
          %v1899 = vunpack.c.3.s8 %v801
          %v1900 = vunpack.c.3.s8 %v802
          %v1901 = vunpack.c.0.s8 %v803
          %v1902 = vunpack.c.0.s8 %v804
          %v1903 = vunpack.c.1.s8 %v803
          %v1904 = vunpack.c.1.s8 %v804
          %v1905 = vunpack.c.2.s8 %v803
          %v1906 = vunpack.c.2.s8 %v804
          %v1907 = vunpack.c.3.s8 %v803
          %v1908 = vunpack.c.3.s8 %v804
          %v1909 = vunpack.c.0.s8 %v805
          %v1910 = vunpack.c.0.s8 %v806
          %v1911 = vunpack.c.1.s8 %v805
          %v1912 = vunpack.c.1.s8 %v806
          %v1913 = vunpack.c.2.s8 %v805
          %v1914 = vunpack.c.2.s8 %v806
          %v1915 = vunpack.c.3.s8 %v805
          %v1916 = vunpack.c.3.s8 %v806
          %v1917 = vunpack.c.0.s8 %v807
          %v1918 = vunpack.c.0.s8 %v808
          %v1919 = vunpack.c.1.s8 %v807
          %v1920 = vunpack.c.1.s8 %v808
          %v1921 = vunpack.c.2.s8 %v807
          %v1922 = vunpack.c.2.s8 %v808
          %v1923 = vunpack.c.3.s8 %v807
          %v1924 = vunpack.c.3.s8 %v808
          %v1925 = vunpack.c.0.s8 %v809
          %v1926 = vunpack.c.0.s8 %v810
          %v1927 = vunpack.c.1.s8 %v809
          %v1928 = vunpack.c.1.s8 %v810
          %v1929 = vunpack.c.2.s8 %v809
          %v1930 = vunpack.c.2.s8 %v810
          %v1931 = vunpack.c.3.s8 %v809
          %v1932 = vunpack.c.3.s8 %v810
          %v1933 = vunpack.c.0.s8 %v811
          %v1934 = vunpack.c.0.s8 %v812
          %v1935 = vunpack.c.1.s8 %v811
          %v1936 = vunpack.c.1.s8 %v812
          %v1937 = vunpack.c.2.s8 %v811
          %v1938 = vunpack.c.2.s8 %v812
          %v1939 = vunpack.c.3.s8 %v811
          %v1940 = vunpack.c.3.s8 %v812
          %v1941 = vunpack.c.0.s8 %v813
          %v1942 = vunpack.c.0.s8 %v814
          %v1943 = vunpack.c.1.s8 %v813
          %v1944 = vunpack.c.1.s8 %v814
          %v1945 = vunpack.c.2.s8 %v813
          %v1946 = vunpack.c.2.s8 %v814
          %v1947 = vunpack.c.3.s8 %v813
          %v1948 = vunpack.c.3.s8 %v814
          %v1949 = vunpack.c.0.s8 %v815
          %v1950 = vunpack.c.0.s8 %v816
          %v1951 = vunpack.c.1.s8 %v815
          %v1952 = vunpack.c.1.s8 %v816
          %v1953 = vunpack.c.2.s8 %v815
          %v1954 = vunpack.c.2.s8 %v816
          %v1955 = vunpack.c.3.s8 %v815
          %v1956 = vunpack.c.3.s8 %v816
          %v1957 = vunpack.c.0.s8 %v817
          %v1958 = vunpack.c.0.s8 %v818
          %v1959 = vunpack.c.1.s8 %v817
          %v1960 = vunpack.c.1.s8 %v818
          %v1961 = vunpack.c.2.s8 %v817
          %v1962 = vunpack.c.2.s8 %v818
          %v1963 = vunpack.c.3.s8 %v817
          %v1964 = vunpack.c.3.s8 %v818
          %v1965 = vunpack.c.0.s8 %v819
          %v1966 = vunpack.c.0.s8 %v820
          %v1967 = vunpack.c.1.s8 %v819
          %v1968 = vunpack.c.1.s8 %v820
          %v1969 = vunpack.c.2.s8 %v819
          %v1970 = vunpack.c.2.s8 %v820
          %v1971 = vunpack.c.3.s8 %v819
          %v1972 = vunpack.c.3.s8 %v820
          %v1973 = vcvt.s32.f32 %v821
          %v1974 = vcvt.s32.f32 %v822
          %v1975 = vcvt.s32.f32 %v823
          %v1976 = vcvt.s32.f32 %v824
          %v1977 = vcvt.s32.f32 %v825
          %v1978 = vcvt.s32.f32 %v826
          %v1979 = vcvt.s32.f32 %v827
          %v1980 = vcvt.s32.f32 %v828
          %v1981 = vcvt.s32.f32 %v829
          %v1982 = vcvt.s32.f32 %v830
          %v1983 = vcvt.s32.f32 %v831
          %v1984 = vcvt.s32.f32 %v832
          %v1985 = vcvt.s32.f32 %v833
          %v1986 = vcvt.s32.f32 %v834
          %v1987 = vcvt.s32.f32 %v835
          %v1988 = vcvt.s32.f32 %v836
          %v1989 = vcvt.s32.f32 %v837
          %v1990 = vcvt.s32.f32 %v838
          %v1991 = vcvt.s32.f32 %v839
          %v1992 = vcvt.s32.f32 %v840
          %v1993 = vcvt.s32.f32 %v841
          %v1994 = vcvt.s32.f32 %v842
          %v1995 = vcvt.s32.f32 %v843
          %v1996 = vcvt.s32.f32 %v844
          %v1997 = vcvt.s32.f32 %v845
          %v1998 = vcvt.s32.f32 %v846
          %v1999 = vcvt.s32.f32 %v847
          %v2000 = vcvt.s32.f32 %v848
          %v2001 = vcvt.s32.f32 %v849
          %v2002 = vcvt.s32.f32 %v850
          %v2003 = vcvt.s32.f32 %v851
          %v2004 = vcvt.s32.f32 %v852
          %v2005 = vcvt.s32.f32 %v853
          %v2006 = vcvt.s32.f32 %v854
          %v2007 = vcvt.s32.f32 %v855
          %v2008 = vcvt.s32.f32 %v856
          %v2009 = vcvt.s32.f32 %v857
          %v2010 = vcvt.s32.f32 %v858
          %v2011 = vcvt.s32.f32 %v859
          %v2012 = vcvt.s32.f32 %v860
          %v2013 = vcvt.s32.f32 %v861
          %v2014 = vcvt.s32.f32 %v862
          %v2015 = vcvt.s32.f32 %v863
          %v2016 = vcvt.s32.f32 %v864
          %v2017 = vcvt.s32.f32 %v865
          %v2018 = vcvt.s32.f32 %v866
          %v2019 = vcvt.s32.f32 %v867
          %v2020 = vcvt.s32.f32 %v868
          %v2021 = vcvt.s32.f32 %v869
          %v2022 = vcvt.s32.f32 %v870
          %v2023 = vcvt.s32.f32 %v871
          %v2024 = vcvt.s32.f32 %v872
          %v2025 = vcvt.s32.f32 %v873
          %v2026 = vcvt.s32.f32 %v874
          %v2027 = vcvt.s32.f32 %v875
          %v2028 = vcvt.s32.f32 %v876
          %v2029 = vcvt.s32.f32 %v877
          %v2030 = vcvt.s32.f32 %v878
          %v2031 = vcvt.s32.f32 %v879
          %v2032 = vcvt.s32.f32 %v880
          %v2033 = vcvt.s32.f32 %v881
          %v2034 = vcvt.s32.f32 %v882
          %v2035 = vcvt.s32.f32 %v883
          %v2036 = vcvt.s32.f32 %v884
          %v2037 = vcvt.s32.f32 %v885
          %v2038 = vcvt.s32.f32 %v886
          %v2039 = vcvt.s32.f32 %v887
          %v2040 = vcvt.s32.f32 %v888
          %v2041 = vcvt.s32.f32 %v889
          %v2042 = vcvt.s32.f32 %v890
          %v2043 = vcvt.s32.f32 %v891
          %v2044 = vcvt.s32.f32 %v892
          %v2045 = vcvt.s32.f32 %v893
          %v2046 = vcvt.s32.f32 %v894
          %v2047 = vcvt.s32.f32 %v895
          %v2048 = vcvt.s32.f32 %v896
          %v2049 = vcvt.s32.f32 %v897
          %v2050 = vcvt.s32.f32 %v898
          %v2051 = vcvt.s32.f32 %v899
          %v2052 = vcvt.s32.f32 %v900
          %v2053 = vcvt.s32.f32 %v901
          %v2054 = vcvt.s32.f32 %v902
          %v2055 = vcvt.s32.f32 %v903
          %v2056 = vcvt.s32.f32 %v904
          %v2057 = vcvt.s32.f32 %v905
          %v2058 = vcvt.s32.f32 %v906
          %v2059 = vcvt.s32.f32 %v907
          %v2060 = vcvt.s32.f32 %v908
          %v2061 = vcvt.s32.f32 %v909
          %v2062 = vcvt.s32.f32 %v910
          %v2063 = vcvt.s32.f32 %v911
          %v2064 = vcvt.s32.f32 %v912
          %v2065 = vcvt.s32.f32 %v913
          %v2066 = vcvt.s32.f32 %v914
          %v2067 = vcvt.s32.f32 %v915
          %v2068 = vcvt.s32.f32 %v916
          %v2069 = vcvt.s32.f32 %v917
          %v2070 = vcvt.s32.f32 %v918
          %v2071 = vcvt.s32.f32 %v919
          %v2072 = vcvt.s32.f32 %v920
          %v2073 = vcvt.s32.f32 %v921
          %v2074 = vcvt.s32.f32 %v922
          %v2075 = vcvt.s32.f32 %v923
          %v2076 = vcvt.s32.f32 %v924
          %v2077 = vcvt.s32.f32 %v925
          %v2078 = vcvt.s32.f32 %v926
          %v2079 = vcvt.s32.f32 %v927
          %v2080 = vcvt.s32.f32 %v928
          %v2081 = vcvt.s32.f32 %v929
          %v2082 = vcvt.s32.f32 %v930
          %v2083 = vcvt.s32.f32 %v931
          %v2084 = vcvt.s32.f32 %v932
          %v2085 = vcvt.s32.f32 %v933
          %v2086 = vcvt.s32.f32 %v934
          %v2087 = vcvt.s32.f32 %v935
          %v2088 = vcvt.s32.f32 %v936
          %v2089 = vcvt.s32.f32 %v937
          %v2090 = vcvt.s32.f32 %v938
          %v2091 = vcvt.s32.f32 %v939
          %v2092 = vcvt.s32.f32 %v940
          %v2093 = vcvt.s32.f32 %v941
          %v2094 = vcvt.s32.f32 %v942
          %v2095 = vcvt.s32.f32 %v943
          %v2096 = vcvt.s32.f32 %v944
          %v2097 = vcvt.s32.f32 %v945
          %v2098 = vcvt.s32.f32 %v946
          %v2099 = vcvt.s32.f32 %v947
          %v2100 = vcvt.s32.f32 %v948
          %v2101 = vcvt.s32.f32 %v949
          %v2102 = vcvt.s32.f32 %v950
          %v2103 = vcvt.s32.f32 %v951
          %v2104 = vcvt.s32.f32 %v952
          %v2105 = vcvt.s32.f32 %v953
          %v2106 = vcvt.s32.f32 %v954
          %v2107 = vcvt.s32.f32 %v955
          %v2108 = vcvt.s32.f32 %v956
          %v2109 = vcvt.s32.f32 %v957
          %v2110 = vcvt.s32.f32 %v958
          %v2111 = vcvt.s32.f32 %v959
          %v2112 = vcvt.s32.f32 %v960
          %v2113 = vcvt.s32.f32 %v961
          %v2114 = vcvt.s32.f32 %v962
          %v2115 = vcvt.s32.f32 %v963
          %v2116 = vcvt.s32.f32 %v964
          %v2117 = vcvt.s32.f32 %v965
          %v2118 = vcvt.s32.f32 %v966
          %v2119 = vcvt.s32.f32 %v967
          %v2120 = vcvt.s32.f32 %v968
          %v2121 = vcvt.s32.f32 %v969
          %v2122 = vcvt.s32.f32 %v970
          %v2123 = vcvt.s32.f32 %v971
          %v2124 = vcvt.s32.f32 %v972
          %v2125 = vcvt.s32.f32 %v973
          %v2126 = vcvt.s32.f32 %v974
          %v2127 = vcvt.s32.f32 %v975
          %v2128 = vcvt.s32.f32 %v976
          %v2129 = vcvt.s32.f32 %v977
          %v2130 = vcvt.s32.f32 %v978
          %v2131 = vcvt.s32.f32 %v979
          %v2132 = vcvt.s32.f32 %v980
          %v2133 = vcvt.s32.f32 %v981
          %v2134 = vcvt.s32.f32 %v982
          %v2135 = vcvt.s32.f32 %v983
          %v2136 = vcvt.s32.f32 %v984
          %v2137 = vcvt.s32.f32 %v985
          %v2138 = vcvt.s32.f32 %v986
          %v2139 = vcvt.s32.f32 %v987
          %v2140 = vcvt.s32.f32 %v988
          %v2141 = vcvt.s32.f32 %v989
          %v2142 = vcvt.s32.f32 %v990
          %v2143 = vcvt.s32.f32 %v991
          %v2144 = vcvt.s32.f32 %v992
          %v2145 = vcvt.s32.f32 %v993
          %v2146 = vcvt.s32.f32 %v994
          %v2147 = vcvt.s32.f32 %v995
          %v2148 = vcvt.s32.f32 %v996
          %v2149 = vcvt.s32.f32 %v997
          %v2150 = vcvt.s32.f32 %v998
          %v2151 = vcvt.s32.f32 %v999
          %v2152 = vcvt.s32.f32 %v1000
          %v2153 = vcvt.s32.f32 %v1001
          %v2154 = vcvt.s32.f32 %v1002
          %v2155 = vcvt.s32.f32 %v1003
          %v2156 = vcvt.s32.f32 %v1004
          %v2157 = vcvt.s32.f32 %v1005
          %v2158 = vcvt.s32.f32 %v1006
          %v2159 = vcvt.s32.f32 %v1007
          %v2160 = vcvt.s32.f32 %v1008
          %v2161 = vcvt.s32.f32 %v1009
          %v2162 = vcvt.s32.f32 %v1010
          %v2163 = vcvt.s32.f32 %v1011
          %v2164 = vcvt.s32.f32 %v1012
          %v2165 = vcvt.s32.f32 %v1013
          %v2166 = vcvt.s32.f32 %v1014
          %v2167 = vcvt.s32.f32 %v1015
          %v2168 = vcvt.s32.f32 %v1016
          %v2169 = vcvt.s32.f32 %v1017
          %v2170 = vcvt.s32.f32 %v1018
          %v2171 = vcvt.s32.f32 %v1019
          %v2172 = vcvt.s32.f32 %v1020
          %v2173 = vcvt.s32.f32 %v1021
          %v2174 = vcvt.s32.f32 %v1022
          %v2175 = vcvt.s32.f32 %v1023
          %v2176 = vcvt.s32.f32 %v1024
          %v2177 = vcvt.s32.f32 %v1025
          %v2178 = vcvt.s32.f32 %v1026
          %v2179 = vcvt.s32.f32 %v1027
          %v2180 = vcvt.s32.f32 %v1028
          %v2181 = vcvt.s32.f32 %v1029
          %v2182 = vcvt.s32.f32 %v1030
          %v2183 = vcvt.s32.f32 %v1031
          %v2184 = vcvt.s32.f32 %v1032
          %v2185 = vcvt.s32.f32 %v1033
          %v2186 = vcvt.s32.f32 %v1034
          %v2187 = vcvt.s32.f32 %v1035
          %v2188 = vcvt.s32.f32 %v1036
          %v2189 = vcvt.s32.f32 %v1037
          %v2190 = vcvt.s32.f32 %v1038
          %v2191 = vcvt.s32.f32 %v1039
          %v2192 = vcvt.s32.f32 %v1040
          %v2193 = vcvt.s32.f32 %v1041
          %v2194 = vcvt.s32.f32 %v1042
          %v2195 = vcvt.s32.f32 %v1043
          %v2196 = vcvt.s32.f32 %v1044
          %v2197 = vcvt.s32.f32 %v1045
          %v2198 = vcvt.s32.f32 %v1046
          %v2199 = vcvt.s32.f32 %v1047
          %v2200 = vcvt.s32.f32 %v1048
          %v2201 = vcvt.s32.f32 %v1049
          %v2202 = vcvt.s32.f32 %v1050
          %v2203 = vcvt.s32.f32 %v1051
          %v2204 = vcvt.s32.f32 %v1052
          %v2205 = vcvt.s32.f32 %v1053
          %v2206 = vcvt.s32.f32 %v1054
          %v2207 = vcvt.s32.f32 %v1055
          %v2208 = vcvt.s32.f32 %v1056
          %v2209 = vcvt.s32.f32 %v1057
          %v2210 = vcvt.s32.f32 %v1058
          %v2211 = vcvt.s32.f32 %v1059
          %v2212 = vcvt.s32.f32 %v1060
          %v2213 = vcvt.s32.f32 %v1061
          %v2214 = vcvt.s32.f32 %v1062
          %v2215 = vcvt.s32.f32 %v1063
          %v2216 = vcvt.s32.f32 %v1064
          %v2217 = vcvt.s32.f32 %v1065
          %v2218 = vcvt.s32.f32 %v1066
          %v2219 = vcvt.s32.f32 %v1067
          %v2220 = vcvt.s32.f32 %v1068
          %v2221 = vcvt.s32.f32 %v1069
          %v2222 = vcvt.s32.f32 %v1070
          %v2223 = vcvt.s32.f32 %v1071
          %v2224 = vcvt.s32.f32 %v1072
          %v2225 = vcvt.s32.f32 %v1073
          %v2226 = vcvt.s32.f32 %v1074
          %v2227 = vcvt.s32.f32 %v1075
          %v2228 = vcvt.s32.f32 %v1076
          %v2229 = vcvt.s32.f32 %v1077
          %v2230 = vcvt.s32.f32 %v1078
          %v2231 = vcvt.s32.f32 %v1079
          %v2232 = vcvt.s32.f32 %v1080
          %v2233 = vcvt.s32.f32 %v1081
          %v2234 = vcvt.s32.f32 %v1082
          %v2235 = vcvt.s32.f32 %v1083
          %v2236 = vcvt.s32.f32 %v1084
          %v2237 = vcvt.s32.f32 %v1085
          %v2238 = vcvt.s32.f32 %v1086
          %v2239 = vcvt.s32.f32 %v1087
          %v2240 = vcvt.s32.f32 %v1088
          %v2241 = vcvt.s32.f32 %v1089
          %v2242 = vcvt.s32.f32 %v1090
          %v2243 = vcvt.s32.f32 %v1091
          %v2244 = vcvt.s32.f32 %v1092
          %v2245 = vcvt.s32.f32 %v1093
          %v2246 = vcvt.s32.f32 %v1094
          %v2247 = vcvt.s32.f32 %v1095
          %v2248 = vcvt.s32.f32 %v1096
          %v2249 = vcvt.s32.f32 %v1097
          %v2250 = vcvt.s32.f32 %v1098
          %v2251 = vcvt.s32.f32 %v1099
          %v2252 = vcvt.s32.f32 %v1100
          %v2253 = vcvt.s32.f32 %v1101
          %v2254 = vcvt.s32.f32 %v1102
          %v2255 = vcvt.s32.f32 %v1103
          %v2256 = vcvt.s32.f32 %v1104
          %v2257 = vcvt.s32.f32 %v1105
          %v2258 = vcvt.s32.f32 %v1106
          %v2259 = vcvt.s32.f32 %v1107
          %v2260 = vcvt.s32.f32 %v1108
          %v2261 = vcvt.s32.f32 %v1109
          %v2262 = vcvt.s32.f32 %v1110
          %v2263 = vcvt.s32.f32 %v1111
          %v2264 = vcvt.s32.f32 %v1112
          %v2265 = vcvt.s32.f32 %v1113
          %v2266 = vcvt.s32.f32 %v1114
          %v2267 = vcvt.s32.f32 %v1115
          %v2268 = vcvt.s32.f32 %v1116
          %v2269 = vcvt.s32.f32 %v1117
          %v2270 = vcvt.s32.f32 %v1118
          %v2271 = vcvt.s32.f32 %v1119
          %v2272 = vcvt.s32.f32 %v1120
          %v2273 = vcvt.s32.f32 %v1121
          %v2274 = vcvt.s32.f32 %v1122
          %v2275 = vcvt.s32.f32 %v1123
          %v2276 = vcvt.s32.f32 %v1124
          %v2277 = vcvt.s32.f32 %v1125
          %v2278 = vcvt.s32.f32 %v1126
          %v2279 = vcvt.s32.f32 %v1127
          %v2280 = vcvt.s32.f32 %v1128
          %v2281 = vcvt.s32.f32 %v1129
          %v2282 = vcvt.s32.f32 %v1130
          %v2283 = vcvt.s32.f32 %v1131
          %v2284 = vcvt.s32.f32 %v1132
          %v2285 = vcvt.s32.f32 %v1133
          %v2286 = vcvt.s32.f32 %v1134
          %v2287 = vcvt.s32.f32 %v1135
          %v2288 = vcvt.s32.f32 %v1136
          %v2289 = vcvt.s32.f32 %v1137
          %v2290 = vcvt.s32.f32 %v1138
          %v2291 = vcvt.s32.f32 %v1139
          %v2292 = vcvt.s32.f32 %v1140
          %v2293 = vcvt.s32.f32 %v1141
          %v2294 = vcvt.s32.f32 %v1142
          %v2295 = vcvt.s32.f32 %v1143
          %v2296 = vcvt.s32.f32 %v1144
          %v2297 = vcvt.s32.f32 %v1145
          %v2298 = vcvt.s32.f32 %v1146
          %v2299 = vcvt.s32.f32 %v1147
          %v2300 = vcvt.s32.f32 %v1148
          %v2301 = vcvt.s32.f32 %v1149
          %v2302 = vcvt.s32.f32 %v1150
          %v2303 = vcvt.s32.f32 %v1151
          %v2304 = vcvt.s32.f32 %v1152
          %v2305 = vcvt.s32.f32 %v1153
          %v2306 = vcvt.s32.f32 %v1154
          %v2307 = vcvt.s32.f32 %v1155
          %v2308 = vcvt.s32.f32 %v1156
          %v2309 = vcvt.s32.f32 %v1157
          %v2310 = vcvt.s32.f32 %v1158
          %v2311 = vcvt.s32.f32 %v1159
          %v2312 = vcvt.s32.f32 %v1160
          %v2313 = vcvt.s32.f32 %v1161
          %v2314 = vcvt.s32.f32 %v1162
          %v2315 = vcvt.s32.f32 %v1163
          %v2316 = vcvt.s32.f32 %v1164
          %v2317 = vcvt.s32.f32 %v1165
          %v2318 = vcvt.s32.f32 %v1166
          %v2319 = vcvt.s32.f32 %v1167
          %v2320 = vcvt.s32.f32 %v1168
          %v2321 = vcvt.s32.f32 %v1169
          %v2322 = vcvt.s32.f32 %v1170
          %v2323 = vcvt.s32.f32 %v1171
          %v2324 = vcvt.s32.f32 %v1172
          %v2325 = vcvt.s32.f32 %v1173
          %v2326 = vcvt.s32.f32 %v1174
          %v2327 = vcvt.s32.f32 %v1175
          %v2328 = vcvt.s32.f32 %v1176
          %v2329 = vcvt.s32.f32 %v1177
          %v2330 = vcvt.s32.f32 %v1178
          %v2331 = vcvt.s32.f32 %v1179
          %v2332 = vcvt.s32.f32 %v1180
          %v2333 = vcvt.s32.f32 %v1181
          %v2334 = vcvt.s32.f32 %v1182
          %v2335 = vcvt.s32.f32 %v1183
          %v2336 = vcvt.s32.f32 %v1184
          %v2337 = vcvt.s32.f32 %v1185
          %v2338 = vcvt.s32.f32 %v1186
          %v2339 = vcvt.s32.f32 %v1187
          %v2340 = vcvt.s32.f32 %v1188
          %v2341 = vcvt.s32.f32 %v1189
          %v2342 = vcvt.s32.f32 %v1190
          %v2343 = vcvt.s32.f32 %v1191
          %v2344 = vcvt.s32.f32 %v1192
          %v2345 = vcvt.s32.f32 %v1193
          %v2346 = vcvt.s32.f32 %v1194
          %v2347 = vcvt.s32.f32 %v1195
          %v2348 = vcvt.s32.f32 %v1196
          %v2349 = vcvt.s32.f32 %v1197
          %v2350 = vcvt.s32.f32 %v1198
          %v2351 = vcvt.s32.f32 %v1199
          %v2352 = vcvt.s32.f32 %v1200
          %v2353 = vcvt.s32.f32 %v1201
          %v2354 = vcvt.s32.f32 %v1202
          %v2355 = vcvt.s32.f32 %v1203
          %v2356 = vcvt.s32.f32 %v1204
          %v2357 = vcvt.s32.f32 %v1205
          %v2358 = vcvt.s32.f32 %v1206
          %v2359 = vcvt.s32.f32 %v1207
          %v2360 = vcvt.s32.f32 %v1208
          %v2361 = vcvt.s32.f32 %v1209
          %v2362 = vcvt.s32.f32 %v1210
          %v2363 = vcvt.s32.f32 %v1211
          %v2364 = vcvt.s32.f32 %v1212
          %v2365 = vcvt.s32.f32 %v1213
          %v2366 = vcvt.s32.f32 %v1214
          %v2367 = vcvt.s32.f32 %v1215
          %v2368 = vcvt.s32.f32 %v1216
          %v2369 = vcvt.s32.f32 %v1217
          %v2370 = vcvt.s32.f32 %v1218
          %v2371 = vcvt.s32.f32 %v1219
          %v2372 = vcvt.s32.f32 %v1220
          %v2373 = vcvt.s32.f32 %v1221
          %v2374 = vcvt.s32.f32 %v1222
          %v2375 = vcvt.s32.f32 %v1223
          %v2376 = vcvt.s32.f32 %v1224
          %v2377 = vcvt.s32.f32 %v1225
          %v2378 = vcvt.s32.f32 %v1226
          %v2379 = vcvt.s32.f32 %v1227
          %v2380 = vcvt.s32.f32 %v1228
          %v2381 = vcvt.s32.f32 %v1229
          %v2382 = vcvt.s32.f32 %v1230
          %v2383 = vcvt.s32.f32 %v1231
          %v2384 = vcvt.s32.f32 %v1232
          %v2385 = vcvt.s32.f32 %v1233
          %v2386 = vcvt.s32.f32 %v1234
          %v2387 = vcvt.s32.f32 %v1235
          %v2388 = vcvt.s32.f32 %v1236
          %v2389 = vcvt.s32.f32 %v1237
          %v2390 = vcvt.s32.f32 %v1238
          %v2391 = vcvt.s32.f32 %v1239
          %v2392 = vcvt.s32.f32 %v1240
          %v2393 = vcvt.s32.f32 %v1241
          %v2394 = vcvt.s32.f32 %v1242
          %v2395 = vcvt.s32.f32 %v1243
          %v2396 = vcvt.s32.f32 %v1244
          %v2397 = vcvt.s32.f32 %v1245
          %v2398 = vcvt.s32.f32 %v1246
          %v2399 = vcvt.s32.f32 %v1247
          %v2400 = vcvt.s32.f32 %v1248
          %v2401 = vcvt.s32.f32 %v1249
          %v2402 = vcvt.s32.f32 %v1250
          %v2403 = vcvt.s32.f32 %v1251
          %v2404 = vcvt.s32.f32 %v1252
          %v2405 = vcvt.s32.f32 %v1253
          %v2406 = vcvt.s32.f32 %v1254
          %v2407 = vcvt.s32.f32 %v1255
          %v2408 = vcvt.s32.f32 %v1256
          %v2409 = vcvt.s32.f32 %v1257
          %v2410 = vcvt.s32.f32 %v1258
          %v2411 = vcvt.s32.f32 %v1259
          %v2412 = vcvt.s32.f32 %v1260
          %v2413 = vcvt.s32.f32 %v1261
          %v2414 = vcvt.s32.f32 %v1262
          %v2415 = vcvt.s32.f32 %v1263
          %v2416 = vcvt.s32.f32 %v1264
          %v2417 = vcvt.s32.f32 %v1265
          %v2418 = vcvt.s32.f32 %v1266
          %v2419 = vcvt.s32.f32 %v1267
          %v2420 = vcvt.s32.f32 %v1268
          %v2421 = vcvt.s32.f32 %v1269
          %v2422 = vcvt.s32.f32 %v1270
          %v2423 = vcvt.s32.f32 %v1271
          %v2424 = vcvt.s32.f32 %v1272
          %v2425 = vcvt.s32.f32 %v1273
          %v2426 = vcvt.s32.f32 %v1274
          %v2427 = vcvt.s32.f32 %v1275
          %v2428 = vcvt.s32.f32 %v1276
          %v2429 = vcvt.s32.f32 %v1277
          %v2430 = vcvt.s32.f32 %v1278
          %v2431 = vcvt.s32.f32 %v1279
          %v2432 = vcvt.s32.f32 %v1280
          %v2433 = vcvt.s32.f32 %v1281
          %v2434 = vcvt.s32.f32 %v1282
          %v2435 = vcvt.s32.f32 %v1283
          %v2436 = vcvt.s32.f32 %v1284
          %v2437 = vcvt.s32.f32 %v1285
          %v2438 = vcvt.s32.f32 %v1286
          %v2439 = vcvt.s32.f32 %v1287
          %v2440 = vcvt.s32.f32 %v1288
          %v2441 = vcvt.s32.f32 %v1289
          %v2442 = vcvt.s32.f32 %v1290
          %v2443 = vcvt.s32.f32 %v1291
          %v2444 = vcvt.s32.f32 %v1292
          %v2445 = vcvt.s32.f32 %v1293
          %v2446 = vcvt.s32.f32 %v1294
          %v2447 = vcvt.s32.f32 %v1295
          %v2448 = vcvt.s32.f32 %v1296
          %v2449 = vcvt.s32.f32 %v1297
          %v2450 = vcvt.s32.f32 %v1298
          %v2451 = vcvt.s32.f32 %v1299
          %v2452 = vcvt.s32.f32 %v1300
          %v2453 = vcvt.s32.f32 %v1301
          %v2454 = vcvt.s32.f32 %v1302
          %v2455 = vcvt.s32.f32 %v1303
          %v2456 = vcvt.s32.f32 %v1304
          %v2457 = vcvt.s32.f32 %v1305
          %v2458 = vcvt.s32.f32 %v1306
          %v2459 = vcvt.s32.f32 %v1307
          %v2460 = vcvt.s32.f32 %v1308
          %v2461 = vcvt.s32.f32 %v1309
          %v2462 = vcvt.s32.f32 %v1310
          %v2463 = vcvt.s32.f32 %v1311
          %v2464 = vcvt.s32.f32 %v1312
          %v2465 = vcvt.s32.f32 %v1313
          %v2466 = vcvt.s32.f32 %v1314
          %v2467 = vcvt.s32.f32 %v1315
          %v2468 = vcvt.s32.f32 %v1316
          %v2469 = vcvt.s32.f32 %v1317
          %v2470 = vcvt.s32.f32 %v1318
          %v2471 = vcvt.s32.f32 %v1319
          %v2472 = vcvt.s32.f32 %v1320
          %v2473 = vcvt.s32.f32 %v1321
          %v2474 = vcvt.s32.f32 %v1322
          %v2475 = vcvt.s32.f32 %v1323
          %v2476 = vcvt.s32.f32 %v1324
          %v2477 = vcvt.s32.f32 %v1325
          %v2478 = vcvt.s32.f32 %v1326
          %v2479 = vcvt.s32.f32 %v1327
          %v2480 = vcvt.s32.f32 %v1328
          %v2481 = vcvt.s32.f32 %v1329
          %v2482 = vcvt.s32.f32 %v1330
          %v2483 = vcvt.s32.f32 %v1331
          %v2484 = vcvt.s32.f32 %v1332
          %v2485 = vcvt.s32.f32 %v1333
          %v2486 = vcvt.s32.f32 %v1334
          %v2487 = vcvt.s32.f32 %v1335
          %v2488 = vcvt.s32.f32 %v1336
          %v2489 = vcvt.s32.f32 %v1337
          %v2490 = vcvt.s32.f32 %v1338
          %v2491 = vcvt.s32.f32 %v1339
          %v2492 = vcvt.s32.f32 %v1340
          %v2493 = vcvt.s32.f32 %v1341
          %v2494 = vcvt.s32.f32 %v1342
          %v2495 = vcvt.s32.f32 %v1343
          %v2496 = vcvt.s32.f32 %v1344
          %v2497 = vcvt.s32.f32 %v1345
          %v2498 = vcvt.s32.f32 %v1346
          %v2499 = vcvt.s32.f32 %v1347
          %v2500 = vcvt.s32.f32 %v1348
          %v2501 = vcvt.s32.f32 %v1349
          %v2502 = vcvt.s32.f32 %v1350
          %v2503 = vcvt.s32.f32 %v1351
          %v2504 = vcvt.s32.f32 %v1352
          %v2505 = vcvt.s32.f32 %v1353
          %v2506 = vcvt.s32.f32 %v1354
          %v2507 = vcvt.s32.f32 %v1355
          %v2508 = vcvt.s32.f32 %v1356
          %v2509 = vcvt.s32.f32 %v1357
          %v2510 = vcvt.s32.f32 %v1358
          %v2511 = vcvt.s32.f32 %v1359
          %v2512 = vcvt.s32.f32 %v1360
          %v2513 = vcvt.s32.f32 %v1361
          %v2514 = vcvt.s32.f32 %v1362
          %v2515 = vcvt.s32.f32 %v1363
          %v2516 = vcvt.s32.f32 %v1364
          %v2517 = vcvt.s32.f32 %v1365
          %v2518 = vcvt.s32.f32 %v1366
          %v2519 = vcvt.s32.f32 %v1367
          %v2520 = vcvt.s32.f32 %v1368
          %v2521 = vcvt.s32.f32 %v1369
          %v2522 = vcvt.s32.f32 %v1370
          %v2523 = vcvt.s32.f32 %v1371
          %v2524 = vcvt.s32.f32 %v1372
          %v2525 = vcvt.s32.f32 %v1373
          %v2526 = vcvt.s32.f32 %v1374
          %v2527 = vcvt.s32.f32 %v1375
          %v2528 = vcvt.s32.f32 %v1376
          %v2529 = vcvt.s32.f32 %v1377
          %v2530 = vcvt.s32.f32 %v1378
          %v2531 = vcvt.s32.f32 %v1379
          %v2532 = vcvt.s32.f32 %v1380
          %v2533 = vcvt.s32.f32 %v1381
          %v2534 = vcvt.s32.f32 %v1382
          %v2535 = vcvt.s32.f32 %v1383
          %v2536 = vcvt.s32.f32 %v1384
          %v2537 = vcvt.s32.f32 %v1385
          %v2538 = vcvt.s32.f32 %v1386
          %v2539 = vcvt.s32.f32 %v1387
          %v2540 = vcvt.s32.f32 %v1388
          %v2541 = vcvt.s32.f32 %v1389
          %v2542 = vcvt.s32.f32 %v1390
          %v2543 = vcvt.s32.f32 %v1391
          %v2544 = vcvt.s32.f32 %v1392
          %v2545 = vcvt.s32.f32 %v1393
          %v2546 = vcvt.s32.f32 %v1394
          %v2547 = vcvt.s32.f32 %v1395
          %v2548 = vcvt.s32.f32 %v1396
          %v2549 = vcvt.s32.f32 %v1397
          %v2550 = vcvt.s32.f32 %v1398
          %v2551 = vcvt.s32.f32 %v1399
          %v2552 = vcvt.s32.f32 %v1400
          %v2553 = vcvt.s32.f32 %v1401
          %v2554 = vcvt.s32.f32 %v1402
          %v2555 = vcvt.s32.f32 %v1403
          %v2556 = vcvt.s32.f32 %v1404
          %v2557 = vcvt.s32.f32 %v1405
          %v2558 = vcvt.s32.f32 %v1406
          %v2559 = vcvt.s32.f32 %v1407
          %v2560 = vcvt.s32.f32 %v1408
          %v2561 = vcvt.s32.f32 %v1409
          %v2562 = vcvt.s32.f32 %v1410
          %v2563 = vcvt.s32.f32 %v1411
          %v2564 = vcvt.s32.f32 %v1412
          %v2565 = vcvt.s32.f32 %v1413
          %v2566 = vcvt.s32.f32 %v1414
          %v2567 = vcvt.s32.f32 %v1415
          %v2568 = vcvt.s32.f32 %v1416
          %v2569 = vcvt.s32.f32 %v1417
          %v2570 = vcvt.s32.f32 %v1418
          %v2571 = vcvt.s32.f32 %v1419
          %v2572 = vcvt.s32.f32 %v1420
          %v2573 = vcvt.s32.f32 %v1421
          %v2574 = vcvt.s32.f32 %v1422
          %v2575 = vcvt.s32.f32 %v1423
          %v2576 = vcvt.s32.f32 %v1424
          %v2577 = vcvt.s32.f32 %v1425
          %v2578 = vcvt.s32.f32 %v1426
          %v2579 = vcvt.s32.f32 %v1427
          %v2580 = vcvt.s32.f32 %v1428
          %v2581 = vcvt.s32.f32 %v1429
          %v2582 = vcvt.s32.f32 %v1430
          %v2583 = vcvt.s32.f32 %v1431
          %v2584 = vcvt.s32.f32 %v1432
          %v2585 = vcvt.s32.f32 %v1433
          %v2586 = vcvt.s32.f32 %v1434
          %v2587 = vcvt.s32.f32 %v1435
          %v2588 = vcvt.s32.f32 %v1436
          %v2589 = vcvt.s32.f32 %v1437
          %v2590 = vcvt.s32.f32 %v1438
          %v2591 = vcvt.s32.f32 %v1439
          %v2592 = vcvt.s32.f32 %v1440
          %v2593 = vcvt.s32.f32 %v1441
          %v2594 = vcvt.s32.f32 %v1442
          %v2595 = vcvt.s32.f32 %v1443
          %v2596 = vcvt.s32.f32 %v1444
          %v2597 = vcvt.s32.f32 %v1445
          %v2598 = vcvt.s32.f32 %v1446
          %v2599 = vcvt.s32.f32 %v1447
          %v2600 = vcvt.s32.f32 %v1448
          %v2601 = vcvt.s32.f32 %v1449
          %v2602 = vcvt.s32.f32 %v1450
          %v2603 = vcvt.s32.f32 %v1451
          %v2604 = vcvt.s32.f32 %v1452
          %v2605 = vcvt.s32.f32 %v1453
          %v2606 = vcvt.s32.f32 %v1454
          %v2607 = vcvt.s32.f32 %v1455
          %v2608 = vcvt.s32.f32 %v1456
          %v2609 = vcvt.s32.f32 %v1457
          %v2610 = vcvt.s32.f32 %v1458
          %v2611 = vcvt.s32.f32 %v1459
          %v2612 = vcvt.s32.f32 %v1460
          %v2613 = vcvt.s32.f32 %v1461
          %v2614 = vcvt.s32.f32 %v1462
          %v2615 = vcvt.s32.f32 %v1463
          %v2616 = vcvt.s32.f32 %v1464
          %v2617 = vcvt.s32.f32 %v1465
          %v2618 = vcvt.s32.f32 %v1466
          %v2619 = vcvt.s32.f32 %v1467
          %v2620 = vcvt.s32.f32 %v1468
          %v2621 = vcvt.s32.f32 %v1469
          %v2622 = vcvt.s32.f32 %v1470
          %v2623 = vcvt.s32.f32 %v1471
          %v2624 = vcvt.s32.f32 %v1472
          %v2625 = vcvt.s32.f32 %v1473
          %v2626 = vcvt.s32.f32 %v1474
          %v2627 = vcvt.s32.f32 %v1475
          %v2628 = vcvt.s32.f32 %v1476
          %v2629 = vcvt.s32.f32 %v1477
          %v2630 = vcvt.s32.f32 %v1478
          %v2631 = vcvt.s32.f32 %v1479
          %v2632 = vcvt.s32.f32 %v1480
          %v2633 = vcvt.s32.f32 %v1481
          %v2634 = vcvt.s32.f32 %v1482
          %v2635 = vcvt.s32.f32 %v1483
          %v2636 = vcvt.s32.f32 %v1484
          %v2637 = vcvt.s32.f32 %v1485
          %v2638 = vcvt.s32.f32 %v1486
          %v2639 = vcvt.s32.f32 %v1487
          %v2640 = vcvt.s32.f32 %v1488
          %v2641 = vcvt.s32.f32 %v1489
          %v2642 = vcvt.s32.f32 %v1490
          %v2643 = vcvt.s32.f32 %v1491
          %v2644 = vcvt.s32.f32 %v1492
          %v2645 = vcvt.s32.f32 %v1493
          %v2646 = vcvt.s32.f32 %v1494
          %v2647 = vcvt.s32.f32 %v1495
          %v2648 = vcvt.s32.f32 %v1496
          %v2649 = vcvt.s32.f32 %v1497
          %v2650 = vcvt.s32.f32 %v1498
          %v2651 = vcvt.s32.f32 %v1499
          %v2652 = vcvt.s32.f32 %v1500
          %v2653 = vcvt.s32.f32 %v1501
          %v2654 = vcvt.s32.f32 %v1502
          %v2655 = vcvt.s32.f32 %v1503
          %v2656 = vcvt.s32.f32 %v1504
          %v2657 = vcvt.s32.f32 %v1505
          %v2658 = vcvt.s32.f32 %v1506
          %v2659 = vcvt.s32.f32 %v1507
          %v2660 = vcvt.s32.f32 %v1508
          %v2661 = vcvt.s32.f32 %v1509
          %v2662 = vcvt.s32.f32 %v1510
          %v2663 = vcvt.s32.f32 %v1511
          %v2664 = vcvt.s32.f32 %v1512
          %v2665 = vcvt.s32.f32 %v1513
          %v2666 = vcvt.s32.f32 %v1514
          %v2667 = vcvt.s32.f32 %v1515
          %v2668 = vcvt.s32.f32 %v1516
          %v2669 = vcvt.s32.f32 %v1517
          %v2670 = vcvt.s32.f32 %v1518
          %v2671 = vcvt.s32.f32 %v1519
          %v2672 = vcvt.s32.f32 %v1520
          %v2673 = vcvt.s32.f32 %v1521
          %v2674 = vcvt.s32.f32 %v1522
          %v2675 = vcvt.s32.f32 %v1523
          %v2676 = vcvt.s32.f32 %v1524
          %v2677 = vcvt.s32.f32 %v1525
          %v2678 = vcvt.s32.f32 %v1526
          %v2679 = vcvt.s32.f32 %v1527
          %v2680 = vcvt.s32.f32 %v1528
          %v2681 = vcvt.s32.f32 %v1529
          %v2682 = vcvt.s32.f32 %v1530
          %v2683 = vcvt.s32.f32 %v1531
          %v2684 = vcvt.s32.f32 %v1532
          %v2685 = vcvt.s32.f32 %v1533
          %v2686 = vcvt.s32.f32 %v1534
          %v2687 = vcvt.s32.f32 %v1535
          %v2688 = vcvt.s32.f32 %v1536
          %v2689 = vcvt.s32.f32 %v1537
          %v2690 = vcvt.s32.f32 %v1538
          %v2691 = vcvt.s32.f32 %v1539
          %v2692 = vcvt.s32.f32 %v1540
          %v2693 = vcvt.s32.f32 %v1541
          %v2694 = vcvt.s32.f32 %v1542
          %v2695 = vcvt.s32.f32 %v1543
          %v2696 = vcvt.s32.f32 %v1544
          %v2697 = vcvt.s32.f32 %v1545
          %v2698 = vcvt.s32.f32 %v1546
          %v2699 = vcvt.s32.f32 %v1547
          %v2700 = vcvt.s32.f32 %v1548
          %v2701 = vcvt.s32.f32 %v1549
          %v2702 = vcvt.s32.f32 %v1550
          %v2703 = vcvt.s32.f32 %v1551
          %v2704 = vcvt.s32.f32 %v1552
          %v2705 = vcvt.s32.f32 %v1553
          %v2706 = vcvt.s32.f32 %v1554
          %v2707 = vcvt.s32.f32 %v1555
          %v2708 = vcvt.s32.f32 %v1556
          %v2709 = vcvt.s32.f32 %v1557
          %v2710 = vcvt.s32.f32 %v1558
          %v2711 = vcvt.s32.f32 %v1559
          %v2712 = vcvt.s32.f32 %v1560
          %v2713 = vcvt.s32.f32 %v1561
          %v2714 = vcvt.s32.f32 %v1562
          %v2715 = vcvt.s32.f32 %v1563
          %v2716 = vcvt.s32.f32 %v1564
          %v2717 = vcvt.s32.f32 %v1565
          %v2718 = vcvt.s32.f32 %v1566
          %v2719 = vcvt.s32.f32 %v1567
          %v2720 = vcvt.s32.f32 %v1568
          %v2721 = vcvt.s32.f32 %v1569
          %v2722 = vcvt.s32.f32 %v1570
          %v2723 = vcvt.s32.f32 %v1571
          %v2724 = vcvt.s32.f32 %v1572
          %v2725 = vcvt.s32.f32 %v1573
          %v2726 = vcvt.s32.f32 %v1574
          %v2727 = vcvt.s32.f32 %v1575
          %v2728 = vcvt.s32.f32 %v1576
          %v2729 = vcvt.s32.f32 %v1577
          %v2730 = vcvt.s32.f32 %v1578
          %v2731 = vcvt.s32.f32 %v1579
          %v2732 = vcvt.s32.f32 %v1580
          %v2733 = vcvt.s32.f32 %v1581
          %v2734 = vcvt.s32.f32 %v1582
          %v2735 = vcvt.s32.f32 %v1583
          %v2736 = vcvt.s32.f32 %v1584
          %v2737 = vcvt.s32.f32 %v1585
          %v2738 = vcvt.s32.f32 %v1586
          %v2739 = vcvt.s32.f32 %v1587
          %v2740 = vcvt.s32.f32 %v1588
          %v2741 = vcvt.s32.f32 %v1589
          %v2742 = vcvt.s32.f32 %v1590
          %v2743 = vcvt.s32.f32 %v1591
          %v2744 = vcvt.s32.f32 %v1592
          %v2745 = vcvt.s32.f32 %v1593
          %v2746 = vcvt.s32.f32 %v1594
          %v2747 = vcvt.s32.f32 %v1595
          %v2748 = vcvt.s32.f32 %v1596
          %v2749 = vcvt.s32.f32 %v1597
          %v2750 = vcvt.s32.f32 %v1598
          %v2751 = vcvt.s32.f32 %v1599
          %v2752 = vcvt.s32.f32 %v1600
          %v2753 = vcvt.s32.f32 %v1601
          %v2754 = vcvt.s32.f32 %v1602
          %v2755 = vcvt.s32.f32 %v1603
          %v2756 = vcvt.s32.f32 %v1604
          %v2757 = vcvt.s32.f32 %v1605
          %v2758 = vcvt.s32.f32 %v1606
          %v2759 = vcvt.s32.f32 %v1607
          %v2760 = vcvt.s32.f32 %v1608
          %v2761 = vcvt.s32.f32 %v1609
          %v2762 = vcvt.s32.f32 %v1610
          %v2763 = vcvt.s32.f32 %v1611
          %v2764 = vcvt.s32.f32 %v1612
          %v2765 = vcvt.s32.f32 %v1613
          %v2766 = vcvt.s32.f32 %v1614
          %v2767 = vcvt.s32.f32 %v1615
          %v2768 = vcvt.s32.f32 %v1616
          %v2769 = vcvt.s32.f32 %v1617
          %v2770 = vcvt.s32.f32 %v1618
          %v2771 = vcvt.s32.f32 %v1619
          %v2772 = vcvt.s32.f32 %v1620
          %v2773 = vcvt.s32.f32 %v1621
          %v2774 = vcvt.s32.f32 %v1622
          %v2775 = vcvt.s32.f32 %v1623
          %v2776 = vcvt.s32.f32 %v1624
          %v2777 = vcvt.s32.f32 %v1625
          %v2778 = vcvt.s32.f32 %v1626
          %v2779 = vcvt.s32.f32 %v1627
          %v2780 = vcvt.s32.f32 %v1628
          %v2781 = vcvt.s32.f32 %v1629
          %v2782 = vcvt.s32.f32 %v1630
          %v2783 = vcvt.s32.f32 %v1631
          %v2784 = vcvt.s32.f32 %v1632
          %v2785 = vcvt.s32.f32 %v1633
          %v2786 = vcvt.s32.f32 %v1634
          %v2787 = vcvt.s32.f32 %v1635
          %v2788 = vcvt.s32.f32 %v1636
          %v2789 = vcvt.s32.f32 %v1637
          %v2790 = vcvt.s32.f32 %v1638
          %v2791 = vcvt.s32.f32 %v1639
          %v2792 = vcvt.s32.f32 %v1640
          %v2793 = vcvt.s32.f32 %v1641
          %v2794 = vcvt.s32.f32 %v1642
          %v2795 = vcvt.s32.f32 %v1643
          %v2796 = vcvt.s32.f32 %v1644
          %v2797 = vcvt.s32.f32 %v1645
          %v2798 = vcvt.s32.f32 %v1646
          %v2799 = vcvt.s32.f32 %v1647
          %v2800 = vcvt.s32.f32 %v1648
          %v2801 = vcvt.s32.f32 %v1649
          %v2802 = vcvt.s32.f32 %v1650
          %v2803 = vcvt.s32.f32 %v1651
          %v2804 = vcvt.s32.f32 %v1652
          %v2805 = vcvt.s32.f32 %v1653
          %v2806 = vcvt.s32.f32 %v1654
          %v2807 = vcvt.s32.f32 %v1655
          %v2808 = vcvt.s32.f32 %v1656
          %v2809 = vcvt.s32.f32 %v1657
          %v2810 = vcvt.s32.f32 %v1658
          %v2811 = vcvt.s32.f32 %v1659
          %v2812 = vcvt.s32.f32 %v1660
          %v2813 = vcvt.s32.f32 %v1661
          %v2814 = vcvt.s32.f32 %v1662
          %v2815 = vcvt.s32.f32 %v1663
          %v2816 = vcvt.s32.f32 %v1664
          %v2817 = vcvt.s32.f32 %v1665
          %v2818 = vcvt.s32.f32 %v1666
          %v2819 = vcvt.s32.f32 %v1667
          %v2820 = vcvt.s32.f32 %v1668
          %v2821 = vcvt.s32.f32 %v1669
          %v2822 = vcvt.s32.f32 %v1670
          %v2823 = vcvt.s32.f32 %v1671
          %v2824 = vcvt.s32.f32 %v1672
          %v2825 = vcvt.s32.f32 %v1673
          %v2826 = vcvt.s32.f32 %v1674
          %v2827 = vcvt.s32.f32 %v1675
          %v2828 = vcvt.s32.f32 %v1676
          %v2829 = vcvt.s32.f32 %v1677
          %v2830 = vcvt.s32.f32 %v1678
          %v2831 = vcvt.s32.f32 %v1679
          %v2832 = vcvt.s32.f32 %v1680
          %v2833 = vcvt.s32.f32 %v1681
          %v2834 = vcvt.s32.f32 %v1682
          %v2835 = vcvt.s32.f32 %v1683
          %v2836 = vcvt.s32.f32 %v1684
          %v2837 = vcvt.s32.f32 %v1685
          %v2838 = vcvt.s32.f32 %v1686
          %v2839 = vcvt.s32.f32 %v1687
          %v2840 = vcvt.s32.f32 %v1688
          %v2841 = vcvt.s32.f32 %v1689
          %v2842 = vcvt.s32.f32 %v1690
          %v2843 = vcvt.s32.f32 %v1691
          %v2844 = vcvt.s32.f32 %v1692
          %v2845 = vcvt.s32.f32 %v1693
          %v2846 = vcvt.s32.f32 %v1694
          %v2847 = vcvt.s32.f32 %v1695
          %v2848 = vcvt.s32.f32 %v1696
          %v2849 = vcvt.s32.f32 %v1697
          %v2850 = vcvt.s32.f32 %v1698
          %v2851 = vcvt.s32.f32 %v1699
          %v2852 = vcvt.s32.f32 %v1700
          %v2853 = vcvt.s32.f32 %v1701
          %v2854 = vcvt.s32.f32 %v1702
          %v2855 = vcvt.s32.f32 %v1703
          %v2856 = vcvt.s32.f32 %v1704
          %v2857 = vcvt.s32.f32 %v1705
          %v2858 = vcvt.s32.f32 %v1706
          %v2859 = vcvt.s32.f32 %v1707
          %v2860 = vcvt.s32.f32 %v1708
          %v2861 = vcvt.s32.f32 %v1709
          %v2862 = vcvt.s32.f32 %v1710
          %v2863 = vcvt.s32.f32 %v1711
          %v2864 = vcvt.s32.f32 %v1712
          %v2865 = vcvt.s32.f32 %v1713
          %v2866 = vcvt.s32.f32 %v1714
          %v2867 = vcvt.s32.f32 %v1715
          %v2868 = vcvt.s32.f32 %v1716
          %v2869 = vcvt.s32.f32 %v1717
          %v2870 = vcvt.s32.f32 %v1718
          %v2871 = vcvt.s32.f32 %v1719
          %v2872 = vcvt.s32.f32 %v1720
          %v2873 = vcvt.s32.f32 %v1721
          %v2874 = vcvt.s32.f32 %v1722
          %v2875 = vcvt.s32.f32 %v1723
          %v2876 = vcvt.s32.f32 %v1724
          %v2877 = vcvt.s32.f32 %v1725
          %v2878 = vcvt.s32.f32 %v1726
          %v2879 = vcvt.s32.f32 %v1727
          %v2880 = vcvt.s32.f32 %v1728
          %v2881 = vcvt.s32.f32 %v1729
          %v2882 = vcvt.s32.f32 %v1730
          %v2883 = vcvt.s32.f32 %v1731
          %v2884 = vcvt.s32.f32 %v1732
          %v2885 = vcvt.s32.f32 %v1733
          %v2886 = vcvt.s32.f32 %v1734
          %v2887 = vcvt.s32.f32 %v1735
          %v2888 = vcvt.s32.f32 %v1736
          %v2889 = vcvt.s32.f32 %v1737
          %v2890 = vcvt.s32.f32 %v1738
          %v2891 = vcvt.s32.f32 %v1739
          %v2892 = vcvt.s32.f32 %v1740
          %v2893 = vcvt.s32.f32 %v1741
          %v2894 = vcvt.s32.f32 %v1742
          %v2895 = vcvt.s32.f32 %v1743
          %v2896 = vcvt.s32.f32 %v1744
          %v2897 = vcvt.s32.f32 %v1745
          %v2898 = vcvt.s32.f32 %v1746
          %v2899 = vcvt.s32.f32 %v1747
          %v2900 = vcvt.s32.f32 %v1748
          %v2901 = vcvt.s32.f32 %v1749
          %v2902 = vcvt.s32.f32 %v1750
          %v2903 = vcvt.s32.f32 %v1751
          %v2904 = vcvt.s32.f32 %v1752
          %v2905 = vcvt.s32.f32 %v1753
          %v2906 = vcvt.s32.f32 %v1754
          %v2907 = vcvt.s32.f32 %v1755
          %v2908 = vcvt.s32.f32 %v1756
          %v2909 = vcvt.s32.f32 %v1757
          %v2910 = vcvt.s32.f32 %v1758
          %v2911 = vcvt.s32.f32 %v1759
          %v2912 = vcvt.s32.f32 %v1760
          %v2913 = vcvt.s32.f32 %v1761
          %v2914 = vcvt.s32.f32 %v1762
          %v2915 = vcvt.s32.f32 %v1763
          %v2916 = vcvt.s32.f32 %v1764
          %v2917 = vcvt.s32.f32 %v1765
          %v2918 = vcvt.s32.f32 %v1766
          %v2919 = vcvt.s32.f32 %v1767
          %v2920 = vcvt.s32.f32 %v1768
          %v2921 = vcvt.s32.f32 %v1769
          %v2922 = vcvt.s32.f32 %v1770
          %v2923 = vcvt.s32.f32 %v1771
          %v2924 = vcvt.s32.f32 %v1772
          %v2925 = vcvt.s32.f32 %v1773
          %v2926 = vcvt.s32.f32 %v1774
          %v2927 = vcvt.s32.f32 %v1775
          %v2928 = vcvt.s32.f32 %v1776
          %v2929 = vcvt.s32.f32 %v1777
          %v2930 = vcvt.s32.f32 %v1778
          %v2931 = vcvt.s32.f32 %v1779
          %v2932 = vcvt.s32.f32 %v1780
          %v2933 = vcvt.s32.f32 %v1781
          %v2934 = vcvt.s32.f32 %v1782
          %v2935 = vcvt.s32.f32 %v1783
          %v2936 = vcvt.s32.f32 %v1784
          %v2937 = vcvt.s32.f32 %v1785
          %v2938 = vcvt.s32.f32 %v1786
          %v2939 = vcvt.s32.f32 %v1787
          %v2940 = vcvt.s32.f32 %v1788
          %v2941 = vcvt.s32.f32 %v1789
          %v2942 = vcvt.s32.f32 %v1790
          %v2943 = vcvt.s32.f32 %v1791
          %v2944 = vcvt.s32.f32 %v1792
          %v2945 = vcvt.s32.f32 %v1793
          %v2946 = vcvt.s32.f32 %v1794
          %v2947 = vcvt.s32.f32 %v1795
          %v2948 = vcvt.s32.f32 %v1796
          %v2949 = vcvt.s32.f32 %v1797
          %v2950 = vcvt.s32.f32 %v1798
          %v2951 = vcvt.s32.f32 %v1799
          %v2952 = vcvt.s32.f32 %v1800
          %v2953 = vcvt.s32.f32 %v1801
          %v2954 = vcvt.s32.f32 %v1802
          %v2955 = vcvt.s32.f32 %v1803
          %v2956 = vcvt.s32.f32 %v1804
          %v2957 = vcvt.s32.f32 %v1805
          %v2958 = vcvt.s32.f32 %v1806
          %v2959 = vcvt.s32.f32 %v1807
          %v2960 = vcvt.s32.f32 %v1808
          %v2961 = vcvt.s32.f32 %v1809
          %v2962 = vcvt.s32.f32 %v1810
          %v2963 = vcvt.s32.f32 %v1811
          %v2964 = vcvt.s32.f32 %v1812
          %v2965 = vcvt.s32.f32 %v1813
          %v2966 = vcvt.s32.f32 %v1814
          %v2967 = vcvt.s32.f32 %v1815
          %v2968 = vcvt.s32.f32 %v1816
          %v2969 = vcvt.s32.f32 %v1817
          %v2970 = vcvt.s32.f32 %v1818
          %v2971 = vcvt.s32.f32 %v1819
          %v2972 = vcvt.s32.f32 %v1820
          %v2973 = vcvt.s32.f32 %v1821
          %v2974 = vcvt.s32.f32 %v1822
          %v2975 = vcvt.s32.f32 %v1823
          %v2976 = vcvt.s32.f32 %v1824
          %v2977 = vcvt.s32.f32 %v1825
          %v2978 = vcvt.s32.f32 %v1826
          %v2979 = vcvt.s32.f32 %v1827
          %v2980 = vcvt.s32.f32 %v1828
          %v2981 = vcvt.s32.f32 %v1829
          %v2982 = vcvt.s32.f32 %v1830
          %v2983 = vcvt.s32.f32 %v1831
          %v2984 = vcvt.s32.f32 %v1832
          %v2985 = vcvt.s32.f32 %v1833
          %v2986 = vcvt.s32.f32 %v1834
          %v2987 = vcvt.s32.f32 %v1835
          %v2988 = vcvt.s32.f32 %v1836
          %v2989 = vcvt.s32.f32 %v1837
          %v2990 = vcvt.s32.f32 %v1838
          %v2991 = vcvt.s32.f32 %v1839
          %v2992 = vcvt.s32.f32 %v1840
          %v2993 = vcvt.s32.f32 %v1841
          %v2994 = vcvt.s32.f32 %v1842
          %v2995 = vcvt.s32.f32 %v1843
          %v2996 = vcvt.s32.f32 %v1844
          %v2997 = vcvt.s32.f32 %v1845
          %v2998 = vcvt.s32.f32 %v1846
          %v2999 = vcvt.s32.f32 %v1847
          %v3000 = vcvt.s32.f32 %v1848
          %v3001 = vcvt.s32.f32 %v1849
          %v3002 = vcvt.s32.f32 %v1850
          %v3003 = vcvt.s32.f32 %v1851
          %v3004 = vcvt.s32.f32 %v1852
          %v3005 = vcvt.s32.f32 %v1853
          %v3006 = vcvt.s32.f32 %v1854
          %v3007 = vcvt.s32.f32 %v1855
          %v3008 = vcvt.s32.f32 %v1856
          %v3009 = vcvt.s32.f32 %v1857
          %v3010 = vcvt.s32.f32 %v1858
          %v3011 = vcvt.s32.f32 %v1859
          %v3012 = vcvt.s32.f32 %v1860
          %v3013 = vcvt.s32.f32 %v1861
          %v3014 = vcvt.s32.f32 %v1862
          %v3015 = vcvt.s32.f32 %v1863
          %v3016 = vcvt.s32.f32 %v1864
          %v3017 = vcvt.s32.f32 %v1865
          %v3018 = vcvt.s32.f32 %v1866
          %v3019 = vcvt.s32.f32 %v1867
          %v3020 = vcvt.s32.f32 %v1868
          %v3021 = vcvt.s32.f32 %v1869
          %v3022 = vcvt.s32.f32 %v1870
          %v3023 = vcvt.s32.f32 %v1871
          %v3024 = vcvt.s32.f32 %v1872
          %v3025 = vcvt.s32.f32 %v1873
          %v3026 = vcvt.s32.f32 %v1874
          %v3027 = vcvt.s32.f32 %v1875
          %v3028 = vcvt.s32.f32 %v1876
          %v3029 = vcvt.s32.f32 %v1877
          %v3030 = vcvt.s32.f32 %v1878
          %v3031 = vcvt.s32.f32 %v1879
          %v3032 = vcvt.s32.f32 %v1880
          %v3033 = vcvt.s32.f32 %v1881
          %v3034 = vcvt.s32.f32 %v1882
          %v3035 = vcvt.s32.f32 %v1883
          %v3036 = vcvt.s32.f32 %v1884
          %v3037 = vcvt.s32.f32 %v1885
          %v3038 = vcvt.s32.f32 %v1886
          %v3039 = vcvt.s32.f32 %v1887
          %v3040 = vcvt.s32.f32 %v1888
          %v3041 = vcvt.s32.f32 %v1889
          %v3042 = vcvt.s32.f32 %v1890
          %v3043 = vcvt.s32.f32 %v1891
          %v3044 = vcvt.s32.f32 %v1892
          %v3045 = vcvt.s32.f32 %v1893
          %v3046 = vcvt.s32.f32 %v1894
          %v3047 = vcvt.s32.f32 %v1895
          %v3048 = vcvt.s32.f32 %v1896
          %v3049 = vcvt.s32.f32 %v1897
          %v3050 = vcvt.s32.f32 %v1898
          %v3051 = vcvt.s32.f32 %v1899
          %v3052 = vcvt.s32.f32 %v1900
          %v3053 = vcvt.s32.f32 %v1901
          %v3054 = vcvt.s32.f32 %v1902
          %v3055 = vcvt.s32.f32 %v1903
          %v3056 = vcvt.s32.f32 %v1904
          %v3057 = vcvt.s32.f32 %v1905
          %v3058 = vcvt.s32.f32 %v1906
          %v3059 = vcvt.s32.f32 %v1907
          %v3060 = vcvt.s32.f32 %v1908
          %v3061 = vcvt.s32.f32 %v1909
          %v3062 = vcvt.s32.f32 %v1910
          %v3063 = vcvt.s32.f32 %v1911
          %v3064 = vcvt.s32.f32 %v1912
          %v3065 = vcvt.s32.f32 %v1913
          %v3066 = vcvt.s32.f32 %v1914
          %v3067 = vcvt.s32.f32 %v1915
          %v3068 = vcvt.s32.f32 %v1916
          %v3069 = vcvt.s32.f32 %v1917
          %v3070 = vcvt.s32.f32 %v1918
          %v3071 = vcvt.s32.f32 %v1919
          %v3072 = vcvt.s32.f32 %v1920
          %v3073 = vcvt.s32.f32 %v1921
          %v3074 = vcvt.s32.f32 %v1922
          %v3075 = vcvt.s32.f32 %v1923
          %v3076 = vcvt.s32.f32 %v1924
          %v3077 = vcvt.s32.f32 %v1925
          %v3078 = vcvt.s32.f32 %v1926
          %v3079 = vcvt.s32.f32 %v1927
          %v3080 = vcvt.s32.f32 %v1928
          %v3081 = vcvt.s32.f32 %v1929
          %v3082 = vcvt.s32.f32 %v1930
          %v3083 = vcvt.s32.f32 %v1931
          %v3084 = vcvt.s32.f32 %v1932
          %v3085 = vcvt.s32.f32 %v1933
          %v3086 = vcvt.s32.f32 %v1934
          %v3087 = vcvt.s32.f32 %v1935
          %v3088 = vcvt.s32.f32 %v1936
          %v3089 = vcvt.s32.f32 %v1937
          %v3090 = vcvt.s32.f32 %v1938
          %v3091 = vcvt.s32.f32 %v1939
          %v3092 = vcvt.s32.f32 %v1940
          %v3093 = vcvt.s32.f32 %v1941
          %v3094 = vcvt.s32.f32 %v1942
          %v3095 = vcvt.s32.f32 %v1943
          %v3096 = vcvt.s32.f32 %v1944
          %v3097 = vcvt.s32.f32 %v1945
          %v3098 = vcvt.s32.f32 %v1946
          %v3099 = vcvt.s32.f32 %v1947
          %v3100 = vcvt.s32.f32 %v1948
          %v3101 = vcvt.s32.f32 %v1949
          %v3102 = vcvt.s32.f32 %v1950
          %v3103 = vcvt.s32.f32 %v1951
          %v3104 = vcvt.s32.f32 %v1952
          %v3105 = vcvt.s32.f32 %v1953
          %v3106 = vcvt.s32.f32 %v1954
          %v3107 = vcvt.s32.f32 %v1955
          %v3108 = vcvt.s32.f32 %v1956
          %v3109 = vcvt.s32.f32 %v1957
          %v3110 = vcvt.s32.f32 %v1958
          %v3111 = vcvt.s32.f32 %v1959
          %v3112 = vcvt.s32.f32 %v1960
          %v3113 = vcvt.s32.f32 %v1961
          %v3114 = vcvt.s32.f32 %v1962
          %v3115 = vcvt.s32.f32 %v1963
          %v3116 = vcvt.s32.f32 %v1964
          %v3117 = vcvt.s32.f32 %v1965
          %v3118 = vcvt.s32.f32 %v1966
          %v3119 = vcvt.s32.f32 %v1967
          %v3120 = vcvt.s32.f32 %v1968
          %v3121 = vcvt.s32.f32 %v1969
          %v3122 = vcvt.s32.f32 %v1970
          %v3123 = vcvt.s32.f32 %v1971
          %v3124 = vcvt.s32.f32 %v1972
          %s3125 = sshra.s32 %s527, 7
          %s3126 = sand.u32 %s527, 127
          %s3127 = smul.addr %s3125, 4
          %s3128 = scalar_lea.vmem %s510, %s3127
          %v3129 = vld [vmem:[%s3128] sm:$0xff]
          %v3130 = vld [vmem:[%s3128 + $0x8] sm:$0xff]
          %v3131 = vld [vmem:[%s3128 + $0x10] sm:$0xff]
          %v3132 = vld [vmem:[%s3128 + $0x18] sm:$0xff]
          %v3133 = vld [vmem:[%s3128 + $0x20] sm:$0xff]
          %v3134 = vld [vmem:[%s3128 + $0x28] sm:$0xff]
          %v3135 = vld [vmem:[%s3128 + $0x30] sm:$0xff]
          %v3136 = vld [vmem:[%s3128 + $0x38] sm:$0xff]
          %v3137 = vld [vmem:[%s3128 + $0x40] sm:$0xff]
          %v3138 = vld [vmem:[%s3128 + $0x48] sm:$0xff]
          %v3139 = vld [vmem:[%s3128 + $0x50] sm:$0xff]
          %v3140 = vld [vmem:[%s3128 + $0x58] sm:$0xff]
          %v3141 = vld [vmem:[%s3128 + $0x60] sm:$0xff]
          %v3142 = vld [vmem:[%s3128 + $0x68] sm:$0xff]
          %v3143 = vld [vmem:[%s3128 + $0x70] sm:$0xff]
          %v3144 = vld [vmem:[%s3128 + $0x78] sm:$0xff]
          %v3145 = vld [vmem:[%s3128 + $0x80] sm:$0xff]
          %v3146 = vld [vmem:[%s3128 + $0x88] sm:$0xff]
          %v3147 = vunpack.c.l.bf16 %v3129
          %v3148 = vunpack.c.h.bf16 %v3129
          %v3149 = vunpack.c.l.bf16 %v3130
          %v3150 = vunpack.c.h.bf16 %v3130
          %v3151 = vunpack.c.l.bf16 %v3131
          %v3152 = vunpack.c.h.bf16 %v3131
          %v3153 = vunpack.c.l.bf16 %v3132
          %v3154 = vunpack.c.h.bf16 %v3132
          %v3155 = vunpack.c.l.bf16 %v3133
          %v3156 = vunpack.c.h.bf16 %v3133
          %v3157 = vunpack.c.l.bf16 %v3134
          %v3158 = vunpack.c.h.bf16 %v3134
          %v3159 = vunpack.c.l.bf16 %v3135
          %v3160 = vunpack.c.h.bf16 %v3135
          %v3161 = vunpack.c.l.bf16 %v3136
          %v3162 = vunpack.c.h.bf16 %v3136
          %v3163 = vunpack.c.l.bf16 %v3137
          %v3164 = vunpack.c.h.bf16 %v3137
          %v3165 = vunpack.c.l.bf16 %v3138
          %v3166 = vunpack.c.h.bf16 %v3138
          %v3167 = vunpack.c.l.bf16 %v3139
          %v3168 = vunpack.c.h.bf16 %v3139
          %v3169 = vunpack.c.l.bf16 %v3140
          %v3170 = vunpack.c.h.bf16 %v3140
          %v3171 = vunpack.c.l.bf16 %v3141
          %v3172 = vunpack.c.h.bf16 %v3141
          %v3173 = vunpack.c.l.bf16 %v3142
          %v3174 = vunpack.c.h.bf16 %v3142
          %v3175 = vunpack.c.l.bf16 %v3143
          %v3176 = vunpack.c.h.bf16 %v3143
          %v3177 = vunpack.c.l.bf16 %v3144
          %v3178 = vunpack.c.h.bf16 %v3144
          %v3179 = vunpack.c.l.bf16 %v3145
          %v3180 = vunpack.c.h.bf16 %v3145
          %v3181 = vunpack.c.l.bf16 %v3146
          %v3182 = vunpack.c.h.bf16 %v3146
          %3183 = vmatprep.subr.mxu0 %v1974
          %3184 = vmatpush1.msra.mxu0 %v1973
          %3185 = vmatprep.subr.mxu0 %v1976
          %3186 = vmatpush1.msra.mxu0 %v1975
          %3187 = vmatprep.subr.mxu0 %v1978
          %3188 = vmatpush1.msra.mxu0 %v1977
          %3189 = vmatprep.subr.mxu0 %v1980
          %3190 = vmatpush1.msra.mxu0 %v1979
          %3191 = vmatprep.subr.mxu0 %v1982
          %3192 = vmatpush1.msra.mxu0 %v1981
          %3193 = vmatprep.subr.mxu0 %v1984
          %3194 = vmatpush1.msra.mxu0 %v1983
          %3195 = vmatprep.subr.mxu0 %v1986
          %3196 = vmatpush1.msra.mxu0 %v1985
          %3197 = vmatprep.subr.mxu0 %v1988
          %3198 = vmatpush1.msra.mxu0 %v1987
          %3199 = vmatprep.subr.mxu0 %v1990
          %3200 = vmatpush1.msra.mxu0 %v1989
          %3201 = vmatprep.subr.mxu0 %v1992
          %3202 = vmatpush1.msra.mxu0 %v1991
          %3203 = vmatprep.subr.mxu0 %v1994
          %3204 = vmatpush1.msra.mxu0 %v1993
          %3205 = vmatprep.subr.mxu0 %v1996
          %3206 = vmatpush1.msra.mxu0 %v1995
          %3207 = vmatprep.subr.mxu0 %v1998
          %3208 = vmatpush1.msra.mxu0 %v1997
          %3209 = vmatprep.subr.mxu0 %v2000
          %3210 = vmatpush1.msra.mxu0 %v1999
          %3211 = vmatprep.subr.mxu0 %v2002
          %3212 = vmatpush1.msra.mxu0 %v2001
          %3213 = vmatprep.subr.mxu0 %v2004
          %3214 = vmatpush1.msra.mxu0 %v2003
          %3215 = vmatprep.subr.mxu0 %v2006
          %3216 = vmatpush1.msra.mxu0 %v2005
          %3217 = vmatprep.subr.mxu0 %v2008
          %3218 = vmatpush1.msra.mxu0 %v2007
          %3219 = vmatprep.subr.mxu0 %v2010
          %3220 = vmatpush1.msra.mxu0 %v2009
          %3221 = vmatprep.subr.mxu0 %v2012
          %3222 = vmatpush1.msra.mxu0 %v2011
          %3223 = vmatprep.subr.mxu0 %v2014
          %3224 = vmatpush1.msra.mxu0 %v2013
          %3225 = vmatprep.subr.mxu0 %v2016
          %3226 = vmatpush1.msra.mxu0 %v2015
          %3227 = vmatprep.subr.mxu0 %v2018
          %3228 = vmatpush1.msra.mxu0 %v2017
          %3229 = vmatprep.subr.mxu0 %v2020
          %3230 = vmatpush1.msra.mxu0 %v2019
          %3231 = vmatprep.subr.mxu0 %v2022
          %3232 = vmatpush1.msra.mxu0 %v2021
          %3233 = vmatprep.subr.mxu0 %v2024
          %3234 = vmatpush1.msra.mxu0 %v2023
          %3235 = vmatprep.subr.mxu0 %v2026
          %3236 = vmatpush1.msra.mxu0 %v2025
          %3237 = vmatprep.subr.mxu0 %v2028
          %3238 = vmatpush1.msra.mxu0 %v2027
          %3239 = vmatprep.subr.mxu0 %v2030
          %3240 = vmatpush1.msra.mxu0 %v2029
          %3241 = vmatprep.subr.mxu0 %v2032
          %3242 = vmatpush1.msra.mxu0 %v2031
          %3243 = vmatprep.subr.mxu0 %v2034
          %3244 = vmatpush1.msra.mxu0 %v2033
          %3245 = vmatprep.subr.mxu0 %v2036
          %3246 = vmatpush1.msra.mxu0 %v2035
          %3247 = vmatprep.mubr.f32.mxu0 %v3148
          %3248 = vmatmul.mubr.f32.gmra.mrb[0].mxu0 %v3147
          %v3249 = vpop.f32.mrb[0].mxu0
          %v3250 = vadd.f32 0.0, %v3249
          %v3251 = vpop.f32.mrb[0].mxu0
          %v3252 = vadd.f32 0.0, %v3251
          %3253 = vdwg.mxu0
          %3254 = vmatprep.subr.mxu0 %v2038
          %3255 = vmatpush1.msra.mxu0 %v2037
          %3256 = vmatprep.subr.mxu0 %v2040
          %3257 = vmatpush1.msra.mxu0 %v2039
          %3258 = vmatprep.subr.mxu0 %v2042
          %3259 = vmatpush1.msra.mxu0 %v2041
          %3260 = vmatprep.subr.mxu0 %v2044
          %3261 = vmatpush1.msra.mxu0 %v2043
          %3262 = vmatprep.subr.mxu0 %v2046
          %3263 = vmatpush1.msra.mxu0 %v2045
          %3264 = vmatprep.subr.mxu0 %v2048
          %3265 = vmatpush1.msra.mxu0 %v2047
          %3266 = vmatprep.subr.mxu0 %v2050
          %3267 = vmatpush1.msra.mxu0 %v2049
          %3268 = vmatprep.subr.mxu0 %v2052
          %3269 = vmatpush1.msra.mxu0 %v2051
          %3270 = vmatprep.subr.mxu0 %v2054
          %3271 = vmatpush1.msra.mxu0 %v2053
          %3272 = vmatprep.subr.mxu0 %v2056
          %3273 = vmatpush1.msra.mxu0 %v2055
          %3274 = vmatprep.subr.mxu0 %v2058
          %3275 = vmatpush1.msra.mxu0 %v2057
          %3276 = vmatprep.subr.mxu0 %v2060
          %3277 = vmatpush1.msra.mxu0 %v2059
          %3278 = vmatprep.subr.mxu0 %v2062
          %3279 = vmatpush1.msra.mxu0 %v2061
          %3280 = vmatprep.subr.mxu0 %v2064
          %3281 = vmatpush1.msra.mxu0 %v2063
          %3282 = vmatprep.subr.mxu0 %v2066
          %3283 = vmatpush1.msra.mxu0 %v2065
          %3284 = vmatprep.subr.mxu0 %v2068
          %3285 = vmatpush1.msra.mxu0 %v2067
          %3286 = vmatprep.subr.mxu0 %v2070
          %3287 = vmatpush1.msra.mxu0 %v2069
          %3288 = vmatprep.subr.mxu0 %v2072
          %3289 = vmatpush1.msra.mxu0 %v2071
          %3290 = vmatprep.subr.mxu0 %v2074
          %3291 = vmatpush1.msra.mxu0 %v2073
          %3292 = vmatprep.subr.mxu0 %v2076
          %3293 = vmatpush1.msra.mxu0 %v2075
          %3294 = vmatprep.subr.mxu0 %v2078
          %3295 = vmatpush1.msra.mxu0 %v2077
          %3296 = vmatprep.subr.mxu0 %v2080
          %3297 = vmatpush1.msra.mxu0 %v2079
          %3298 = vmatprep.subr.mxu0 %v2082
          %3299 = vmatpush1.msra.mxu0 %v2081
          %3300 = vmatprep.subr.mxu0 %v2084
          %3301 = vmatpush1.msra.mxu0 %v2083
          %3302 = vmatprep.subr.mxu0 %v2086
          %3303 = vmatpush1.msra.mxu0 %v2085
          %3304 = vmatprep.subr.mxu0 %v2088
          %3305 = vmatpush1.msra.mxu0 %v2087
          %3306 = vmatprep.subr.mxu0 %v2090
          %3307 = vmatpush1.msra.mxu0 %v2089
          %3308 = vmatprep.subr.mxu0 %v2092
          %3309 = vmatpush1.msra.mxu0 %v2091
          %3310 = vmatprep.subr.mxu0 %v2094
          %3311 = vmatpush1.msra.mxu0 %v2093
          %3312 = vmatprep.subr.mxu0 %v2096
          %3313 = vmatpush1.msra.mxu0 %v2095
          %3314 = vmatprep.subr.mxu0 %v2098
          %3315 = vmatpush1.msra.mxu0 %v2097
          %3316 = vmatprep.subr.mxu0 %v2100
          %3317 = vmatpush1.msra.mxu0 %v2099
          %3318 = vmatprep.mubr.f32.mxu0 %v3150
          %3319 = vmatmul.mubr.f32.gmra.mrb[0].mxu0 %v3149
          %v3320 = vpop.f32.mrb[0].mxu0
          %v3321 = vadd.f32 %v3250, %v3320
          %v3322 = vpop.f32.mrb[0].mxu0
          %v3323 = vadd.f32 %v3252, %v3322
          %3324 = vdwg.mxu0
          %3325 = vmatprep.subr.mxu0 %v2102
          %3326 = vmatpush1.msra.mxu0 %v2101
          %3327 = vmatprep.subr.mxu0 %v2104
          %3328 = vmatpush1.msra.mxu0 %v2103
          %3329 = vmatprep.subr.mxu0 %v2106
          %3330 = vmatpush1.msra.mxu0 %v2105
          %3331 = vmatprep.subr.mxu0 %v2108
          %3332 = vmatpush1.msra.mxu0 %v2107
          %3333 = vmatprep.subr.mxu0 %v2110
          %3334 = vmatpush1.msra.mxu0 %v2109
          %3335 = vmatprep.subr.mxu0 %v2112
          %3336 = vmatpush1.msra.mxu0 %v2111
          %3337 = vmatprep.subr.mxu0 %v2114
          %3338 = vmatpush1.msra.mxu0 %v2113
          %3339 = vmatprep.subr.mxu0 %v2116
          %3340 = vmatpush1.msra.mxu0 %v2115
          %3341 = vmatprep.subr.mxu0 %v2118
          %3342 = vmatpush1.msra.mxu0 %v2117
          %3343 = vmatprep.subr.mxu0 %v2120
          %3344 = vmatpush1.msra.mxu0 %v2119
          %3345 = vmatprep.subr.mxu0 %v2122
          %3346 = vmatpush1.msra.mxu0 %v2121
          %3347 = vmatprep.subr.mxu0 %v2124
          %3348 = vmatpush1.msra.mxu0 %v2123
          %3349 = vmatprep.subr.mxu0 %v2126
          %3350 = vmatpush1.msra.mxu0 %v2125
          %3351 = vmatprep.subr.mxu0 %v2128
          %3352 = vmatpush1.msra.mxu0 %v2127
          %3353 = vmatprep.subr.mxu0 %v2130
          %3354 = vmatpush1.msra.mxu0 %v2129
          %3355 = vmatprep.subr.mxu0 %v2132
          %3356 = vmatpush1.msra.mxu0 %v2131
          %3357 = vmatprep.subr.mxu0 %v2134
          %3358 = vmatpush1.msra.mxu0 %v2133
          %3359 = vmatprep.subr.mxu0 %v2136
          %3360 = vmatpush1.msra.mxu0 %v2135
          %3361 = vmatprep.subr.mxu0 %v2138
          %3362 = vmatpush1.msra.mxu0 %v2137
          %3363 = vmatprep.subr.mxu0 %v2140
          %3364 = vmatpush1.msra.mxu0 %v2139
          %3365 = vmatprep.subr.mxu0 %v2142
          %3366 = vmatpush1.msra.mxu0 %v2141
          %3367 = vmatprep.subr.mxu0 %v2144
          %3368 = vmatpush1.msra.mxu0 %v2143
          %3369 = vmatprep.subr.mxu0 %v2146
          %3370 = vmatpush1.msra.mxu0 %v2145
          %3371 = vmatprep.subr.mxu0 %v2148
          %3372 = vmatpush1.msra.mxu0 %v2147
          %3373 = vmatprep.subr.mxu0 %v2150
          %3374 = vmatpush1.msra.mxu0 %v2149
          %3375 = vmatprep.subr.mxu0 %v2152
          %3376 = vmatpush1.msra.mxu0 %v2151
          %3377 = vmatprep.subr.mxu0 %v2154
          %3378 = vmatpush1.msra.mxu0 %v2153
          %3379 = vmatprep.subr.mxu0 %v2156
          %3380 = vmatpush1.msra.mxu0 %v2155
          %3381 = vmatprep.subr.mxu0 %v2158
          %3382 = vmatpush1.msra.mxu0 %v2157
          %3383 = vmatprep.subr.mxu0 %v2160
          %3384 = vmatpush1.msra.mxu0 %v2159
          %3385 = vmatprep.subr.mxu0 %v2162
          %3386 = vmatpush1.msra.mxu0 %v2161
          %3387 = vmatprep.subr.mxu0 %v2164
          %3388 = vmatpush1.msra.mxu0 %v2163
          %3389 = vmatprep.mubr.f32.mxu0 %v3152
          %3390 = vmatmul.mubr.f32.gmra.mrb[0].mxu0 %v3151
          %v3391 = vpop.f32.mrb[0].mxu0
          %v3392 = vadd.f32 %v3321, %v3391
          %v3393 = vpop.f32.mrb[0].mxu0
          %v3394 = vadd.f32 %v3323, %v3393
          %3395 = vdwg.mxu0
          %3396 = vmatprep.subr.mxu0 %v2166
          %3397 = vmatpush1.msra.mxu0 %v2165
          %3398 = vmatprep.subr.mxu0 %v2168
          %3399 = vmatpush1.msra.mxu0 %v2167
          %3400 = vmatprep.subr.mxu0 %v2170
          %3401 = vmatpush1.msra.mxu0 %v2169
          %3402 = vmatprep.subr.mxu0 %v2172
          %3403 = vmatpush1.msra.mxu0 %v2171
          %3404 = vmatprep.subr.mxu0 %v2174
          %3405 = vmatpush1.msra.mxu0 %v2173
          %3406 = vmatprep.subr.mxu0 %v2176
          %3407 = vmatpush1.msra.mxu0 %v2175
          %3408 = vmatprep.subr.mxu0 %v2178
          %3409 = vmatpush1.msra.mxu0 %v2177
          %3410 = vmatprep.subr.mxu0 %v2180
          %3411 = vmatpush1.msra.mxu0 %v2179
          %3412 = vmatprep.subr.mxu0 %v2182
          %3413 = vmatpush1.msra.mxu0 %v2181
          %3414 = vmatprep.subr.mxu0 %v2184
          %3415 = vmatpush1.msra.mxu0 %v2183
          %3416 = vmatprep.subr.mxu0 %v2186
          %3417 = vmatpush1.msra.mxu0 %v2185
          %3418 = vmatprep.subr.mxu0 %v2188
          %3419 = vmatpush1.msra.mxu0 %v2187
          %3420 = vmatprep.subr.mxu0 %v2190
          %3421 = vmatpush1.msra.mxu0 %v2189
          %3422 = vmatprep.subr.mxu0 %v2192
          %3423 = vmatpush1.msra.mxu0 %v2191
          %3424 = vmatprep.subr.mxu0 %v2194
          %3425 = vmatpush1.msra.mxu0 %v2193
          %3426 = vmatprep.subr.mxu0 %v2196
          %3427 = vmatpush1.msra.mxu0 %v2195
          %3428 = vmatprep.subr.mxu0 %v2198
          %3429 = vmatpush1.msra.mxu0 %v2197
          %3430 = vmatprep.subr.mxu0 %v2200
          %3431 = vmatpush1.msra.mxu0 %v2199
          %3432 = vmatprep.subr.mxu0 %v2202
          %3433 = vmatpush1.msra.mxu0 %v2201
          %3434 = vmatprep.subr.mxu0 %v2204
          %3435 = vmatpush1.msra.mxu0 %v2203
          %3436 = vmatprep.subr.mxu0 %v2206
          %3437 = vmatpush1.msra.mxu0 %v2205
          %3438 = vmatprep.subr.mxu0 %v2208
          %3439 = vmatpush1.msra.mxu0 %v2207
          %3440 = vmatprep.subr.mxu0 %v2210
          %3441 = vmatpush1.msra.mxu0 %v2209
          %3442 = vmatprep.subr.mxu0 %v2212
          %3443 = vmatpush1.msra.mxu0 %v2211
          %3444 = vmatprep.subr.mxu0 %v2214
          %3445 = vmatpush1.msra.mxu0 %v2213
          %3446 = vmatprep.subr.mxu0 %v2216
          %3447 = vmatpush1.msra.mxu0 %v2215
          %3448 = vmatprep.subr.mxu0 %v2218
          %3449 = vmatpush1.msra.mxu0 %v2217
          %3450 = vmatprep.subr.mxu0 %v2220
          %3451 = vmatpush1.msra.mxu0 %v2219
          %3452 = vmatprep.subr.mxu0 %v2222
          %3453 = vmatpush1.msra.mxu0 %v2221
          %3454 = vmatprep.subr.mxu0 %v2224
          %3455 = vmatpush1.msra.mxu0 %v2223
          %3456 = vmatprep.subr.mxu0 %v2226
          %3457 = vmatpush1.msra.mxu0 %v2225
          %3458 = vmatprep.subr.mxu0 %v2228
          %3459 = vmatpush1.msra.mxu0 %v2227
          %3460 = vmatprep.mubr.f32.mxu0 %v3154
          %3461 = vmatmul.mubr.f32.gmra.mrb[0].mxu0 %v3153
          %v3462 = vpop.f32.mrb[0].mxu0
          %v3463 = vadd.f32 %v3392, %v3462
          %v3464 = vpop.f32.mrb[0].mxu0
          %v3465 = vadd.f32 %v3394, %v3464
          %3466 = vdwg.mxu0
          %3467 = vmatprep.subr.mxu0 %v2230
          %3468 = vmatpush1.msra.mxu0 %v2229
          %3469 = vmatprep.subr.mxu0 %v2232
          %3470 = vmatpush1.msra.mxu0 %v2231
          %3471 = vmatprep.subr.mxu0 %v2234
          %3472 = vmatpush1.msra.mxu0 %v2233
          %3473 = vmatprep.subr.mxu0 %v2236
          %3474 = vmatpush1.msra.mxu0 %v2235
          %3475 = vmatprep.subr.mxu0 %v2238
          %3476 = vmatpush1.msra.mxu0 %v2237
          %3477 = vmatprep.subr.mxu0 %v2240
          %3478 = vmatpush1.msra.mxu0 %v2239
          %3479 = vmatprep.subr.mxu0 %v2242
          %3480 = vmatpush1.msra.mxu0 %v2241
          %3481 = vmatprep.subr.mxu0 %v2244
          %3482 = vmatpush1.msra.mxu0 %v2243
          %3483 = vmatprep.subr.mxu0 %v2246
          %3484 = vmatpush1.msra.mxu0 %v2245
          %3485 = vmatprep.subr.mxu0 %v2248
          %3486 = vmatpush1.msra.mxu0 %v2247
          %3487 = vmatprep.subr.mxu0 %v2250
          %3488 = vmatpush1.msra.mxu0 %v2249
          %3489 = vmatprep.subr.mxu0 %v2252
          %3490 = vmatpush1.msra.mxu0 %v2251
          %3491 = vmatprep.subr.mxu0 %v2254
          %3492 = vmatpush1.msra.mxu0 %v2253
          %3493 = vmatprep.subr.mxu0 %v2256
          %3494 = vmatpush1.msra.mxu0 %v2255
          %3495 = vmatprep.subr.mxu0 %v2258
          %3496 = vmatpush1.msra.mxu0 %v2257
          %3497 = vmatprep.subr.mxu0 %v2260
          %3498 = vmatpush1.msra.mxu0 %v2259
          %3499 = vmatprep.subr.mxu0 %v2262
          %3500 = vmatpush1.msra.mxu0 %v2261
          %3501 = vmatprep.subr.mxu0 %v2264
          %3502 = vmatpush1.msra.mxu0 %v2263
          %3503 = vmatprep.subr.mxu0 %v2266
          %3504 = vmatpush1.msra.mxu0 %v2265
          %3505 = vmatprep.subr.mxu0 %v2268
          %3506 = vmatpush1.msra.mxu0 %v2267
          %3507 = vmatprep.subr.mxu0 %v2270
          %3508 = vmatpush1.msra.mxu0 %v2269
          %3509 = vmatprep.subr.mxu0 %v2272
          %3510 = vmatpush1.msra.mxu0 %v2271
          %3511 = vmatprep.subr.mxu0 %v2274
          %3512 = vmatpush1.msra.mxu0 %v2273
          %3513 = vmatprep.subr.mxu0 %v2276
          %3514 = vmatpush1.msra.mxu0 %v2275
          %3515 = vmatprep.subr.mxu0 %v2278
          %3516 = vmatpush1.msra.mxu0 %v2277
          %3517 = vmatprep.subr.mxu0 %v2280
          %3518 = vmatpush1.msra.mxu0 %v2279
          %3519 = vmatprep.subr.mxu0 %v2282
          %3520 = vmatpush1.msra.mxu0 %v2281
          %3521 = vmatprep.subr.mxu0 %v2284
          %3522 = vmatpush1.msra.mxu0 %v2283
          %3523 = vmatprep.subr.mxu0 %v2286
          %3524 = vmatpush1.msra.mxu0 %v2285
          %3525 = vmatprep.subr.mxu0 %v2288
          %3526 = vmatpush1.msra.mxu0 %v2287
          %3527 = vmatprep.subr.mxu0 %v2290
          %3528 = vmatpush1.msra.mxu0 %v2289
          %3529 = vmatprep.subr.mxu0 %v2292
          %3530 = vmatpush1.msra.mxu0 %v2291
          %3531 = vmatprep.mubr.f32.mxu0 %v3156
          %3532 = vmatmul.mubr.f32.gmra.mrb[0].mxu0 %v3155
          %v3533 = vpop.f32.mrb[0].mxu0
          %v3534 = vadd.f32 %v3463, %v3533
          %v3535 = vpop.f32.mrb[0].mxu0
          %v3536 = vadd.f32 %v3465, %v3535
          %3537 = vdwg.mxu0
          %3538 = vmatprep.subr.mxu0 %v2294
          %3539 = vmatpush1.msra.mxu0 %v2293
          %3540 = vmatprep.subr.mxu0 %v2296
          %3541 = vmatpush1.msra.mxu0 %v2295
          %3542 = vmatprep.subr.mxu0 %v2298
          %3543 = vmatpush1.msra.mxu0 %v2297
          %3544 = vmatprep.subr.mxu0 %v2300
          %3545 = vmatpush1.msra.mxu0 %v2299
          %3546 = vmatprep.subr.mxu0 %v2302
          %3547 = vmatpush1.msra.mxu0 %v2301
          %3548 = vmatprep.subr.mxu0 %v2304
          %3549 = vmatpush1.msra.mxu0 %v2303
          %3550 = vmatprep.subr.mxu0 %v2306
          %3551 = vmatpush1.msra.mxu0 %v2305
          %3552 = vmatprep.subr.mxu0 %v2308
          %3553 = vmatpush1.msra.mxu0 %v2307
          %3554 = vmatprep.subr.mxu0 %v2310
          %3555 = vmatpush1.msra.mxu0 %v2309
          %3556 = vmatprep.subr.mxu0 %v2312
          %3557 = vmatpush1.msra.mxu0 %v2311
          %3558 = vmatprep.subr.mxu0 %v2314
          %3559 = vmatpush1.msra.mxu0 %v2313
          %3560 = vmatprep.subr.mxu0 %v2316
          %3561 = vmatpush1.msra.mxu0 %v2315
          %3562 = vmatprep.subr.mxu0 %v2318
          %3563 = vmatpush1.msra.mxu0 %v2317
          %3564 = vmatprep.subr.mxu0 %v2320
          %3565 = vmatpush1.msra.mxu0 %v2319
          %3566 = vmatprep.subr.mxu0 %v2322
          %3567 = vmatpush1.msra.mxu0 %v2321
          %3568 = vmatprep.subr.mxu0 %v2324
          %3569 = vmatpush1.msra.mxu0 %v2323
          %3570 = vmatprep.subr.mxu0 %v2326
          %3571 = vmatpush1.msra.mxu0 %v2325
          %3572 = vmatprep.subr.mxu0 %v2328
          %3573 = vmatpush1.msra.mxu0 %v2327
          %3574 = vmatprep.subr.mxu0 %v2330
          %3575 = vmatpush1.msra.mxu0 %v2329
          %3576 = vmatprep.subr.mxu0 %v2332
          %3577 = vmatpush1.msra.mxu0 %v2331
          %3578 = vmatprep.subr.mxu0 %v2334
          %3579 = vmatpush1.msra.mxu0 %v2333
          %3580 = vmatprep.subr.mxu0 %v2336
          %3581 = vmatpush1.msra.mxu0 %v2335
          %3582 = vmatprep.subr.mxu0 %v2338
          %3583 = vmatpush1.msra.mxu0 %v2337
          %3584 = vmatprep.subr.mxu0 %v2340
          %3585 = vmatpush1.msra.mxu0 %v2339
          %3586 = vmatprep.subr.mxu0 %v2342
          %3587 = vmatpush1.msra.mxu0 %v2341
          %3588 = vmatprep.subr.mxu0 %v2344
          %3589 = vmatpush1.msra.mxu0 %v2343
          %3590 = vmatprep.subr.mxu0 %v2346
          %3591 = vmatpush1.msra.mxu0 %v2345
          %3592 = vmatprep.subr.mxu0 %v2348
          %3593 = vmatpush1.msra.mxu0 %v2347
          %3594 = vmatprep.subr.mxu0 %v2350
          %3595 = vmatpush1.msra.mxu0 %v2349
          %3596 = vmatprep.subr.mxu0 %v2352
          %3597 = vmatpush1.msra.mxu0 %v2351
          %3598 = vmatprep.subr.mxu0 %v2354
          %3599 = vmatpush1.msra.mxu0 %v2353
          %3600 = vmatprep.subr.mxu0 %v2356
          %3601 = vmatpush1.msra.mxu0 %v2355
          %3602 = vmatprep.mubr.f32.mxu0 %v3158
          %3603 = vmatmul.mubr.f32.gmra.mrb[0].mxu0 %v3157
          %v3604 = vpop.f32.mrb[0].mxu0
          %v3605 = vadd.f32 %v3534, %v3604
          %v3606 = vpop.f32.mrb[0].mxu0
          %v3607 = vadd.f32 %v3536, %v3606
          %3608 = vdwg.mxu0
          %3609 = vmatprep.subr.mxu0 %v2358
          %3610 = vmatpush1.msra.mxu0 %v2357
          %3611 = vmatprep.subr.mxu0 %v2360
          %3612 = vmatpush1.msra.mxu0 %v2359
          %3613 = vmatprep.subr.mxu0 %v2362
          %3614 = vmatpush1.msra.mxu0 %v2361
          %3615 = vmatprep.subr.mxu0 %v2364
          %3616 = vmatpush1.msra.mxu0 %v2363
          %3617 = vmatprep.subr.mxu0 %v2366
          %3618 = vmatpush1.msra.mxu0 %v2365
          %3619 = vmatprep.subr.mxu0 %v2368
          %3620 = vmatpush1.msra.mxu0 %v2367
          %3621 = vmatprep.subr.mxu0 %v2370
          %3622 = vmatpush1.msra.mxu0 %v2369
          %3623 = vmatprep.subr.mxu0 %v2372
          %3624 = vmatpush1.msra.mxu0 %v2371
          %3625 = vmatprep.subr.mxu0 %v2374
          %3626 = vmatpush1.msra.mxu0 %v2373
          %3627 = vmatprep.subr.mxu0 %v2376
          %3628 = vmatpush1.msra.mxu0 %v2375
          %3629 = vmatprep.subr.mxu0 %v2378
          %3630 = vmatpush1.msra.mxu0 %v2377
          %3631 = vmatprep.subr.mxu0 %v2380
          %3632 = vmatpush1.msra.mxu0 %v2379
          %3633 = vmatprep.subr.mxu0 %v2382
          %3634 = vmatpush1.msra.mxu0 %v2381
          %3635 = vmatprep.subr.mxu0 %v2384
          %3636 = vmatpush1.msra.mxu0 %v2383
          %3637 = vmatprep.subr.mxu0 %v2386
          %3638 = vmatpush1.msra.mxu0 %v2385
          %3639 = vmatprep.subr.mxu0 %v2388
          %3640 = vmatpush1.msra.mxu0 %v2387
          %3641 = vmatprep.subr.mxu0 %v2390
          %3642 = vmatpush1.msra.mxu0 %v2389
          %3643 = vmatprep.subr.mxu0 %v2392
          %3644 = vmatpush1.msra.mxu0 %v2391
          %3645 = vmatprep.subr.mxu0 %v2394
          %3646 = vmatpush1.msra.mxu0 %v2393
          %3647 = vmatprep.subr.mxu0 %v2396
          %3648 = vmatpush1.msra.mxu0 %v2395
          %3649 = vmatprep.subr.mxu0 %v2398
          %3650 = vmatpush1.msra.mxu0 %v2397
          %3651 = vmatprep.subr.mxu0 %v2400
          %3652 = vmatpush1.msra.mxu0 %v2399
          %3653 = vmatprep.subr.mxu0 %v2402
          %3654 = vmatpush1.msra.mxu0 %v2401
          %3655 = vmatprep.subr.mxu0 %v2404
          %3656 = vmatpush1.msra.mxu0 %v2403
          %3657 = vmatprep.subr.mxu0 %v2406
          %3658 = vmatpush1.msra.mxu0 %v2405
          %3659 = vmatprep.subr.mxu0 %v2408
          %3660 = vmatpush1.msra.mxu0 %v2407
          %3661 = vmatprep.subr.mxu0 %v2410
          %3662 = vmatpush1.msra.mxu0 %v2409
          %3663 = vmatprep.subr.mxu0 %v2412
          %3664 = vmatpush1.msra.mxu0 %v2411
          %3665 = vmatprep.subr.mxu0 %v2414
          %3666 = vmatpush1.msra.mxu0 %v2413
          %3667 = vmatprep.subr.mxu0 %v2416
          %3668 = vmatpush1.msra.mxu0 %v2415
          %3669 = vmatprep.subr.mxu0 %v2418
          %3670 = vmatpush1.msra.mxu0 %v2417
          %3671 = vmatprep.subr.mxu0 %v2420
          %3672 = vmatpush1.msra.mxu0 %v2419
          %3673 = vmatprep.mubr.f32.mxu0 %v3160
          %3674 = vmatmul.mubr.f32.gmra.mrb[0].mxu0 %v3159
          %v3675 = vpop.f32.mrb[0].mxu0
          %v3676 = vadd.f32 %v3605, %v3675
          %v3677 = vpop.f32.mrb[0].mxu0
          %v3678 = vadd.f32 %v3607, %v3677
          %3679 = vdwg.mxu0
          %3680 = vmatprep.subr.mxu0 %v2422
          %3681 = vmatpush1.msra.mxu0 %v2421
          %3682 = vmatprep.subr.mxu0 %v2424
          %3683 = vmatpush1.msra.mxu0 %v2423
          %3684 = vmatprep.subr.mxu0 %v2426
          %3685 = vmatpush1.msra.mxu0 %v2425
          %3686 = vmatprep.subr.mxu0 %v2428
          %3687 = vmatpush1.msra.mxu0 %v2427
          %3688 = vmatprep.subr.mxu0 %v2430
          %3689 = vmatpush1.msra.mxu0 %v2429
          %3690 = vmatprep.subr.mxu0 %v2432
          %3691 = vmatpush1.msra.mxu0 %v2431
          %3692 = vmatprep.subr.mxu0 %v2434
          %3693 = vmatpush1.msra.mxu0 %v2433
          %3694 = vmatprep.subr.mxu0 %v2436
          %3695 = vmatpush1.msra.mxu0 %v2435
          %3696 = vmatprep.subr.mxu0 %v2438
          %3697 = vmatpush1.msra.mxu0 %v2437
          %3698 = vmatprep.subr.mxu0 %v2440
          %3699 = vmatpush1.msra.mxu0 %v2439
          %3700 = vmatprep.subr.mxu0 %v2442
          %3701 = vmatpush1.msra.mxu0 %v2441
          %3702 = vmatprep.subr.mxu0 %v2444
          %3703 = vmatpush1.msra.mxu0 %v2443
          %3704 = vmatprep.subr.mxu0 %v2446
          %3705 = vmatpush1.msra.mxu0 %v2445
          %3706 = vmatprep.subr.mxu0 %v2448
          %3707 = vmatpush1.msra.mxu0 %v2447
          %3708 = vmatprep.subr.mxu0 %v2450
          %3709 = vmatpush1.msra.mxu0 %v2449
          %3710 = vmatprep.subr.mxu0 %v2452
          %3711 = vmatpush1.msra.mxu0 %v2451
          %3712 = vmatprep.subr.mxu0 %v2454
          %3713 = vmatpush1.msra.mxu0 %v2453
          %3714 = vmatprep.subr.mxu0 %v2456
          %3715 = vmatpush1.msra.mxu0 %v2455
          %3716 = vmatprep.subr.mxu0 %v2458
          %3717 = vmatpush1.msra.mxu0 %v2457
          %3718 = vmatprep.subr.mxu0 %v2460
          %3719 = vmatpush1.msra.mxu0 %v2459
          %3720 = vmatprep.subr.mxu0 %v2462
          %3721 = vmatpush1.msra.mxu0 %v2461
          %3722 = vmatprep.subr.mxu0 %v2464
          %3723 = vmatpush1.msra.mxu0 %v2463
          %3724 = vmatprep.subr.mxu0 %v2466
          %3725 = vmatpush1.msra.mxu0 %v2465
          %3726 = vmatprep.subr.mxu0 %v2468
          %3727 = vmatpush1.msra.mxu0 %v2467
          %3728 = vmatprep.subr.mxu0 %v2470
          %3729 = vmatpush1.msra.mxu0 %v2469
          %3730 = vmatprep.subr.mxu0 %v2472
          %3731 = vmatpush1.msra.mxu0 %v2471
          %3732 = vmatprep.subr.mxu0 %v2474
          %3733 = vmatpush1.msra.mxu0 %v2473
          %3734 = vmatprep.subr.mxu0 %v2476
          %3735 = vmatpush1.msra.mxu0 %v2475
          %3736 = vmatprep.subr.mxu0 %v2478
          %3737 = vmatpush1.msra.mxu0 %v2477
          %3738 = vmatprep.subr.mxu0 %v2480
          %3739 = vmatpush1.msra.mxu0 %v2479
          %3740 = vmatprep.subr.mxu0 %v2482
          %3741 = vmatpush1.msra.mxu0 %v2481
          %3742 = vmatprep.subr.mxu0 %v2484
          %3743 = vmatpush1.msra.mxu0 %v2483
          %3744 = vmatprep.mubr.f32.mxu0 %v3162
          %3745 = vmatmul.mubr.f32.gmra.mrb[0].mxu0 %v3161
          %v3746 = vpop.f32.mrb[0].mxu0
          %v3747 = vadd.f32 %v3676, %v3746
          %v3748 = vpop.f32.mrb[0].mxu0
          %v3749 = vadd.f32 %v3678, %v3748
          %3750 = vdwg.mxu0
          %3751 = vmatprep.subr.mxu0 %v2486
          %3752 = vmatpush1.msra.mxu0 %v2485
          %3753 = vmatprep.subr.mxu0 %v2488
          %3754 = vmatpush1.msra.mxu0 %v2487
          %3755 = vmatprep.subr.mxu0 %v2490
          %3756 = vmatpush1.msra.mxu0 %v2489
          %3757 = vmatprep.subr.mxu0 %v2492
          %3758 = vmatpush1.msra.mxu0 %v2491
          %3759 = vmatprep.subr.mxu0 %v2494
          %3760 = vmatpush1.msra.mxu0 %v2493
          %3761 = vmatprep.subr.mxu0 %v2496
          %3762 = vmatpush1.msra.mxu0 %v2495
          %3763 = vmatprep.subr.mxu0 %v2498
          %3764 = vmatpush1.msra.mxu0 %v2497
          %3765 = vmatprep.subr.mxu0 %v2500
          %3766 = vmatpush1.msra.mxu0 %v2499
          %3767 = vmatprep.subr.mxu0 %v2502
          %3768 = vmatpush1.msra.mxu0 %v2501
          %3769 = vmatprep.subr.mxu0 %v2504
          %3770 = vmatpush1.msra.mxu0 %v2503
          %3771 = vmatprep.subr.mxu0 %v2506
          %3772 = vmatpush1.msra.mxu0 %v2505
          %3773 = vmatprep.subr.mxu0 %v2508
          %3774 = vmatpush1.msra.mxu0 %v2507
          %3775 = vmatprep.subr.mxu0 %v2510
          %3776 = vmatpush1.msra.mxu0 %v2509
          %3777 = vmatprep.subr.mxu0 %v2512
          %3778 = vmatpush1.msra.mxu0 %v2511
          %3779 = vmatprep.subr.mxu0 %v2514
          %3780 = vmatpush1.msra.mxu0 %v2513
          %3781 = vmatprep.subr.mxu0 %v2516
          %3782 = vmatpush1.msra.mxu0 %v2515
          %3783 = vmatprep.subr.mxu0 %v2518
          %3784 = vmatpush1.msra.mxu0 %v2517
          %3785 = vmatprep.subr.mxu0 %v2520
          %3786 = vmatpush1.msra.mxu0 %v2519
          %3787 = vmatprep.subr.mxu0 %v2522
          %3788 = vmatpush1.msra.mxu0 %v2521
          %3789 = vmatprep.subr.mxu0 %v2524
          %3790 = vmatpush1.msra.mxu0 %v2523
          %3791 = vmatprep.subr.mxu0 %v2526
          %3792 = vmatpush1.msra.mxu0 %v2525
          %3793 = vmatprep.subr.mxu0 %v2528
          %3794 = vmatpush1.msra.mxu0 %v2527
          %3795 = vmatprep.subr.mxu0 %v2530
          %3796 = vmatpush1.msra.mxu0 %v2529
          %3797 = vmatprep.subr.mxu0 %v2532
          %3798 = vmatpush1.msra.mxu0 %v2531
          %3799 = vmatprep.subr.mxu0 %v2534
          %3800 = vmatpush1.msra.mxu0 %v2533
          %3801 = vmatprep.subr.mxu0 %v2536
          %3802 = vmatpush1.msra.mxu0 %v2535
          %3803 = vmatprep.subr.mxu0 %v2538
          %3804 = vmatpush1.msra.mxu0 %v2537
          %3805 = vmatprep.subr.mxu0 %v2540
          %3806 = vmatpush1.msra.mxu0 %v2539
          %3807 = vmatprep.subr.mxu0 %v2542
          %3808 = vmatpush1.msra.mxu0 %v2541
          %3809 = vmatprep.subr.mxu0 %v2544
          %3810 = vmatpush1.msra.mxu0 %v2543
          %3811 = vmatprep.subr.mxu0 %v2546
          %3812 = vmatpush1.msra.mxu0 %v2545
          %3813 = vmatprep.subr.mxu0 %v2548
          %3814 = vmatpush1.msra.mxu0 %v2547
          %3815 = vmatprep.mubr.f32.mxu0 %v3164
          %3816 = vmatmul.mubr.f32.gmra.mrb[0].mxu0 %v3163
          %v3817 = vpop.f32.mrb[0].mxu0
          %v3818 = vadd.f32 %v3747, %v3817
          %v3819 = vpop.f32.mrb[0].mxu0
          %v3820 = vadd.f32 %v3749, %v3819
          %3821 = vdwg.mxu0
          %3822 = vmatprep.subr.mxu0 %v2550
          %3823 = vmatpush1.msra.mxu0 %v2549
          %3824 = vmatprep.subr.mxu0 %v2552
          %3825 = vmatpush1.msra.mxu0 %v2551
          %3826 = vmatprep.subr.mxu0 %v2554
          %3827 = vmatpush1.msra.mxu0 %v2553
          %3828 = vmatprep.subr.mxu0 %v2556
          %3829 = vmatpush1.msra.mxu0 %v2555
          %3830 = vmatprep.subr.mxu0 %v2558
          %3831 = vmatpush1.msra.mxu0 %v2557
          %3832 = vmatprep.subr.mxu0 %v2560
          %3833 = vmatpush1.msra.mxu0 %v2559
          %3834 = vmatprep.subr.mxu0 %v2562
          %3835 = vmatpush1.msra.mxu0 %v2561
          %3836 = vmatprep.subr.mxu0 %v2564
          %3837 = vmatpush1.msra.mxu0 %v2563
          %3838 = vmatprep.subr.mxu0 %v2566
          %3839 = vmatpush1.msra.mxu0 %v2565
          %3840 = vmatprep.subr.mxu0 %v2568
          %3841 = vmatpush1.msra.mxu0 %v2567
          %3842 = vmatprep.subr.mxu0 %v2570
          %3843 = vmatpush1.msra.mxu0 %v2569
          %3844 = vmatprep.subr.mxu0 %v2572
          %3845 = vmatpush1.msra.mxu0 %v2571
          %3846 = vmatprep.subr.mxu0 %v2574
          %3847 = vmatpush1.msra.mxu0 %v2573
          %3848 = vmatprep.subr.mxu0 %v2576
          %3849 = vmatpush1.msra.mxu0 %v2575
          %3850 = vmatprep.subr.mxu0 %v2578
          %3851 = vmatpush1.msra.mxu0 %v2577
          %3852 = vmatprep.subr.mxu0 %v2580
          %3853 = vmatpush1.msra.mxu0 %v2579
          %3854 = vmatprep.subr.mxu0 %v2582
          %3855 = vmatpush1.msra.mxu0 %v2581
          %3856 = vmatprep.subr.mxu0 %v2584
          %3857 = vmatpush1.msra.mxu0 %v2583
          %3858 = vmatprep.subr.mxu0 %v2586
          %3859 = vmatpush1.msra.mxu0 %v2585
          %3860 = vmatprep.subr.mxu0 %v2588
          %3861 = vmatpush1.msra.mxu0 %v2587
          %3862 = vmatprep.subr.mxu0 %v2590
          %3863 = vmatpush1.msra.mxu0 %v2589
          %3864 = vmatprep.subr.mxu0 %v2592
          %3865 = vmatpush1.msra.mxu0 %v2591
          %3866 = vmatprep.subr.mxu0 %v2594
          %3867 = vmatpush1.msra.mxu0 %v2593
          %3868 = vmatprep.subr.mxu0 %v2596
          %3869 = vmatpush1.msra.mxu0 %v2595
          %3870 = vmatprep.subr.mxu0 %v2598
          %3871 = vmatpush1.msra.mxu0 %v2597
          %3872 = vmatprep.subr.mxu0 %v2600
          %3873 = vmatpush1.msra.mxu0 %v2599
          %3874 = vmatprep.subr.mxu0 %v2602
          %3875 = vmatpush1.msra.mxu0 %v2601
          %3876 = vmatprep.subr.mxu0 %v2604
          %3877 = vmatpush1.msra.mxu0 %v2603
          %3878 = vmatprep.subr.mxu0 %v2606
          %3879 = vmatpush1.msra.mxu0 %v2605
          %3880 = vmatprep.subr.mxu0 %v2608
          %3881 = vmatpush1.msra.mxu0 %v2607
          %3882 = vmatprep.subr.mxu0 %v2610
          %3883 = vmatpush1.msra.mxu0 %v2609
          %3884 = vmatprep.subr.mxu0 %v2612
          %3885 = vmatpush1.msra.mxu0 %v2611
          %3886 = vmatprep.mubr.f32.mxu0 %v3166
          %3887 = vmatmul.mubr.f32.gmra.mrb[0].mxu0 %v3165
          %v3888 = vpop.f32.mrb[0].mxu0
          %v3889 = vadd.f32 %v3818, %v3888
          %v3890 = vpop.f32.mrb[0].mxu0
          %v3891 = vadd.f32 %v3820, %v3890
          %3892 = vdwg.mxu0
          %3893 = vmatprep.subr.mxu0 %v2614
          %3894 = vmatpush1.msra.mxu0 %v2613
          %3895 = vmatprep.subr.mxu0 %v2616
          %3896 = vmatpush1.msra.mxu0 %v2615
          %3897 = vmatprep.subr.mxu0 %v2618
          %3898 = vmatpush1.msra.mxu0 %v2617
          %3899 = vmatprep.subr.mxu0 %v2620
          %3900 = vmatpush1.msra.mxu0 %v2619
          %3901 = vmatprep.subr.mxu0 %v2622
          %3902 = vmatpush1.msra.mxu0 %v2621
          %3903 = vmatprep.subr.mxu0 %v2624
          %3904 = vmatpush1.msra.mxu0 %v2623
          %3905 = vmatprep.subr.mxu0 %v2626
          %3906 = vmatpush1.msra.mxu0 %v2625
          %3907 = vmatprep.subr.mxu0 %v2628
          %3908 = vmatpush1.msra.mxu0 %v2627
          %3909 = vmatprep.subr.mxu0 %v2630
          %3910 = vmatpush1.msra.mxu0 %v2629
          %3911 = vmatprep.subr.mxu0 %v2632
          %3912 = vmatpush1.msra.mxu0 %v2631
          %3913 = vmatprep.subr.mxu0 %v2634
          %3914 = vmatpush1.msra.mxu0 %v2633
          %3915 = vmatprep.subr.mxu0 %v2636
          %3916 = vmatpush1.msra.mxu0 %v2635
          %3917 = vmatprep.subr.mxu0 %v2638
          %3918 = vmatpush1.msra.mxu0 %v2637
          %3919 = vmatprep.subr.mxu0 %v2640
          %3920 = vmatpush1.msra.mxu0 %v2639
          %3921 = vmatprep.subr.mxu0 %v2642
          %3922 = vmatpush1.msra.mxu0 %v2641
          %3923 = vmatprep.subr.mxu0 %v2644
          %3924 = vmatpush1.msra.mxu0 %v2643
          %3925 = vmatprep.subr.mxu0 %v2646
          %3926 = vmatpush1.msra.mxu0 %v2645
          %3927 = vmatprep.subr.mxu0 %v2648
          %3928 = vmatpush1.msra.mxu0 %v2647
          %3929 = vmatprep.subr.mxu0 %v2650
          %3930 = vmatpush1.msra.mxu0 %v2649
          %3931 = vmatprep.subr.mxu0 %v2652
          %3932 = vmatpush1.msra.mxu0 %v2651
          %3933 = vmatprep.subr.mxu0 %v2654
          %3934 = vmatpush1.msra.mxu0 %v2653
          %3935 = vmatprep.subr.mxu0 %v2656
          %3936 = vmatpush1.msra.mxu0 %v2655
          %3937 = vmatprep.subr.mxu0 %v2658
          %3938 = vmatpush1.msra.mxu0 %v2657
          %3939 = vmatprep.subr.mxu0 %v2660
          %3940 = vmatpush1.msra.mxu0 %v2659
          %3941 = vmatprep.subr.mxu0 %v2662
          %3942 = vmatpush1.msra.mxu0 %v2661
          %3943 = vmatprep.subr.mxu0 %v2664
          %3944 = vmatpush1.msra.mxu0 %v2663
          %3945 = vmatprep.subr.mxu0 %v2666
          %3946 = vmatpush1.msra.mxu0 %v2665
          %3947 = vmatprep.subr.mxu0 %v2668
          %3948 = vmatpush1.msra.mxu0 %v2667
          %3949 = vmatprep.subr.mxu0 %v2670
          %3950 = vmatpush1.msra.mxu0 %v2669
          %3951 = vmatprep.subr.mxu0 %v2672
          %3952 = vmatpush1.msra.mxu0 %v2671
          %3953 = vmatprep.subr.mxu0 %v2674
          %3954 = vmatpush1.msra.mxu0 %v2673
          %3955 = vmatprep.subr.mxu0 %v2676
          %3956 = vmatpush1.msra.mxu0 %v2675
          %3957 = vmatprep.mubr.f32.mxu0 %v3168
          %3958 = vmatmul.mubr.f32.gmra.mrb[0].mxu0 %v3167
          %v3959 = vpop.f32.mrb[0].mxu0
          %v3960 = vadd.f32 %v3889, %v3959
          %v3961 = vpop.f32.mrb[0].mxu0
          %v3962 = vadd.f32 %v3891, %v3961
          %3963 = vdwg.mxu0
          %3964 = vmatprep.subr.mxu0 %v2678
          %3965 = vmatpush1.msra.mxu0 %v2677
          %3966 = vmatprep.subr.mxu0 %v2680
          %3967 = vmatpush1.msra.mxu0 %v2679
          %3968 = vmatprep.subr.mxu0 %v2682
          %3969 = vmatpush1.msra.mxu0 %v2681
          %3970 = vmatprep.subr.mxu0 %v2684
          %3971 = vmatpush1.msra.mxu0 %v2683
          %3972 = vmatprep.subr.mxu0 %v2686
          %3973 = vmatpush1.msra.mxu0 %v2685
          %3974 = vmatprep.subr.mxu0 %v2688
          %3975 = vmatpush1.msra.mxu0 %v2687
          %3976 = vmatprep.subr.mxu0 %v2690
          %3977 = vmatpush1.msra.mxu0 %v2689
          %3978 = vmatprep.subr.mxu0 %v2692
          %3979 = vmatpush1.msra.mxu0 %v2691
          %3980 = vmatprep.subr.mxu0 %v2694
          %3981 = vmatpush1.msra.mxu0 %v2693
          %3982 = vmatprep.subr.mxu0 %v2696
          %3983 = vmatpush1.msra.mxu0 %v2695
          %3984 = vmatprep.subr.mxu0 %v2698
          %3985 = vmatpush1.msra.mxu0 %v2697
          %3986 = vmatprep.subr.mxu0 %v2700
          %3987 = vmatpush1.msra.mxu0 %v2699
          %3988 = vmatprep.subr.mxu0 %v2702
          %3989 = vmatpush1.msra.mxu0 %v2701
          %3990 = vmatprep.subr.mxu0 %v2704
          %3991 = vmatpush1.msra.mxu0 %v2703
          %3992 = vmatprep.subr.mxu0 %v2706
          %3993 = vmatpush1.msra.mxu0 %v2705
          %3994 = vmatprep.subr.mxu0 %v2708
          %3995 = vmatpush1.msra.mxu0 %v2707
          %3996 = vmatprep.subr.mxu0 %v2710
          %3997 = vmatpush1.msra.mxu0 %v2709
          %3998 = vmatprep.subr.mxu0 %v2712
          %3999 = vmatpush1.msra.mxu0 %v2711
          %4000 = vmatprep.subr.mxu0 %v2714
          %4001 = vmatpush1.msra.mxu0 %v2713
          %4002 = vmatprep.subr.mxu0 %v2716
          %4003 = vmatpush1.msra.mxu0 %v2715
          %4004 = vmatprep.subr.mxu0 %v2718
          %4005 = vmatpush1.msra.mxu0 %v2717
          %4006 = vmatprep.subr.mxu0 %v2720
          %4007 = vmatpush1.msra.mxu0 %v2719
          %4008 = vmatprep.subr.mxu0 %v2722
          %4009 = vmatpush1.msra.mxu0 %v2721
          %4010 = vmatprep.subr.mxu0 %v2724
          %4011 = vmatpush1.msra.mxu0 %v2723
          %4012 = vmatprep.subr.mxu0 %v2726
          %4013 = vmatpush1.msra.mxu0 %v2725
          %4014 = vmatprep.subr.mxu0 %v2728
          %4015 = vmatpush1.msra.mxu0 %v2727
          %4016 = vmatprep.subr.mxu0 %v2730
          %4017 = vmatpush1.msra.mxu0 %v2729
          %4018 = vmatprep.subr.mxu0 %v2732
          %4019 = vmatpush1.msra.mxu0 %v2731
          %4020 = vmatprep.subr.mxu0 %v2734
          %4021 = vmatpush1.msra.mxu0 %v2733
          %4022 = vmatprep.subr.mxu0 %v2736
          %4023 = vmatpush1.msra.mxu0 %v2735
          %4024 = vmatprep.subr.mxu0 %v2738
          %4025 = vmatpush1.msra.mxu0 %v2737
          %4026 = vmatprep.subr.mxu0 %v2740
          %4027 = vmatpush1.msra.mxu0 %v2739
          %4028 = vmatprep.mubr.f32.mxu0 %v3170
          %4029 = vmatmul.mubr.f32.gmra.mrb[0].mxu0 %v3169
          %v4030 = vpop.f32.mrb[0].mxu0
          %v4031 = vadd.f32 %v3960, %v4030
          %v4032 = vpop.f32.mrb[0].mxu0
          %v4033 = vadd.f32 %v3962, %v4032
          %4034 = vdwg.mxu0
          %4035 = vmatprep.subr.mxu0 %v2742
          %4036 = vmatpush1.msra.mxu0 %v2741
          %4037 = vmatprep.subr.mxu0 %v2744
          %4038 = vmatpush1.msra.mxu0 %v2743
          %4039 = vmatprep.subr.mxu0 %v2746
          %4040 = vmatpush1.msra.mxu0 %v2745
          %4041 = vmatprep.subr.mxu0 %v2748
          %4042 = vmatpush1.msra.mxu0 %v2747
          %4043 = vmatprep.subr.mxu0 %v2750
          %4044 = vmatpush1.msra.mxu0 %v2749
          %4045 = vmatprep.subr.mxu0 %v2752
          %4046 = vmatpush1.msra.mxu0 %v2751
          %4047 = vmatprep.subr.mxu0 %v2754
          %4048 = vmatpush1.msra.mxu0 %v2753
          %4049 = vmatprep.subr.mxu0 %v2756
          %4050 = vmatpush1.msra.mxu0 %v2755
          %4051 = vmatprep.subr.mxu0 %v2758
          %4052 = vmatpush1.msra.mxu0 %v2757
          %4053 = vmatprep.subr.mxu0 %v2760
          %4054 = vmatpush1.msra.mxu0 %v2759
          %4055 = vmatprep.subr.mxu0 %v2762
          %4056 = vmatpush1.msra.mxu0 %v2761
          %4057 = vmatprep.subr.mxu0 %v2764
          %4058 = vmatpush1.msra.mxu0 %v2763
          %4059 = vmatprep.subr.mxu0 %v2766
          %4060 = vmatpush1.msra.mxu0 %v2765
          %4061 = vmatprep.subr.mxu0 %v2768
          %4062 = vmatpush1.msra.mxu0 %v2767
          %4063 = vmatprep.subr.mxu0 %v2770
          %4064 = vmatpush1.msra.mxu0 %v2769
          %4065 = vmatprep.subr.mxu0 %v2772
          %4066 = vmatpush1.msra.mxu0 %v2771
          %4067 = vmatprep.subr.mxu0 %v2774
          %4068 = vmatpush1.msra.mxu0 %v2773
          %4069 = vmatprep.subr.mxu0 %v2776
          %4070 = vmatpush1.msra.mxu0 %v2775
          %4071 = vmatprep.subr.mxu0 %v2778
          %4072 = vmatpush1.msra.mxu0 %v2777
          %4073 = vmatprep.subr.mxu0 %v2780
          %4074 = vmatpush1.msra.mxu0 %v2779
          %4075 = vmatprep.subr.mxu0 %v2782
          %4076 = vmatpush1.msra.mxu0 %v2781
          %4077 = vmatprep.subr.mxu0 %v2784
          %4078 = vmatpush1.msra.mxu0 %v2783
          %4079 = vmatprep.subr.mxu0 %v2786
          %4080 = vmatpush1.msra.mxu0 %v2785
          %4081 = vmatprep.subr.mxu0 %v2788
          %4082 = vmatpush1.msra.mxu0 %v2787
          %4083 = vmatprep.subr.mxu0 %v2790
          %4084 = vmatpush1.msra.mxu0 %v2789
          %4085 = vmatprep.subr.mxu0 %v2792
          %4086 = vmatpush1.msra.mxu0 %v2791
          %4087 = vmatprep.subr.mxu0 %v2794
          %4088 = vmatpush1.msra.mxu0 %v2793
          %4089 = vmatprep.subr.mxu0 %v2796
          %4090 = vmatpush1.msra.mxu0 %v2795
          %4091 = vmatprep.subr.mxu0 %v2798
          %4092 = vmatpush1.msra.mxu0 %v2797
          %4093 = vmatprep.subr.mxu0 %v2800
          %4094 = vmatpush1.msra.mxu0 %v2799
          %4095 = vmatprep.subr.mxu0 %v2802
          %4096 = vmatpush1.msra.mxu0 %v2801
          %4097 = vmatprep.subr.mxu0 %v2804
          %4098 = vmatpush1.msra.mxu0 %v2803
          %4099 = vmatprep.mubr.f32.mxu0 %v3172
          %4100 = vmatmul.mubr.f32.gmra.mrb[0].mxu0 %v3171
          %v4101 = vpop.f32.mrb[0].mxu0
          %v4102 = vadd.f32 %v4031, %v4101
          %v4103 = vpop.f32.mrb[0].mxu0
          %v4104 = vadd.f32 %v4033, %v4103
          %4105 = vdwg.mxu0
          %4106 = vmatprep.subr.mxu0 %v2806
          %4107 = vmatpush1.msra.mxu0 %v2805
          %4108 = vmatprep.subr.mxu0 %v2808
          %4109 = vmatpush1.msra.mxu0 %v2807
          %4110 = vmatprep.subr.mxu0 %v2810
          %4111 = vmatpush1.msra.mxu0 %v2809
          %4112 = vmatprep.subr.mxu0 %v2812
          %4113 = vmatpush1.msra.mxu0 %v2811
          %4114 = vmatprep.subr.mxu0 %v2814
          %4115 = vmatpush1.msra.mxu0 %v2813
          %4116 = vmatprep.subr.mxu0 %v2816
          %4117 = vmatpush1.msra.mxu0 %v2815
          %4118 = vmatprep.subr.mxu0 %v2818
          %4119 = vmatpush1.msra.mxu0 %v2817
          %4120 = vmatprep.subr.mxu0 %v2820
          %4121 = vmatpush1.msra.mxu0 %v2819
          %4122 = vmatprep.subr.mxu0 %v2822
          %4123 = vmatpush1.msra.mxu0 %v2821
          %4124 = vmatprep.subr.mxu0 %v2824
          %4125 = vmatpush1.msra.mxu0 %v2823
          %4126 = vmatprep.subr.mxu0 %v2826
          %4127 = vmatpush1.msra.mxu0 %v2825
          %4128 = vmatprep.subr.mxu0 %v2828
          %4129 = vmatpush1.msra.mxu0 %v2827
          %4130 = vmatprep.subr.mxu0 %v2830
          %4131 = vmatpush1.msra.mxu0 %v2829
          %4132 = vmatprep.subr.mxu0 %v2832
          %4133 = vmatpush1.msra.mxu0 %v2831
          %4134 = vmatprep.subr.mxu0 %v2834
          %4135 = vmatpush1.msra.mxu0 %v2833
          %4136 = vmatprep.subr.mxu0 %v2836
          %4137 = vmatpush1.msra.mxu0 %v2835
          %4138 = vmatprep.subr.mxu0 %v2838
          %4139 = vmatpush1.msra.mxu0 %v2837
          %4140 = vmatprep.subr.mxu0 %v2840
          %4141 = vmatpush1.msra.mxu0 %v2839
          %4142 = vmatprep.subr.mxu0 %v2842
          %4143 = vmatpush1.msra.mxu0 %v2841
          %4144 = vmatprep.subr.mxu0 %v2844
          %4145 = vmatpush1.msra.mxu0 %v2843
          %4146 = vmatprep.subr.mxu0 %v2846
          %4147 = vmatpush1.msra.mxu0 %v2845
          %4148 = vmatprep.subr.mxu0 %v2848
          %4149 = vmatpush1.msra.mxu0 %v2847
          %4150 = vmatprep.subr.mxu0 %v2850
          %4151 = vmatpush1.msra.mxu0 %v2849
          %4152 = vmatprep.subr.mxu0 %v2852
          %4153 = vmatpush1.msra.mxu0 %v2851
          %4154 = vmatprep.subr.mxu0 %v2854
          %4155 = vmatpush1.msra.mxu0 %v2853
          %4156 = vmatprep.subr.mxu0 %v2856
          %4157 = vmatpush1.msra.mxu0 %v2855
          %4158 = vmatprep.subr.mxu0 %v2858
          %4159 = vmatpush1.msra.mxu0 %v2857
          %4160 = vmatprep.subr.mxu0 %v2860
          %4161 = vmatpush1.msra.mxu0 %v2859
          %4162 = vmatprep.subr.mxu0 %v2862
          %4163 = vmatpush1.msra.mxu0 %v2861
          %4164 = vmatprep.subr.mxu0 %v2864
          %4165 = vmatpush1.msra.mxu0 %v2863
          %4166 = vmatprep.subr.mxu0 %v2866
          %4167 = vmatpush1.msra.mxu0 %v2865
          %4168 = vmatprep.subr.mxu0 %v2868
          %4169 = vmatpush1.msra.mxu0 %v2867
          %4170 = vmatprep.mubr.f32.mxu0 %v3174
          %4171 = vmatmul.mubr.f32.gmra.mrb[0].mxu0 %v3173
          %v4172 = vpop.f32.mrb[0].mxu0
          %v4173 = vadd.f32 %v4102, %v4172
          %v4174 = vpop.f32.mrb[0].mxu0
          %v4175 = vadd.f32 %v4104, %v4174
          %4176 = vdwg.mxu0
          %4177 = vmatprep.subr.mxu0 %v2870
          %4178 = vmatpush1.msra.mxu0 %v2869
          %4179 = vmatprep.subr.mxu0 %v2872
          %4180 = vmatpush1.msra.mxu0 %v2871
          %4181 = vmatprep.subr.mxu0 %v2874
          %4182 = vmatpush1.msra.mxu0 %v2873
          %4183 = vmatprep.subr.mxu0 %v2876
          %4184 = vmatpush1.msra.mxu0 %v2875
          %4185 = vmatprep.subr.mxu0 %v2878
          %4186 = vmatpush1.msra.mxu0 %v2877
          %4187 = vmatprep.subr.mxu0 %v2880
          %4188 = vmatpush1.msra.mxu0 %v2879
          %4189 = vmatprep.subr.mxu0 %v2882
          %4190 = vmatpush1.msra.mxu0 %v2881
          %4191 = vmatprep.subr.mxu0 %v2884
          %4192 = vmatpush1.msra.mxu0 %v2883
          %4193 = vmatprep.subr.mxu0 %v2886
          %4194 = vmatpush1.msra.mxu0 %v2885
          %4195 = vmatprep.subr.mxu0 %v2888
          %4196 = vmatpush1.msra.mxu0 %v2887
          %4197 = vmatprep.subr.mxu0 %v2890
          %4198 = vmatpush1.msra.mxu0 %v2889
          %4199 = vmatprep.subr.mxu0 %v2892
          %4200 = vmatpush1.msra.mxu0 %v2891
          %4201 = vmatprep.subr.mxu0 %v2894
          %4202 = vmatpush1.msra.mxu0 %v2893
          %4203 = vmatprep.subr.mxu0 %v2896
          %4204 = vmatpush1.msra.mxu0 %v2895
          %4205 = vmatprep.subr.mxu0 %v2898
          %4206 = vmatpush1.msra.mxu0 %v2897
          %4207 = vmatprep.subr.mxu0 %v2900
          %4208 = vmatpush1.msra.mxu0 %v2899
          %4209 = vmatprep.subr.mxu0 %v2902
          %4210 = vmatpush1.msra.mxu0 %v2901
          %4211 = vmatprep.subr.mxu0 %v2904
          %4212 = vmatpush1.msra.mxu0 %v2903
          %4213 = vmatprep.subr.mxu0 %v2906
          %4214 = vmatpush1.msra.mxu0 %v2905
          %4215 = vmatprep.subr.mxu0 %v2908
          %4216 = vmatpush1.msra.mxu0 %v2907
          %4217 = vmatprep.subr.mxu0 %v2910
          %4218 = vmatpush1.msra.mxu0 %v2909
          %4219 = vmatprep.subr.mxu0 %v2912
          %4220 = vmatpush1.msra.mxu0 %v2911
          %4221 = vmatprep.subr.mxu0 %v2914
          %4222 = vmatpush1.msra.mxu0 %v2913
          %4223 = vmatprep.subr.mxu0 %v2916
          %4224 = vmatpush1.msra.mxu0 %v2915
          %4225 = vmatprep.subr.mxu0 %v2918
          %4226 = vmatpush1.msra.mxu0 %v2917
          %4227 = vmatprep.subr.mxu0 %v2920
          %4228 = vmatpush1.msra.mxu0 %v2919
          %4229 = vmatprep.subr.mxu0 %v2922
          %4230 = vmatpush1.msra.mxu0 %v2921
          %4231 = vmatprep.subr.mxu0 %v2924
          %4232 = vmatpush1.msra.mxu0 %v2923
          %4233 = vmatprep.subr.mxu0 %v2926
          %4234 = vmatpush1.msra.mxu0 %v2925
          %4235 = vmatprep.subr.mxu0 %v2928
          %4236 = vmatpush1.msra.mxu0 %v2927
          %4237 = vmatprep.subr.mxu0 %v2930
          %4238 = vmatpush1.msra.mxu0 %v2929
          %4239 = vmatprep.subr.mxu0 %v2932
          %4240 = vmatpush1.msra.mxu0 %v2931
          %4241 = vmatprep.mubr.f32.mxu0 %v3176
          %4242 = vmatmul.mubr.f32.gmra.mrb[0].mxu0 %v3175
          %v4243 = vpop.f32.mrb[0].mxu0
          %v4244 = vadd.f32 %v4173, %v4243
          %v4245 = vpop.f32.mrb[0].mxu0
          %v4246 = vadd.f32 %v4175, %v4245
          %4247 = vdwg.mxu0
          %4248 = vmatprep.subr.mxu0 %v2934
          %4249 = vmatpush1.msra.mxu0 %v2933
          %4250 = vmatprep.subr.mxu0 %v2936
          %4251 = vmatpush1.msra.mxu0 %v2935
          %4252 = vmatprep.subr.mxu0 %v2938
          %4253 = vmatpush1.msra.mxu0 %v2937
          %4254 = vmatprep.subr.mxu0 %v2940
          %4255 = vmatpush1.msra.mxu0 %v2939
          %4256 = vmatprep.subr.mxu0 %v2942
          %4257 = vmatpush1.msra.mxu0 %v2941
          %4258 = vmatprep.subr.mxu0 %v2944
          %4259 = vmatpush1.msra.mxu0 %v2943
          %4260 = vmatprep.subr.mxu0 %v2946
          %4261 = vmatpush1.msra.mxu0 %v2945
          %4262 = vmatprep.subr.mxu0 %v2948
          %4263 = vmatpush1.msra.mxu0 %v2947
          %4264 = vmatprep.subr.mxu0 %v2950
          %4265 = vmatpush1.msra.mxu0 %v2949
          %4266 = vmatprep.subr.mxu0 %v2952
          %4267 = vmatpush1.msra.mxu0 %v2951
          %4268 = vmatprep.subr.mxu0 %v2954
          %4269 = vmatpush1.msra.mxu0 %v2953
          %4270 = vmatprep.subr.mxu0 %v2956
          %4271 = vmatpush1.msra.mxu0 %v2955
          %4272 = vmatprep.subr.mxu0 %v2958
          %4273 = vmatpush1.msra.mxu0 %v2957
          %4274 = vmatprep.subr.mxu0 %v2960
          %4275 = vmatpush1.msra.mxu0 %v2959
          %4276 = vmatprep.subr.mxu0 %v2962
          %4277 = vmatpush1.msra.mxu0 %v2961
          %4278 = vmatprep.subr.mxu0 %v2964
          %4279 = vmatpush1.msra.mxu0 %v2963
          %4280 = vmatprep.subr.mxu0 %v2966
          %4281 = vmatpush1.msra.mxu0 %v2965
          %4282 = vmatprep.subr.mxu0 %v2968
          %4283 = vmatpush1.msra.mxu0 %v2967
          %4284 = vmatprep.subr.mxu0 %v2970
          %4285 = vmatpush1.msra.mxu0 %v2969
          %4286 = vmatprep.subr.mxu0 %v2972
          %4287 = vmatpush1.msra.mxu0 %v2971
          %4288 = vmatprep.subr.mxu0 %v2974
          %4289 = vmatpush1.msra.mxu0 %v2973
          %4290 = vmatprep.subr.mxu0 %v2976
          %4291 = vmatpush1.msra.mxu0 %v2975
          %4292 = vmatprep.subr.mxu0 %v2978
          %4293 = vmatpush1.msra.mxu0 %v2977
          %4294 = vmatprep.subr.mxu0 %v2980
          %4295 = vmatpush1.msra.mxu0 %v2979
          %4296 = vmatprep.subr.mxu0 %v2982
          %4297 = vmatpush1.msra.mxu0 %v2981
          %4298 = vmatprep.subr.mxu0 %v2984
          %4299 = vmatpush1.msra.mxu0 %v2983
          %4300 = vmatprep.subr.mxu0 %v2986
          %4301 = vmatpush1.msra.mxu0 %v2985
          %4302 = vmatprep.subr.mxu0 %v2988
          %4303 = vmatpush1.msra.mxu0 %v2987
          %4304 = vmatprep.subr.mxu0 %v2990
          %4305 = vmatpush1.msra.mxu0 %v2989
          %4306 = vmatprep.subr.mxu0 %v2992
          %4307 = vmatpush1.msra.mxu0 %v2991
          %4308 = vmatprep.subr.mxu0 %v2994
          %4309 = vmatpush1.msra.mxu0 %v2993
          %4310 = vmatprep.subr.mxu0 %v2996
          %4311 = vmatpush1.msra.mxu0 %v2995
          %4312 = vmatprep.mubr.f32.mxu0 %v3178
          %4313 = vmatmul.mubr.f32.gmra.mrb[0].mxu0 %v3177
          %v4314 = vpop.f32.mrb[0].mxu0
          %v4315 = vadd.f32 %v4244, %v4314
          %v4316 = vpop.f32.mrb[0].mxu0
          %v4317 = vadd.f32 %v4246, %v4316
          %4318 = vdwg.mxu0
          %4319 = vmatprep.subr.mxu0 %v2998
          %4320 = vmatpush1.msra.mxu0 %v2997
          %4321 = vmatprep.subr.mxu0 %v3000
          %4322 = vmatpush1.msra.mxu0 %v2999
          %4323 = vmatprep.subr.mxu0 %v3002
          %4324 = vmatpush1.msra.mxu0 %v3001
          %4325 = vmatprep.subr.mxu0 %v3004
          %4326 = vmatpush1.msra.mxu0 %v3003
          %4327 = vmatprep.subr.mxu0 %v3006
          %4328 = vmatpush1.msra.mxu0 %v3005
          %4329 = vmatprep.subr.mxu0 %v3008
          %4330 = vmatpush1.msra.mxu0 %v3007
          %4331 = vmatprep.subr.mxu0 %v3010
          %4332 = vmatpush1.msra.mxu0 %v3009
          %4333 = vmatprep.subr.mxu0 %v3012
          %4334 = vmatpush1.msra.mxu0 %v3011
          %4335 = vmatprep.subr.mxu0 %v3014
          %4336 = vmatpush1.msra.mxu0 %v3013
          %4337 = vmatprep.subr.mxu0 %v3016
          %4338 = vmatpush1.msra.mxu0 %v3015
          %4339 = vmatprep.subr.mxu0 %v3018
          %4340 = vmatpush1.msra.mxu0 %v3017
          %4341 = vmatprep.subr.mxu0 %v3020
          %4342 = vmatpush1.msra.mxu0 %v3019
          %4343 = vmatprep.subr.mxu0 %v3022
          %4344 = vmatpush1.msra.mxu0 %v3021
          %4345 = vmatprep.subr.mxu0 %v3024
          %4346 = vmatpush1.msra.mxu0 %v3023
          %4347 = vmatprep.subr.mxu0 %v3026
          %4348 = vmatpush1.msra.mxu0 %v3025
          %4349 = vmatprep.subr.mxu0 %v3028
          %4350 = vmatpush1.msra.mxu0 %v3027
          %4351 = vmatprep.subr.mxu0 %v3030
          %4352 = vmatpush1.msra.mxu0 %v3029
          %4353 = vmatprep.subr.mxu0 %v3032
          %4354 = vmatpush1.msra.mxu0 %v3031
          %4355 = vmatprep.subr.mxu0 %v3034
          %4356 = vmatpush1.msra.mxu0 %v3033
          %4357 = vmatprep.subr.mxu0 %v3036
          %4358 = vmatpush1.msra.mxu0 %v3035
          %4359 = vmatprep.subr.mxu0 %v3038
          %4360 = vmatpush1.msra.mxu0 %v3037
          %4361 = vmatprep.subr.mxu0 %v3040
          %4362 = vmatpush1.msra.mxu0 %v3039
          %4363 = vmatprep.subr.mxu0 %v3042
          %4364 = vmatpush1.msra.mxu0 %v3041
          %4365 = vmatprep.subr.mxu0 %v3044
          %4366 = vmatpush1.msra.mxu0 %v3043
          %4367 = vmatprep.subr.mxu0 %v3046
          %4368 = vmatpush1.msra.mxu0 %v3045
          %4369 = vmatprep.subr.mxu0 %v3048
          %4370 = vmatpush1.msra.mxu0 %v3047
          %4371 = vmatprep.subr.mxu0 %v3050
          %4372 = vmatpush1.msra.mxu0 %v3049
          %4373 = vmatprep.subr.mxu0 %v3052
          %4374 = vmatpush1.msra.mxu0 %v3051
          %4375 = vmatprep.subr.mxu0 %v3054
          %4376 = vmatpush1.msra.mxu0 %v3053
          %4377 = vmatprep.subr.mxu0 %v3056
          %4378 = vmatpush1.msra.mxu0 %v3055
          %4379 = vmatprep.subr.mxu0 %v3058
          %4380 = vmatpush1.msra.mxu0 %v3057
          %4381 = vmatprep.subr.mxu0 %v3060
          %4382 = vmatpush1.msra.mxu0 %v3059
          %4383 = vmatprep.mubr.f32.mxu0 %v3180
          %4384 = vmatmul.mubr.f32.gmra.mrb[0].mxu0 %v3179
          %v4385 = vpop.f32.mrb[0].mxu0
          %v4386 = vadd.f32 %v4315, %v4385
          %v4387 = vpop.f32.mrb[0].mxu0
          %v4388 = vadd.f32 %v4317, %v4387
          %4389 = vdwg.mxu0
          %4390 = vmatprep.subr.mxu0 %v3062
          %4391 = vmatpush1.msra.mxu0 %v3061
          %4392 = vmatprep.subr.mxu0 %v3064
          %4393 = vmatpush1.msra.mxu0 %v3063
          %4394 = vmatprep.subr.mxu0 %v3066
          %4395 = vmatpush1.msra.mxu0 %v3065
          %4396 = vmatprep.subr.mxu0 %v3068
          %4397 = vmatpush1.msra.mxu0 %v3067
          %4398 = vmatprep.subr.mxu0 %v3070
          %4399 = vmatpush1.msra.mxu0 %v3069
          %4400 = vmatprep.subr.mxu0 %v3072
          %4401 = vmatpush1.msra.mxu0 %v3071
          %4402 = vmatprep.subr.mxu0 %v3074
          %4403 = vmatpush1.msra.mxu0 %v3073
          %4404 = vmatprep.subr.mxu0 %v3076
          %4405 = vmatpush1.msra.mxu0 %v3075
          %4406 = vmatprep.subr.mxu0 %v3078
          %4407 = vmatpush1.msra.mxu0 %v3077
          %4408 = vmatprep.subr.mxu0 %v3080
          %4409 = vmatpush1.msra.mxu0 %v3079
          %4410 = vmatprep.subr.mxu0 %v3082
          %4411 = vmatpush1.msra.mxu0 %v3081
          %4412 = vmatprep.subr.mxu0 %v3084
          %4413 = vmatpush1.msra.mxu0 %v3083
          %4414 = vmatprep.subr.mxu0 %v3086
          %4415 = vmatpush1.msra.mxu0 %v3085
          %4416 = vmatprep.subr.mxu0 %v3088
          %4417 = vmatpush1.msra.mxu0 %v3087
          %4418 = vmatprep.subr.mxu0 %v3090
          %4419 = vmatpush1.msra.mxu0 %v3089
          %4420 = vmatprep.subr.mxu0 %v3092
          %4421 = vmatpush1.msra.mxu0 %v3091
          %4422 = vmatprep.subr.mxu0 %v3094
          %4423 = vmatpush1.msra.mxu0 %v3093
          %4424 = vmatprep.subr.mxu0 %v3096
          %4425 = vmatpush1.msra.mxu0 %v3095
          %4426 = vmatprep.subr.mxu0 %v3098
          %4427 = vmatpush1.msra.mxu0 %v3097
          %4428 = vmatprep.subr.mxu0 %v3100
          %4429 = vmatpush1.msra.mxu0 %v3099
          %4430 = vmatprep.subr.mxu0 %v3102
          %4431 = vmatpush1.msra.mxu0 %v3101
          %4432 = vmatprep.subr.mxu0 %v3104
          %4433 = vmatpush1.msra.mxu0 %v3103
          %4434 = vmatprep.subr.mxu0 %v3106
          %4435 = vmatpush1.msra.mxu0 %v3105
          %4436 = vmatprep.subr.mxu0 %v3108
          %4437 = vmatpush1.msra.mxu0 %v3107
          %4438 = vmatprep.subr.mxu0 %v3110
          %4439 = vmatpush1.msra.mxu0 %v3109
          %4440 = vmatprep.subr.mxu0 %v3112
          %4441 = vmatpush1.msra.mxu0 %v3111
          %4442 = vmatprep.subr.mxu0 %v3114
          %4443 = vmatpush1.msra.mxu0 %v3113
          %4444 = vmatprep.subr.mxu0 %v3116
          %4445 = vmatpush1.msra.mxu0 %v3115
          %4446 = vmatprep.subr.mxu0 %v3118
          %4447 = vmatpush1.msra.mxu0 %v3117
          %4448 = vmatprep.subr.mxu0 %v3120
          %4449 = vmatpush1.msra.mxu0 %v3119
          %4450 = vmatprep.subr.mxu0 %v3122
          %4451 = vmatpush1.msra.mxu0 %v3121
          %4452 = vmatprep.subr.mxu0 %v3124
          %4453 = vmatpush1.msra.mxu0 %v3123
          %4454 = vmatprep.mubr.f32.mxu0 %v3182
          %4455 = vmatmul.mubr.f32.gmra.mrb[0].mxu0 %v3181
          %v4456 = vpop.f32.mrb[0].mxu0
          %v4457 = vadd.f32 %v4386, %v4456
          %v4458 = vpop.f32.mrb[0].mxu0
          %v4459 = vadd.f32 %v4388, %v4458
          %4460 = vdwg.mxu0
          %v4461 = vadd.f32 %v525, %v4457
          %v4462 = vadd.f32 %v526, %v4459
        $region81: #{multitask_forward.1} parent=71 // loop_footer
          %s524 = sadd.s32 1, %s520
        $region82: #{multitask_forward.1} parent=71 // loop_footer_branch
          %519 = sbr.rel target = $region78
        $region83: #{multitask_forward.1} parent=71 // loop_exit
          _
        %s4463 = smul.u32 %s31, 2
        %s4464 = scalar_lea.vmem %s2, %s4463
        %v4465 = vld [vmem:[%s4464] sm:$0x3]
        %v4467 = vlaneseq
        %v4468 = vshrl.u32 %v4467, 7
        %v4469 = vsub.s32 0, %v4468
        %v4470 = vrot.slane %v4465, %v4469
        %v4471 = vlaneseq
        %v4472 = vshrl.u32 %v4471, 7
        %v4473 = vsub.s32 1, %v4472
        %v4474 = vrot.slane %v4465, %v4473
        %v4477 = vmul.f32 %v525, %v4470
        %v4478 = vmul.f32 %v526, %v4474
        %s4479 = scalar_lea.vmem %s3, %s4463
        %v4480 = vld [vmem:[%s4479] sm:$0x3]
        %v4482 = vlaneseq
        %v4483 = vshrl.u32 %v4482, 7
        %v4484 = vsub.s32 0, %v4483
        %v4485 = vrot.slane %v4480, %v4484
        %v4486 = vlaneseq
        %v4487 = vshrl.u32 %v4486, 7
        %v4488 = vsub.s32 1, %v4487
        %v4489 = vrot.slane %v4480, %v4488
        %v4492 = vadd.f32 %v4477, %v4485
        %v4493 = vadd.f32 %v4478, %v4489
        %v4494 = vmax.f32 %v4492, 0.0
        %v4495 = vmax.f32 %v4493, 0.0
        %vm4496 = vcmask 1043456
        %v4497 = vsel %vm4496, %v4494, 0.0
        %v4498 = vrot.slane %v4497, 4
        %v4499 = vadd.f32 %v4497, %v4498
        %v4500 = vrot.slane %v4499, 2
        %v4501 = vadd.f32 %v4499, %v4500
        %v4502 = vrot.slane %v4501, 1
        %v4503 = vadd.f32 %v4501, %v4502
        %v4504 = vsel %vm4496, %v4495, 0.0
        %v4505 = vrot.slane %v4504, 4
        %v4506 = vadd.f32 %v4504, %v4505
        %v4507 = vrot.slane %v4506, 2
        %v4508 = vadd.f32 %v4506, %v4507
        %v4509 = vrot.slane %v4508, 1
        %v4510 = vadd.f32 %v4508, %v4509
        %v4511 = vrcp.pop 4.0
        %v4512 = vmul.f32 %v4503, %v4511
        %v4513 = vmul.f32 %v4510, %v4511
        %v4516 = vrot.slane %v4494, 4
        %v4517 = vrot.slane %v4495, 4
        %v4520 = vsel %vm4496, %v4516, 0.0
        %v4521 = vrot.slane %v4520, 4
        %v4522 = vadd.f32 %v4520, %v4521
        %v4523 = vrot.slane %v4522, 2
        %v4524 = vadd.f32 %v4522, %v4523
        %v4525 = vrot.slane %v4524, 1
        %v4526 = vadd.f32 %v4524, %v4525
        %v4527 = vsel %vm4496, %v4517, 0.0
        %v4528 = vrot.slane %v4527, 4
        %v4529 = vadd.f32 %v4527, %v4528
        %v4530 = vrot.slane %v4529, 2
        %v4531 = vadd.f32 %v4529, %v4530
        %v4532 = vrot.slane %v4531, 1
        %v4533 = vadd.f32 %v4531, %v4532
        %v4534 = vmul.f32 %v4526, %v4511
        %v4535 = vmul.f32 %v4533, %v4511
        %vm4536 = vcmask 1040384
        %v4537 = vsel %vm4536, %v4512, %v4534
        %v4538 = vsel %vm4536, %v4513, %v4535
        %s4539 = smul.u32 %s31, 256
        %s4540 = scalar_lea.vmem %s4, %s4539
        %v4541 = vld [vmem:[%s4540] sm:$0xff]
        %v4542 = vld [vmem:[%s4540 + $0x8] sm:$0xff]
        %v4543 = vld [vmem:[%s4540 + $0x10] sm:$0xff]
        %v4544 = vld [vmem:[%s4540 + $0x18] sm:$0xff]
        %v4545 = vld [vmem:[%s4540 + $0x20] sm:$0xff]
        %v4546 = vld [vmem:[%s4540 + $0x28] sm:$0xff]
        %v4547 = vld [vmem:[%s4540 + $0x30] sm:$0xff]
        %v4548 = vld [vmem:[%s4540 + $0x38] sm:$0xff]
        %v4549 = vld [vmem:[%s4540 + $0x40] sm:$0xff]
        %v4550 = vld [vmem:[%s4540 + $0x48] sm:$0xff]
        %v4551 = vld [vmem:[%s4540 + $0x50] sm:$0xff]
        %v4552 = vld [vmem:[%s4540 + $0x58] sm:$0xff]
        %v4553 = vld [vmem:[%s4540 + $0x60] sm:$0xff]
        %v4554 = vld [vmem:[%s4540 + $0x68] sm:$0xff]
        %v4555 = vld [vmem:[%s4540 + $0x70] sm:$0xff]
        %v4556 = vld [vmem:[%s4540 + $0x78] sm:$0xff]
        %v4557 = vld [vmem:[%s4540 + $0x80] sm:$0xff]
        %v4558 = vld [vmem:[%s4540 + $0x88] sm:$0xff]
        %v4559 = vld [vmem:[%s4540 + $0x90] sm:$0xff]
        %v4560 = vld [vmem:[%s4540 + $0x98] sm:$0xff]
        %v4561 = vld [vmem:[%s4540 + $0xa0] sm:$0xff]
        %v4562 = vld [vmem:[%s4540 + $0xa8] sm:$0xff]
        %v4563 = vld [vmem:[%s4540 + $0xb0] sm:$0xff]
        %v4564 = vld [vmem:[%s4540 + $0xb8] sm:$0xff]
        %v4565 = vld [vmem:[%s4540 + $0xc0] sm:$0xff]
        %v4566 = vld [vmem:[%s4540 + $0xc8] sm:$0xff]
        %v4567 = vld [vmem:[%s4540 + $0xd0] sm:$0xff]
        %v4568 = vld [vmem:[%s4540 + $0xd8] sm:$0xff]
        %v4569 = vld [vmem:[%s4540 + $0xe0] sm:$0xff]
        %v4570 = vld [vmem:[%s4540 + $0xe8] sm:$0xff]
        %v4571 = vld [vmem:[%s4540 + $0xf0] sm:$0xff]
        %v4572 = vld [vmem:[%s4540 + $0xf8] sm:$0xff]
        %s4573 = scalar_lea.vmem %s5, %s31
        %v4574 = vld [vmem:[%s4573] sm:$0x1]
        %v4576 = vlaneseq
        %v4577 = vshrl.u32 %v4576, 7
        %v4578 = vsub.s32 0, %v4577
        %v4579 = vrot.slane %v4574, %v4578
        %4581 = vmatprep.subr.mxu0 0.0
        %4582 = vmatpush1.msra.mxu0 %v4541
        %4583 = vmatprep.subr.mxu0 0.0
        %4584 = vmatpush1.msra.mxu0 %v4542
        %4585 = vmatprep.subr.mxu0 0.0
        %4586 = vmatpush1.msra.mxu0 %v4543
        %4587 = vmatprep.subr.mxu0 0.0
        %4588 = vmatpush1.msra.mxu0 %v4544
        %4589 = vmatprep.subr.mxu0 0.0
        %4590 = vmatpush1.msra.mxu0 %v4545
        %4591 = vmatprep.subr.mxu0 0.0
        %4592 = vmatpush1.msra.mxu0 %v4546
        %4593 = vmatprep.subr.mxu0 0.0
        %4594 = vmatpush1.msra.mxu0 %v4547
        %4595 = vmatprep.subr.mxu0 0.0
        %4596 = vmatpush1.msra.mxu0 %v4548
        %4597 = vmatprep.subr.mxu0 0.0
        %4598 = vmatpush1.msra.mxu0 %v4549
        %4599 = vmatprep.subr.mxu0 0.0
        %4600 = vmatpush1.msra.mxu0 %v4550
        %4601 = vmatprep.subr.mxu0 0.0
        %4602 = vmatpush1.msra.mxu0 %v4551
        %4603 = vmatprep.subr.mxu0 0.0
        %4604 = vmatpush1.msra.mxu0 %v4552
        %4605 = vmatprep.subr.mxu0 0.0
        %4606 = vmatpush1.msra.mxu0 %v4553
        %4607 = vmatprep.subr.mxu0 0.0
        %4608 = vmatpush1.msra.mxu0 %v4554
        %4609 = vmatprep.subr.mxu0 0.0
        %4610 = vmatpush1.msra.mxu0 %v4555
        %4611 = vmatprep.subr.mxu0 0.0
        %4612 = vmatpush1.msra.mxu0 %v4556
        %4613 = vmatprep.subr.mxu0 0.0
        %4614 = vmatpush1.msra.mxu0 %v4557
        %4615 = vmatprep.subr.mxu0 0.0
        %4616 = vmatpush1.msra.mxu0 %v4558
        %4617 = vmatprep.subr.mxu0 0.0
        %4618 = vmatpush1.msra.mxu0 %v4559
        %4619 = vmatprep.subr.mxu0 0.0
        %4620 = vmatpush1.msra.mxu0 %v4560
        %4621 = vmatprep.subr.mxu0 0.0
        %4622 = vmatpush1.msra.mxu0 %v4561
        %4623 = vmatprep.subr.mxu0 0.0
        %4624 = vmatpush1.msra.mxu0 %v4562
        %4625 = vmatprep.subr.mxu0 0.0
        %4626 = vmatpush1.msra.mxu0 %v4563
        %4627 = vmatprep.subr.mxu0 0.0
        %4628 = vmatpush1.msra.mxu0 %v4564
        %4629 = vmatprep.subr.mxu0 0.0
        %4630 = vmatpush1.msra.mxu0 %v4565
        %4631 = vmatprep.subr.mxu0 0.0
        %4632 = vmatpush1.msra.mxu0 %v4566
        %4633 = vmatprep.subr.mxu0 0.0
        %4634 = vmatpush1.msra.mxu0 %v4567
        %4635 = vmatprep.subr.mxu0 0.0
        %4636 = vmatpush1.msra.mxu0 %v4568
        %4637 = vmatprep.subr.mxu0 0.0
        %4638 = vmatpush1.msra.mxu0 %v4569
        %4639 = vmatprep.subr.mxu0 0.0
        %4640 = vmatpush1.msra.mxu0 %v4570
        %4641 = vmatprep.subr.mxu0 0.0
        %4642 = vmatpush1.msra.mxu0 %v4571
        %4643 = vmatprep.subr.mxu0 0.0
        %4644 = vmatpush1.msra.mxu0 %v4572
        %4645 = vmatprep.mubr.f32.mxu0 %v4538
        %4646 = vmatmul.mubr.f32.gmra.mrb[0].mxu0 %v4537
        %v4647 = vpop.f32.mrb[0].mxu0
        %v4648 = vadd.f32 %v4579, %v4647
        %v4649 = vpop.f32.mrb[0].mxu0
        %4650 = vdwg.mxu0
        %v4651 = vmax.f32 %v4648, 0.0
        %s4652 = smul.u32 %s31, 128
        %s4653 = scalar_lea.vmem %s6, %s4652
        %v4654 = vld [vmem:[%s4653] sm:$0xff]
        %v4655 = vld [vmem:[%s4653 + $0x8] sm:$0xff]
        %v4656 = vld [vmem:[%s4653 + $0x10] sm:$0xff]
        %v4657 = vld [vmem:[%s4653 + $0x18] sm:$0xff]
        %v4658 = vld [vmem:[%s4653 + $0x20] sm:$0xff]
        %v4659 = vld [vmem:[%s4653 + $0x28] sm:$0xff]
        %v4660 = vld [vmem:[%s4653 + $0x30] sm:$0xff]
        %v4661 = vld [vmem:[%s4653 + $0x38] sm:$0xff]
        %v4662 = vld [vmem:[%s4653 + $0x40] sm:$0xff]
        %v4663 = vld [vmem:[%s4653 + $0x48] sm:$0xff]
        %v4664 = vld [vmem:[%s4653 + $0x50] sm:$0xff]
        %v4665 = vld [vmem:[%s4653 + $0x58] sm:$0xff]
        %v4666 = vld [vmem:[%s4653 + $0x60] sm:$0xff]
        %v4667 = vld [vmem:[%s4653 + $0x68] sm:$0xff]
        %v4668 = vld [vmem:[%s4653 + $0x70] sm:$0xff]
        %v4669 = vld [vmem:[%s4653 + $0x78] sm:$0xff]
        %s4670 = scalar_lea.vmem %s7, %s31
        %v4671 = vld [vmem:[%s4670] sm:$0x1]
        %v4673 = vlaneseq
        %v4674 = vshrl.u32 %v4673, 7
        %v4675 = vsub.s32 0, %v4674
        %v4676 = vrot.slane %v4671, %v4675
        %4678 = vmatprep.subr.mxu0 0.0
        %4679 = vmatpush1.msra.mxu0 %v4654
        %4680 = vmatprep.subr.mxu0 0.0
        %4681 = vmatpush1.msra.mxu0 %v4655
        %4682 = vmatprep.subr.mxu0 0.0
        %4683 = vmatpush1.msra.mxu0 %v4656
        %4684 = vmatprep.subr.mxu0 0.0
        %4685 = vmatpush1.msra.mxu0 %v4657
        %4686 = vmatprep.subr.mxu0 0.0
        %4687 = vmatpush1.msra.mxu0 %v4658
        %4688 = vmatprep.subr.mxu0 0.0
        %4689 = vmatpush1.msra.mxu0 %v4659
        %4690 = vmatprep.subr.mxu0 0.0
        %4691 = vmatpush1.msra.mxu0 %v4660
        %4692 = vmatprep.subr.mxu0 0.0
        %4693 = vmatpush1.msra.mxu0 %v4661
        %4694 = vmatprep.subr.mxu0 0.0
        %4695 = vmatpush1.msra.mxu0 %v4662
        %4696 = vmatprep.subr.mxu0 0.0
        %4697 = vmatpush1.msra.mxu0 %v4663
        %4698 = vmatprep.subr.mxu0 0.0
        %4699 = vmatpush1.msra.mxu0 %v4664
        %4700 = vmatprep.subr.mxu0 0.0
        %4701 = vmatpush1.msra.mxu0 %v4665
        %4702 = vmatprep.subr.mxu0 0.0
        %4703 = vmatpush1.msra.mxu0 %v4666
        %4704 = vmatprep.subr.mxu0 0.0
        %4705 = vmatpush1.msra.mxu0 %v4667
        %4706 = vmatprep.subr.mxu0 0.0
        %4707 = vmatpush1.msra.mxu0 %v4668
        %4708 = vmatprep.subr.mxu0 0.0
        %4709 = vmatpush1.msra.mxu0 %v4669
        %4710 = vmatprep.subr.mxu0 0.0
        %4711 = vmatpush1.msra.mxu0 0.0
        %4712 = vmatprep.subr.mxu0 0.0
        %4713 = vmatpush1.msra.mxu0 0.0
        %4714 = vmatprep.subr.mxu0 0.0
        %4715 = vmatpush1.msra.mxu0 0.0
        %4716 = vmatprep.subr.mxu0 0.0
        %4717 = vmatpush1.msra.mxu0 0.0
        %4718 = vmatprep.subr.mxu0 0.0
        %4719 = vmatpush1.msra.mxu0 0.0
        %4720 = vmatprep.subr.mxu0 0.0
        %4721 = vmatpush1.msra.mxu0 0.0
        %4722 = vmatprep.subr.mxu0 0.0
        %4723 = vmatpush1.msra.mxu0 0.0
        %4724 = vmatprep.subr.mxu0 0.0
        %4725 = vmatpush1.msra.mxu0 0.0
        %4726 = vmatprep.subr.mxu0 0.0
        %4727 = vmatpush1.msra.mxu0 0.0
        %4728 = vmatprep.subr.mxu0 0.0
        %4729 = vmatpush1.msra.mxu0 0.0
        %4730 = vmatprep.subr.mxu0 0.0
        %4731 = vmatpush1.msra.mxu0 0.0
        %4732 = vmatprep.subr.mxu0 0.0
        %4733 = vmatpush1.msra.mxu0 0.0
        %4734 = vmatprep.subr.mxu0 0.0
        %4735 = vmatpush1.msra.mxu0 0.0
        %4736 = vmatprep.subr.mxu0 0.0
        %4737 = vmatpush1.msra.mxu0 0.0
        %4738 = vmatprep.subr.mxu0 0.0
        %4739 = vmatpush1.msra.mxu0 0.0
        %4740 = vmatprep.subr.mxu0 0.0
        %4741 = vmatpush1.msra.mxu0 0.0
        %4742 = vmatprep.mubr.f32.mxu0 0.0
        %4743 = vmatmul.mubr.f32.gmra.mrb[0].mxu0 %v4651
        %v4744 = vpop.f32.mrb[0].mxu0
        %v4745 = vadd.f32 %v4676, %v4744
        %v4746 = vpop.f32.mrb[0].mxu0
        %4747 = vdwg.mxu0
        %vm4748 = vcmask 197632
        %v4749 = vsel %vm4748, %v4745, -inf
        %4750 = vmax.xlane.f32.xlu0 %v4749
        %v4751 = vpop.xlane.xlu0 %4750
        %v4752 = vsub.f32 %v4745, %v4751
        %v4753 = vmul.f32 %v4752, 1.442695
        %v4754 = vpow.pop %v4753
        %v4755 = vsel %vm4748, %v4754, 0.0
        %4756 = vadd.xlane.f32.xlu0 %v4755
        %v4757 = vpop.xlane.xlu0 %4756
        %v4758 = vrcp.pop %v4757
        %v4759 = vmul.f32 %v4754, %v4758
        %4760 = vst.msk [vmem:[%s514] sm:$0x3] %vm4748, %v4759
        %v4761 = vld [vmem:[%s8] sm:$0xff]
        %v4762 = vld [vmem:[%s8 + $0x8] sm:$0xff]
        %v4763 = vld [vmem:[%s9] sm:$0xff]
        %v4764 = vld [vmem:[%s9 + $0x8] sm:$0xff]
        %v4765 = vld [vmem:[%s9 + $0x10] sm:$0xff]
        %v4766 = vld [vmem:[%s9 + $0x18] sm:$0xff]
        %v4767 = vld [vmem:[%s9 + $0x20] sm:$0xff]
        %v4768 = vld [vmem:[%s9 + $0x28] sm:$0xff]
        %v4769 = vld [vmem:[%s9 + $0x30] sm:$0xff]
        %v4770 = vld [vmem:[%s9 + $0x38] sm:$0xff]
        %v4771 = vld [vmem:[%s9 + $0x40] sm:$0xff]
        %v4772 = vld [vmem:[%s9 + $0x48] sm:$0xff]
        %v4773 = vld [vmem:[%s9 + $0x50] sm:$0xff]
        %v4774 = vld [vmem:[%s9 + $0x58] sm:$0xff]
        %v4775 = vld [vmem:[%s9 + $0x60] sm:$0xff]
        %v4776 = vld [vmem:[%s9 + $0x68] sm:$0xff]
        %v4777 = vld [vmem:[%s9 + $0x70] sm:$0xff]
        %v4778 = vld [vmem:[%s9 + $0x78] sm:$0xff]
        %v4779 = vld [vmem:[%s9 + $0x80] sm:$0xff]
        %v4780 = vld [vmem:[%s9 + $0x88] sm:$0xff]
        %v4781 = vld [vmem:[%s9 + $0x90] sm:$0xff]
        %v4782 = vld [vmem:[%s9 + $0x98] sm:$0xff]
        %v4783 = vld [vmem:[%s9 + $0xa0] sm:$0xff]
        %v4784 = vld [vmem:[%s9 + $0xa8] sm:$0xff]
        %v4785 = vld [vmem:[%s9 + $0xb0] sm:$0xff]
        %v4786 = vld [vmem:[%s9 + $0xb8] sm:$0xff]
        %v4787 = vld [vmem:[%s9 + $0xc0] sm:$0xff]
        %v4788 = vld [vmem:[%s9 + $0xc8] sm:$0xff]
        %v4789 = vld [vmem:[%s9 + $0xd0] sm:$0xff]
        %v4790 = vld [vmem:[%s9 + $0xd8] sm:$0xff]
        %v4791 = vld [vmem:[%s9 + $0xe0] sm:$0xff]
        %v4792 = vld [vmem:[%s9 + $0xe8] sm:$0xff]
        %v4793 = vld [vmem:[%s9 + $0xf0] sm:$0xff]
        %v4794 = vld [vmem:[%s9 + $0xf8] sm:$0xff]
        %v4795 = vld [vmem:[%s9 + $0x100] sm:$0xff]
        %v4796 = vld [vmem:[%s9 + $0x108] sm:$0xff]
        %v4797 = vld [vmem:[%s9 + $0x110] sm:$0xff]
        %v4798 = vld [vmem:[%s9 + $0x118] sm:$0xff]
        %v4799 = vld [vmem:[%s9 + $0x120] sm:$0xff]
        %v4800 = vld [vmem:[%s9 + $0x128] sm:$0xff]
        %v4801 = vld [vmem:[%s9 + $0x130] sm:$0xff]
        %v4802 = vld [vmem:[%s9 + $0x138] sm:$0xff]
        %v4803 = vld [vmem:[%s9 + $0x140] sm:$0xff]
        %v4804 = vld [vmem:[%s9 + $0x148] sm:$0xff]
        %v4805 = vld [vmem:[%s9 + $0x150] sm:$0xff]
        %v4806 = vld [vmem:[%s9 + $0x158] sm:$0xff]
        %v4807 = vld [vmem:[%s9 + $0x160] sm:$0xff]
        %v4808 = vld [vmem:[%s9 + $0x168] sm:$0xff]
        %v4809 = vld [vmem:[%s9 + $0x170] sm:$0xff]
        %v4810 = vld [vmem:[%s9 + $0x178] sm:$0xff]
        %v4811 = vld [vmem:[%s9 + $0x180] sm:$0xff]
        %v4812 = vld [vmem:[%s9 + $0x188] sm:$0xff]
        %v4813 = vld [vmem:[%s9 + $0x190] sm:$0xff]
        %v4814 = vld [vmem:[%s9 + $0x198] sm:$0xff]
        %v4815 = vld [vmem:[%s9 + $0x1a0] sm:$0xff]
        %v4816 = vld [vmem:[%s9 + $0x1a8] sm:$0xff]
        %v4817 = vld [vmem:[%s9 + $0x1b0] sm:$0xff]
        %v4818 = vld [vmem:[%s9 + $0x1b8] sm:$0xff]
        %v4819 = vld [vmem:[%s9 + $0x1c0] sm:$0xff]
        %v4820 = vld [vmem:[%s9 + $0x1c8] sm:$0xff]
        %v4821 = vld [vmem:[%s9 + $0x1d0] sm:$0xff]
        %v4822 = vld [vmem:[%s9 + $0x1d8] sm:$0xff]
        %v4823 = vld [vmem:[%s9 + $0x1e0] sm:$0xff]
        %v4824 = vld [vmem:[%s9 + $0x1e8] sm:$0xff]
        %v4825 = vld [vmem:[%s9 + $0x1f0] sm:$0xff]
        %v4826 = vld [vmem:[%s9 + $0x1f8] sm:$0xff]
        %v4827 = vld [vmem:[%s9 + $0x200] sm:$0xff]
        %v4828 = vld [vmem:[%s9 + $0x208] sm:$0xff]
        %v4829 = vld [vmem:[%s9 + $0x210] sm:$0xff]
        %v4830 = vld [vmem:[%s9 + $0x218] sm:$0xff]
        %v4831 = vld [vmem:[%s9 + $0x220] sm:$0xff]
        %v4832 = vld [vmem:[%s9 + $0x228] sm:$0xff]
        %v4833 = vld [vmem:[%s9 + $0x230] sm:$0xff]
        %v4834 = vld [vmem:[%s9 + $0x238] sm:$0xff]
        %v4835 = vld [vmem:[%s9 + $0x240] sm:$0xff]
        %v4836 = vld [vmem:[%s9 + $0x248] sm:$0xff]
        %v4837 = vld [vmem:[%s9 + $0x250] sm:$0xff]
        %v4838 = vld [vmem:[%s9 + $0x258] sm:$0xff]
        %v4839 = vld [vmem:[%s9 + $0x260] sm:$0xff]
        %v4840 = vld [vmem:[%s9 + $0x268] sm:$0xff]
        %v4841 = vld [vmem:[%s9 + $0x270] sm:$0xff]
        %v4842 = vld [vmem:[%s9 + $0x278] sm:$0xff]
        %v4843 = vld [vmem:[%s9 + $0x280] sm:$0xff]
        %v4844 = vld [vmem:[%s9 + $0x288] sm:$0xff]
        %v4845 = vld [vmem:[%s9 + $0x290] sm:$0xff]
        %v4846 = vld [vmem:[%s9 + $0x298] sm:$0xff]
        %v4847 = vld [vmem:[%s9 + $0x2a0] sm:$0xff]
        %v4848 = vld [vmem:[%s9 + $0x2a8] sm:$0xff]
        %v4849 = vld [vmem:[%s9 + $0x2b0] sm:$0xff]
        %v4850 = vld [vmem:[%s9 + $0x2b8] sm:$0xff]
        %v4851 = vld [vmem:[%s9 + $0x2c0] sm:$0xff]
        %v4852 = vld [vmem:[%s9 + $0x2c8] sm:$0xff]
        %v4853 = vld [vmem:[%s9 + $0x2d0] sm:$0xff]
        %v4854 = vld [vmem:[%s9 + $0x2d8] sm:$0xff]
        %v4855 = vld [vmem:[%s9 + $0x2e0] sm:$0xff]
        %v4856 = vld [vmem:[%s9 + $0x2e8] sm:$0xff]
        %v4857 = vld [vmem:[%s9 + $0x2f0] sm:$0xff]
        %v4858 = vld [vmem:[%s9 + $0x2f8] sm:$0xff]
        %v4859 = vld [vmem:[%s9 + $0x300] sm:$0xff]
        %v4860 = vld [vmem:[%s9 + $0x308] sm:$0xff]
        %v4861 = vld [vmem:[%s9 + $0x310] sm:$0xff]
        %v4862 = vld [vmem:[%s9 + $0x318] sm:$0xff]
        %v4863 = vld [vmem:[%s9 + $0x320] sm:$0xff]
        %v4864 = vld [vmem:[%s9 + $0x328] sm:$0xff]
        %v4865 = vld [vmem:[%s9 + $0x330] sm:$0xff]
        %v4866 = vld [vmem:[%s9 + $0x338] sm:$0xff]
        %v4867 = vld [vmem:[%s9 + $0x340] sm:$0xff]
        %v4868 = vld [vmem:[%s9 + $0x348] sm:$0xff]
        %v4869 = vld [vmem:[%s9 + $0x350] sm:$0xff]
        %v4870 = vld [vmem:[%s9 + $0x358] sm:$0xff]
        %v4871 = vld [vmem:[%s9 + $0x360] sm:$0xff]
        %v4872 = vld [vmem:[%s9 + $0x368] sm:$0xff]
        %v4873 = vld [vmem:[%s9 + $0x370] sm:$0xff]
        %v4874 = vld [vmem:[%s9 + $0x378] sm:$0xff]
        %v4875 = vld [vmem:[%s9 + $0x380] sm:$0xff]
        %v4876 = vld [vmem:[%s9 + $0x388] sm:$0xff]
        %v4877 = vld [vmem:[%s9 + $0x390] sm:$0xff]
        %v4878 = vld [vmem:[%s9 + $0x398] sm:$0xff]
        %v4879 = vld [vmem:[%s9 + $0x3a0] sm:$0xff]
        %v4880 = vld [vmem:[%s9 + $0x3a8] sm:$0xff]
        %v4881 = vld [vmem:[%s9 + $0x3b0] sm:$0xff]
        %v4882 = vld [vmem:[%s9 + $0x3b8] sm:$0xff]
        %v4883 = vld [vmem:[%s9 + $0x3c0] sm:$0xff]
        %v4884 = vld [vmem:[%s9 + $0x3c8] sm:$0xff]
        %v4885 = vld [vmem:[%s9 + $0x3d0] sm:$0xff]
        %v4886 = vld [vmem:[%s9 + $0x3d8] sm:$0xff]
        %v4887 = vld [vmem:[%s9 + $0x3e0] sm:$0xff]
        %v4888 = vld [vmem:[%s9 + $0x3e8] sm:$0xff]
        %v4889 = vld [vmem:[%s9 + $0x3f0] sm:$0xff]
        %v4890 = vld [vmem:[%s9 + $0x3f8] sm:$0xff]
        %v4891 = vld [vmem:[%s9 + $0x400] sm:$0xff]
        %v4892 = vld [vmem:[%s9 + $0x408] sm:$0xff]
        %v4893 = vld [vmem:[%s9 + $0x410] sm:$0xff]
        %v4894 = vld [vmem:[%s9 + $0x418] sm:$0xff]
        %v4895 = vld [vmem:[%s9 + $0x420] sm:$0xff]
        %v4896 = vld [vmem:[%s9 + $0x428] sm:$0xff]
        %v4897 = vld [vmem:[%s9 + $0x430] sm:$0xff]
        %v4898 = vld [vmem:[%s9 + $0x438] sm:$0xff]
        %v4899 = vld [vmem:[%s9 + $0x440] sm:$0xff]
        %v4900 = vld [vmem:[%s9 + $0x448] sm:$0xff]
        %v4901 = vld [vmem:[%s9 + $0x450] sm:$0xff]
        %v4902 = vld [vmem:[%s9 + $0x458] sm:$0xff]
        %v4903 = vld [vmem:[%s9 + $0x460] sm:$0xff]
        %v4904 = vld [vmem:[%s9 + $0x468] sm:$0xff]
        %v4905 = vld [vmem:[%s9 + $0x470] sm:$0xff]
        %v4906 = vld [vmem:[%s9 + $0x478] sm:$0xff]
        %v4907 = vld [vmem:[%s9 + $0x480] sm:$0xff]
        %v4908 = vld [vmem:[%s9 + $0x488] sm:$0xff]
        %v4909 = vld [vmem:[%s9 + $0x490] sm:$0xff]
        %v4910 = vld [vmem:[%s9 + $0x498] sm:$0xff]
        %v4911 = vld [vmem:[%s9 + $0x4a0] sm:$0xff]
        %v4912 = vld [vmem:[%s9 + $0x4a8] sm:$0xff]
        %v4913 = vld [vmem:[%s9 + $0x4b0] sm:$0xff]
        %v4914 = vld [vmem:[%s9 + $0x4b8] sm:$0xff]
        %v4915 = vld [vmem:[%s9 + $0x4c0] sm:$0xff]
        %v4916 = vld [vmem:[%s9 + $0x4c8] sm:$0xff]
        %v4917 = vld [vmem:[%s9 + $0x4d0] sm:$0xff]
        %v4918 = vld [vmem:[%s9 + $0x4d8] sm:$0xff]
        %v4919 = vld [vmem:[%s9 + $0x4e0] sm:$0xff]
        %v4920 = vld [vmem:[%s9 + $0x4e8] sm:$0xff]
        %v4921 = vld [vmem:[%s9 + $0x4f0] sm:$0xff]
        %v4922 = vld [vmem:[%s9 + $0x4f8] sm:$0xff]
        %v4923 = vld [vmem:[%s9 + $0x500] sm:$0xff]
        %v4924 = vld [vmem:[%s9 + $0x508] sm:$0xff]
        %v4925 = vld [vmem:[%s9 + $0x510] sm:$0xff]
        %v4926 = vld [vmem:[%s9 + $0x518] sm:$0xff]
        %v4927 = vld [vmem:[%s9 + $0x520] sm:$0xff]
        %v4928 = vld [vmem:[%s9 + $0x528] sm:$0xff]
        %v4929 = vld [vmem:[%s9 + $0x530] sm:$0xff]
        %v4930 = vld [vmem:[%s9 + $0x538] sm:$0xff]
        %v4931 = vld [vmem:[%s9 + $0x540] sm:$0xff]
        %v4932 = vld [vmem:[%s9 + $0x548] sm:$0xff]
        %v4933 = vld [vmem:[%s9 + $0x550] sm:$0xff]
        %v4934 = vld [vmem:[%s9 + $0x558] sm:$0xff]
        %v4935 = vld [vmem:[%s9 + $0x560] sm:$0xff]
        %v4936 = vld [vmem:[%s9 + $0x568] sm:$0xff]
        %v4937 = vld [vmem:[%s9 + $0x570] sm:$0xff]
        %v4938 = vld [vmem:[%s9 + $0x578] sm:$0xff]
        %v4939 = vld [vmem:[%s9 + $0x580] sm:$0xff]
        %v4940 = vld [vmem:[%s9 + $0x588] sm:$0xff]
        %v4941 = vld [vmem:[%s9 + $0x590] sm:$0xff]
        %v4942 = vld [vmem:[%s9 + $0x598] sm:$0xff]
        %v4943 = vld [vmem:[%s9 + $0x5a0] sm:$0xff]
        %v4944 = vld [vmem:[%s9 + $0x5a8] sm:$0xff]
        %v4945 = vld [vmem:[%s9 + $0x5b0] sm:$0xff]
        %v4946 = vld [vmem:[%s9 + $0x5b8] sm:$0xff]
        %v4947 = vld [vmem:[%s9 + $0x5c0] sm:$0xff]
        %v4948 = vld [vmem:[%s9 + $0x5c8] sm:$0xff]
        %v4949 = vld [vmem:[%s9 + $0x5d0] sm:$0xff]
        %v4950 = vld [vmem:[%s9 + $0x5d8] sm:$0xff]
        %v4951 = vld [vmem:[%s9 + $0x5e0] sm:$0xff]
        %v4952 = vld [vmem:[%s9 + $0x5e8] sm:$0xff]
        %v4953 = vld [vmem:[%s9 + $0x5f0] sm:$0xff]
        %v4954 = vld [vmem:[%s9 + $0x5f8] sm:$0xff]
        %v4955 = vld [vmem:[%s9 + $0x600] sm:$0xff]
        %v4956 = vld [vmem:[%s9 + $0x608] sm:$0xff]
        %v4957 = vld [vmem:[%s9 + $0x610] sm:$0xff]
        %v4958 = vld [vmem:[%s9 + $0x618] sm:$0xff]
        %v4959 = vld [vmem:[%s9 + $0x620] sm:$0xff]
        %v4960 = vld [vmem:[%s9 + $0x628] sm:$0xff]
        %v4961 = vld [vmem:[%s9 + $0x630] sm:$0xff]
        %v4962 = vld [vmem:[%s9 + $0x638] sm:$0xff]
        %v4963 = vld [vmem:[%s9 + $0x640] sm:$0xff]
        %v4964 = vld [vmem:[%s9 + $0x648] sm:$0xff]
        %v4965 = vld [vmem:[%s9 + $0x650] sm:$0xff]
        %v4966 = vld [vmem:[%s9 + $0x658] sm:$0xff]
        %v4967 = vld [vmem:[%s9 + $0x660] sm:$0xff]
        %v4968 = vld [vmem:[%s9 + $0x668] sm:$0xff]
        %v4969 = vld [vmem:[%s9 + $0x670] sm:$0xff]
        %v4970 = vld [vmem:[%s9 + $0x678] sm:$0xff]
        %v4971 = vld [vmem:[%s9 + $0x680] sm:$0xff]
        %v4972 = vld [vmem:[%s9 + $0x688] sm:$0xff]
        %v4973 = vld [vmem:[%s9 + $0x690] sm:$0xff]
        %v4974 = vld [vmem:[%s9 + $0x698] sm:$0xff]
        %v4975 = vld [vmem:[%s9 + $0x6a0] sm:$0xff]
        %v4976 = vld [vmem:[%s9 + $0x6a8] sm:$0xff]
        %v4977 = vld [vmem:[%s9 + $0x6b0] sm:$0xff]
        %v4978 = vld [vmem:[%s9 + $0x6b8] sm:$0xff]
        %v4979 = vld [vmem:[%s9 + $0x6c0] sm:$0xff]
        %v4980 = vld [vmem:[%s9 + $0x6c8] sm:$0xff]
        %v4981 = vld [vmem:[%s9 + $0x6d0] sm:$0xff]
        %v4982 = vld [vmem:[%s9 + $0x6d8] sm:$0xff]
        %v4983 = vld [vmem:[%s9 + $0x6e0] sm:$0xff]
        %v4984 = vld [vmem:[%s9 + $0x6e8] sm:$0xff]
        %v4985 = vld [vmem:[%s9 + $0x6f0] sm:$0xff]
        %v4986 = vld [vmem:[%s9 + $0x6f8] sm:$0xff]
        %v4987 = vld [vmem:[%s9 + $0x700] sm:$0xff]
        %v4988 = vld [vmem:[%s9 + $0x708] sm:$0xff]
        %v4989 = vld [vmem:[%s9 + $0x710] sm:$0xff]
        %v4990 = vld [vmem:[%s9 + $0x718] sm:$0xff]
        %v4991 = vld [vmem:[%s9 + $0x720] sm:$0xff]
        %v4992 = vld [vmem:[%s9 + $0x728] sm:$0xff]
        %v4993 = vld [vmem:[%s9 + $0x730] sm:$0xff]
        %v4994 = vld [vmem:[%s9 + $0x738] sm:$0xff]
        %v4995 = vld [vmem:[%s9 + $0x740] sm:$0xff]
        %v4996 = vld [vmem:[%s9 + $0x748] sm:$0xff]
        %v4997 = vld [vmem:[%s9 + $0x750] sm:$0xff]
        %v4998 = vld [vmem:[%s9 + $0x758] sm:$0xff]
        %v4999 = vld [vmem:[%s9 + $0x760] sm:$0xff]
        %v5000 = vld [vmem:[%s9 + $0x768] sm:$0xff]
        %v5001 = vld [vmem:[%s9 + $0x770] sm:$0xff]
        %v5002 = vld [vmem:[%s9 + $0x778] sm:$0xff]
        %v5003 = vld [vmem:[%s9 + $0x780] sm:$0xff]
        %v5004 = vld [vmem:[%s9 + $0x788] sm:$0xff]
        %v5005 = vld [vmem:[%s9 + $0x790] sm:$0xff]
        %v5006 = vld [vmem:[%s9 + $0x798] sm:$0xff]
        %v5007 = vld [vmem:[%s9 + $0x7a0] sm:$0xff]
        %v5008 = vld [vmem:[%s9 + $0x7a8] sm:$0xff]
        %v5009 = vld [vmem:[%s9 + $0x7b0] sm:$0xff]
        %v5010 = vld [vmem:[%s9 + $0x7b8] sm:$0xff]
        %v5011 = vld [vmem:[%s9 + $0x7c0] sm:$0xff]
        %v5012 = vld [vmem:[%s9 + $0x7c8] sm:$0xff]
        %v5013 = vld [vmem:[%s9 + $0x7d0] sm:$0xff]
        %v5014 = vld [vmem:[%s9 + $0x7d8] sm:$0xff]
        %v5015 = vld [vmem:[%s9 + $0x7e0] sm:$0xff]
        %v5016 = vld [vmem:[%s9 + $0x7e8] sm:$0xff]
        %v5017 = vld [vmem:[%s9 + $0x7f0] sm:$0xff]
        %v5018 = vld [vmem:[%s9 + $0x7f8] sm:$0xff]
        %v5019 = vld [vmem:[%s9 + $0x800] sm:$0xff]
        %v5020 = vld [vmem:[%s9 + $0x808] sm:$0xff]
        %v5021 = vld [vmem:[%s9 + $0x810] sm:$0xff]
        %v5022 = vld [vmem:[%s9 + $0x818] sm:$0xff]
        %v5023 = vld [vmem:[%s9 + $0x820] sm:$0xff]
        %v5024 = vld [vmem:[%s9 + $0x828] sm:$0xff]
        %v5025 = vld [vmem:[%s9 + $0x830] sm:$0xff]
        %v5026 = vld [vmem:[%s9 + $0x838] sm:$0xff]
        %v5027 = vld [vmem:[%s9 + $0x840] sm:$0xff]
        %v5028 = vld [vmem:[%s9 + $0x848] sm:$0xff]
        %v5029 = vld [vmem:[%s9 + $0x850] sm:$0xff]
        %v5030 = vld [vmem:[%s9 + $0x858] sm:$0xff]
        %v5031 = vld [vmem:[%s9 + $0x860] sm:$0xff]
        %v5032 = vld [vmem:[%s9 + $0x868] sm:$0xff]
        %v5033 = vld [vmem:[%s9 + $0x870] sm:$0xff]
        %v5034 = vld [vmem:[%s9 + $0x878] sm:$0xff]
        %v5035 = vld [vmem:[%s9 + $0x880] sm:$0xff]
        %v5036 = vld [vmem:[%s9 + $0x888] sm:$0xff]
        %v5037 = vld [vmem:[%s9 + $0x890] sm:$0xff]
        %v5038 = vld [vmem:[%s9 + $0x898] sm:$0xff]
        %v5039 = vld [vmem:[%s9 + $0x8a0] sm:$0xff]
        %v5040 = vld [vmem:[%s9 + $0x8a8] sm:$0xff]
        %v5041 = vld [vmem:[%s9 + $0x8b0] sm:$0xff]
        %v5042 = vld [vmem:[%s9 + $0x8b8] sm:$0xff]
        %v5043 = vld [vmem:[%s9 + $0x8c0] sm:$0xff]
        %v5044 = vld [vmem:[%s9 + $0x8c8] sm:$0xff]
        %v5045 = vld [vmem:[%s9 + $0x8d0] sm:$0xff]
        %v5046 = vld [vmem:[%s9 + $0x8d8] sm:$0xff]
        %v5047 = vld [vmem:[%s9 + $0x8e0] sm:$0xff]
        %v5048 = vld [vmem:[%s9 + $0x8e8] sm:$0xff]
        %v5049 = vld [vmem:[%s9 + $0x8f0] sm:$0xff]
        %v5050 = vld [vmem:[%s9 + $0x8f8] sm:$0xff]
        %v5051 = vld [vmem:[%s9 + $0x900] sm:$0xff]
        %v5052 = vld [vmem:[%s9 + $0x908] sm:$0xff]
        %v5053 = vld [vmem:[%s9 + $0x910] sm:$0xff]
        %v5054 = vld [vmem:[%s9 + $0x918] sm:$0xff]
        %v5055 = vld [vmem:[%s9 + $0x920] sm:$0xff]
        %v5056 = vld [vmem:[%s9 + $0x928] sm:$0xff]
        %v5057 = vld [vmem:[%s9 + $0x930] sm:$0xff]
        %v5058 = vld [vmem:[%s9 + $0x938] sm:$0xff]
        %v5059 = vld [vmem:[%s9 + $0x940] sm:$0xff]
        %v5060 = vld [vmem:[%s9 + $0x948] sm:$0xff]
        %v5061 = vld [vmem:[%s9 + $0x950] sm:$0xff]
        %v5062 = vld [vmem:[%s9 + $0x958] sm:$0xff]
        %v5063 = vld [vmem:[%s9 + $0x960] sm:$0xff]
        %v5064 = vld [vmem:[%s9 + $0x968] sm:$0xff]
        %v5065 = vld [vmem:[%s9 + $0x970] sm:$0xff]
        %v5066 = vld [vmem:[%s9 + $0x978] sm:$0xff]
        %v5067 = vld [vmem:[%s9 + $0x980] sm:$0xff]
        %v5068 = vld [vmem:[%s9 + $0x988] sm:$0xff]
        %v5069 = vld [vmem:[%s9 + $0x990] sm:$0xff]
        %v5070 = vld [vmem:[%s9 + $0x998] sm:$0xff]
        %v5071 = vld [vmem:[%s9 + $0x9a0] sm:$0xff]
        %v5072 = vld [vmem:[%s9 + $0x9a8] sm:$0xff]
        %v5073 = vld [vmem:[%s9 + $0x9b0] sm:$0xff]
        %v5074 = vld [vmem:[%s9 + $0x9b8] sm:$0xff]
        %v5075 = vld [vmem:[%s9 + $0x9c0] sm:$0xff]
        %v5076 = vld [vmem:[%s9 + $0x9c8] sm:$0xff]
        %v5077 = vld [vmem:[%s9 + $0x9d0] sm:$0xff]
        %v5078 = vld [vmem:[%s9 + $0x9d8] sm:$0xff]
        %v5079 = vld [vmem:[%s9 + $0x9e0] sm:$0xff]
        %v5080 = vld [vmem:[%s9 + $0x9e8] sm:$0xff]
        %v5081 = vld [vmem:[%s9 + $0x9f0] sm:$0xff]
        %v5082 = vld [vmem:[%s9 + $0x9f8] sm:$0xff]
        %v5083 = vld [vmem:[%s9 + $0xa00] sm:$0xff]
        %v5084 = vld [vmem:[%s9 + $0xa08] sm:$0xff]
        %v5085 = vld [vmem:[%s9 + $0xa10] sm:$0xff]
        %v5086 = vld [vmem:[%s9 + $0xa18] sm:$0xff]
        %v5087 = vld [vmem:[%s9 + $0xa20] sm:$0xff]
        %v5088 = vld [vmem:[%s9 + $0xa28] sm:$0xff]
        %v5089 = vld [vmem:[%s9 + $0xa30] sm:$0xff]
        %v5090 = vld [vmem:[%s9 + $0xa38] sm:$0xff]
        %v5091 = vld [vmem:[%s9 + $0xa40] sm:$0xff]
        %v5092 = vld [vmem:[%s9 + $0xa48] sm:$0xff]
        %v5093 = vld [vmem:[%s9 + $0xa50] sm:$0xff]
        %v5094 = vld [vmem:[%s9 + $0xa58] sm:$0xff]
        %v5095 = vld [vmem:[%s9 + $0xa60] sm:$0xff]
        %v5096 = vld [vmem:[%s9 + $0xa68] sm:$0xff]
        %v5097 = vld [vmem:[%s9 + $0xa70] sm:$0xff]
        %v5098 = vld [vmem:[%s9 + $0xa78] sm:$0xff]
        %v5099 = vld [vmem:[%s9 + $0xa80] sm:$0xff]
        %v5100 = vld [vmem:[%s9 + $0xa88] sm:$0xff]
        %v5101 = vld [vmem:[%s9 + $0xa90] sm:$0xff]
        %v5102 = vld [vmem:[%s9 + $0xa98] sm:$0xff]
        %v5103 = vld [vmem:[%s9 + $0xaa0] sm:$0xff]
        %v5104 = vld [vmem:[%s9 + $0xaa8] sm:$0xff]
        %v5105 = vld [vmem:[%s9 + $0xab0] sm:$0xff]
        %v5106 = vld [vmem:[%s9 + $0xab8] sm:$0xff]
        %v5107 = vld [vmem:[%s9 + $0xac0] sm:$0xff]
        %v5108 = vld [vmem:[%s9 + $0xac8] sm:$0xff]
        %v5109 = vld [vmem:[%s9 + $0xad0] sm:$0xff]
        %v5110 = vld [vmem:[%s9 + $0xad8] sm:$0xff]
        %v5111 = vld [vmem:[%s9 + $0xae0] sm:$0xff]
        %v5112 = vld [vmem:[%s9 + $0xae8] sm:$0xff]
        %v5113 = vld [vmem:[%s9 + $0xaf0] sm:$0xff]
        %v5114 = vld [vmem:[%s9 + $0xaf8] sm:$0xff]
        %v5115 = vld [vmem:[%s9 + $0xb00] sm:$0xff]
        %v5116 = vld [vmem:[%s9 + $0xb08] sm:$0xff]
        %v5117 = vld [vmem:[%s9 + $0xb10] sm:$0xff]
        %v5118 = vld [vmem:[%s9 + $0xb18] sm:$0xff]
        %v5119 = vld [vmem:[%s9 + $0xb20] sm:$0xff]
        %v5120 = vld [vmem:[%s9 + $0xb28] sm:$0xff]
        %v5121 = vld [vmem:[%s9 + $0xb30] sm:$0xff]
        %v5122 = vld [vmem:[%s9 + $0xb38] sm:$0xff]
        %v5123 = vld [vmem:[%s9 + $0xb40] sm:$0xff]
        %v5124 = vld [vmem:[%s9 + $0xb48] sm:$0xff]
        %v5125 = vld [vmem:[%s9 + $0xb50] sm:$0xff]
        %v5126 = vld [vmem:[%s9 + $0xb58] sm:$0xff]
        %v5127 = vld [vmem:[%s9 + $0xb60] sm:$0xff]
        %v5128 = vld [vmem:[%s9 + $0xb68] sm:$0xff]
        %v5129 = vld [vmem:[%s9 + $0xb70] sm:$0xff]
        %v5130 = vld [vmem:[%s9 + $0xb78] sm:$0xff]
        %v5131 = vld [vmem:[%s9 + $0xb80] sm:$0xff]
        %v5132 = vld [vmem:[%s9 + $0xb88] sm:$0xff]
        %v5133 = vld [vmem:[%s9 + $0xb90] sm:$0xff]
        %v5134 = vld [vmem:[%s9 + $0xb98] sm:$0xff]
        %v5135 = vld [vmem:[%s9 + $0xba0] sm:$0xff]
        %v5136 = vld [vmem:[%s9 + $0xba8] sm:$0xff]
        %v5137 = vld [vmem:[%s9 + $0xbb0] sm:$0xff]
        %v5138 = vld [vmem:[%s9 + $0xbb8] sm:$0xff]
        %v5139 = vld [vmem:[%s9 + $0xbc0] sm:$0xff]
        %v5140 = vld [vmem:[%s9 + $0xbc8] sm:$0xff]
        %v5141 = vld [vmem:[%s9 + $0xbd0] sm:$0xff]
        %v5142 = vld [vmem:[%s9 + $0xbd8] sm:$0xff]
        %v5143 = vld [vmem:[%s9 + $0xbe0] sm:$0xff]
        %v5144 = vld [vmem:[%s9 + $0xbe8] sm:$0xff]
        %v5145 = vld [vmem:[%s9 + $0xbf0] sm:$0xff]
        %v5146 = vld [vmem:[%s9 + $0xbf8] sm:$0xff]
        %v5147 = vld [vmem:[%s9 + $0xc00] sm:$0xff]
        %v5148 = vld [vmem:[%s9 + $0xc08] sm:$0xff]
        %v5149 = vld [vmem:[%s9 + $0xc10] sm:$0xff]
        %v5150 = vld [vmem:[%s9 + $0xc18] sm:$0xff]
        %v5151 = vld [vmem:[%s9 + $0xc20] sm:$0xff]
        %v5152 = vld [vmem:[%s9 + $0xc28] sm:$0xff]
        %v5153 = vld [vmem:[%s9 + $0xc30] sm:$0xff]
        %v5154 = vld [vmem:[%s9 + $0xc38] sm:$0xff]
        %v5155 = vld [vmem:[%s9 + $0xc40] sm:$0xff]
        %v5156 = vld [vmem:[%s9 + $0xc48] sm:$0xff]
        %v5157 = vld [vmem:[%s9 + $0xc50] sm:$0xff]
        %v5158 = vld [vmem:[%s9 + $0xc58] sm:$0xff]
        %v5159 = vld [vmem:[%s9 + $0xc60] sm:$0xff]
        %v5160 = vld [vmem:[%s9 + $0xc68] sm:$0xff]
        %v5161 = vld [vmem:[%s9 + $0xc70] sm:$0xff]
        %v5162 = vld [vmem:[%s9 + $0xc78] sm:$0xff]
        %v5163 = vld [vmem:[%s9 + $0xc80] sm:$0xff]
        %v5164 = vld [vmem:[%s9 + $0xc88] sm:$0xff]
        %v5165 = vld [vmem:[%s9 + $0xc90] sm:$0xff]
        %v5166 = vld [vmem:[%s9 + $0xc98] sm:$0xff]
        %v5167 = vld [vmem:[%s9 + $0xca0] sm:$0xff]
        %v5168 = vld [vmem:[%s9 + $0xca8] sm:$0xff]
        %v5169 = vld [vmem:[%s9 + $0xcb0] sm:$0xff]
        %v5170 = vld [vmem:[%s9 + $0xcb8] sm:$0xff]
        %v5171 = vld [vmem:[%s9 + $0xcc0] sm:$0xff]
        %v5172 = vld [vmem:[%s9 + $0xcc8] sm:$0xff]
        %v5173 = vld [vmem:[%s9 + $0xcd0] sm:$0xff]
        %v5174 = vld [vmem:[%s9 + $0xcd8] sm:$0xff]
        %v5175 = vld [vmem:[%s9 + $0xce0] sm:$0xff]
        %v5176 = vld [vmem:[%s9 + $0xce8] sm:$0xff]
        %v5177 = vld [vmem:[%s9 + $0xcf0] sm:$0xff]
        %v5178 = vld [vmem:[%s9 + $0xcf8] sm:$0xff]
        %v5179 = vld [vmem:[%s9 + $0xd00] sm:$0xff]
        %v5180 = vld [vmem:[%s9 + $0xd08] sm:$0xff]
        %v5181 = vld [vmem:[%s9 + $0xd10] sm:$0xff]
        %v5182 = vld [vmem:[%s9 + $0xd18] sm:$0xff]
        %v5183 = vld [vmem:[%s9 + $0xd20] sm:$0xff]
        %v5184 = vld [vmem:[%s9 + $0xd28] sm:$0xff]
        %v5185 = vld [vmem:[%s9 + $0xd30] sm:$0xff]
        %v5186 = vld [vmem:[%s9 + $0xd38] sm:$0xff]
        %v5187 = vld [vmem:[%s9 + $0xd40] sm:$0xff]
        %v5188 = vld [vmem:[%s9 + $0xd48] sm:$0xff]
        %v5189 = vld [vmem:[%s9 + $0xd50] sm:$0xff]
        %v5190 = vld [vmem:[%s9 + $0xd58] sm:$0xff]
        %v5191 = vld [vmem:[%s9 + $0xd60] sm:$0xff]
        %v5192 = vld [vmem:[%s9 + $0xd68] sm:$0xff]
        %v5193 = vld [vmem:[%s9 + $0xd70] sm:$0xff]
        %v5194 = vld [vmem:[%s9 + $0xd78] sm:$0xff]
        %v5195 = vld [vmem:[%s9 + $0xd80] sm:$0xff]
        %v5196 = vld [vmem:[%s9 + $0xd88] sm:$0xff]
        %v5197 = vld [vmem:[%s9 + $0xd90] sm:$0xff]
        %v5198 = vld [vmem:[%s9 + $0xd98] sm:$0xff]
        %v5199 = vld [vmem:[%s9 + $0xda0] sm:$0xff]
        %v5200 = vld [vmem:[%s9 + $0xda8] sm:$0xff]
        %v5201 = vld [vmem:[%s9 + $0xdb0] sm:$0xff]
        %v5202 = vld [vmem:[%s9 + $0xdb8] sm:$0xff]
        %v5203 = vld [vmem:[%s9 + $0xdc0] sm:$0xff]
        %v5204 = vld [vmem:[%s9 + $0xdc8] sm:$0xff]
        %v5205 = vld [vmem:[%s9 + $0xdd0] sm:$0xff]
        %v5206 = vld [vmem:[%s9 + $0xdd8] sm:$0xff]
        %v5207 = vld [vmem:[%s9 + $0xde0] sm:$0xff]
        %v5208 = vld [vmem:[%s9 + $0xde8] sm:$0xff]
        %v5209 = vld [vmem:[%s9 + $0xdf0] sm:$0xff]
        %v5210 = vld [vmem:[%s9 + $0xdf8] sm:$0xff]
        %v5211 = vld [vmem:[%s9 + $0xe00] sm:$0xff]
        %v5212 = vld [vmem:[%s9 + $0xe08] sm:$0xff]
        %v5213 = vld [vmem:[%s9 + $0xe10] sm:$0xff]
        %v5214 = vld [vmem:[%s9 + $0xe18] sm:$0xff]
        %v5215 = vld [vmem:[%s9 + $0xe20] sm:$0xff]
        %v5216 = vld [vmem:[%s9 + $0xe28] sm:$0xff]
        %v5217 = vld [vmem:[%s9 + $0xe30] sm:$0xff]
        %v5218 = vld [vmem:[%s9 + $0xe38] sm:$0xff]
        %v5219 = vld [vmem:[%s9 + $0xe40] sm:$0xff]
        %v5220 = vld [vmem:[%s9 + $0xe48] sm:$0xff]
        %v5221 = vld [vmem:[%s9 + $0xe50] sm:$0xff]
        %v5222 = vld [vmem:[%s9 + $0xe58] sm:$0xff]
        %v5223 = vld [vmem:[%s9 + $0xe60] sm:$0xff]
        %v5224 = vld [vmem:[%s9 + $0xe68] sm:$0xff]
        %v5225 = vld [vmem:[%s9 + $0xe70] sm:$0xff]
        %v5226 = vld [vmem:[%s9 + $0xe78] sm:$0xff]
        %v5227 = vld [vmem:[%s9 + $0xe80] sm:$0xff]
        %v5228 = vld [vmem:[%s9 + $0xe88] sm:$0xff]
        %v5229 = vld [vmem:[%s9 + $0xe90] sm:$0xff]
        %v5230 = vld [vmem:[%s9 + $0xe98] sm:$0xff]
        %v5231 = vld [vmem:[%s9 + $0xea0] sm:$0xff]
        %v5232 = vld [vmem:[%s9 + $0xea8] sm:$0xff]
        %v5233 = vld [vmem:[%s9 + $0xeb0] sm:$0xff]
        %v5234 = vld [vmem:[%s9 + $0xeb8] sm:$0xff]
        %v5235 = vld [vmem:[%s9 + $0xec0] sm:$0xff]
        %v5236 = vld [vmem:[%s9 + $0xec8] sm:$0xff]
        %v5237 = vld [vmem:[%s9 + $0xed0] sm:$0xff]
        %v5238 = vld [vmem:[%s9 + $0xed8] sm:$0xff]
        %v5239 = vld [vmem:[%s9 + $0xee0] sm:$0xff]
        %v5240 = vld [vmem:[%s9 + $0xee8] sm:$0xff]
        %v5241 = vld [vmem:[%s9 + $0xef0] sm:$0xff]
        %v5242 = vld [vmem:[%s9 + $0xef8] sm:$0xff]
        %v5243 = vld [vmem:[%s9 + $0xf00] sm:$0xff]
        %v5244 = vld [vmem:[%s9 + $0xf08] sm:$0xff]
        %v5245 = vld [vmem:[%s9 + $0xf10] sm:$0xff]
        %v5246 = vld [vmem:[%s9 + $0xf18] sm:$0xff]
        %v5247 = vld [vmem:[%s9 + $0xf20] sm:$0xff]
        %v5248 = vld [vmem:[%s9 + $0xf28] sm:$0xff]
        %v5249 = vld [vmem:[%s9 + $0xf30] sm:$0xff]
        %v5250 = vld [vmem:[%s9 + $0xf38] sm:$0xff]
        %v5251 = vld [vmem:[%s9 + $0xf40] sm:$0xff]
        %v5252 = vld [vmem:[%s9 + $0xf48] sm:$0xff]
        %v5253 = vld [vmem:[%s9 + $0xf50] sm:$0xff]
        %v5254 = vld [vmem:[%s9 + $0xf58] sm:$0xff]
        %v5255 = vld [vmem:[%s9 + $0xf60] sm:$0xff]
        %v5256 = vld [vmem:[%s9 + $0xf68] sm:$0xff]
        %v5257 = vld [vmem:[%s9 + $0xf70] sm:$0xff]
        %v5258 = vld [vmem:[%s9 + $0xf78] sm:$0xff]
        %v5259 = vld [vmem:[%s9 + $0xf80] sm:$0xff]
        %v5260 = vld [vmem:[%s9 + $0xf88] sm:$0xff]
        %v5261 = vld [vmem:[%s9 + $0xf90] sm:$0xff]
        %v5262 = vld [vmem:[%s9 + $0xf98] sm:$0xff]
        %v5263 = vld [vmem:[%s9 + $0xfa0] sm:$0xff]
        %v5264 = vld [vmem:[%s9 + $0xfa8] sm:$0xff]
        %v5265 = vld [vmem:[%s9 + $0xfb0] sm:$0xff]
        %v5266 = vld [vmem:[%s9 + $0xfb8] sm:$0xff]
        %v5267 = vld [vmem:[%s9 + $0xfc0] sm:$0xff]
        %v5268 = vld [vmem:[%s9 + $0xfc8] sm:$0xff]
        %v5269 = vld [vmem:[%s9 + $0xfd0] sm:$0xff]
        %v5270 = vld [vmem:[%s9 + $0xfd8] sm:$0xff]
        %v5271 = vld [vmem:[%s9 + $0xfe0] sm:$0xff]
        %v5272 = vld [vmem:[%s9 + $0xfe8] sm:$0xff]
        %v5273 = vld [vmem:[%s9 + $0xff0] sm:$0xff]
        %v5274 = vld [vmem:[%s9 + $0xff8] sm:$0xff]
        %v5275 = vld [vmem:[%s10] sm:$0xf]
        %v5277 = vlaneseq
        %v5278 = vshrl.u32 %v5277, 7
        %v5279 = vsub.s32 0, %v5278
        %v5280 = vrot.slane %v5275, %v5279
        %v5281 = vlaneseq
        %v5282 = vshrl.u32 %v5281, 7
        %v5283 = vsub.s32 1, %v5282
        %v5284 = vrot.slane %v5275, %v5283
        %v5285 = vlaneseq
        %v5286 = vshrl.u32 %v5285, 7
        %v5287 = vsub.s32 2, %v5286
        %v5288 = vrot.slane %v5275, %v5287
        %v5289 = vlaneseq
        %v5290 = vshrl.u32 %v5289, 7
        %v5291 = vsub.s32 3, %v5290
        %v5292 = vrot.slane %v5275, %v5291
        %v5299 = vcombine.high %v4761, %v4761
        %v5301 = vunpack.c.l.s4 1966171168
        %v5302 = vunpack.c.0.s8 %v5301
        %v5303 = vlaneseq
        %v5304 = vshrl.u32 %v5303, 7
        %v5305 = vsub.s32 %v5302, %v5304
        %v5306 = vrot.slane %v4761, %v5305
        %v5308 = vunpack.c.l.s4 1966171168
        %v5309 = vunpack.c.0.s8 %v5308
        %v5310 = vlaneseq
        %v5311 = vshrl.u32 %v5310, 7
        %v5312 = vsub.s32 %v5309, %v5311
        %v5313 = vrot.slane %v5299, %v5312
        %v5314 = vcombine.high %v5306, %v5306
        %v5315 = vcombine.high %v5313, %v5313
        %v5317 = vunpack.c.l.s4 1966171168
        %v5318 = vunpack.c.0.s8 %v5317
        %v5319 = vlaneseq
        %v5320 = vshrl.u32 %v5319, 7
        %v5321 = vsub.s32 %v5318, %v5320
        %v5322 = vrot.slane %v5306, %v5321
        %v5324 = vunpack.c.l.s4 1966171168
        %v5325 = vunpack.c.0.s8 %v5324
        %v5326 = vlaneseq
        %v5327 = vshrl.u32 %v5326, 7
        %v5328 = vsub.s32 %v5325, %v5327
        %v5329 = vrot.slane %v5313, %v5328
        %v5331 = vunpack.c.l.s4 1966171168
        %v5332 = vunpack.c.0.s8 %v5331
        %v5333 = vlaneseq
        %v5334 = vshrl.u32 %v5333, 7
        %v5335 = vsub.s32 %v5332, %v5334
        %v5336 = vrot.slane %v5314, %v5335
        %v5338 = vunpack.c.l.s4 1966171168
        %v5339 = vunpack.c.0.s8 %v5338
        %v5340 = vlaneseq
        %v5341 = vshrl.u32 %v5340, 7
        %v5342 = vsub.s32 %v5339, %v5341
        %v5343 = vrot.slane %v5315, %v5342
        %v5344 = vcombine.high %v5322, %v5322
        %v5345 = vcombine.high %v5329, %v5329
        %v5346 = vcombine.high %v5336, %v5336
        %v5347 = vcombine.high %v5343, %v5343
        %v5348 = vcombine.high %v4762, %v4762
        %v5350 = vunpack.c.l.s4 1966171168
        %v5351 = vunpack.c.0.s8 %v5350
        %v5352 = vlaneseq
        %v5353 = vshrl.u32 %v5352, 7
        %v5354 = vsub.s32 %v5351, %v5353
        %v5355 = vrot.slane %v4762, %v5354
        %v5357 = vunpack.c.l.s4 1966171168
        %v5358 = vunpack.c.0.s8 %v5357
        %v5359 = vlaneseq
        %v5360 = vshrl.u32 %v5359, 7
        %v5361 = vsub.s32 %v5358, %v5360
        %v5362 = vrot.slane %v5348, %v5361
        %v5363 = vcombine.high %v5355, %v5355
        %v5364 = vcombine.high %v5362, %v5362
        %v5366 = vunpack.c.l.s4 1966171168
        %v5367 = vunpack.c.0.s8 %v5366
        %v5368 = vlaneseq
        %v5369 = vshrl.u32 %v5368, 7
        %v5370 = vsub.s32 %v5367, %v5369
        %v5371 = vrot.slane %v5355, %v5370
        %v5373 = vunpack.c.l.s4 1966171168
        %v5374 = vunpack.c.0.s8 %v5373
        %v5375 = vlaneseq
        %v5376 = vshrl.u32 %v5375, 7
        %v5377 = vsub.s32 %v5374, %v5376
        %v5378 = vrot.slane %v5362, %v5377
        %v5380 = vunpack.c.l.s4 1966171168
        %v5381 = vunpack.c.0.s8 %v5380
        %v5382 = vlaneseq
        %v5383 = vshrl.u32 %v5382, 7
        %v5384 = vsub.s32 %v5381, %v5383
        %v5385 = vrot.slane %v5363, %v5384
        %v5387 = vunpack.c.l.s4 1966171168
        %v5388 = vunpack.c.0.s8 %v5387
        %v5389 = vlaneseq
        %v5390 = vshrl.u32 %v5389, 7
        %v5391 = vsub.s32 %v5388, %v5390
        %v5392 = vrot.slane %v5364, %v5391
        %v5393 = vcombine.high %v5371, %v5371
        %v5394 = vcombine.high %v5378, %v5378
        %v5395 = vcombine.high %v5385, %v5385
        %v5396 = vcombine.high %v5392, %v5392
        %v5925 = vunpack.c.l.b16 %v4763
        %v5926 = vunpack.c.h.b16 %v4763
        %v5927 = vunpack.c.l.b16 %v4764
        %v5928 = vunpack.c.h.b16 %v4764
        %v5929 = vunpack.c.l.b16 %v4765
        %v5930 = vunpack.c.h.b16 %v4765
        %v5931 = vunpack.c.l.b16 %v4766
        %v5932 = vunpack.c.h.b16 %v4766
        %v5933 = vunpack.c.l.b16 %v4767
        %v5934 = vunpack.c.h.b16 %v4767
        %v5935 = vunpack.c.l.b16 %v4768
        %v5936 = vunpack.c.h.b16 %v4768
        %v5937 = vunpack.c.l.b16 %v4769
        %v5938 = vunpack.c.h.b16 %v4769
        %v5939 = vunpack.c.l.b16 %v4770
        %v5940 = vunpack.c.h.b16 %v4770
        %v5941 = vunpack.c.l.b16 %v4771
        %v5942 = vunpack.c.h.b16 %v4771
        %v5943 = vunpack.c.l.b16 %v4772
        %v5944 = vunpack.c.h.b16 %v4772
        %v5945 = vunpack.c.l.b16 %v4773
        %v5946 = vunpack.c.h.b16 %v4773
        %v5947 = vunpack.c.l.b16 %v4774
        %v5948 = vunpack.c.h.b16 %v4774
        %v5949 = vunpack.c.l.b16 %v4775
        %v5950 = vunpack.c.h.b16 %v4775
        %v5951 = vunpack.c.l.b16 %v4776
        %v5952 = vunpack.c.h.b16 %v4776
        %v5953 = vunpack.c.l.b16 %v4777
        %v5954 = vunpack.c.h.b16 %v4777
        %v5955 = vunpack.c.l.b16 %v4778
        %v5956 = vunpack.c.h.b16 %v4778
        %v5957 = vunpack.c.l.b16 %v4779
        %v5958 = vunpack.c.h.b16 %v4779
        %v5959 = vunpack.c.l.b16 %v4780
        %v5960 = vunpack.c.h.b16 %v4780
        %v5961 = vunpack.c.l.b16 %v4781
        %v5962 = vunpack.c.h.b16 %v4781
        %v5963 = vunpack.c.l.b16 %v4782
        %v5964 = vunpack.c.h.b16 %v4782
        %v5965 = vunpack.c.l.b16 %v4783
        %v5966 = vunpack.c.h.b16 %v4783
        %v5967 = vunpack.c.l.b16 %v4784
        %v5968 = vunpack.c.h.b16 %v4784
        %v5969 = vunpack.c.l.b16 %v4785
        %v5970 = vunpack.c.h.b16 %v4785
        %v5971 = vunpack.c.l.b16 %v4786
        %v5972 = vunpack.c.h.b16 %v4786
        %v5973 = vunpack.c.l.b16 %v4787
        %v5974 = vunpack.c.h.b16 %v4787
        %v5975 = vunpack.c.l.b16 %v4788
        %v5976 = vunpack.c.h.b16 %v4788
        %v5977 = vunpack.c.l.b16 %v4789
        %v5978 = vunpack.c.h.b16 %v4789
        %v5979 = vunpack.c.l.b16 %v4790
        %v5980 = vunpack.c.h.b16 %v4790
        %v5981 = vunpack.c.l.b16 %v4791
        %v5982 = vunpack.c.h.b16 %v4791
        %v5983 = vunpack.c.l.b16 %v4792
        %v5984 = vunpack.c.h.b16 %v4792
        %v5985 = vunpack.c.l.b16 %v4793
        %v5986 = vunpack.c.h.b16 %v4793
        %v5987 = vunpack.c.l.b16 %v4794
        %v5988 = vunpack.c.h.b16 %v4794
        %v5989 = vunpack.c.l.b16 %v4795
        %v5990 = vunpack.c.h.b16 %v4795
        %v5991 = vunpack.c.l.b16 %v4796
        %v5992 = vunpack.c.h.b16 %v4796
        %v5993 = vunpack.c.l.b16 %v4797
        %v5994 = vunpack.c.h.b16 %v4797
        %v5995 = vunpack.c.l.b16 %v4798
        %v5996 = vunpack.c.h.b16 %v4798
        %v5997 = vunpack.c.l.b16 %v4799
        %v5998 = vunpack.c.h.b16 %v4799
        %v5999 = vunpack.c.l.b16 %v4800
        %v6000 = vunpack.c.h.b16 %v4800
        %v6001 = vunpack.c.l.b16 %v4801
        %v6002 = vunpack.c.h.b16 %v4801
        %v6003 = vunpack.c.l.b16 %v4802
        %v6004 = vunpack.c.h.b16 %v4802
        %v6005 = vunpack.c.l.b16 %v4803
        %v6006 = vunpack.c.h.b16 %v4803
        %v6007 = vunpack.c.l.b16 %v4804
        %v6008 = vunpack.c.h.b16 %v4804
        %v6009 = vunpack.c.l.b16 %v4805
        %v6010 = vunpack.c.h.b16 %v4805
        %v6011 = vunpack.c.l.b16 %v4806
        %v6012 = vunpack.c.h.b16 %v4806
        %v6013 = vunpack.c.l.b16 %v4807
        %v6014 = vunpack.c.h.b16 %v4807
        %v6015 = vunpack.c.l.b16 %v4808
        %v6016 = vunpack.c.h.b16 %v4808
        %v6017 = vunpack.c.l.b16 %v4809
        %v6018 = vunpack.c.h.b16 %v4809
        %v6019 = vunpack.c.l.b16 %v4810
        %v6020 = vunpack.c.h.b16 %v4810
        %v6021 = vunpack.c.l.b16 %v4811
        %v6022 = vunpack.c.h.b16 %v4811
        %v6023 = vunpack.c.l.b16 %v4812
        %v6024 = vunpack.c.h.b16 %v4812
        %v6025 = vunpack.c.l.b16 %v4813
        %v6026 = vunpack.c.h.b16 %v4813
        %v6027 = vunpack.c.l.b16 %v4814
        %v6028 = vunpack.c.h.b16 %v4814
        %v6029 = vunpack.c.l.b16 %v4815
        %v6030 = vunpack.c.h.b16 %v4815
        %v6031 = vunpack.c.l.b16 %v4816
        %v6032 = vunpack.c.h.b16 %v4816
        %v6033 = vunpack.c.l.b16 %v4817
        %v6034 = vunpack.c.h.b16 %v4817
        %v6035 = vunpack.c.l.b16 %v4818
        %v6036 = vunpack.c.h.b16 %v4818
        %v6037 = vunpack.c.l.b16 %v4819
        %v6038 = vunpack.c.h.b16 %v4819
        %v6039 = vunpack.c.l.b16 %v4820
        %v6040 = vunpack.c.h.b16 %v4820
        %v6041 = vunpack.c.l.b16 %v4821
        %v6042 = vunpack.c.h.b16 %v4821
        %v6043 = vunpack.c.l.b16 %v4822
        %v6044 = vunpack.c.h.b16 %v4822
        %v6045 = vunpack.c.l.b16 %v4823
        %v6046 = vunpack.c.h.b16 %v4823
        %v6047 = vunpack.c.l.b16 %v4824
        %v6048 = vunpack.c.h.b16 %v4824
        %v6049 = vunpack.c.l.b16 %v4825
        %v6050 = vunpack.c.h.b16 %v4825
        %v6051 = vunpack.c.l.b16 %v4826
        %v6052 = vunpack.c.h.b16 %v4826
        %v6053 = vunpack.c.l.b16 %v4827
        %v6054 = vunpack.c.h.b16 %v4827
        %v6055 = vunpack.c.l.b16 %v4828
        %v6056 = vunpack.c.h.b16 %v4828
        %v6057 = vunpack.c.l.b16 %v4829
        %v6058 = vunpack.c.h.b16 %v4829
        %v6059 = vunpack.c.l.b16 %v4830
        %v6060 = vunpack.c.h.b16 %v4830
        %v6061 = vunpack.c.l.b16 %v4831
        %v6062 = vunpack.c.h.b16 %v4831
        %v6063 = vunpack.c.l.b16 %v4832
        %v6064 = vunpack.c.h.b16 %v4832
        %v6065 = vunpack.c.l.b16 %v4833
        %v6066 = vunpack.c.h.b16 %v4833
        %v6067 = vunpack.c.l.b16 %v4834
        %v6068 = vunpack.c.h.b16 %v4834
        %v6069 = vunpack.c.l.b16 %v4835
        %v6070 = vunpack.c.h.b16 %v4835
        %v6071 = vunpack.c.l.b16 %v4836
        %v6072 = vunpack.c.h.b16 %v4836
        %v6073 = vunpack.c.l.b16 %v4837
        %v6074 = vunpack.c.h.b16 %v4837
        %v6075 = vunpack.c.l.b16 %v4838
        %v6076 = vunpack.c.h.b16 %v4838
        %v6077 = vunpack.c.l.b16 %v4839
        %v6078 = vunpack.c.h.b16 %v4839
        %v6079 = vunpack.c.l.b16 %v4840
        %v6080 = vunpack.c.h.b16 %v4840
        %v6081 = vunpack.c.l.b16 %v4841
        %v6082 = vunpack.c.h.b16 %v4841
        %v6083 = vunpack.c.l.b16 %v4842
        %v6084 = vunpack.c.h.b16 %v4842
        %v6085 = vunpack.c.l.b16 %v4843
        %v6086 = vunpack.c.h.b16 %v4843
        %v6087 = vunpack.c.l.b16 %v4844
        %v6088 = vunpack.c.h.b16 %v4844
        %v6089 = vunpack.c.l.b16 %v4845
        %v6090 = vunpack.c.h.b16 %v4845
        %v6091 = vunpack.c.l.b16 %v4846
        %v6092 = vunpack.c.h.b16 %v4846
        %v6093 = vunpack.c.l.b16 %v4847
        %v6094 = vunpack.c.h.b16 %v4847
        %v6095 = vunpack.c.l.b16 %v4848
        %v6096 = vunpack.c.h.b16 %v4848
        %v6097 = vunpack.c.l.b16 %v4849
        %v6098 = vunpack.c.h.b16 %v4849
        %v6099 = vunpack.c.l.b16 %v4850
        %v6100 = vunpack.c.h.b16 %v4850
        %v6101 = vunpack.c.l.b16 %v4851
        %v6102 = vunpack.c.h.b16 %v4851
        %v6103 = vunpack.c.l.b16 %v4852
        %v6104 = vunpack.c.h.b16 %v4852
        %v6105 = vunpack.c.l.b16 %v4853
        %v6106 = vunpack.c.h.b16 %v4853
        %v6107 = vunpack.c.l.b16 %v4854
        %v6108 = vunpack.c.h.b16 %v4854
        %v6109 = vunpack.c.l.b16 %v4855
        %v6110 = vunpack.c.h.b16 %v4855
        %v6111 = vunpack.c.l.b16 %v4856
        %v6112 = vunpack.c.h.b16 %v4856
        %v6113 = vunpack.c.l.b16 %v4857
        %v6114 = vunpack.c.h.b16 %v4857
        %v6115 = vunpack.c.l.b16 %v4858
        %v6116 = vunpack.c.h.b16 %v4858
        %v6117 = vunpack.c.l.b16 %v4859
        %v6118 = vunpack.c.h.b16 %v4859
        %v6119 = vunpack.c.l.b16 %v4860
        %v6120 = vunpack.c.h.b16 %v4860
        %v6121 = vunpack.c.l.b16 %v4861
        %v6122 = vunpack.c.h.b16 %v4861
        %v6123 = vunpack.c.l.b16 %v4862
        %v6124 = vunpack.c.h.b16 %v4862
        %v6125 = vunpack.c.l.b16 %v4863
        %v6126 = vunpack.c.h.b16 %v4863
        %v6127 = vunpack.c.l.b16 %v4864
        %v6128 = vunpack.c.h.b16 %v4864
        %v6129 = vunpack.c.l.b16 %v4865
        %v6130 = vunpack.c.h.b16 %v4865
        %v6131 = vunpack.c.l.b16 %v4866
        %v6132 = vunpack.c.h.b16 %v4866
        %v6133 = vunpack.c.l.b16 %v4867
        %v6134 = vunpack.c.h.b16 %v4867
        %v6135 = vunpack.c.l.b16 %v4868
        %v6136 = vunpack.c.h.b16 %v4868
        %v6137 = vunpack.c.l.b16 %v4869
        %v6138 = vunpack.c.h.b16 %v4869
        %v6139 = vunpack.c.l.b16 %v4870
        %v6140 = vunpack.c.h.b16 %v4870
        %v6141 = vunpack.c.l.b16 %v4871
        %v6142 = vunpack.c.h.b16 %v4871
        %v6143 = vunpack.c.l.b16 %v4872
        %v6144 = vunpack.c.h.b16 %v4872
        %v6145 = vunpack.c.l.b16 %v4873
        %v6146 = vunpack.c.h.b16 %v4873
        %v6147 = vunpack.c.l.b16 %v4874
        %v6148 = vunpack.c.h.b16 %v4874
        %v6149 = vunpack.c.l.b16 %v4875
        %v6150 = vunpack.c.h.b16 %v4875
        %v6151 = vunpack.c.l.b16 %v4876
        %v6152 = vunpack.c.h.b16 %v4876
        %v6153 = vunpack.c.l.b16 %v4877
        %v6154 = vunpack.c.h.b16 %v4877
        %v6155 = vunpack.c.l.b16 %v4878
        %v6156 = vunpack.c.h.b16 %v4878
        %v6157 = vunpack.c.l.b16 %v4879
        %v6158 = vunpack.c.h.b16 %v4879
        %v6159 = vunpack.c.l.b16 %v4880
        %v6160 = vunpack.c.h.b16 %v4880
        %v6161 = vunpack.c.l.b16 %v4881
        %v6162 = vunpack.c.h.b16 %v4881
        %v6163 = vunpack.c.l.b16 %v4882
        %v6164 = vunpack.c.h.b16 %v4882
        %v6165 = vunpack.c.l.b16 %v4883
        %v6166 = vunpack.c.h.b16 %v4883
        %v6167 = vunpack.c.l.b16 %v4884
        %v6168 = vunpack.c.h.b16 %v4884
        %v6169 = vunpack.c.l.b16 %v4885
        %v6170 = vunpack.c.h.b16 %v4885
        %v6171 = vunpack.c.l.b16 %v4886
        %v6172 = vunpack.c.h.b16 %v4886
        %v6173 = vunpack.c.l.b16 %v4887
        %v6174 = vunpack.c.h.b16 %v4887
        %v6175 = vunpack.c.l.b16 %v4888
        %v6176 = vunpack.c.h.b16 %v4888
        %v6177 = vunpack.c.l.b16 %v4889
        %v6178 = vunpack.c.h.b16 %v4889
        %v6179 = vunpack.c.l.b16 %v4890
        %v6180 = vunpack.c.h.b16 %v4890
        %v6181 = vunpack.c.l.b16 %v4891
        %v6182 = vunpack.c.h.b16 %v4891
        %v6183 = vunpack.c.l.b16 %v4892
        %v6184 = vunpack.c.h.b16 %v4892
        %v6185 = vunpack.c.l.b16 %v4893
        %v6186 = vunpack.c.h.b16 %v4893
        %v6187 = vunpack.c.l.b16 %v4894
        %v6188 = vunpack.c.h.b16 %v4894
        %v6189 = vunpack.c.l.b16 %v4895
        %v6190 = vunpack.c.h.b16 %v4895
        %v6191 = vunpack.c.l.b16 %v4896
        %v6192 = vunpack.c.h.b16 %v4896
        %v6193 = vunpack.c.l.b16 %v4897
        %v6194 = vunpack.c.h.b16 %v4897
        %v6195 = vunpack.c.l.b16 %v4898
        %v6196 = vunpack.c.h.b16 %v4898
        %v6197 = vunpack.c.l.b16 %v4899
        %v6198 = vunpack.c.h.b16 %v4899
        %v6199 = vunpack.c.l.b16 %v4900
        %v6200 = vunpack.c.h.b16 %v4900
        %v6201 = vunpack.c.l.b16 %v4901
        %v6202 = vunpack.c.h.b16 %v4901
        %v6203 = vunpack.c.l.b16 %v4902
        %v6204 = vunpack.c.h.b16 %v4902
        %v6205 = vunpack.c.l.b16 %v4903
        %v6206 = vunpack.c.h.b16 %v4903
        %v6207 = vunpack.c.l.b16 %v4904
        %v6208 = vunpack.c.h.b16 %v4904
        %v6209 = vunpack.c.l.b16 %v4905
        %v6210 = vunpack.c.h.b16 %v4905
        %v6211 = vunpack.c.l.b16 %v4906
        %v6212 = vunpack.c.h.b16 %v4906
        %v6213 = vunpack.c.l.b16 %v4907
        %v6214 = vunpack.c.h.b16 %v4907
        %v6215 = vunpack.c.l.b16 %v4908
        %v6216 = vunpack.c.h.b16 %v4908
        %v6217 = vunpack.c.l.b16 %v4909
        %v6218 = vunpack.c.h.b16 %v4909
        %v6219 = vunpack.c.l.b16 %v4910
        %v6220 = vunpack.c.h.b16 %v4910
        %v6221 = vunpack.c.l.b16 %v4911
        %v6222 = vunpack.c.h.b16 %v4911
        %v6223 = vunpack.c.l.b16 %v4912
        %v6224 = vunpack.c.h.b16 %v4912
        %v6225 = vunpack.c.l.b16 %v4913
        %v6226 = vunpack.c.h.b16 %v4913
        %v6227 = vunpack.c.l.b16 %v4914
        %v6228 = vunpack.c.h.b16 %v4914
        %v6229 = vunpack.c.l.b16 %v4915
        %v6230 = vunpack.c.h.b16 %v4915
        %v6231 = vunpack.c.l.b16 %v4916
        %v6232 = vunpack.c.h.b16 %v4916
        %v6233 = vunpack.c.l.b16 %v4917
        %v6234 = vunpack.c.h.b16 %v4917
        %v6235 = vunpack.c.l.b16 %v4918
        %v6236 = vunpack.c.h.b16 %v4918
        %v6237 = vunpack.c.l.b16 %v4919
        %v6238 = vunpack.c.h.b16 %v4919
        %v6239 = vunpack.c.l.b16 %v4920
        %v6240 = vunpack.c.h.b16 %v4920
        %v6241 = vunpack.c.l.b16 %v4921
        %v6242 = vunpack.c.h.b16 %v4921
        %v6243 = vunpack.c.l.b16 %v4922
        %v6244 = vunpack.c.h.b16 %v4922
        %v6245 = vunpack.c.l.b16 %v4923
        %v6246 = vunpack.c.h.b16 %v4923
        %v6247 = vunpack.c.l.b16 %v4924
        %v6248 = vunpack.c.h.b16 %v4924
        %v6249 = vunpack.c.l.b16 %v4925
        %v6250 = vunpack.c.h.b16 %v4925
        %v6251 = vunpack.c.l.b16 %v4926
        %v6252 = vunpack.c.h.b16 %v4926
        %v6253 = vunpack.c.l.b16 %v4927
        %v6254 = vunpack.c.h.b16 %v4927
        %v6255 = vunpack.c.l.b16 %v4928
        %v6256 = vunpack.c.h.b16 %v4928
        %v6257 = vunpack.c.l.b16 %v4929
        %v6258 = vunpack.c.h.b16 %v4929
        %v6259 = vunpack.c.l.b16 %v4930
        %v6260 = vunpack.c.h.b16 %v4930
        %v6261 = vunpack.c.l.b16 %v4931
        %v6262 = vunpack.c.h.b16 %v4931
        %v6263 = vunpack.c.l.b16 %v4932
        %v6264 = vunpack.c.h.b16 %v4932
        %v6265 = vunpack.c.l.b16 %v4933
        %v6266 = vunpack.c.h.b16 %v4933
        %v6267 = vunpack.c.l.b16 %v4934
        %v6268 = vunpack.c.h.b16 %v4934
        %v6269 = vunpack.c.l.b16 %v4935
        %v6270 = vunpack.c.h.b16 %v4935
        %v6271 = vunpack.c.l.b16 %v4936
        %v6272 = vunpack.c.h.b16 %v4936
        %v6273 = vunpack.c.l.b16 %v4937
        %v6274 = vunpack.c.h.b16 %v4937
        %v6275 = vunpack.c.l.b16 %v4938
        %v6276 = vunpack.c.h.b16 %v4938
        %v6277 = vunpack.c.l.b16 %v4939
        %v6278 = vunpack.c.h.b16 %v4939
        %v6279 = vunpack.c.l.b16 %v4940
        %v6280 = vunpack.c.h.b16 %v4940
        %v6281 = vunpack.c.l.b16 %v4941
        %v6282 = vunpack.c.h.b16 %v4941
        %v6283 = vunpack.c.l.b16 %v4942
        %v6284 = vunpack.c.h.b16 %v4942
        %v6285 = vunpack.c.l.b16 %v4943
        %v6286 = vunpack.c.h.b16 %v4943
        %v6287 = vunpack.c.l.b16 %v4944
        %v6288 = vunpack.c.h.b16 %v4944
        %v6289 = vunpack.c.l.b16 %v4945
        %v6290 = vunpack.c.h.b16 %v4945
        %v6291 = vunpack.c.l.b16 %v4946
        %v6292 = vunpack.c.h.b16 %v4946
        %v6293 = vunpack.c.l.b16 %v4947
        %v6294 = vunpack.c.h.b16 %v4947
        %v6295 = vunpack.c.l.b16 %v4948
        %v6296 = vunpack.c.h.b16 %v4948
        %v6297 = vunpack.c.l.b16 %v4949
        %v6298 = vunpack.c.h.b16 %v4949
        %v6299 = vunpack.c.l.b16 %v4950
        %v6300 = vunpack.c.h.b16 %v4950
        %v6301 = vunpack.c.l.b16 %v4951
        %v6302 = vunpack.c.h.b16 %v4951
        %v6303 = vunpack.c.l.b16 %v4952
        %v6304 = vunpack.c.h.b16 %v4952
        %v6305 = vunpack.c.l.b16 %v4953
        %v6306 = vunpack.c.h.b16 %v4953
        %v6307 = vunpack.c.l.b16 %v4954
        %v6308 = vunpack.c.h.b16 %v4954
        %v6309 = vunpack.c.l.b16 %v4955
        %v6310 = vunpack.c.h.b16 %v4955
        %v6311 = vunpack.c.l.b16 %v4956
        %v6312 = vunpack.c.h.b16 %v4956
        %v6313 = vunpack.c.l.b16 %v4957
        %v6314 = vunpack.c.h.b16 %v4957
        %v6315 = vunpack.c.l.b16 %v4958
        %v6316 = vunpack.c.h.b16 %v4958
        %v6317 = vunpack.c.l.b16 %v4959
        %v6318 = vunpack.c.h.b16 %v4959
        %v6319 = vunpack.c.l.b16 %v4960
        %v6320 = vunpack.c.h.b16 %v4960
        %v6321 = vunpack.c.l.b16 %v4961
        %v6322 = vunpack.c.h.b16 %v4961
        %v6323 = vunpack.c.l.b16 %v4962
        %v6324 = vunpack.c.h.b16 %v4962
        %v6325 = vunpack.c.l.b16 %v4963
        %v6326 = vunpack.c.h.b16 %v4963
        %v6327 = vunpack.c.l.b16 %v4964
        %v6328 = vunpack.c.h.b16 %v4964
        %v6329 = vunpack.c.l.b16 %v4965
        %v6330 = vunpack.c.h.b16 %v4965
        %v6331 = vunpack.c.l.b16 %v4966
        %v6332 = vunpack.c.h.b16 %v4966
        %v6333 = vunpack.c.l.b16 %v4967
        %v6334 = vunpack.c.h.b16 %v4967
        %v6335 = vunpack.c.l.b16 %v4968
        %v6336 = vunpack.c.h.b16 %v4968
        %v6337 = vunpack.c.l.b16 %v4969
        %v6338 = vunpack.c.h.b16 %v4969
        %v6339 = vunpack.c.l.b16 %v4970
        %v6340 = vunpack.c.h.b16 %v4970
        %v6341 = vunpack.c.l.b16 %v4971
        %v6342 = vunpack.c.h.b16 %v4971
        %v6343 = vunpack.c.l.b16 %v4972
        %v6344 = vunpack.c.h.b16 %v4972
        %v6345 = vunpack.c.l.b16 %v4973
        %v6346 = vunpack.c.h.b16 %v4973
        %v6347 = vunpack.c.l.b16 %v4974
        %v6348 = vunpack.c.h.b16 %v4974
        %v6349 = vunpack.c.l.b16 %v4975
        %v6350 = vunpack.c.h.b16 %v4975
        %v6351 = vunpack.c.l.b16 %v4976
        %v6352 = vunpack.c.h.b16 %v4976
        %v6353 = vunpack.c.l.b16 %v4977
        %v6354 = vunpack.c.h.b16 %v4977
        %v6355 = vunpack.c.l.b16 %v4978
        %v6356 = vunpack.c.h.b16 %v4978
        %v6357 = vunpack.c.l.b16 %v4979
        %v6358 = vunpack.c.h.b16 %v4979
        %v6359 = vunpack.c.l.b16 %v4980
        %v6360 = vunpack.c.h.b16 %v4980
        %v6361 = vunpack.c.l.b16 %v4981
        %v6362 = vunpack.c.h.b16 %v4981
        %v6363 = vunpack.c.l.b16 %v4982
        %v6364 = vunpack.c.h.b16 %v4982
        %v6365 = vunpack.c.l.b16 %v4983
        %v6366 = vunpack.c.h.b16 %v4983
        %v6367 = vunpack.c.l.b16 %v4984
        %v6368 = vunpack.c.h.b16 %v4984
        %v6369 = vunpack.c.l.b16 %v4985
        %v6370 = vunpack.c.h.b16 %v4985
        %v6371 = vunpack.c.l.b16 %v4986
        %v6372 = vunpack.c.h.b16 %v4986
        %v6373 = vunpack.c.l.b16 %v4987
        %v6374 = vunpack.c.h.b16 %v4987
        %v6375 = vunpack.c.l.b16 %v4988
        %v6376 = vunpack.c.h.b16 %v4988
        %v6377 = vunpack.c.l.b16 %v4989
        %v6378 = vunpack.c.h.b16 %v4989
        %v6379 = vunpack.c.l.b16 %v4990
        %v6380 = vunpack.c.h.b16 %v4990
        %v6381 = vunpack.c.l.b16 %v4991
        %v6382 = vunpack.c.h.b16 %v4991
        %v6383 = vunpack.c.l.b16 %v4992
        %v6384 = vunpack.c.h.b16 %v4992
        %v6385 = vunpack.c.l.b16 %v4993
        %v6386 = vunpack.c.h.b16 %v4993
        %v6387 = vunpack.c.l.b16 %v4994
        %v6388 = vunpack.c.h.b16 %v4994
        %v6389 = vunpack.c.l.b16 %v4995
        %v6390 = vunpack.c.h.b16 %v4995
        %v6391 = vunpack.c.l.b16 %v4996
        %v6392 = vunpack.c.h.b16 %v4996
        %v6393 = vunpack.c.l.b16 %v4997
        %v6394 = vunpack.c.h.b16 %v4997
        %v6395 = vunpack.c.l.b16 %v4998
        %v6396 = vunpack.c.h.b16 %v4998
        %v6397 = vunpack.c.l.b16 %v4999
        %v6398 = vunpack.c.h.b16 %v4999
        %v6399 = vunpack.c.l.b16 %v5000
        %v6400 = vunpack.c.h.b16 %v5000
        %v6401 = vunpack.c.l.b16 %v5001
        %v6402 = vunpack.c.h.b16 %v5001
        %v6403 = vunpack.c.l.b16 %v5002
        %v6404 = vunpack.c.h.b16 %v5002
        %v6405 = vunpack.c.l.b16 %v5003
        %v6406 = vunpack.c.h.b16 %v5003
        %v6407 = vunpack.c.l.b16 %v5004
        %v6408 = vunpack.c.h.b16 %v5004
        %v6409 = vunpack.c.l.b16 %v5005
        %v6410 = vunpack.c.h.b16 %v5005
        %v6411 = vunpack.c.l.b16 %v5006
        %v6412 = vunpack.c.h.b16 %v5006
        %v6413 = vunpack.c.l.b16 %v5007
        %v6414 = vunpack.c.h.b16 %v5007
        %v6415 = vunpack.c.l.b16 %v5008
        %v6416 = vunpack.c.h.b16 %v5008
        %v6417 = vunpack.c.l.b16 %v5009
        %v6418 = vunpack.c.h.b16 %v5009
        %v6419 = vunpack.c.l.b16 %v5010
        %v6420 = vunpack.c.h.b16 %v5010
        %v6421 = vunpack.c.l.b16 %v5011
        %v6422 = vunpack.c.h.b16 %v5011
        %v6423 = vunpack.c.l.b16 %v5012
        %v6424 = vunpack.c.h.b16 %v5012
        %v6425 = vunpack.c.l.b16 %v5013
        %v6426 = vunpack.c.h.b16 %v5013
        %v6427 = vunpack.c.l.b16 %v5014
        %v6428 = vunpack.c.h.b16 %v5014
        %v6429 = vunpack.c.l.b16 %v5015
        %v6430 = vunpack.c.h.b16 %v5015
        %v6431 = vunpack.c.l.b16 %v5016
        %v6432 = vunpack.c.h.b16 %v5016
        %v6433 = vunpack.c.l.b16 %v5017
        %v6434 = vunpack.c.h.b16 %v5017
        %v6435 = vunpack.c.l.b16 %v5018
        %v6436 = vunpack.c.h.b16 %v5018
        %v6437 = vunpack.c.l.b16 %v5019
        %v6438 = vunpack.c.h.b16 %v5019
        %v6439 = vunpack.c.l.b16 %v5020
        %v6440 = vunpack.c.h.b16 %v5020
        %v6441 = vunpack.c.l.b16 %v5021
        %v6442 = vunpack.c.h.b16 %v5021
        %v6443 = vunpack.c.l.b16 %v5022
        %v6444 = vunpack.c.h.b16 %v5022
        %v6445 = vunpack.c.l.b16 %v5023
        %v6446 = vunpack.c.h.b16 %v5023
        %v6447 = vunpack.c.l.b16 %v5024
        %v6448 = vunpack.c.h.b16 %v5024
        %v6449 = vunpack.c.l.b16 %v5025
        %v6450 = vunpack.c.h.b16 %v5025
        %v6451 = vunpack.c.l.b16 %v5026
        %v6452 = vunpack.c.h.b16 %v5026
        %v6453 = vunpack.c.l.b16 %v5027
        %v6454 = vunpack.c.h.b16 %v5027
        %v6455 = vunpack.c.l.b16 %v5028
        %v6456 = vunpack.c.h.b16 %v5028
        %v6457 = vunpack.c.l.b16 %v5029
        %v6458 = vunpack.c.h.b16 %v5029
        %v6459 = vunpack.c.l.b16 %v5030
        %v6460 = vunpack.c.h.b16 %v5030
        %v6461 = vunpack.c.l.b16 %v5031
        %v6462 = vunpack.c.h.b16 %v5031
        %v6463 = vunpack.c.l.b16 %v5032
        %v6464 = vunpack.c.h.b16 %v5032
        %v6465 = vunpack.c.l.b16 %v5033
        %v6466 = vunpack.c.h.b16 %v5033
        %v6467 = vunpack.c.l.b16 %v5034
        %v6468 = vunpack.c.h.b16 %v5034
        %v6469 = vunpack.c.l.b16 %v5035
        %v6470 = vunpack.c.h.b16 %v5035
        %v6471 = vunpack.c.l.b16 %v5036
        %v6472 = vunpack.c.h.b16 %v5036
        %v6473 = vunpack.c.l.b16 %v5037
        %v6474 = vunpack.c.h.b16 %v5037
        %v6475 = vunpack.c.l.b16 %v5038
        %v6476 = vunpack.c.h.b16 %v5038
        %v6477 = vunpack.c.l.b16 %v5039
        %v6478 = vunpack.c.h.b16 %v5039
        %v6479 = vunpack.c.l.b16 %v5040
        %v6480 = vunpack.c.h.b16 %v5040
        %v6481 = vunpack.c.l.b16 %v5041
        %v6482 = vunpack.c.h.b16 %v5041
        %v6483 = vunpack.c.l.b16 %v5042
        %v6484 = vunpack.c.h.b16 %v5042
        %v6485 = vunpack.c.l.b16 %v5043
        %v6486 = vunpack.c.h.b16 %v5043
        %v6487 = vunpack.c.l.b16 %v5044
        %v6488 = vunpack.c.h.b16 %v5044
        %v6489 = vunpack.c.l.b16 %v5045
        %v6490 = vunpack.c.h.b16 %v5045
        %v6491 = vunpack.c.l.b16 %v5046
        %v6492 = vunpack.c.h.b16 %v5046
        %v6493 = vunpack.c.l.b16 %v5047
        %v6494 = vunpack.c.h.b16 %v5047
        %v6495 = vunpack.c.l.b16 %v5048
        %v6496 = vunpack.c.h.b16 %v5048
        %v6497 = vunpack.c.l.b16 %v5049
        %v6498 = vunpack.c.h.b16 %v5049
        %v6499 = vunpack.c.l.b16 %v5050
        %v6500 = vunpack.c.h.b16 %v5050
        %v6501 = vunpack.c.l.b16 %v5051
        %v6502 = vunpack.c.h.b16 %v5051
        %v6503 = vunpack.c.l.b16 %v5052
        %v6504 = vunpack.c.h.b16 %v5052
        %v6505 = vunpack.c.l.b16 %v5053
        %v6506 = vunpack.c.h.b16 %v5053
        %v6507 = vunpack.c.l.b16 %v5054
        %v6508 = vunpack.c.h.b16 %v5054
        %v6509 = vunpack.c.l.b16 %v5055
        %v6510 = vunpack.c.h.b16 %v5055
        %v6511 = vunpack.c.l.b16 %v5056
        %v6512 = vunpack.c.h.b16 %v5056
        %v6513 = vunpack.c.l.b16 %v5057
        %v6514 = vunpack.c.h.b16 %v5057
        %v6515 = vunpack.c.l.b16 %v5058
        %v6516 = vunpack.c.h.b16 %v5058
        %v6517 = vunpack.c.l.b16 %v5059
        %v6518 = vunpack.c.h.b16 %v5059
        %v6519 = vunpack.c.l.b16 %v5060
        %v6520 = vunpack.c.h.b16 %v5060
        %v6521 = vunpack.c.l.b16 %v5061
        %v6522 = vunpack.c.h.b16 %v5061
        %v6523 = vunpack.c.l.b16 %v5062
        %v6524 = vunpack.c.h.b16 %v5062
        %v6525 = vunpack.c.l.b16 %v5063
        %v6526 = vunpack.c.h.b16 %v5063
        %v6527 = vunpack.c.l.b16 %v5064
        %v6528 = vunpack.c.h.b16 %v5064
        %v6529 = vunpack.c.l.b16 %v5065
        %v6530 = vunpack.c.h.b16 %v5065
        %v6531 = vunpack.c.l.b16 %v5066
        %v6532 = vunpack.c.h.b16 %v5066
        %v6533 = vunpack.c.l.b16 %v5067
        %v6534 = vunpack.c.h.b16 %v5067
        %v6535 = vunpack.c.l.b16 %v5068
        %v6536 = vunpack.c.h.b16 %v5068
        %v6537 = vunpack.c.l.b16 %v5069
        %v6538 = vunpack.c.h.b16 %v5069
        %v6539 = vunpack.c.l.b16 %v5070
        %v6540 = vunpack.c.h.b16 %v5070
        %v6541 = vunpack.c.l.b16 %v5071
        %v6542 = vunpack.c.h.b16 %v5071
        %v6543 = vunpack.c.l.b16 %v5072
        %v6544 = vunpack.c.h.b16 %v5072
        %v6545 = vunpack.c.l.b16 %v5073
        %v6546 = vunpack.c.h.b16 %v5073
        %v6547 = vunpack.c.l.b16 %v5074
        %v6548 = vunpack.c.h.b16 %v5074
        %v6549 = vunpack.c.l.b16 %v5075
        %v6550 = vunpack.c.h.b16 %v5075
        %v6551 = vunpack.c.l.b16 %v5076
        %v6552 = vunpack.c.h.b16 %v5076
        %v6553 = vunpack.c.l.b16 %v5077
        %v6554 = vunpack.c.h.b16 %v5077
        %v6555 = vunpack.c.l.b16 %v5078
        %v6556 = vunpack.c.h.b16 %v5078
        %v6557 = vunpack.c.l.b16 %v5079
        %v6558 = vunpack.c.h.b16 %v5079
        %v6559 = vunpack.c.l.b16 %v5080
        %v6560 = vunpack.c.h.b16 %v5080
        %v6561 = vunpack.c.l.b16 %v5081
        %v6562 = vunpack.c.h.b16 %v5081
        %v6563 = vunpack.c.l.b16 %v5082
        %v6564 = vunpack.c.h.b16 %v5082
        %v6565 = vunpack.c.l.b16 %v5083
        %v6566 = vunpack.c.h.b16 %v5083
        %v6567 = vunpack.c.l.b16 %v5084
        %v6568 = vunpack.c.h.b16 %v5084
        %v6569 = vunpack.c.l.b16 %v5085
        %v6570 = vunpack.c.h.b16 %v5085
        %v6571 = vunpack.c.l.b16 %v5086
        %v6572 = vunpack.c.h.b16 %v5086
        %v6573 = vunpack.c.l.b16 %v5087
        %v6574 = vunpack.c.h.b16 %v5087
        %v6575 = vunpack.c.l.b16 %v5088
        %v6576 = vunpack.c.h.b16 %v5088
        %v6577 = vunpack.c.l.b16 %v5089
        %v6578 = vunpack.c.h.b16 %v5089
        %v6579 = vunpack.c.l.b16 %v5090
        %v6580 = vunpack.c.h.b16 %v5090
        %v6581 = vunpack.c.l.b16 %v5091
        %v6582 = vunpack.c.h.b16 %v5091
        %v6583 = vunpack.c.l.b16 %v5092
        %v6584 = vunpack.c.h.b16 %v5092
        %v6585 = vunpack.c.l.b16 %v5093
        %v6586 = vunpack.c.h.b16 %v5093
        %v6587 = vunpack.c.l.b16 %v5094
        %v6588 = vunpack.c.h.b16 %v5094
        %v6589 = vunpack.c.l.b16 %v5095
        %v6590 = vunpack.c.h.b16 %v5095
        %v6591 = vunpack.c.l.b16 %v5096
        %v6592 = vunpack.c.h.b16 %v5096
        %v6593 = vunpack.c.l.b16 %v5097
        %v6594 = vunpack.c.h.b16 %v5097
        %v6595 = vunpack.c.l.b16 %v5098
        %v6596 = vunpack.c.h.b16 %v5098
        %v6597 = vunpack.c.l.b16 %v5099
        %v6598 = vunpack.c.h.b16 %v5099
        %v6599 = vunpack.c.l.b16 %v5100
        %v6600 = vunpack.c.h.b16 %v5100
        %v6601 = vunpack.c.l.b16 %v5101
        %v6602 = vunpack.c.h.b16 %v5101
        %v6603 = vunpack.c.l.b16 %v5102
        %v6604 = vunpack.c.h.b16 %v5102
        %v6605 = vunpack.c.l.b16 %v5103
        %v6606 = vunpack.c.h.b16 %v5103
        %v6607 = vunpack.c.l.b16 %v5104
        %v6608 = vunpack.c.h.b16 %v5104
        %v6609 = vunpack.c.l.b16 %v5105
        %v6610 = vunpack.c.h.b16 %v5105
        %v6611 = vunpack.c.l.b16 %v5106
        %v6612 = vunpack.c.h.b16 %v5106
        %v6613 = vunpack.c.l.b16 %v5107
        %v6614 = vunpack.c.h.b16 %v5107
        %v6615 = vunpack.c.l.b16 %v5108
        %v6616 = vunpack.c.h.b16 %v5108
        %v6617 = vunpack.c.l.b16 %v5109
        %v6618 = vunpack.c.h.b16 %v5109
        %v6619 = vunpack.c.l.b16 %v5110
        %v6620 = vunpack.c.h.b16 %v5110
        %v6621 = vunpack.c.l.b16 %v5111
        %v6622 = vunpack.c.h.b16 %v5111
        %v6623 = vunpack.c.l.b16 %v5112
        %v6624 = vunpack.c.h.b16 %v5112
        %v6625 = vunpack.c.l.b16 %v5113
        %v6626 = vunpack.c.h.b16 %v5113
        %v6627 = vunpack.c.l.b16 %v5114
        %v6628 = vunpack.c.h.b16 %v5114
        %v6629 = vunpack.c.l.b16 %v5115
        %v6630 = vunpack.c.h.b16 %v5115
        %v6631 = vunpack.c.l.b16 %v5116
        %v6632 = vunpack.c.h.b16 %v5116
        %v6633 = vunpack.c.l.b16 %v5117
        %v6634 = vunpack.c.h.b16 %v5117
        %v6635 = vunpack.c.l.b16 %v5118
        %v6636 = vunpack.c.h.b16 %v5118
        %v6637 = vunpack.c.l.b16 %v5119
        %v6638 = vunpack.c.h.b16 %v5119
        %v6639 = vunpack.c.l.b16 %v5120
        %v6640 = vunpack.c.h.b16 %v5120
        %v6641 = vunpack.c.l.b16 %v5121
        %v6642 = vunpack.c.h.b16 %v5121
        %v6643 = vunpack.c.l.b16 %v5122
        %v6644 = vunpack.c.h.b16 %v5122
        %v6645 = vunpack.c.l.b16 %v5123
        %v6646 = vunpack.c.h.b16 %v5123
        %v6647 = vunpack.c.l.b16 %v5124
        %v6648 = vunpack.c.h.b16 %v5124
        %v6649 = vunpack.c.l.b16 %v5125
        %v6650 = vunpack.c.h.b16 %v5125
        %v6651 = vunpack.c.l.b16 %v5126
        %v6652 = vunpack.c.h.b16 %v5126
        %v6653 = vunpack.c.l.b16 %v5127
        %v6654 = vunpack.c.h.b16 %v5127
        %v6655 = vunpack.c.l.b16 %v5128
        %v6656 = vunpack.c.h.b16 %v5128
        %v6657 = vunpack.c.l.b16 %v5129
        %v6658 = vunpack.c.h.b16 %v5129
        %v6659 = vunpack.c.l.b16 %v5130
        %v6660 = vunpack.c.h.b16 %v5130
        %v6661 = vunpack.c.l.b16 %v5131
        %v6662 = vunpack.c.h.b16 %v5131
        %v6663 = vunpack.c.l.b16 %v5132
        %v6664 = vunpack.c.h.b16 %v5132
        %v6665 = vunpack.c.l.b16 %v5133
        %v6666 = vunpack.c.h.b16 %v5133
        %v6667 = vunpack.c.l.b16 %v5134
        %v6668 = vunpack.c.h.b16 %v5134
        %v6669 = vunpack.c.l.b16 %v5135
        %v6670 = vunpack.c.h.b16 %v5135
        %v6671 = vunpack.c.l.b16 %v5136
        %v6672 = vunpack.c.h.b16 %v5136
        %v6673 = vunpack.c.l.b16 %v5137
        %v6674 = vunpack.c.h.b16 %v5137
        %v6675 = vunpack.c.l.b16 %v5138
        %v6676 = vunpack.c.h.b16 %v5138
        %v6677 = vunpack.c.l.b16 %v5139
        %v6678 = vunpack.c.h.b16 %v5139
        %v6679 = vunpack.c.l.b16 %v5140
        %v6680 = vunpack.c.h.b16 %v5140
        %v6681 = vunpack.c.l.b16 %v5141
        %v6682 = vunpack.c.h.b16 %v5141
        %v6683 = vunpack.c.l.b16 %v5142
        %v6684 = vunpack.c.h.b16 %v5142
        %v6685 = vunpack.c.l.b16 %v5143
        %v6686 = vunpack.c.h.b16 %v5143
        %v6687 = vunpack.c.l.b16 %v5144
        %v6688 = vunpack.c.h.b16 %v5144
        %v6689 = vunpack.c.l.b16 %v5145
        %v6690 = vunpack.c.h.b16 %v5145
        %v6691 = vunpack.c.l.b16 %v5146
        %v6692 = vunpack.c.h.b16 %v5146
        %v6693 = vunpack.c.l.b16 %v5147
        %v6694 = vunpack.c.h.b16 %v5147
        %v6695 = vunpack.c.l.b16 %v5148
        %v6696 = vunpack.c.h.b16 %v5148
        %v6697 = vunpack.c.l.b16 %v5149
        %v6698 = vunpack.c.h.b16 %v5149
        %v6699 = vunpack.c.l.b16 %v5150
        %v6700 = vunpack.c.h.b16 %v5150
        %v6701 = vunpack.c.l.b16 %v5151
        %v6702 = vunpack.c.h.b16 %v5151
        %v6703 = vunpack.c.l.b16 %v5152
        %v6704 = vunpack.c.h.b16 %v5152
        %v6705 = vunpack.c.l.b16 %v5153
        %v6706 = vunpack.c.h.b16 %v5153
        %v6707 = vunpack.c.l.b16 %v5154
        %v6708 = vunpack.c.h.b16 %v5154
        %v6709 = vunpack.c.l.b16 %v5155
        %v6710 = vunpack.c.h.b16 %v5155
        %v6711 = vunpack.c.l.b16 %v5156
        %v6712 = vunpack.c.h.b16 %v5156
        %v6713 = vunpack.c.l.b16 %v5157
        %v6714 = vunpack.c.h.b16 %v5157
        %v6715 = vunpack.c.l.b16 %v5158
        %v6716 = vunpack.c.h.b16 %v5158
        %v6717 = vunpack.c.l.b16 %v5159
        %v6718 = vunpack.c.h.b16 %v5159
        %v6719 = vunpack.c.l.b16 %v5160
        %v6720 = vunpack.c.h.b16 %v5160
        %v6721 = vunpack.c.l.b16 %v5161
        %v6722 = vunpack.c.h.b16 %v5161
        %v6723 = vunpack.c.l.b16 %v5162
        %v6724 = vunpack.c.h.b16 %v5162
        %v6725 = vunpack.c.l.b16 %v5163
        %v6726 = vunpack.c.h.b16 %v5163
        %v6727 = vunpack.c.l.b16 %v5164
        %v6728 = vunpack.c.h.b16 %v5164
        %v6729 = vunpack.c.l.b16 %v5165
        %v6730 = vunpack.c.h.b16 %v5165
        %v6731 = vunpack.c.l.b16 %v5166
        %v6732 = vunpack.c.h.b16 %v5166
        %v6733 = vunpack.c.l.b16 %v5167
        %v6734 = vunpack.c.h.b16 %v5167
        %v6735 = vunpack.c.l.b16 %v5168
        %v6736 = vunpack.c.h.b16 %v5168
        %v6737 = vunpack.c.l.b16 %v5169
        %v6738 = vunpack.c.h.b16 %v5169
        %v6739 = vunpack.c.l.b16 %v5170
        %v6740 = vunpack.c.h.b16 %v5170
        %v6741 = vunpack.c.l.b16 %v5171
        %v6742 = vunpack.c.h.b16 %v5171
        %v6743 = vunpack.c.l.b16 %v5172
        %v6744 = vunpack.c.h.b16 %v5172
        %v6745 = vunpack.c.l.b16 %v5173
        %v6746 = vunpack.c.h.b16 %v5173
        %v6747 = vunpack.c.l.b16 %v5174
        %v6748 = vunpack.c.h.b16 %v5174
        %v6749 = vunpack.c.l.b16 %v5175
        %v6750 = vunpack.c.h.b16 %v5175
        %v6751 = vunpack.c.l.b16 %v5176
        %v6752 = vunpack.c.h.b16 %v5176
        %v6753 = vunpack.c.l.b16 %v5177
        %v6754 = vunpack.c.h.b16 %v5177
        %v6755 = vunpack.c.l.b16 %v5178
        %v6756 = vunpack.c.h.b16 %v5178
        %v6757 = vunpack.c.l.b16 %v5179
        %v6758 = vunpack.c.h.b16 %v5179
        %v6759 = vunpack.c.l.b16 %v5180
        %v6760 = vunpack.c.h.b16 %v5180
        %v6761 = vunpack.c.l.b16 %v5181
        %v6762 = vunpack.c.h.b16 %v5181
        %v6763 = vunpack.c.l.b16 %v5182
        %v6764 = vunpack.c.h.b16 %v5182
        %v6765 = vunpack.c.l.b16 %v5183
        %v6766 = vunpack.c.h.b16 %v5183
        %v6767 = vunpack.c.l.b16 %v5184
        %v6768 = vunpack.c.h.b16 %v5184
        %v6769 = vunpack.c.l.b16 %v5185
        %v6770 = vunpack.c.h.b16 %v5185
        %v6771 = vunpack.c.l.b16 %v5186
        %v6772 = vunpack.c.h.b16 %v5186
        %v6773 = vunpack.c.l.b16 %v5187
        %v6774 = vunpack.c.h.b16 %v5187
        %v6775 = vunpack.c.l.b16 %v5188
        %v6776 = vunpack.c.h.b16 %v5188
        %v6777 = vunpack.c.l.b16 %v5189
        %v6778 = vunpack.c.h.b16 %v5189
        %v6779 = vunpack.c.l.b16 %v5190
        %v6780 = vunpack.c.h.b16 %v5190
        %v6781 = vunpack.c.l.b16 %v5191
        %v6782 = vunpack.c.h.b16 %v5191
        %v6783 = vunpack.c.l.b16 %v5192
        %v6784 = vunpack.c.h.b16 %v5192
        %v6785 = vunpack.c.l.b16 %v5193
        %v6786 = vunpack.c.h.b16 %v5193
        %v6787 = vunpack.c.l.b16 %v5194
        %v6788 = vunpack.c.h.b16 %v5194
        %v6789 = vunpack.c.l.b16 %v5195
        %v6790 = vunpack.c.h.b16 %v5195
        %v6791 = vunpack.c.l.b16 %v5196
        %v6792 = vunpack.c.h.b16 %v5196
        %v6793 = vunpack.c.l.b16 %v5197
        %v6794 = vunpack.c.h.b16 %v5197
        %v6795 = vunpack.c.l.b16 %v5198
        %v6796 = vunpack.c.h.b16 %v5198
        %v6797 = vunpack.c.l.b16 %v5199
        %v6798 = vunpack.c.h.b16 %v5199
        %v6799 = vunpack.c.l.b16 %v5200
        %v6800 = vunpack.c.h.b16 %v5200
        %v6801 = vunpack.c.l.b16 %v5201
        %v6802 = vunpack.c.h.b16 %v5201
        %v6803 = vunpack.c.l.b16 %v5202
        %v6804 = vunpack.c.h.b16 %v5202
        %v6805 = vunpack.c.l.b16 %v5203
        %v6806 = vunpack.c.h.b16 %v5203
        %v6807 = vunpack.c.l.b16 %v5204
        %v6808 = vunpack.c.h.b16 %v5204
        %v6809 = vunpack.c.l.b16 %v5205
        %v6810 = vunpack.c.h.b16 %v5205
        %v6811 = vunpack.c.l.b16 %v5206
        %v6812 = vunpack.c.h.b16 %v5206
        %v6813 = vunpack.c.l.b16 %v5207
        %v6814 = vunpack.c.h.b16 %v5207
        %v6815 = vunpack.c.l.b16 %v5208
        %v6816 = vunpack.c.h.b16 %v5208
        %v6817 = vunpack.c.l.b16 %v5209
        %v6818 = vunpack.c.h.b16 %v5209
        %v6819 = vunpack.c.l.b16 %v5210
        %v6820 = vunpack.c.h.b16 %v5210
        %v6821 = vunpack.c.l.b16 %v5211
        %v6822 = vunpack.c.h.b16 %v5211
        %v6823 = vunpack.c.l.b16 %v5212
        %v6824 = vunpack.c.h.b16 %v5212
        %v6825 = vunpack.c.l.b16 %v5213
        %v6826 = vunpack.c.h.b16 %v5213
        %v6827 = vunpack.c.l.b16 %v5214
        %v6828 = vunpack.c.h.b16 %v5214
        %v6829 = vunpack.c.l.b16 %v5215
        %v6830 = vunpack.c.h.b16 %v5215
        %v6831 = vunpack.c.l.b16 %v5216
        %v6832 = vunpack.c.h.b16 %v5216
        %v6833 = vunpack.c.l.b16 %v5217
        %v6834 = vunpack.c.h.b16 %v5217
        %v6835 = vunpack.c.l.b16 %v5218
        %v6836 = vunpack.c.h.b16 %v5218
        %v6837 = vunpack.c.l.b16 %v5219
        %v6838 = vunpack.c.h.b16 %v5219
        %v6839 = vunpack.c.l.b16 %v5220
        %v6840 = vunpack.c.h.b16 %v5220
        %v6841 = vunpack.c.l.b16 %v5221
        %v6842 = vunpack.c.h.b16 %v5221
        %v6843 = vunpack.c.l.b16 %v5222
        %v6844 = vunpack.c.h.b16 %v5222
        %v6845 = vunpack.c.l.b16 %v5223
        %v6846 = vunpack.c.h.b16 %v5223
        %v6847 = vunpack.c.l.b16 %v5224
        %v6848 = vunpack.c.h.b16 %v5224
        %v6849 = vunpack.c.l.b16 %v5225
        %v6850 = vunpack.c.h.b16 %v5225
        %v6851 = vunpack.c.l.b16 %v5226
        %v6852 = vunpack.c.h.b16 %v5226
        %v6853 = vunpack.c.l.b16 %v5227
        %v6854 = vunpack.c.h.b16 %v5227
        %v6855 = vunpack.c.l.b16 %v5228
        %v6856 = vunpack.c.h.b16 %v5228
        %v6857 = vunpack.c.l.b16 %v5229
        %v6858 = vunpack.c.h.b16 %v5229
        %v6859 = vunpack.c.l.b16 %v5230
        %v6860 = vunpack.c.h.b16 %v5230
        %v6861 = vunpack.c.l.b16 %v5231
        %v6862 = vunpack.c.h.b16 %v5231
        %v6863 = vunpack.c.l.b16 %v5232
        %v6864 = vunpack.c.h.b16 %v5232
        %v6865 = vunpack.c.l.b16 %v5233
        %v6866 = vunpack.c.h.b16 %v5233
        %v6867 = vunpack.c.l.b16 %v5234
        %v6868 = vunpack.c.h.b16 %v5234
        %v6869 = vunpack.c.l.b16 %v5235
        %v6870 = vunpack.c.h.b16 %v5235
        %v6871 = vunpack.c.l.b16 %v5236
        %v6872 = vunpack.c.h.b16 %v5236
        %v6873 = vunpack.c.l.b16 %v5237
        %v6874 = vunpack.c.h.b16 %v5237
        %v6875 = vunpack.c.l.b16 %v5238
        %v6876 = vunpack.c.h.b16 %v5238
        %v6877 = vunpack.c.l.b16 %v5239
        %v6878 = vunpack.c.h.b16 %v5239
        %v6879 = vunpack.c.l.b16 %v5240
        %v6880 = vunpack.c.h.b16 %v5240
        %v6881 = vunpack.c.l.b16 %v5241
        %v6882 = vunpack.c.h.b16 %v5241
        %v6883 = vunpack.c.l.b16 %v5242
        %v6884 = vunpack.c.h.b16 %v5242
        %v6885 = vunpack.c.l.b16 %v5243
        %v6886 = vunpack.c.h.b16 %v5243
        %v6887 = vunpack.c.l.b16 %v5244
        %v6888 = vunpack.c.h.b16 %v5244
        %v6889 = vunpack.c.l.b16 %v5245
        %v6890 = vunpack.c.h.b16 %v5245
        %v6891 = vunpack.c.l.b16 %v5246
        %v6892 = vunpack.c.h.b16 %v5246
        %v6893 = vunpack.c.l.b16 %v5247
        %v6894 = vunpack.c.h.b16 %v5247
        %v6895 = vunpack.c.l.b16 %v5248
        %v6896 = vunpack.c.h.b16 %v5248
        %v6897 = vunpack.c.l.b16 %v5249
        %v6898 = vunpack.c.h.b16 %v5249
        %v6899 = vunpack.c.l.b16 %v5250
        %v6900 = vunpack.c.h.b16 %v5250
        %v6901 = vunpack.c.l.b16 %v5251
        %v6902 = vunpack.c.h.b16 %v5251
        %v6903 = vunpack.c.l.b16 %v5252
        %v6904 = vunpack.c.h.b16 %v5252
        %v6905 = vunpack.c.l.b16 %v5253
        %v6906 = vunpack.c.h.b16 %v5253
        %v6907 = vunpack.c.l.b16 %v5254
        %v6908 = vunpack.c.h.b16 %v5254
        %v6909 = vunpack.c.l.b16 %v5255
        %v6910 = vunpack.c.h.b16 %v5255
        %v6911 = vunpack.c.l.b16 %v5256
        %v6912 = vunpack.c.h.b16 %v5256
        %v6913 = vunpack.c.l.b16 %v5257
        %v6914 = vunpack.c.h.b16 %v5257
        %v6915 = vunpack.c.l.b16 %v5258
        %v6916 = vunpack.c.h.b16 %v5258
        %v6917 = vunpack.c.l.b16 %v5259
        %v6918 = vunpack.c.h.b16 %v5259
        %v6919 = vunpack.c.l.b16 %v5260
        %v6920 = vunpack.c.h.b16 %v5260
        %v6921 = vunpack.c.l.b16 %v5261
        %v6922 = vunpack.c.h.b16 %v5261
        %v6923 = vunpack.c.l.b16 %v5262
        %v6924 = vunpack.c.h.b16 %v5262
        %v6925 = vunpack.c.l.b16 %v5263
        %v6926 = vunpack.c.h.b16 %v5263
        %v6927 = vunpack.c.l.b16 %v5264
        %v6928 = vunpack.c.h.b16 %v5264
        %v6929 = vunpack.c.l.b16 %v5265
        %v6930 = vunpack.c.h.b16 %v5265
        %v6931 = vunpack.c.l.b16 %v5266
        %v6932 = vunpack.c.h.b16 %v5266
        %v6933 = vunpack.c.l.b16 %v5267
        %v6934 = vunpack.c.h.b16 %v5267
        %v6935 = vunpack.c.l.b16 %v5268
        %v6936 = vunpack.c.h.b16 %v5268
        %v6937 = vunpack.c.l.b16 %v5269
        %v6938 = vunpack.c.h.b16 %v5269
        %v6939 = vunpack.c.l.b16 %v5270
        %v6940 = vunpack.c.h.b16 %v5270
        %v6941 = vunpack.c.l.b16 %v5271
        %v6942 = vunpack.c.h.b16 %v5271
        %v6943 = vunpack.c.l.b16 %v5272
        %v6944 = vunpack.c.h.b16 %v5272
        %v6945 = vunpack.c.l.b16 %v5273
        %v6946 = vunpack.c.h.b16 %v5273
        %v6947 = vunpack.c.l.b16 %v5274
        %v6948 = vunpack.c.h.b16 %v5274
        %v6949 = vpack.c.b16 %v5929, %v5925
        %v6950 = vpack.c.b16 %v5930, %v5926
        %v6951 = vpack.c.b16 %v5931, %v5927
        %v6952 = vpack.c.b16 %v5932, %v5928
        %v6953 = vpack.c.b16 %v5937, %v5933
        %v6954 = vpack.c.b16 %v5938, %v5934
        %v6955 = vpack.c.b16 %v5939, %v5935
        %v6956 = vpack.c.b16 %v5940, %v5936
        %v6957 = vpack.c.b16 %v5945, %v5941
        %v6958 = vpack.c.b16 %v5946, %v5942
        %v6959 = vpack.c.b16 %v5947, %v5943
        %v6960 = vpack.c.b16 %v5948, %v5944
        %v6961 = vpack.c.b16 %v5953, %v5949
        %v6962 = vpack.c.b16 %v5954, %v5950
        %v6963 = vpack.c.b16 %v5955, %v5951
        %v6964 = vpack.c.b16 %v5956, %v5952
        %v6965 = vpack.c.b16 %v5961, %v5957
        %v6966 = vpack.c.b16 %v5962, %v5958
        %v6967 = vpack.c.b16 %v5963, %v5959
        %v6968 = vpack.c.b16 %v5964, %v5960
        %v6969 = vpack.c.b16 %v5969, %v5965
        %v6970 = vpack.c.b16 %v5970, %v5966
        %v6971 = vpack.c.b16 %v5971, %v5967
        %v6972 = vpack.c.b16 %v5972, %v5968
        %v6973 = vpack.c.b16 %v5977, %v5973
        %v6974 = vpack.c.b16 %v5978, %v5974
        %v6975 = vpack.c.b16 %v5979, %v5975
        %v6976 = vpack.c.b16 %v5980, %v5976
        %v6977 = vpack.c.b16 %v5985, %v5981
        %v6978 = vpack.c.b16 %v5986, %v5982
        %v6979 = vpack.c.b16 %v5987, %v5983
        %v6980 = vpack.c.b16 %v5988, %v5984
        %v6981 = vpack.c.b16 %v5993, %v5989
        %v6982 = vpack.c.b16 %v5994, %v5990
        %v6983 = vpack.c.b16 %v5995, %v5991
        %v6984 = vpack.c.b16 %v5996, %v5992
        %v6985 = vpack.c.b16 %v6001, %v5997
        %v6986 = vpack.c.b16 %v6002, %v5998
        %v6987 = vpack.c.b16 %v6003, %v5999
        %v6988 = vpack.c.b16 %v6004, %v6000
        %v6989 = vpack.c.b16 %v6009, %v6005
        %v6990 = vpack.c.b16 %v6010, %v6006
        %v6991 = vpack.c.b16 %v6011, %v6007
        %v6992 = vpack.c.b16 %v6012, %v6008
        %v6993 = vpack.c.b16 %v6017, %v6013
        %v6994 = vpack.c.b16 %v6018, %v6014
        %v6995 = vpack.c.b16 %v6019, %v6015
        %v6996 = vpack.c.b16 %v6020, %v6016
        %v6997 = vpack.c.b16 %v6025, %v6021
        %v6998 = vpack.c.b16 %v6026, %v6022
        %v6999 = vpack.c.b16 %v6027, %v6023
        %v7000 = vpack.c.b16 %v6028, %v6024
        %v7001 = vpack.c.b16 %v6033, %v6029
        %v7002 = vpack.c.b16 %v6034, %v6030
        %v7003 = vpack.c.b16 %v6035, %v6031
        %v7004 = vpack.c.b16 %v6036, %v6032
        %v7005 = vpack.c.b16 %v6041, %v6037
        %v7006 = vpack.c.b16 %v6042, %v6038
        %v7007 = vpack.c.b16 %v6043, %v6039
        %v7008 = vpack.c.b16 %v6044, %v6040
        %v7009 = vpack.c.b16 %v6049, %v6045
        %v7010 = vpack.c.b16 %v6050, %v6046
        %v7011 = vpack.c.b16 %v6051, %v6047
        %v7012 = vpack.c.b16 %v6052, %v6048
        %v7013 = vpack.c.b16 %v6057, %v6053
        %v7014 = vpack.c.b16 %v6058, %v6054
        %v7015 = vpack.c.b16 %v6059, %v6055
        %v7016 = vpack.c.b16 %v6060, %v6056
        %v7017 = vpack.c.b16 %v6065, %v6061
        %v7018 = vpack.c.b16 %v6066, %v6062
        %v7019 = vpack.c.b16 %v6067, %v6063
        %v7020 = vpack.c.b16 %v6068, %v6064
        %v7021 = vpack.c.b16 %v6073, %v6069
        %v7022 = vpack.c.b16 %v6074, %v6070
        %v7023 = vpack.c.b16 %v6075, %v6071
        %v7024 = vpack.c.b16 %v6076, %v6072
        %v7025 = vpack.c.b16 %v6081, %v6077
        %v7026 = vpack.c.b16 %v6082, %v6078
        %v7027 = vpack.c.b16 %v6083, %v6079
        %v7028 = vpack.c.b16 %v6084, %v6080
        %v7029 = vpack.c.b16 %v6089, %v6085
        %v7030 = vpack.c.b16 %v6090, %v6086
        %v7031 = vpack.c.b16 %v6091, %v6087
        %v7032 = vpack.c.b16 %v6092, %v6088
        %v7033 = vpack.c.b16 %v6097, %v6093
        %v7034 = vpack.c.b16 %v6098, %v6094
        %v7035 = vpack.c.b16 %v6099, %v6095
        %v7036 = vpack.c.b16 %v6100, %v6096
        %v7037 = vpack.c.b16 %v6105, %v6101
        %v7038 = vpack.c.b16 %v6106, %v6102
        %v7039 = vpack.c.b16 %v6107, %v6103
        %v7040 = vpack.c.b16 %v6108, %v6104
        %v7041 = vpack.c.b16 %v6113, %v6109
        %v7042 = vpack.c.b16 %v6114, %v6110
        %v7043 = vpack.c.b16 %v6115, %v6111
        %v7044 = vpack.c.b16 %v6116, %v6112
        %v7045 = vpack.c.b16 %v6121, %v6117
        %v7046 = vpack.c.b16 %v6122, %v6118
        %v7047 = vpack.c.b16 %v6123, %v6119
        %v7048 = vpack.c.b16 %v6124, %v6120
        %v7049 = vpack.c.b16 %v6129, %v6125
        %v7050 = vpack.c.b16 %v6130, %v6126
        %v7051 = vpack.c.b16 %v6131, %v6127
        %v7052 = vpack.c.b16 %v6132, %v6128
        %v7053 = vpack.c.b16 %v6137, %v6133
        %v7054 = vpack.c.b16 %v6138, %v6134
        %v7055 = vpack.c.b16 %v6139, %v6135
        %v7056 = vpack.c.b16 %v6140, %v6136
        %v7057 = vpack.c.b16 %v6145, %v6141
        %v7058 = vpack.c.b16 %v6146, %v6142
        %v7059 = vpack.c.b16 %v6147, %v6143
        %v7060 = vpack.c.b16 %v6148, %v6144
        %v7061 = vpack.c.b16 %v6153, %v6149
        %v7062 = vpack.c.b16 %v6154, %v6150
        %v7063 = vpack.c.b16 %v6155, %v6151
        %v7064 = vpack.c.b16 %v6156, %v6152
        %v7065 = vpack.c.b16 %v6161, %v6157
        %v7066 = vpack.c.b16 %v6162, %v6158
        %v7067 = vpack.c.b16 %v6163, %v6159
        %v7068 = vpack.c.b16 %v6164, %v6160
        %v7069 = vpack.c.b16 %v6169, %v6165
        %v7070 = vpack.c.b16 %v6170, %v6166
        %v7071 = vpack.c.b16 %v6171, %v6167
        %v7072 = vpack.c.b16 %v6172, %v6168
        %v7073 = vpack.c.b16 %v6177, %v6173
        %v7074 = vpack.c.b16 %v6178, %v6174
        %v7075 = vpack.c.b16 %v6179, %v6175
        %v7076 = vpack.c.b16 %v6180, %v6176
        %v7077 = vpack.c.b16 %v6185, %v6181
        %v7078 = vpack.c.b16 %v6186, %v6182
        %v7079 = vpack.c.b16 %v6187, %v6183
        %v7080 = vpack.c.b16 %v6188, %v6184
        %v7081 = vpack.c.b16 %v6193, %v6189
        %v7082 = vpack.c.b16 %v6194, %v6190
        %v7083 = vpack.c.b16 %v6195, %v6191
        %v7084 = vpack.c.b16 %v6196, %v6192
        %v7085 = vpack.c.b16 %v6201, %v6197
        %v7086 = vpack.c.b16 %v6202, %v6198
        %v7087 = vpack.c.b16 %v6203, %v6199
        %v7088 = vpack.c.b16 %v6204, %v6200
        %v7089 = vpack.c.b16 %v6209, %v6205
        %v7090 = vpack.c.b16 %v6210, %v6206
        %v7091 = vpack.c.b16 %v6211, %v6207
        %v7092 = vpack.c.b16 %v6212, %v6208
        %v7093 = vpack.c.b16 %v6217, %v6213
        %v7094 = vpack.c.b16 %v6218, %v6214
        %v7095 = vpack.c.b16 %v6219, %v6215
        %v7096 = vpack.c.b16 %v6220, %v6216
        %v7097 = vpack.c.b16 %v6225, %v6221
        %v7098 = vpack.c.b16 %v6226, %v6222
        %v7099 = vpack.c.b16 %v6227, %v6223
        %v7100 = vpack.c.b16 %v6228, %v6224
        %v7101 = vpack.c.b16 %v6233, %v6229
        %v7102 = vpack.c.b16 %v6234, %v6230
        %v7103 = vpack.c.b16 %v6235, %v6231
        %v7104 = vpack.c.b16 %v6236, %v6232
        %v7105 = vpack.c.b16 %v6241, %v6237
        %v7106 = vpack.c.b16 %v6242, %v6238
        %v7107 = vpack.c.b16 %v6243, %v6239
        %v7108 = vpack.c.b16 %v6244, %v6240
        %v7109 = vpack.c.b16 %v6249, %v6245
        %v7110 = vpack.c.b16 %v6250, %v6246
        %v7111 = vpack.c.b16 %v6251, %v6247
        %v7112 = vpack.c.b16 %v6252, %v6248
        %v7113 = vpack.c.b16 %v6257, %v6253
        %v7114 = vpack.c.b16 %v6258, %v6254
        %v7115 = vpack.c.b16 %v6259, %v6255
        %v7116 = vpack.c.b16 %v6260, %v6256
        %v7117 = vpack.c.b16 %v6265, %v6261
        %v7118 = vpack.c.b16 %v6266, %v6262
        %v7119 = vpack.c.b16 %v6267, %v6263
        %v7120 = vpack.c.b16 %v6268, %v6264
        %v7121 = vpack.c.b16 %v6273, %v6269
        %v7122 = vpack.c.b16 %v6274, %v6270
        %v7123 = vpack.c.b16 %v6275, %v6271
        %v7124 = vpack.c.b16 %v6276, %v6272
        %v7125 = vpack.c.b16 %v6281, %v6277
        %v7126 = vpack.c.b16 %v6282, %v6278
        %v7127 = vpack.c.b16 %v6283, %v6279
        %v7128 = vpack.c.b16 %v6284, %v6280
        %v7129 = vpack.c.b16 %v6289, %v6285
        %v7130 = vpack.c.b16 %v6290, %v6286
        %v7131 = vpack.c.b16 %v6291, %v6287
        %v7132 = vpack.c.b16 %v6292, %v6288
        %v7133 = vpack.c.b16 %v6297, %v6293
        %v7134 = vpack.c.b16 %v6298, %v6294
        %v7135 = vpack.c.b16 %v6299, %v6295
        %v7136 = vpack.c.b16 %v6300, %v6296
        %v7137 = vpack.c.b16 %v6305, %v6301
        %v7138 = vpack.c.b16 %v6306, %v6302
        %v7139 = vpack.c.b16 %v6307, %v6303
        %v7140 = vpack.c.b16 %v6308, %v6304
        %v7141 = vpack.c.b16 %v6313, %v6309
        %v7142 = vpack.c.b16 %v6314, %v6310
        %v7143 = vpack.c.b16 %v6315, %v6311
        %v7144 = vpack.c.b16 %v6316, %v6312
        %v7145 = vpack.c.b16 %v6321, %v6317
        %v7146 = vpack.c.b16 %v6322, %v6318
        %v7147 = vpack.c.b16 %v6323, %v6319
        %v7148 = vpack.c.b16 %v6324, %v6320
        %v7149 = vpack.c.b16 %v6329, %v6325
        %v7150 = vpack.c.b16 %v6330, %v6326
        %v7151 = vpack.c.b16 %v6331, %v6327
        %v7152 = vpack.c.b16 %v6332, %v6328
        %v7153 = vpack.c.b16 %v6337, %v6333
        %v7154 = vpack.c.b16 %v6338, %v6334
        %v7155 = vpack.c.b16 %v6339, %v6335
        %v7156 = vpack.c.b16 %v6340, %v6336
        %v7157 = vpack.c.b16 %v6345, %v6341
        %v7158 = vpack.c.b16 %v6346, %v6342
        %v7159 = vpack.c.b16 %v6347, %v6343
        %v7160 = vpack.c.b16 %v6348, %v6344
        %v7161 = vpack.c.b16 %v6353, %v6349
        %v7162 = vpack.c.b16 %v6354, %v6350
        %v7163 = vpack.c.b16 %v6355, %v6351
        %v7164 = vpack.c.b16 %v6356, %v6352
        %v7165 = vpack.c.b16 %v6361, %v6357
        %v7166 = vpack.c.b16 %v6362, %v6358
        %v7167 = vpack.c.b16 %v6363, %v6359
        %v7168 = vpack.c.b16 %v6364, %v6360
        %v7169 = vpack.c.b16 %v6369, %v6365
        %v7170 = vpack.c.b16 %v6370, %v6366
        %v7171 = vpack.c.b16 %v6371, %v6367
        %v7172 = vpack.c.b16 %v6372, %v6368
        %v7173 = vpack.c.b16 %v6377, %v6373
        %v7174 = vpack.c.b16 %v6378, %v6374
        %v7175 = vpack.c.b16 %v6379, %v6375
        %v7176 = vpack.c.b16 %v6380, %v6376
        %v7177 = vpack.c.b16 %v6385, %v6381
        %v7178 = vpack.c.b16 %v6386, %v6382
        %v7179 = vpack.c.b16 %v6387, %v6383
        %v7180 = vpack.c.b16 %v6388, %v6384
        %v7181 = vpack.c.b16 %v6393, %v6389
        %v7182 = vpack.c.b16 %v6394, %v6390
        %v7183 = vpack.c.b16 %v6395, %v6391
        %v7184 = vpack.c.b16 %v6396, %v6392
        %v7185 = vpack.c.b16 %v6401, %v6397
        %v7186 = vpack.c.b16 %v6402, %v6398
        %v7187 = vpack.c.b16 %v6403, %v6399
        %v7188 = vpack.c.b16 %v6404, %v6400
        %v7189 = vpack.c.b16 %v6409, %v6405
        %v7190 = vpack.c.b16 %v6410, %v6406
        %v7191 = vpack.c.b16 %v6411, %v6407
        %v7192 = vpack.c.b16 %v6412, %v6408
        %v7193 = vpack.c.b16 %v6417, %v6413
        %v7194 = vpack.c.b16 %v6418, %v6414
        %v7195 = vpack.c.b16 %v6419, %v6415
        %v7196 = vpack.c.b16 %v6420, %v6416
        %v7197 = vpack.c.b16 %v6425, %v6421
        %v7198 = vpack.c.b16 %v6426, %v6422
        %v7199 = vpack.c.b16 %v6427, %v6423
        %v7200 = vpack.c.b16 %v6428, %v6424
        %v7201 = vpack.c.b16 %v6433, %v6429
        %v7202 = vpack.c.b16 %v6434, %v6430
        %v7203 = vpack.c.b16 %v6435, %v6431
        %v7204 = vpack.c.b16 %v6436, %v6432
        %v7205 = vpack.c.b16 %v6441, %v6437
        %v7206 = vpack.c.b16 %v6442, %v6438
        %v7207 = vpack.c.b16 %v6443, %v6439
        %v7208 = vpack.c.b16 %v6444, %v6440
        %v7209 = vpack.c.b16 %v6449, %v6445
        %v7210 = vpack.c.b16 %v6450, %v6446
        %v7211 = vpack.c.b16 %v6451, %v6447
        %v7212 = vpack.c.b16 %v6452, %v6448
        %v7213 = vpack.c.b16 %v6457, %v6453
        %v7214 = vpack.c.b16 %v6458, %v6454
        %v7215 = vpack.c.b16 %v6459, %v6455
        %v7216 = vpack.c.b16 %v6460, %v6456
        %v7217 = vpack.c.b16 %v6465, %v6461
        %v7218 = vpack.c.b16 %v6466, %v6462
        %v7219 = vpack.c.b16 %v6467, %v6463
        %v7220 = vpack.c.b16 %v6468, %v6464
        %v7221 = vpack.c.b16 %v6473, %v6469
        %v7222 = vpack.c.b16 %v6474, %v6470
        %v7223 = vpack.c.b16 %v6475, %v6471
        %v7224 = vpack.c.b16 %v6476, %v6472
        %v7225 = vpack.c.b16 %v6481, %v6477
        %v7226 = vpack.c.b16 %v6482, %v6478
        %v7227 = vpack.c.b16 %v6483, %v6479
        %v7228 = vpack.c.b16 %v6484, %v6480
        %v7229 = vpack.c.b16 %v6489, %v6485
        %v7230 = vpack.c.b16 %v6490, %v6486
        %v7231 = vpack.c.b16 %v6491, %v6487
        %v7232 = vpack.c.b16 %v6492, %v6488
        %v7233 = vpack.c.b16 %v6497, %v6493
        %v7234 = vpack.c.b16 %v6498, %v6494
        %v7235 = vpack.c.b16 %v6499, %v6495
        %v7236 = vpack.c.b16 %v6500, %v6496
        %v7237 = vpack.c.b16 %v6505, %v6501
        %v7238 = vpack.c.b16 %v6506, %v6502
        %v7239 = vpack.c.b16 %v6507, %v6503
        %v7240 = vpack.c.b16 %v6508, %v6504
        %v7241 = vpack.c.b16 %v6513, %v6509
        %v7242 = vpack.c.b16 %v6514, %v6510
        %v7243 = vpack.c.b16 %v6515, %v6511
        %v7244 = vpack.c.b16 %v6516, %v6512
        %v7245 = vpack.c.b16 %v6521, %v6517
        %v7246 = vpack.c.b16 %v6522, %v6518
        %v7247 = vpack.c.b16 %v6523, %v6519
        %v7248 = vpack.c.b16 %v6524, %v6520
        %v7249 = vpack.c.b16 %v6529, %v6525
        %v7250 = vpack.c.b16 %v6530, %v6526
        %v7251 = vpack.c.b16 %v6531, %v6527
        %v7252 = vpack.c.b16 %v6532, %v6528
        %v7253 = vpack.c.b16 %v6537, %v6533
        %v7254 = vpack.c.b16 %v6538, %v6534
        %v7255 = vpack.c.b16 %v6539, %v6535
        %v7256 = vpack.c.b16 %v6540, %v6536
        %v7257 = vpack.c.b16 %v6545, %v6541
        %v7258 = vpack.c.b16 %v6546, %v6542
        %v7259 = vpack.c.b16 %v6547, %v6543
        %v7260 = vpack.c.b16 %v6548, %v6544
        %v7261 = vpack.c.b16 %v6553, %v6549
        %v7262 = vpack.c.b16 %v6554, %v6550
        %v7263 = vpack.c.b16 %v6555, %v6551
        %v7264 = vpack.c.b16 %v6556, %v6552
        %v7265 = vpack.c.b16 %v6561, %v6557
        %v7266 = vpack.c.b16 %v6562, %v6558
        %v7267 = vpack.c.b16 %v6563, %v6559
        %v7268 = vpack.c.b16 %v6564, %v6560
        %v7269 = vpack.c.b16 %v6569, %v6565
        %v7270 = vpack.c.b16 %v6570, %v6566
        %v7271 = vpack.c.b16 %v6571, %v6567
        %v7272 = vpack.c.b16 %v6572, %v6568
        %v7273 = vpack.c.b16 %v6577, %v6573
        %v7274 = vpack.c.b16 %v6578, %v6574
        %v7275 = vpack.c.b16 %v6579, %v6575
        %v7276 = vpack.c.b16 %v6580, %v6576
        %v7277 = vpack.c.b16 %v6585, %v6581
        %v7278 = vpack.c.b16 %v6586, %v6582
        %v7279 = vpack.c.b16 %v6587, %v6583
        %v7280 = vpack.c.b16 %v6588, %v6584
        %v7281 = vpack.c.b16 %v6593, %v6589
        %v7282 = vpack.c.b16 %v6594, %v6590
        %v7283 = vpack.c.b16 %v6595, %v6591
        %v7284 = vpack.c.b16 %v6596, %v6592
        %v7285 = vpack.c.b16 %v6601, %v6597
        %v7286 = vpack.c.b16 %v6602, %v6598
        %v7287 = vpack.c.b16 %v6603, %v6599
        %v7288 = vpack.c.b16 %v6604, %v6600
        %v7289 = vpack.c.b16 %v6609, %v6605
        %v7290 = vpack.c.b16 %v6610, %v6606
        %v7291 = vpack.c.b16 %v6611, %v6607
        %v7292 = vpack.c.b16 %v6612, %v6608
        %v7293 = vpack.c.b16 %v6617, %v6613
        %v7294 = vpack.c.b16 %v6618, %v6614
        %v7295 = vpack.c.b16 %v6619, %v6615
        %v7296 = vpack.c.b16 %v6620, %v6616
        %v7297 = vpack.c.b16 %v6625, %v6621
        %v7298 = vpack.c.b16 %v6626, %v6622
        %v7299 = vpack.c.b16 %v6627, %v6623
        %v7300 = vpack.c.b16 %v6628, %v6624
        %v7301 = vpack.c.b16 %v6633, %v6629
        %v7302 = vpack.c.b16 %v6634, %v6630
        %v7303 = vpack.c.b16 %v6635, %v6631
        %v7304 = vpack.c.b16 %v6636, %v6632
        %v7305 = vpack.c.b16 %v6641, %v6637
        %v7306 = vpack.c.b16 %v6642, %v6638
        %v7307 = vpack.c.b16 %v6643, %v6639
        %v7308 = vpack.c.b16 %v6644, %v6640
        %v7309 = vpack.c.b16 %v6649, %v6645
        %v7310 = vpack.c.b16 %v6650, %v6646
        %v7311 = vpack.c.b16 %v6651, %v6647
        %v7312 = vpack.c.b16 %v6652, %v6648
        %v7313 = vpack.c.b16 %v6657, %v6653
        %v7314 = vpack.c.b16 %v6658, %v6654
        %v7315 = vpack.c.b16 %v6659, %v6655
        %v7316 = vpack.c.b16 %v6660, %v6656
        %v7317 = vpack.c.b16 %v6665, %v6661
        %v7318 = vpack.c.b16 %v6666, %v6662
        %v7319 = vpack.c.b16 %v6667, %v6663
        %v7320 = vpack.c.b16 %v6668, %v6664
        %v7321 = vpack.c.b16 %v6673, %v6669
        %v7322 = vpack.c.b16 %v6674, %v6670
        %v7323 = vpack.c.b16 %v6675, %v6671
        %v7324 = vpack.c.b16 %v6676, %v6672
        %v7325 = vpack.c.b16 %v6681, %v6677
        %v7326 = vpack.c.b16 %v6682, %v6678
        %v7327 = vpack.c.b16 %v6683, %v6679
        %v7328 = vpack.c.b16 %v6684, %v6680
        %v7329 = vpack.c.b16 %v6689, %v6685
        %v7330 = vpack.c.b16 %v6690, %v6686
        %v7331 = vpack.c.b16 %v6691, %v6687
        %v7332 = vpack.c.b16 %v6692, %v6688
        %v7333 = vpack.c.b16 %v6697, %v6693
        %v7334 = vpack.c.b16 %v6698, %v6694
        %v7335 = vpack.c.b16 %v6699, %v6695
        %v7336 = vpack.c.b16 %v6700, %v6696
        %v7337 = vpack.c.b16 %v6705, %v6701
        %v7338 = vpack.c.b16 %v6706, %v6702
        %v7339 = vpack.c.b16 %v6707, %v6703
        %v7340 = vpack.c.b16 %v6708, %v6704
        %v7341 = vpack.c.b16 %v6713, %v6709
        %v7342 = vpack.c.b16 %v6714, %v6710
        %v7343 = vpack.c.b16 %v6715, %v6711
        %v7344 = vpack.c.b16 %v6716, %v6712
        %v7345 = vpack.c.b16 %v6721, %v6717
        %v7346 = vpack.c.b16 %v6722, %v6718
        %v7347 = vpack.c.b16 %v6723, %v6719
        %v7348 = vpack.c.b16 %v6724, %v6720
        %v7349 = vpack.c.b16 %v6729, %v6725
        %v7350 = vpack.c.b16 %v6730, %v6726
        %v7351 = vpack.c.b16 %v6731, %v6727
        %v7352 = vpack.c.b16 %v6732, %v6728
        %v7353 = vpack.c.b16 %v6737, %v6733
        %v7354 = vpack.c.b16 %v6738, %v6734
        %v7355 = vpack.c.b16 %v6739, %v6735
        %v7356 = vpack.c.b16 %v6740, %v6736
        %v7357 = vpack.c.b16 %v6745, %v6741
        %v7358 = vpack.c.b16 %v6746, %v6742
        %v7359 = vpack.c.b16 %v6747, %v6743
        %v7360 = vpack.c.b16 %v6748, %v6744
        %v7361 = vpack.c.b16 %v6753, %v6749
        %v7362 = vpack.c.b16 %v6754, %v6750
        %v7363 = vpack.c.b16 %v6755, %v6751
        %v7364 = vpack.c.b16 %v6756, %v6752
        %v7365 = vpack.c.b16 %v6761, %v6757
        %v7366 = vpack.c.b16 %v6762, %v6758
        %v7367 = vpack.c.b16 %v6763, %v6759
        %v7368 = vpack.c.b16 %v6764, %v6760
        %v7369 = vpack.c.b16 %v6769, %v6765
        %v7370 = vpack.c.b16 %v6770, %v6766
        %v7371 = vpack.c.b16 %v6771, %v6767
        %v7372 = vpack.c.b16 %v6772, %v6768
        %v7373 = vpack.c.b16 %v6777, %v6773
        %v7374 = vpack.c.b16 %v6778, %v6774
        %v7375 = vpack.c.b16 %v6779, %v6775
        %v7376 = vpack.c.b16 %v6780, %v6776
        %v7377 = vpack.c.b16 %v6785, %v6781
        %v7378 = vpack.c.b16 %v6786, %v6782
        %v7379 = vpack.c.b16 %v6787, %v6783
        %v7380 = vpack.c.b16 %v6788, %v6784
        %v7381 = vpack.c.b16 %v6793, %v6789
        %v7382 = vpack.c.b16 %v6794, %v6790
        %v7383 = vpack.c.b16 %v6795, %v6791
        %v7384 = vpack.c.b16 %v6796, %v6792
        %v7385 = vpack.c.b16 %v6801, %v6797
        %v7386 = vpack.c.b16 %v6802, %v6798
        %v7387 = vpack.c.b16 %v6803, %v6799
        %v7388 = vpack.c.b16 %v6804, %v6800
        %v7389 = vpack.c.b16 %v6809, %v6805
        %v7390 = vpack.c.b16 %v6810, %v6806
        %v7391 = vpack.c.b16 %v6811, %v6807
        %v7392 = vpack.c.b16 %v6812, %v6808
        %v7393 = vpack.c.b16 %v6817, %v6813
        %v7394 = vpack.c.b16 %v6818, %v6814
        %v7395 = vpack.c.b16 %v6819, %v6815
        %v7396 = vpack.c.b16 %v6820, %v6816
        %v7397 = vpack.c.b16 %v6825, %v6821
        %v7398 = vpack.c.b16 %v6826, %v6822
        %v7399 = vpack.c.b16 %v6827, %v6823
        %v7400 = vpack.c.b16 %v6828, %v6824
        %v7401 = vpack.c.b16 %v6833, %v6829
        %v7402 = vpack.c.b16 %v6834, %v6830
        %v7403 = vpack.c.b16 %v6835, %v6831
        %v7404 = vpack.c.b16 %v6836, %v6832
        %v7405 = vpack.c.b16 %v6841, %v6837
        %v7406 = vpack.c.b16 %v6842, %v6838
        %v7407 = vpack.c.b16 %v6843, %v6839
        %v7408 = vpack.c.b16 %v6844, %v6840
        %v7409 = vpack.c.b16 %v6849, %v6845
        %v7410 = vpack.c.b16 %v6850, %v6846
        %v7411 = vpack.c.b16 %v6851, %v6847
        %v7412 = vpack.c.b16 %v6852, %v6848
        %v7413 = vpack.c.b16 %v6857, %v6853
        %v7414 = vpack.c.b16 %v6858, %v6854
        %v7415 = vpack.c.b16 %v6859, %v6855
        %v7416 = vpack.c.b16 %v6860, %v6856
        %v7417 = vpack.c.b16 %v6865, %v6861
        %v7418 = vpack.c.b16 %v6866, %v6862
        %v7419 = vpack.c.b16 %v6867, %v6863
        %v7420 = vpack.c.b16 %v6868, %v6864
        %v7421 = vpack.c.b16 %v6873, %v6869
        %v7422 = vpack.c.b16 %v6874, %v6870
        %v7423 = vpack.c.b16 %v6875, %v6871
        %v7424 = vpack.c.b16 %v6876, %v6872
        %v7425 = vpack.c.b16 %v6881, %v6877
        %v7426 = vpack.c.b16 %v6882, %v6878
        %v7427 = vpack.c.b16 %v6883, %v6879
        %v7428 = vpack.c.b16 %v6884, %v6880
        %v7429 = vpack.c.b16 %v6889, %v6885
        %v7430 = vpack.c.b16 %v6890, %v6886
        %v7431 = vpack.c.b16 %v6891, %v6887
        %v7432 = vpack.c.b16 %v6892, %v6888
        %v7433 = vpack.c.b16 %v6897, %v6893
        %v7434 = vpack.c.b16 %v6898, %v6894
        %v7435 = vpack.c.b16 %v6899, %v6895
        %v7436 = vpack.c.b16 %v6900, %v6896
        %v7437 = vpack.c.b16 %v6905, %v6901
        %v7438 = vpack.c.b16 %v6906, %v6902
        %v7439 = vpack.c.b16 %v6907, %v6903
        %v7440 = vpack.c.b16 %v6908, %v6904
        %v7441 = vpack.c.b16 %v6913, %v6909
        %v7442 = vpack.c.b16 %v6914, %v6910
        %v7443 = vpack.c.b16 %v6915, %v6911
        %v7444 = vpack.c.b16 %v6916, %v6912
        %v7445 = vpack.c.b16 %v6921, %v6917
        %v7446 = vpack.c.b16 %v6922, %v6918
        %v7447 = vpack.c.b16 %v6923, %v6919
        %v7448 = vpack.c.b16 %v6924, %v6920
        %v7449 = vpack.c.b16 %v6929, %v6925
        %v7450 = vpack.c.b16 %v6930, %v6926
        %v7451 = vpack.c.b16 %v6931, %v6927
        %v7452 = vpack.c.b16 %v6932, %v6928
        %v7453 = vpack.c.b16 %v6937, %v6933
        %v7454 = vpack.c.b16 %v6938, %v6934
        %v7455 = vpack.c.b16 %v6939, %v6935
        %v7456 = vpack.c.b16 %v6940, %v6936
        %v7457 = vpack.c.b16 %v6945, %v6941
        %v7458 = vpack.c.b16 %v6946, %v6942
        %v7459 = vpack.c.b16 %v6947, %v6943
        %v7460 = vpack.c.b16 %v6948, %v6944
        %7973 = vmatprep.subr.bf16.mxu0 %v6950
        %7974 = vmatpush1.bf16.msra.mxu0 %v6949
        %7975 = vmatprep.subr.bf16.mxu0 %v6954
        %7976 = vmatpush1.bf16.msra.mxu0 %v6953
        %7977 = vmatprep.subr.bf16.mxu0 %v6958
        %7978 = vmatpush1.bf16.msra.mxu0 %v6957
        %7979 = vmatprep.subr.bf16.mxu0 %v6962
        %7980 = vmatpush1.bf16.msra.mxu0 %v6961
        %7981 = vmatprep.subr.bf16.mxu0 %v6966
        %7982 = vmatpush1.bf16.msra.mxu0 %v6965
        %7983 = vmatprep.subr.bf16.mxu0 %v6970
        %7984 = vmatpush1.bf16.msra.mxu0 %v6969
        %7985 = vmatprep.subr.bf16.mxu0 %v6974
        %7986 = vmatpush1.bf16.msra.mxu0 %v6973
        %7987 = vmatprep.subr.bf16.mxu0 %v6978
        %7988 = vmatpush1.bf16.msra.mxu0 %v6977
        %7989 = vmatprep.subr.bf16.mxu0 %v6982
        %7990 = vmatpush1.bf16.msra.mxu0 %v6981
        %7991 = vmatprep.subr.bf16.mxu0 %v6986
        %7992 = vmatpush1.bf16.msra.mxu0 %v6985
        %7993 = vmatprep.subr.bf16.mxu0 %v6990
        %7994 = vmatpush1.bf16.msra.mxu0 %v6989
        %7995 = vmatprep.subr.bf16.mxu0 %v6994
        %7996 = vmatpush1.bf16.msra.mxu0 %v6993
        %7997 = vmatprep.subr.bf16.mxu0 %v6998
        %7998 = vmatpush1.bf16.msra.mxu0 %v6997
        %7999 = vmatprep.subr.bf16.mxu0 %v7002
        %8000 = vmatpush1.bf16.msra.mxu0 %v7001
        %8001 = vmatprep.subr.bf16.mxu0 %v7006
        %8002 = vmatpush1.bf16.msra.mxu0 %v7005
        %8003 = vmatprep.subr.bf16.mxu0 %v7010
        %8004 = vmatpush1.bf16.msra.mxu0 %v7009
        %8005 = vmatprep.mubr.bf16.mxu0 %v5336
        %8006 = vmatmul.mubr.bf16.gmra.mrb[0].mxu0 %v5322
        %v8007 = vpop.f32.mrb[0].mxu0
        %v8008 = vadd.f32 %v5280, %v8007
        %v8009 = vpop.f32.mrb[0].mxu0
        %v8010 = vadd.f32 %v5284, %v8009
        %v8011 = vpop.f32.mrb[0].mxu0
        %v8012 = vpop.f32.mrb[0].mxu0
        %8013 = vdwg.mxu0
        %8014 = vmatprep.subr.bf16.mxu0 %v7014
        %8015 = vmatpush1.bf16.msra.mxu0 %v7013
        %8016 = vmatprep.subr.bf16.mxu0 %v7018
        %8017 = vmatpush1.bf16.msra.mxu0 %v7017
        %8018 = vmatprep.subr.bf16.mxu0 %v7022
        %8019 = vmatpush1.bf16.msra.mxu0 %v7021
        %8020 = vmatprep.subr.bf16.mxu0 %v7026
        %8021 = vmatpush1.bf16.msra.mxu0 %v7025
        %8022 = vmatprep.subr.bf16.mxu0 %v7030
        %8023 = vmatpush1.bf16.msra.mxu0 %v7029
        %8024 = vmatprep.subr.bf16.mxu0 %v7034
        %8025 = vmatpush1.bf16.msra.mxu0 %v7033
        %8026 = vmatprep.subr.bf16.mxu0 %v7038
        %8027 = vmatpush1.bf16.msra.mxu0 %v7037
        %8028 = vmatprep.subr.bf16.mxu0 %v7042
        %8029 = vmatpush1.bf16.msra.mxu0 %v7041
        %8030 = vmatprep.subr.bf16.mxu0 %v7046
        %8031 = vmatpush1.bf16.msra.mxu0 %v7045
        %8032 = vmatprep.subr.bf16.mxu0 %v7050
        %8033 = vmatpush1.bf16.msra.mxu0 %v7049
        %8034 = vmatprep.subr.bf16.mxu0 %v7054
        %8035 = vmatpush1.bf16.msra.mxu0 %v7053
        %8036 = vmatprep.subr.bf16.mxu0 %v7058
        %8037 = vmatpush1.bf16.msra.mxu0 %v7057
        %8038 = vmatprep.subr.bf16.mxu0 %v7062
        %8039 = vmatpush1.bf16.msra.mxu0 %v7061
        %8040 = vmatprep.subr.bf16.mxu0 %v7066
        %8041 = vmatpush1.bf16.msra.mxu0 %v7065
        %8042 = vmatprep.subr.bf16.mxu0 %v7070
        %8043 = vmatpush1.bf16.msra.mxu0 %v7069
        %8044 = vmatprep.subr.bf16.mxu0 %v7074
        %8045 = vmatpush1.bf16.msra.mxu0 %v7073
        %8046 = vmatprep.mubr.bf16.mxu0 %v5346
        %8047 = vmatmul.mubr.bf16.gmra.mrb[0].mxu0 %v5344
        %v8048 = vpop.f32.mrb[0].mxu0
        %v8049 = vadd.f32 %v8008, %v8048
        %v8050 = vpop.f32.mrb[0].mxu0
        %v8051 = vadd.f32 %v8010, %v8050
        %v8052 = vpop.f32.mrb[0].mxu0
        %v8053 = vpop.f32.mrb[0].mxu0
        %8054 = vdwg.mxu0
        %8055 = vmatprep.subr.bf16.mxu0 %v7078
        %8056 = vmatpush1.bf16.msra.mxu0 %v7077
        %8057 = vmatprep.subr.bf16.mxu0 %v7082
        %8058 = vmatpush1.bf16.msra.mxu0 %v7081
        %8059 = vmatprep.subr.bf16.mxu0 %v7086
        %8060 = vmatpush1.bf16.msra.mxu0 %v7085
        %8061 = vmatprep.subr.bf16.mxu0 %v7090
        %8062 = vmatpush1.bf16.msra.mxu0 %v7089
        %8063 = vmatprep.subr.bf16.mxu0 %v7094
        %8064 = vmatpush1.bf16.msra.mxu0 %v7093
        %8065 = vmatprep.subr.bf16.mxu0 %v7098
        %8066 = vmatpush1.bf16.msra.mxu0 %v7097
        %8067 = vmatprep.subr.bf16.mxu0 %v7102
        %8068 = vmatpush1.bf16.msra.mxu0 %v7101
        %8069 = vmatprep.subr.bf16.mxu0 %v7106
        %8070 = vmatpush1.bf16.msra.mxu0 %v7105
        %8071 = vmatprep.subr.bf16.mxu0 %v7110
        %8072 = vmatpush1.bf16.msra.mxu0 %v7109
        %8073 = vmatprep.subr.bf16.mxu0 %v7114
        %8074 = vmatpush1.bf16.msra.mxu0 %v7113
        %8075 = vmatprep.subr.bf16.mxu0 %v7118
        %8076 = vmatpush1.bf16.msra.mxu0 %v7117
        %8077 = vmatprep.subr.bf16.mxu0 %v7122
        %8078 = vmatpush1.bf16.msra.mxu0 %v7121
        %8079 = vmatprep.subr.bf16.mxu0 %v7126
        %8080 = vmatpush1.bf16.msra.mxu0 %v7125
        %8081 = vmatprep.subr.bf16.mxu0 %v7130
        %8082 = vmatpush1.bf16.msra.mxu0 %v7129
        %8083 = vmatprep.subr.bf16.mxu0 %v7134
        %8084 = vmatpush1.bf16.msra.mxu0 %v7133
        %8085 = vmatprep.subr.bf16.mxu0 %v7138
        %8086 = vmatpush1.bf16.msra.mxu0 %v7137
        %8087 = vmatprep.mubr.bf16.mxu0 %v5343
        %8088 = vmatmul.mubr.bf16.gmra.mrb[0].mxu0 %v5329
        %v8089 = vpop.f32.mrb[0].mxu0
        %v8090 = vadd.f32 %v8049, %v8089
        %v8091 = vpop.f32.mrb[0].mxu0
        %v8092 = vadd.f32 %v8051, %v8091
        %v8093 = vpop.f32.mrb[0].mxu0
        %v8094 = vpop.f32.mrb[0].mxu0
        %8095 = vdwg.mxu0
        %8096 = vmatprep.subr.bf16.mxu0 %v7142
        %8097 = vmatpush1.bf16.msra.mxu0 %v7141
        %8098 = vmatprep.subr.bf16.mxu0 %v7146
        %8099 = vmatpush1.bf16.msra.mxu0 %v7145
        %8100 = vmatprep.subr.bf16.mxu0 %v7150
        %8101 = vmatpush1.bf16.msra.mxu0 %v7149
        %8102 = vmatprep.subr.bf16.mxu0 %v7154
        %8103 = vmatpush1.bf16.msra.mxu0 %v7153
        %8104 = vmatprep.subr.bf16.mxu0 %v7158
        %8105 = vmatpush1.bf16.msra.mxu0 %v7157
        %8106 = vmatprep.subr.bf16.mxu0 %v7162
        %8107 = vmatpush1.bf16.msra.mxu0 %v7161
        %8108 = vmatprep.subr.bf16.mxu0 %v7166
        %8109 = vmatpush1.bf16.msra.mxu0 %v7165
        %8110 = vmatprep.subr.bf16.mxu0 %v7170
        %8111 = vmatpush1.bf16.msra.mxu0 %v7169
        %8112 = vmatprep.subr.bf16.mxu0 %v7174
        %8113 = vmatpush1.bf16.msra.mxu0 %v7173
        %8114 = vmatprep.subr.bf16.mxu0 %v7178
        %8115 = vmatpush1.bf16.msra.mxu0 %v7177
        %8116 = vmatprep.subr.bf16.mxu0 %v7182
        %8117 = vmatpush1.bf16.msra.mxu0 %v7181
        %8118 = vmatprep.subr.bf16.mxu0 %v7186
        %8119 = vmatpush1.bf16.msra.mxu0 %v7185
        %8120 = vmatprep.subr.bf16.mxu0 %v7190
        %8121 = vmatpush1.bf16.msra.mxu0 %v7189
        %8122 = vmatprep.subr.bf16.mxu0 %v7194
        %8123 = vmatpush1.bf16.msra.mxu0 %v7193
        %8124 = vmatprep.subr.bf16.mxu0 %v7198
        %8125 = vmatpush1.bf16.msra.mxu0 %v7197
        %8126 = vmatprep.subr.bf16.mxu0 %v7202
        %8127 = vmatpush1.bf16.msra.mxu0 %v7201
        %8128 = vmatprep.mubr.bf16.mxu0 %v5347
        %8129 = vmatmul.mubr.bf16.gmra.mrb[0].mxu0 %v5345
        %v8130 = vpop.f32.mrb[0].mxu0
        %v8131 = vadd.f32 %v8090, %v8130
        %v8132 = vpop.f32.mrb[0].mxu0
        %v8133 = vadd.f32 %v8092, %v8132
        %v8134 = vpop.f32.mrb[0].mxu0
        %v8135 = vpop.f32.mrb[0].mxu0
        %8136 = vdwg.mxu0
        %8137 = vmatprep.subr.bf16.mxu0 %v7206
        %8138 = vmatpush1.bf16.msra.mxu0 %v7205
        %8139 = vmatprep.subr.bf16.mxu0 %v7210
        %8140 = vmatpush1.bf16.msra.mxu0 %v7209
        %8141 = vmatprep.subr.bf16.mxu0 %v7214
        %8142 = vmatpush1.bf16.msra.mxu0 %v7213
        %8143 = vmatprep.subr.bf16.mxu0 %v7218
        %8144 = vmatpush1.bf16.msra.mxu0 %v7217
        %8145 = vmatprep.subr.bf16.mxu0 %v7222
        %8146 = vmatpush1.bf16.msra.mxu0 %v7221
        %8147 = vmatprep.subr.bf16.mxu0 %v7226
        %8148 = vmatpush1.bf16.msra.mxu0 %v7225
        %8149 = vmatprep.subr.bf16.mxu0 %v7230
        %8150 = vmatpush1.bf16.msra.mxu0 %v7229
        %8151 = vmatprep.subr.bf16.mxu0 %v7234
        %8152 = vmatpush1.bf16.msra.mxu0 %v7233
        %8153 = vmatprep.subr.bf16.mxu0 %v7238
        %8154 = vmatpush1.bf16.msra.mxu0 %v7237
        %8155 = vmatprep.subr.bf16.mxu0 %v7242
        %8156 = vmatpush1.bf16.msra.mxu0 %v7241
        %8157 = vmatprep.subr.bf16.mxu0 %v7246
        %8158 = vmatpush1.bf16.msra.mxu0 %v7245
        %8159 = vmatprep.subr.bf16.mxu0 %v7250
        %8160 = vmatpush1.bf16.msra.mxu0 %v7249
        %8161 = vmatprep.subr.bf16.mxu0 %v7254
        %8162 = vmatpush1.bf16.msra.mxu0 %v7253
        %8163 = vmatprep.subr.bf16.mxu0 %v7258
        %8164 = vmatpush1.bf16.msra.mxu0 %v7257
        %8165 = vmatprep.subr.bf16.mxu0 %v7262
        %8166 = vmatpush1.bf16.msra.mxu0 %v7261
        %8167 = vmatprep.subr.bf16.mxu0 %v7266
        %8168 = vmatpush1.bf16.msra.mxu0 %v7265
        %8169 = vmatprep.mubr.bf16.mxu0 %v5385
        %8170 = vmatmul.mubr.bf16.gmra.mrb[0].mxu0 %v5371
        %v8171 = vpop.f32.mrb[0].mxu0
        %v8172 = vadd.f32 %v8131, %v8171
        %v8173 = vpop.f32.mrb[0].mxu0
        %v8174 = vadd.f32 %v8133, %v8173
        %v8175 = vpop.f32.mrb[0].mxu0
        %v8176 = vpop.f32.mrb[0].mxu0
        %8177 = vdwg.mxu0
        %8178 = vmatprep.subr.bf16.mxu0 %v7270
        %8179 = vmatpush1.bf16.msra.mxu0 %v7269
        %8180 = vmatprep.subr.bf16.mxu0 %v7274
        %8181 = vmatpush1.bf16.msra.mxu0 %v7273
        %8182 = vmatprep.subr.bf16.mxu0 %v7278
        %8183 = vmatpush1.bf16.msra.mxu0 %v7277
        %8184 = vmatprep.subr.bf16.mxu0 %v7282
        %8185 = vmatpush1.bf16.msra.mxu0 %v7281
        %8186 = vmatprep.subr.bf16.mxu0 %v7286
        %8187 = vmatpush1.bf16.msra.mxu0 %v7285
        %8188 = vmatprep.subr.bf16.mxu0 %v7290
        %8189 = vmatpush1.bf16.msra.mxu0 %v7289
        %8190 = vmatprep.subr.bf16.mxu0 %v7294
        %8191 = vmatpush1.bf16.msra.mxu0 %v7293
        %8192 = vmatprep.subr.bf16.mxu0 %v7298
        %8193 = vmatpush1.bf16.msra.mxu0 %v7297
        %8194 = vmatprep.subr.bf16.mxu0 %v7302
        %8195 = vmatpush1.bf16.msra.mxu0 %v7301
        %8196 = vmatprep.subr.bf16.mxu0 %v7306
        %8197 = vmatpush1.bf16.msra.mxu0 %v7305
        %8198 = vmatprep.subr.bf16.mxu0 %v7310
        %8199 = vmatpush1.bf16.msra.mxu0 %v7309
        %8200 = vmatprep.subr.bf16.mxu0 %v7314
        %8201 = vmatpush1.bf16.msra.mxu0 %v7313
        %8202 = vmatprep.subr.bf16.mxu0 %v7318
        %8203 = vmatpush1.bf16.msra.mxu0 %v7317
        %8204 = vmatprep.subr.bf16.mxu0 %v7322
        %8205 = vmatpush1.bf16.msra.mxu0 %v7321
        %8206 = vmatprep.subr.bf16.mxu0 %v7326
        %8207 = vmatpush1.bf16.msra.mxu0 %v7325
        %8208 = vmatprep.subr.bf16.mxu0 %v7330
        %8209 = vmatpush1.bf16.msra.mxu0 %v7329
        %8210 = vmatprep.mubr.bf16.mxu0 %v5395
        %8211 = vmatmul.mubr.bf16.gmra.mrb[0].mxu0 %v5393
        %v8212 = vpop.f32.mrb[0].mxu0
        %v8213 = vadd.f32 %v8172, %v8212
        %v8214 = vpop.f32.mrb[0].mxu0
        %v8215 = vadd.f32 %v8174, %v8214
        %v8216 = vpop.f32.mrb[0].mxu0
        %v8217 = vpop.f32.mrb[0].mxu0
        %8218 = vdwg.mxu0
        %8219 = vmatprep.subr.bf16.mxu0 %v7334
        %8220 = vmatpush1.bf16.msra.mxu0 %v7333
        %8221 = vmatprep.subr.bf16.mxu0 %v7338
        %8222 = vmatpush1.bf16.msra.mxu0 %v7337
        %8223 = vmatprep.subr.bf16.mxu0 %v7342
        %8224 = vmatpush1.bf16.msra.mxu0 %v7341
        %8225 = vmatprep.subr.bf16.mxu0 %v7346
        %8226 = vmatpush1.bf16.msra.mxu0 %v7345
        %8227 = vmatprep.subr.bf16.mxu0 %v7350
        %8228 = vmatpush1.bf16.msra.mxu0 %v7349
        %8229 = vmatprep.subr.bf16.mxu0 %v7354
        %8230 = vmatpush1.bf16.msra.mxu0 %v7353
        %8231 = vmatprep.subr.bf16.mxu0 %v7358
        %8232 = vmatpush1.bf16.msra.mxu0 %v7357
        %8233 = vmatprep.subr.bf16.mxu0 %v7362
        %8234 = vmatpush1.bf16.msra.mxu0 %v7361
        %8235 = vmatprep.subr.bf16.mxu0 %v7366
        %8236 = vmatpush1.bf16.msra.mxu0 %v7365
        %8237 = vmatprep.subr.bf16.mxu0 %v7370
        %8238 = vmatpush1.bf16.msra.mxu0 %v7369
        %8239 = vmatprep.subr.bf16.mxu0 %v7374
        %8240 = vmatpush1.bf16.msra.mxu0 %v7373
        %8241 = vmatprep.subr.bf16.mxu0 %v7378
        %8242 = vmatpush1.bf16.msra.mxu0 %v7377
        %8243 = vmatprep.subr.bf16.mxu0 %v7382
        %8244 = vmatpush1.bf16.msra.mxu0 %v7381
        %8245 = vmatprep.subr.bf16.mxu0 %v7386
        %8246 = vmatpush1.bf16.msra.mxu0 %v7385
        %8247 = vmatprep.subr.bf16.mxu0 %v7390
        %8248 = vmatpush1.bf16.msra.mxu0 %v7389
        %8249 = vmatprep.subr.bf16.mxu0 %v7394
        %8250 = vmatpush1.bf16.msra.mxu0 %v7393
        %8251 = vmatprep.mubr.bf16.mxu0 %v5392
        %8252 = vmatmul.mubr.bf16.gmra.mrb[0].mxu0 %v5378
        %v8253 = vpop.f32.mrb[0].mxu0
        %v8254 = vadd.f32 %v8213, %v8253
        %v8255 = vpop.f32.mrb[0].mxu0
        %v8256 = vadd.f32 %v8215, %v8255
        %v8257 = vpop.f32.mrb[0].mxu0
        %v8258 = vpop.f32.mrb[0].mxu0
        %8259 = vdwg.mxu0
        %8260 = vmatprep.subr.bf16.mxu0 %v7398
        %8261 = vmatpush1.bf16.msra.mxu0 %v7397
        %8262 = vmatprep.subr.bf16.mxu0 %v7402
        %8263 = vmatpush1.bf16.msra.mxu0 %v7401
        %8264 = vmatprep.subr.bf16.mxu0 %v7406
        %8265 = vmatpush1.bf16.msra.mxu0 %v7405
        %8266 = vmatprep.subr.bf16.mxu0 %v7410
        %8267 = vmatpush1.bf16.msra.mxu0 %v7409
        %8268 = vmatprep.subr.bf16.mxu0 %v7414
        %8269 = vmatpush1.bf16.msra.mxu0 %v7413
        %8270 = vmatprep.subr.bf16.mxu0 %v7418
        %8271 = vmatpush1.bf16.msra.mxu0 %v7417
        %8272 = vmatprep.subr.bf16.mxu0 %v7422
        %8273 = vmatpush1.bf16.msra.mxu0 %v7421
        %8274 = vmatprep.subr.bf16.mxu0 %v7426
        %8275 = vmatpush1.bf16.msra.mxu0 %v7425
        %8276 = vmatprep.subr.bf16.mxu0 %v7430
        %8277 = vmatpush1.bf16.msra.mxu0 %v7429
        %8278 = vmatprep.subr.bf16.mxu0 %v7434
        %8279 = vmatpush1.bf16.msra.mxu0 %v7433
        %8280 = vmatprep.subr.bf16.mxu0 %v7438
        %8281 = vmatpush1.bf16.msra.mxu0 %v7437
        %8282 = vmatprep.subr.bf16.mxu0 %v7442
        %8283 = vmatpush1.bf16.msra.mxu0 %v7441
        %8284 = vmatprep.subr.bf16.mxu0 %v7446
        %8285 = vmatpush1.bf16.msra.mxu0 %v7445
        %8286 = vmatprep.subr.bf16.mxu0 %v7450
        %8287 = vmatpush1.bf16.msra.mxu0 %v7449
        %8288 = vmatprep.subr.bf16.mxu0 %v7454
        %8289 = vmatpush1.bf16.msra.mxu0 %v7453
        %8290 = vmatprep.subr.bf16.mxu0 %v7458
        %8291 = vmatpush1.bf16.msra.mxu0 %v7457
        %8292 = vmatprep.mubr.bf16.mxu0 %v5396
        %8293 = vmatmul.mubr.bf16.gmra.mrb[0].mxu0 %v5394
        %v8294 = vpop.f32.mrb[0].mxu0
        %v8295 = vadd.f32 %v8254, %v8294
        %v8296 = vpop.f32.mrb[0].mxu0
        %v8297 = vadd.f32 %v8256, %v8296
        %v8298 = vpop.f32.mrb[0].mxu0
        %v8299 = vpop.f32.mrb[0].mxu0
        %8300 = vdwg.mxu0
        %8301 = vmatprep.subr.bf16.mxu0 %v6952
        %8302 = vmatpush1.bf16.msra.mxu0 %v6951
        %8303 = vmatprep.subr.bf16.mxu0 %v6956
        %8304 = vmatpush1.bf16.msra.mxu0 %v6955
        %8305 = vmatprep.subr.bf16.mxu0 %v6960
        %8306 = vmatpush1.bf16.msra.mxu0 %v6959
        %8307 = vmatprep.subr.bf16.mxu0 %v6964
        %8308 = vmatpush1.bf16.msra.mxu0 %v6963
        %8309 = vmatprep.subr.bf16.mxu0 %v6968
        %8310 = vmatpush1.bf16.msra.mxu0 %v6967
        %8311 = vmatprep.subr.bf16.mxu0 %v6972
        %8312 = vmatpush1.bf16.msra.mxu0 %v6971
        %8313 = vmatprep.subr.bf16.mxu0 %v6976
        %8314 = vmatpush1.bf16.msra.mxu0 %v6975
        %8315 = vmatprep.subr.bf16.mxu0 %v6980
        %8316 = vmatpush1.bf16.msra.mxu0 %v6979
        %8317 = vmatprep.subr.bf16.mxu0 %v6984
        %8318 = vmatpush1.bf16.msra.mxu0 %v6983
        %8319 = vmatprep.subr.bf16.mxu0 %v6988
        %8320 = vmatpush1.bf16.msra.mxu0 %v6987
        %8321 = vmatprep.subr.bf16.mxu0 %v6992
        %8322 = vmatpush1.bf16.msra.mxu0 %v6991
        %8323 = vmatprep.subr.bf16.mxu0 %v6996
        %8324 = vmatpush1.bf16.msra.mxu0 %v6995
        %8325 = vmatprep.subr.bf16.mxu0 %v7000
        %8326 = vmatpush1.bf16.msra.mxu0 %v6999
        %8327 = vmatprep.subr.bf16.mxu0 %v7004
        %8328 = vmatpush1.bf16.msra.mxu0 %v7003
        %8329 = vmatprep.subr.bf16.mxu0 %v7008
        %8330 = vmatpush1.bf16.msra.mxu0 %v7007
        %8331 = vmatprep.subr.bf16.mxu0 %v7012
        %8332 = vmatpush1.bf16.msra.mxu0 %v7011
        %8333 = vmatprep.mubr.bf16.mxu0 %v5336
        %8334 = vmatmul.mubr.bf16.gmra.mrb[0].mxu0 %v5322
        %v8335 = vpop.f32.mrb[0].mxu0
        %v8336 = vadd.f32 %v5288, %v8335
        %v8337 = vpop.f32.mrb[0].mxu0
        %v8338 = vadd.f32 %v5292, %v8337
        %v8339 = vpop.f32.mrb[0].mxu0
        %v8340 = vpop.f32.mrb[0].mxu0
        %8341 = vdwg.mxu0
        %8342 = vmatprep.subr.bf16.mxu0 %v7016
        %8343 = vmatpush1.bf16.msra.mxu0 %v7015
        %8344 = vmatprep.subr.bf16.mxu0 %v7020
        %8345 = vmatpush1.bf16.msra.mxu0 %v7019
        %8346 = vmatprep.subr.bf16.mxu0 %v7024
        %8347 = vmatpush1.bf16.msra.mxu0 %v7023
        %8348 = vmatprep.subr.bf16.mxu0 %v7028
        %8349 = vmatpush1.bf16.msra.mxu0 %v7027
        %8350 = vmatprep.subr.bf16.mxu0 %v7032
        %8351 = vmatpush1.bf16.msra.mxu0 %v7031
        %8352 = vmatprep.subr.bf16.mxu0 %v7036
        %8353 = vmatpush1.bf16.msra.mxu0 %v7035
        %8354 = vmatprep.subr.bf16.mxu0 %v7040
        %8355 = vmatpush1.bf16.msra.mxu0 %v7039
        %8356 = vmatprep.subr.bf16.mxu0 %v7044
        %8357 = vmatpush1.bf16.msra.mxu0 %v7043
        %8358 = vmatprep.subr.bf16.mxu0 %v7048
        %8359 = vmatpush1.bf16.msra.mxu0 %v7047
        %8360 = vmatprep.subr.bf16.mxu0 %v7052
        %8361 = vmatpush1.bf16.msra.mxu0 %v7051
        %8362 = vmatprep.subr.bf16.mxu0 %v7056
        %8363 = vmatpush1.bf16.msra.mxu0 %v7055
        %8364 = vmatprep.subr.bf16.mxu0 %v7060
        %8365 = vmatpush1.bf16.msra.mxu0 %v7059
        %8366 = vmatprep.subr.bf16.mxu0 %v7064
        %8367 = vmatpush1.bf16.msra.mxu0 %v7063
        %8368 = vmatprep.subr.bf16.mxu0 %v7068
        %8369 = vmatpush1.bf16.msra.mxu0 %v7067
        %8370 = vmatprep.subr.bf16.mxu0 %v7072
        %8371 = vmatpush1.bf16.msra.mxu0 %v7071
        %8372 = vmatprep.subr.bf16.mxu0 %v7076
        %8373 = vmatpush1.bf16.msra.mxu0 %v7075
        %8374 = vmatprep.mubr.bf16.mxu0 %v5346
        %8375 = vmatmul.mubr.bf16.gmra.mrb[0].mxu0 %v5344
        %v8376 = vpop.f32.mrb[0].mxu0
        %v8377 = vadd.f32 %v8336, %v8376
        %v8378 = vpop.f32.mrb[0].mxu0
        %v8379 = vadd.f32 %v8338, %v8378
        %v8380 = vpop.f32.mrb[0].mxu0
        %v8381 = vpop.f32.mrb[0].mxu0
        %8382 = vdwg.mxu0
        %8383 = vmatprep.subr.bf16.mxu0 %v7080
        %8384 = vmatpush1.bf16.msra.mxu0 %v7079
        %8385 = vmatprep.subr.bf16.mxu0 %v7084
        %8386 = vmatpush1.bf16.msra.mxu0 %v7083
        %8387 = vmatprep.subr.bf16.mxu0 %v7088
        %8388 = vmatpush1.bf16.msra.mxu0 %v7087
        %8389 = vmatprep.subr.bf16.mxu0 %v7092
        %8390 = vmatpush1.bf16.msra.mxu0 %v7091
        %8391 = vmatprep.subr.bf16.mxu0 %v7096
        %8392 = vmatpush1.bf16.msra.mxu0 %v7095
        %8393 = vmatprep.subr.bf16.mxu0 %v7100
        %8394 = vmatpush1.bf16.msra.mxu0 %v7099
        %8395 = vmatprep.subr.bf16.mxu0 %v7104
        %8396 = vmatpush1.bf16.msra.mxu0 %v7103
        %8397 = vmatprep.subr.bf16.mxu0 %v7108
        %8398 = vmatpush1.bf16.msra.mxu0 %v7107
        %8399 = vmatprep.subr.bf16.mxu0 %v7112
        %8400 = vmatpush1.bf16.msra.mxu0 %v7111
        %8401 = vmatprep.subr.bf16.mxu0 %v7116
        %8402 = vmatpush1.bf16.msra.mxu0 %v7115
        %8403 = vmatprep.subr.bf16.mxu0 %v7120
        %8404 = vmatpush1.bf16.msra.mxu0 %v7119
        %8405 = vmatprep.subr.bf16.mxu0 %v7124
        %8406 = vmatpush1.bf16.msra.mxu0 %v7123
        %8407 = vmatprep.subr.bf16.mxu0 %v7128
        %8408 = vmatpush1.bf16.msra.mxu0 %v7127
        %8409 = vmatprep.subr.bf16.mxu0 %v7132
        %8410 = vmatpush1.bf16.msra.mxu0 %v7131
        %8411 = vmatprep.subr.bf16.mxu0 %v7136
        %8412 = vmatpush1.bf16.msra.mxu0 %v7135
        %8413 = vmatprep.subr.bf16.mxu0 %v7140
        %8414 = vmatpush1.bf16.msra.mxu0 %v7139
        %8415 = vmatprep.mubr.bf16.mxu0 %v5343
        %8416 = vmatmul.mubr.bf16.gmra.mrb[0].mxu0 %v5329
        %v8417 = vpop.f32.mrb[0].mxu0
        %v8418 = vadd.f32 %v8377, %v8417
        %v8419 = vpop.f32.mrb[0].mxu0
        %v8420 = vadd.f32 %v8379, %v8419
        %v8421 = vpop.f32.mrb[0].mxu0
        %v8422 = vpop.f32.mrb[0].mxu0
        %8423 = vdwg.mxu0
        %8424 = vmatprep.subr.bf16.mxu0 %v7144
        %8425 = vmatpush1.bf16.msra.mxu0 %v7143
        %8426 = vmatprep.subr.bf16.mxu0 %v7148
        %8427 = vmatpush1.bf16.msra.mxu0 %v7147
        %8428 = vmatprep.subr.bf16.mxu0 %v7152
        %8429 = vmatpush1.bf16.msra.mxu0 %v7151
        %8430 = vmatprep.subr.bf16.mxu0 %v7156
        %8431 = vmatpush1.bf16.msra.mxu0 %v7155
        %8432 = vmatprep.subr.bf16.mxu0 %v7160
        %8433 = vmatpush1.bf16.msra.mxu0 %v7159
        %8434 = vmatprep.subr.bf16.mxu0 %v7164
        %8435 = vmatpush1.bf16.msra.mxu0 %v7163
        %8436 = vmatprep.subr.bf16.mxu0 %v7168
        %8437 = vmatpush1.bf16.msra.mxu0 %v7167
        %8438 = vmatprep.subr.bf16.mxu0 %v7172
        %8439 = vmatpush1.bf16.msra.mxu0 %v7171
        %8440 = vmatprep.subr.bf16.mxu0 %v7176
        %8441 = vmatpush1.bf16.msra.mxu0 %v7175
        %8442 = vmatprep.subr.bf16.mxu0 %v7180
        %8443 = vmatpush1.bf16.msra.mxu0 %v7179
        %8444 = vmatprep.subr.bf16.mxu0 %v7184
        %8445 = vmatpush1.bf16.msra.mxu0 %v7183
        %8446 = vmatprep.subr.bf16.mxu0 %v7188
        %8447 = vmatpush1.bf16.msra.mxu0 %v7187
        %8448 = vmatprep.subr.bf16.mxu0 %v7192
        %8449 = vmatpush1.bf16.msra.mxu0 %v7191
        %8450 = vmatprep.subr.bf16.mxu0 %v7196
        %8451 = vmatpush1.bf16.msra.mxu0 %v7195
        %8452 = vmatprep.subr.bf16.mxu0 %v7200
        %8453 = vmatpush1.bf16.msra.mxu0 %v7199
        %8454 = vmatprep.subr.bf16.mxu0 %v7204
        %8455 = vmatpush1.bf16.msra.mxu0 %v7203
        %8456 = vmatprep.mubr.bf16.mxu0 %v5347
        %8457 = vmatmul.mubr.bf16.gmra.mrb[0].mxu0 %v5345
        %v8458 = vpop.f32.mrb[0].mxu0
        %v8459 = vadd.f32 %v8418, %v8458
        %v8460 = vpop.f32.mrb[0].mxu0
        %v8461 = vadd.f32 %v8420, %v8460
        %v8462 = vpop.f32.mrb[0].mxu0
        %v8463 = vpop.f32.mrb[0].mxu0
        %8464 = vdwg.mxu0
        %8465 = vmatprep.subr.bf16.mxu0 %v7208
        %8466 = vmatpush1.bf16.msra.mxu0 %v7207
        %8467 = vmatprep.subr.bf16.mxu0 %v7212
        %8468 = vmatpush1.bf16.msra.mxu0 %v7211
        %8469 = vmatprep.subr.bf16.mxu0 %v7216
        %8470 = vmatpush1.bf16.msra.mxu0 %v7215
        %8471 = vmatprep.subr.bf16.mxu0 %v7220
        %8472 = vmatpush1.bf16.msra.mxu0 %v7219
        %8473 = vmatprep.subr.bf16.mxu0 %v7224
        %8474 = vmatpush1.bf16.msra.mxu0 %v7223
        %8475 = vmatprep.subr.bf16.mxu0 %v7228
        %8476 = vmatpush1.bf16.msra.mxu0 %v7227
        %8477 = vmatprep.subr.bf16.mxu0 %v7232
        %8478 = vmatpush1.bf16.msra.mxu0 %v7231
        %8479 = vmatprep.subr.bf16.mxu0 %v7236
        %8480 = vmatpush1.bf16.msra.mxu0 %v7235
        %8481 = vmatprep.subr.bf16.mxu0 %v7240
        %8482 = vmatpush1.bf16.msra.mxu0 %v7239
        %8483 = vmatprep.subr.bf16.mxu0 %v7244
        %8484 = vmatpush1.bf16.msra.mxu0 %v7243
        %8485 = vmatprep.subr.bf16.mxu0 %v7248
        %8486 = vmatpush1.bf16.msra.mxu0 %v7247
        %8487 = vmatprep.subr.bf16.mxu0 %v7252
        %8488 = vmatpush1.bf16.msra.mxu0 %v7251
        %8489 = vmatprep.subr.bf16.mxu0 %v7256
        %8490 = vmatpush1.bf16.msra.mxu0 %v7255
        %8491 = vmatprep.subr.bf16.mxu0 %v7260
        %8492 = vmatpush1.bf16.msra.mxu0 %v7259
        %8493 = vmatprep.subr.bf16.mxu0 %v7264
        %8494 = vmatpush1.bf16.msra.mxu0 %v7263
        %8495 = vmatprep.subr.bf16.mxu0 %v7268
        %8496 = vmatpush1.bf16.msra.mxu0 %v7267
        %8497 = vmatprep.mubr.bf16.mxu0 %v5385
        %8498 = vmatmul.mubr.bf16.gmra.mrb[0].mxu0 %v5371
        %v8499 = vpop.f32.mrb[0].mxu0
        %v8500 = vadd.f32 %v8459, %v8499
        %v8501 = vpop.f32.mrb[0].mxu0
        %v8502 = vadd.f32 %v8461, %v8501
        %v8503 = vpop.f32.mrb[0].mxu0
        %v8504 = vpop.f32.mrb[0].mxu0
        %8505 = vdwg.mxu0
        %8506 = vmatprep.subr.bf16.mxu0 %v7272
        %8507 = vmatpush1.bf16.msra.mxu0 %v7271
        %8508 = vmatprep.subr.bf16.mxu0 %v7276
        %8509 = vmatpush1.bf16.msra.mxu0 %v7275
        %8510 = vmatprep.subr.bf16.mxu0 %v7280
        %8511 = vmatpush1.bf16.msra.mxu0 %v7279
        %8512 = vmatprep.subr.bf16.mxu0 %v7284
        %8513 = vmatpush1.bf16.msra.mxu0 %v7283
        %8514 = vmatprep.subr.bf16.mxu0 %v7288
        %8515 = vmatpush1.bf16.msra.mxu0 %v7287
        %8516 = vmatprep.subr.bf16.mxu0 %v7292
        %8517 = vmatpush1.bf16.msra.mxu0 %v7291
        %8518 = vmatprep.subr.bf16.mxu0 %v7296
        %8519 = vmatpush1.bf16.msra.mxu0 %v7295
        %8520 = vmatprep.subr.bf16.mxu0 %v7300
        %8521 = vmatpush1.bf16.msra.mxu0 %v7299
        %8522 = vmatprep.subr.bf16.mxu0 %v7304
        %8523 = vmatpush1.bf16.msra.mxu0 %v7303
        %8524 = vmatprep.subr.bf16.mxu0 %v7308
        %8525 = vmatpush1.bf16.msra.mxu0 %v7307
        %8526 = vmatprep.subr.bf16.mxu0 %v7312
        %8527 = vmatpush1.bf16.msra.mxu0 %v7311
        %8528 = vmatprep.subr.bf16.mxu0 %v7316
        %8529 = vmatpush1.bf16.msra.mxu0 %v7315
        %8530 = vmatprep.subr.bf16.mxu0 %v7320
        %8531 = vmatpush1.bf16.msra.mxu0 %v7319
        %8532 = vmatprep.subr.bf16.mxu0 %v7324
        %8533 = vmatpush1.bf16.msra.mxu0 %v7323
        %8534 = vmatprep.subr.bf16.mxu0 %v7328
        %8535 = vmatpush1.bf16.msra.mxu0 %v7327
        %8536 = vmatprep.subr.bf16.mxu0 %v7332
        %8537 = vmatpush1.bf16.msra.mxu0 %v7331
        %8538 = vmatprep.mubr.bf16.mxu0 %v5395
        %8539 = vmatmul.mubr.bf16.gmra.mrb[0].mxu0 %v5393
        %v8540 = vpop.f32.mrb[0].mxu0
        %v8541 = vadd.f32 %v8500, %v8540
        %v8542 = vpop.f32.mrb[0].mxu0
        %v8543 = vadd.f32 %v8502, %v8542
        %v8544 = vpop.f32.mrb[0].mxu0
        %v8545 = vpop.f32.mrb[0].mxu0
        %8546 = vdwg.mxu0
        %8547 = vmatprep.subr.bf16.mxu0 %v7336
        %8548 = vmatpush1.bf16.msra.mxu0 %v7335
        %8549 = vmatprep.subr.bf16.mxu0 %v7340
        %8550 = vmatpush1.bf16.msra.mxu0 %v7339
        %8551 = vmatprep.subr.bf16.mxu0 %v7344
        %8552 = vmatpush1.bf16.msra.mxu0 %v7343
        %8553 = vmatprep.subr.bf16.mxu0 %v7348
        %8554 = vmatpush1.bf16.msra.mxu0 %v7347
        %8555 = vmatprep.subr.bf16.mxu0 %v7352
        %8556 = vmatpush1.bf16.msra.mxu0 %v7351
        %8557 = vmatprep.subr.bf16.mxu0 %v7356
        %8558 = vmatpush1.bf16.msra.mxu0 %v7355
        %8559 = vmatprep.subr.bf16.mxu0 %v7360
        %8560 = vmatpush1.bf16.msra.mxu0 %v7359
        %8561 = vmatprep.subr.bf16.mxu0 %v7364
        %8562 = vmatpush1.bf16.msra.mxu0 %v7363
        %8563 = vmatprep.subr.bf16.mxu0 %v7368
        %8564 = vmatpush1.bf16.msra.mxu0 %v7367
        %8565 = vmatprep.subr.bf16.mxu0 %v7372
        %8566 = vmatpush1.bf16.msra.mxu0 %v7371
        %8567 = vmatprep.subr.bf16.mxu0 %v7376
        %8568 = vmatpush1.bf16.msra.mxu0 %v7375
        %8569 = vmatprep.subr.bf16.mxu0 %v7380
        %8570 = vmatpush1.bf16.msra.mxu0 %v7379
        %8571 = vmatprep.subr.bf16.mxu0 %v7384
        %8572 = vmatpush1.bf16.msra.mxu0 %v7383
        %8573 = vmatprep.subr.bf16.mxu0 %v7388
        %8574 = vmatpush1.bf16.msra.mxu0 %v7387
        %8575 = vmatprep.subr.bf16.mxu0 %v7392
        %8576 = vmatpush1.bf16.msra.mxu0 %v7391
        %8577 = vmatprep.subr.bf16.mxu0 %v7396
        %8578 = vmatpush1.bf16.msra.mxu0 %v7395
        %8579 = vmatprep.mubr.bf16.mxu0 %v5392
        %8580 = vmatmul.mubr.bf16.gmra.mrb[0].mxu0 %v5378
        %v8581 = vpop.f32.mrb[0].mxu0
        %v8582 = vadd.f32 %v8541, %v8581
        %v8583 = vpop.f32.mrb[0].mxu0
        %v8584 = vadd.f32 %v8543, %v8583
        %v8585 = vpop.f32.mrb[0].mxu0
        %v8586 = vpop.f32.mrb[0].mxu0
        %8587 = vdwg.mxu0
        %8588 = vmatprep.subr.bf16.mxu0 %v7400
        %8589 = vmatpush1.bf16.msra.mxu0 %v7399
        %8590 = vmatprep.subr.bf16.mxu0 %v7404
        %8591 = vmatpush1.bf16.msra.mxu0 %v7403
        %8592 = vmatprep.subr.bf16.mxu0 %v7408
        %8593 = vmatpush1.bf16.msra.mxu0 %v7407
        %8594 = vmatprep.subr.bf16.mxu0 %v7412
        %8595 = vmatpush1.bf16.msra.mxu0 %v7411
        %8596 = vmatprep.subr.bf16.mxu0 %v7416
        %8597 = vmatpush1.bf16.msra.mxu0 %v7415
        %8598 = vmatprep.subr.bf16.mxu0 %v7420
        %8599 = vmatpush1.bf16.msra.mxu0 %v7419
        %8600 = vmatprep.subr.bf16.mxu0 %v7424
        %8601 = vmatpush1.bf16.msra.mxu0 %v7423
        %8602 = vmatprep.subr.bf16.mxu0 %v7428
        %8603 = vmatpush1.bf16.msra.mxu0 %v7427
        %8604 = vmatprep.subr.bf16.mxu0 %v7432
        %8605 = vmatpush1.bf16.msra.mxu0 %v7431
        %8606 = vmatprep.subr.bf16.mxu0 %v7436
        %8607 = vmatpush1.bf16.msra.mxu0 %v7435
        %8608 = vmatprep.subr.bf16.mxu0 %v7440
        %8609 = vmatpush1.bf16.msra.mxu0 %v7439
        %8610 = vmatprep.subr.bf16.mxu0 %v7444
        %8611 = vmatpush1.bf16.msra.mxu0 %v7443
        %8612 = vmatprep.subr.bf16.mxu0 %v7448
        %8613 = vmatpush1.bf16.msra.mxu0 %v7447
        %8614 = vmatprep.subr.bf16.mxu0 %v7452
        %8615 = vmatpush1.bf16.msra.mxu0 %v7451
        %8616 = vmatprep.subr.bf16.mxu0 %v7456
        %8617 = vmatpush1.bf16.msra.mxu0 %v7455
        %8618 = vmatprep.subr.bf16.mxu0 %v7460
        %8619 = vmatpush1.bf16.msra.mxu0 %v7459
        %8620 = vmatprep.mubr.bf16.mxu0 %v5396
        %8621 = vmatmul.mubr.bf16.gmra.mrb[0].mxu0 %v5394
        %v8622 = vpop.f32.mrb[0].mxu0
        %v8623 = vadd.f32 %v8582, %v8622
        %v8624 = vpop.f32.mrb[0].mxu0
        %v8625 = vadd.f32 %v8584, %v8624
        %v8626 = vpop.f32.mrb[0].mxu0
        %v8627 = vpop.f32.mrb[0].mxu0
        %8628 = vdwg.mxu0
        %v8629 = vmax.f32 %v8295, 0.0
        %v8630 = vmax.f32 %v8297, 0.0
        %v8631 = vmax.f32 %v8623, 0.0
        %v8632 = vmax.f32 %v8625, 0.0
        %v8633 = vld [vmem:[%s11] sm:$0xff]
        %v8634 = vld [vmem:[%s11 + $0x8] sm:$0xff]
        %v8635 = vld [vmem:[%s11 + $0x10] sm:$0xff]
        %v8636 = vld [vmem:[%s11 + $0x18] sm:$0xff]
        %v8637 = vld [vmem:[%s11 + $0x20] sm:$0xff]
        %v8638 = vld [vmem:[%s11 + $0x28] sm:$0xff]
        %v8639 = vld [vmem:[%s11 + $0x30] sm:$0xff]
        %v8640 = vld [vmem:[%s11 + $0x38] sm:$0xff]
        %v8641 = vld [vmem:[%s11 + $0x40] sm:$0xff]
        %v8642 = vld [vmem:[%s11 + $0x48] sm:$0xff]
        %v8643 = vld [vmem:[%s11 + $0x50] sm:$0xff]
        %v8644 = vld [vmem:[%s11 + $0x58] sm:$0xff]
        %v8645 = vld [vmem:[%s11 + $0x60] sm:$0xff]
        %v8646 = vld [vmem:[%s11 + $0x68] sm:$0xff]
        %v8647 = vld [vmem:[%s11 + $0x70] sm:$0xff]
        %v8648 = vld [vmem:[%s11 + $0x78] sm:$0xff]
        %v8649 = vld [vmem:[%s11 + $0x80] sm:$0xff]
        %v8650 = vld [vmem:[%s11 + $0x88] sm:$0xff]
        %v8651 = vld [vmem:[%s11 + $0x90] sm:$0xff]
        %v8652 = vld [vmem:[%s11 + $0x98] sm:$0xff]
        %v8653 = vld [vmem:[%s11 + $0xa0] sm:$0xff]
        %v8654 = vld [vmem:[%s11 + $0xa8] sm:$0xff]
        %v8655 = vld [vmem:[%s11 + $0xb0] sm:$0xff]
        %v8656 = vld [vmem:[%s11 + $0xb8] sm:$0xff]
        %v8657 = vld [vmem:[%s11 + $0xc0] sm:$0xff]
        %v8658 = vld [vmem:[%s11 + $0xc8] sm:$0xff]
        %v8659 = vld [vmem:[%s11 + $0xd0] sm:$0xff]
        %v8660 = vld [vmem:[%s11 + $0xd8] sm:$0xff]
        %v8661 = vld [vmem:[%s11 + $0xe0] sm:$0xff]
        %v8662 = vld [vmem:[%s11 + $0xe8] sm:$0xff]
        %v8663 = vld [vmem:[%s11 + $0xf0] sm:$0xff]
        %v8664 = vld [vmem:[%s11 + $0xf8] sm:$0xff]
        %v8665 = vld [vmem:[%s11 + $0x100] sm:$0xff]
        %v8666 = vld [vmem:[%s11 + $0x108] sm:$0xff]
        %v8667 = vld [vmem:[%s11 + $0x110] sm:$0xff]
        %v8668 = vld [vmem:[%s11 + $0x118] sm:$0xff]
        %v8669 = vld [vmem:[%s11 + $0x120] sm:$0xff]
        %v8670 = vld [vmem:[%s11 + $0x128] sm:$0xff]
        %v8671 = vld [vmem:[%s11 + $0x130] sm:$0xff]
        %v8672 = vld [vmem:[%s11 + $0x138] sm:$0xff]
        %v8673 = vld [vmem:[%s11 + $0x140] sm:$0xff]
        %v8674 = vld [vmem:[%s11 + $0x148] sm:$0xff]
        %v8675 = vld [vmem:[%s11 + $0x150] sm:$0xff]
        %v8676 = vld [vmem:[%s11 + $0x158] sm:$0xff]
        %v8677 = vld [vmem:[%s11 + $0x160] sm:$0xff]
        %v8678 = vld [vmem:[%s11 + $0x168] sm:$0xff]
        %v8679 = vld [vmem:[%s11 + $0x170] sm:$0xff]
        %v8680 = vld [vmem:[%s11 + $0x178] sm:$0xff]
        %v8681 = vld [vmem:[%s11 + $0x180] sm:$0xff]
        %v8682 = vld [vmem:[%s11 + $0x188] sm:$0xff]
        %v8683 = vld [vmem:[%s11 + $0x190] sm:$0xff]
        %v8684 = vld [vmem:[%s11 + $0x198] sm:$0xff]
        %v8685 = vld [vmem:[%s11 + $0x1a0] sm:$0xff]
        %v8686 = vld [vmem:[%s11 + $0x1a8] sm:$0xff]
        %v8687 = vld [vmem:[%s11 + $0x1b0] sm:$0xff]
        %v8688 = vld [vmem:[%s11 + $0x1b8] sm:$0xff]
        %v8689 = vld [vmem:[%s11 + $0x1c0] sm:$0xff]
        %v8690 = vld [vmem:[%s11 + $0x1c8] sm:$0xff]
        %v8691 = vld [vmem:[%s11 + $0x1d0] sm:$0xff]
        %v8692 = vld [vmem:[%s11 + $0x1d8] sm:$0xff]
        %v8693 = vld [vmem:[%s11 + $0x1e0] sm:$0xff]
        %v8694 = vld [vmem:[%s11 + $0x1e8] sm:$0xff]
        %v8695 = vld [vmem:[%s11 + $0x1f0] sm:$0xff]
        %v8696 = vld [vmem:[%s11 + $0x1f8] sm:$0xff]
        %v8697 = vld [vmem:[#allocation2] sm:$0x1]
        %v8699 = vlaneseq
        %v8700 = vshrl.u32 %v8699, 7
        %v8701 = vsub.s32 0, %v8700
        %v8702 = vrot.slane %v8697, %v8701
        %8704 = vmatprep.subr.mxu0 0.0
        %8705 = vmatpush1.msra.mxu0 %v8633
        %8706 = vmatprep.subr.mxu0 0.0
        %8707 = vmatpush1.msra.mxu0 %v8634
        %8708 = vmatprep.subr.mxu0 0.0
        %8709 = vmatpush1.msra.mxu0 %v8635
        %8710 = vmatprep.subr.mxu0 0.0
        %8711 = vmatpush1.msra.mxu0 %v8636
        %8712 = vmatprep.subr.mxu0 0.0
        %8713 = vmatpush1.msra.mxu0 %v8637
        %8714 = vmatprep.subr.mxu0 0.0
        %8715 = vmatpush1.msra.mxu0 %v8638
        %8716 = vmatprep.subr.mxu0 0.0
        %8717 = vmatpush1.msra.mxu0 %v8639
        %8718 = vmatprep.subr.mxu0 0.0
        %8719 = vmatpush1.msra.mxu0 %v8640
        %8720 = vmatprep.subr.mxu0 0.0
        %8721 = vmatpush1.msra.mxu0 %v8641
        %8722 = vmatprep.subr.mxu0 0.0
        %8723 = vmatpush1.msra.mxu0 %v8642
        %8724 = vmatprep.subr.mxu0 0.0
        %8725 = vmatpush1.msra.mxu0 %v8643
        %8726 = vmatprep.subr.mxu0 0.0
        %8727 = vmatpush1.msra.mxu0 %v8644
        %8728 = vmatprep.subr.mxu0 0.0
        %8729 = vmatpush1.msra.mxu0 %v8645
        %8730 = vmatprep.subr.mxu0 0.0
        %8731 = vmatpush1.msra.mxu0 %v8646
        %8732 = vmatprep.subr.mxu0 0.0
        %8733 = vmatpush1.msra.mxu0 %v8647
        %8734 = vmatprep.subr.mxu0 0.0
        %8735 = vmatpush1.msra.mxu0 %v8648
        %8736 = vmatprep.subr.mxu0 0.0
        %8737 = vmatpush1.msra.mxu0 %v8649
        %8738 = vmatprep.subr.mxu0 0.0
        %8739 = vmatpush1.msra.mxu0 %v8650
        %8740 = vmatprep.subr.mxu0 0.0
        %8741 = vmatpush1.msra.mxu0 %v8651
        %8742 = vmatprep.subr.mxu0 0.0
        %8743 = vmatpush1.msra.mxu0 %v8652
        %8744 = vmatprep.subr.mxu0 0.0
        %8745 = vmatpush1.msra.mxu0 %v8653
        %8746 = vmatprep.subr.mxu0 0.0
        %8747 = vmatpush1.msra.mxu0 %v8654
        %8748 = vmatprep.subr.mxu0 0.0
        %8749 = vmatpush1.msra.mxu0 %v8655
        %8750 = vmatprep.subr.mxu0 0.0
        %8751 = vmatpush1.msra.mxu0 %v8656
        %8752 = vmatprep.subr.mxu0 0.0
        %8753 = vmatpush1.msra.mxu0 %v8657
        %8754 = vmatprep.subr.mxu0 0.0
        %8755 = vmatpush1.msra.mxu0 %v8658
        %8756 = vmatprep.subr.mxu0 0.0
        %8757 = vmatpush1.msra.mxu0 %v8659
        %8758 = vmatprep.subr.mxu0 0.0
        %8759 = vmatpush1.msra.mxu0 %v8660
        %8760 = vmatprep.subr.mxu0 0.0
        %8761 = vmatpush1.msra.mxu0 %v8661
        %8762 = vmatprep.subr.mxu0 0.0
        %8763 = vmatpush1.msra.mxu0 %v8662
        %8764 = vmatprep.subr.mxu0 0.0
        %8765 = vmatpush1.msra.mxu0 %v8663
        %8766 = vmatprep.subr.mxu0 0.0
        %8767 = vmatpush1.msra.mxu0 %v8664
        %8768 = vmatprep.mubr.f32.mxu0 %v8630
        %8769 = vmatmul.mubr.f32.gmra.mrb[0].mxu0 %v8629
        %v8770 = vpop.f32.mrb[0].mxu0
        %v8771 = vadd.f32 %v8702, %v8770
        %v8772 = vpop.f32.mrb[0].mxu0
        %8773 = vdwg.mxu0
        %8774 = vmatprep.subr.mxu0 0.0
        %8775 = vmatpush1.msra.mxu0 %v8665
        %8776 = vmatprep.subr.mxu0 0.0
        %8777 = vmatpush1.msra.mxu0 %v8666
        %8778 = vmatprep.subr.mxu0 0.0
        %8779 = vmatpush1.msra.mxu0 %v8667
        %8780 = vmatprep.subr.mxu0 0.0
        %8781 = vmatpush1.msra.mxu0 %v8668
        %8782 = vmatprep.subr.mxu0 0.0
        %8783 = vmatpush1.msra.mxu0 %v8669
        %8784 = vmatprep.subr.mxu0 0.0
        %8785 = vmatpush1.msra.mxu0 %v8670
        %8786 = vmatprep.subr.mxu0 0.0
        %8787 = vmatpush1.msra.mxu0 %v8671
        %8788 = vmatprep.subr.mxu0 0.0
        %8789 = vmatpush1.msra.mxu0 %v8672
        %8790 = vmatprep.subr.mxu0 0.0
        %8791 = vmatpush1.msra.mxu0 %v8673
        %8792 = vmatprep.subr.mxu0 0.0
        %8793 = vmatpush1.msra.mxu0 %v8674
        %8794 = vmatprep.subr.mxu0 0.0
        %8795 = vmatpush1.msra.mxu0 %v8675
        %8796 = vmatprep.subr.mxu0 0.0
        %8797 = vmatpush1.msra.mxu0 %v8676
        %8798 = vmatprep.subr.mxu0 0.0
        %8799 = vmatpush1.msra.mxu0 %v8677
        %8800 = vmatprep.subr.mxu0 0.0
        %8801 = vmatpush1.msra.mxu0 %v8678
        %8802 = vmatprep.subr.mxu0 0.0
        %8803 = vmatpush1.msra.mxu0 %v8679
        %8804 = vmatprep.subr.mxu0 0.0
        %8805 = vmatpush1.msra.mxu0 %v8680
        %8806 = vmatprep.subr.mxu0 0.0
        %8807 = vmatpush1.msra.mxu0 %v8681
        %8808 = vmatprep.subr.mxu0 0.0
        %8809 = vmatpush1.msra.mxu0 %v8682
        %8810 = vmatprep.subr.mxu0 0.0
        %8811 = vmatpush1.msra.mxu0 %v8683
        %8812 = vmatprep.subr.mxu0 0.0
        %8813 = vmatpush1.msra.mxu0 %v8684
        %8814 = vmatprep.subr.mxu0 0.0
        %8815 = vmatpush1.msra.mxu0 %v8685
        %8816 = vmatprep.subr.mxu0 0.0
        %8817 = vmatpush1.msra.mxu0 %v8686
        %8818 = vmatprep.subr.mxu0 0.0
        %8819 = vmatpush1.msra.mxu0 %v8687
        %8820 = vmatprep.subr.mxu0 0.0
        %8821 = vmatpush1.msra.mxu0 %v8688
        %8822 = vmatprep.subr.mxu0 0.0
        %8823 = vmatpush1.msra.mxu0 %v8689
        %8824 = vmatprep.subr.mxu0 0.0
        %8825 = vmatpush1.msra.mxu0 %v8690
        %8826 = vmatprep.subr.mxu0 0.0
        %8827 = vmatpush1.msra.mxu0 %v8691
        %8828 = vmatprep.subr.mxu0 0.0
        %8829 = vmatpush1.msra.mxu0 %v8692
        %8830 = vmatprep.subr.mxu0 0.0
        %8831 = vmatpush1.msra.mxu0 %v8693
        %8832 = vmatprep.subr.mxu0 0.0
        %8833 = vmatpush1.msra.mxu0 %v8694
        %8834 = vmatprep.subr.mxu0 0.0
        %8835 = vmatpush1.msra.mxu0 %v8695
        %8836 = vmatprep.subr.mxu0 0.0
        %8837 = vmatpush1.msra.mxu0 %v8696
        %8838 = vmatprep.mubr.f32.mxu0 %v8632
        %8839 = vmatmul.mubr.f32.gmra.mrb[0].mxu0 %v8631
        %v8840 = vpop.f32.mrb[0].mxu0
        %v8841 = vadd.f32 %v8771, %v8840
        %v8842 = vpop.f32.mrb[0].mxu0
        %8843 = vdwg.mxu0
        %v8844 = vxor.u32 %v8841, 2147483648
        %v8845 = vmul.f32 %v8844, 1.442695
        %v8846 = vpow.pop %v8845
        %v8847 = vadd.f32 %v8846, 1.0
        %v8848 = vrcp.pop %v8847
        %v8849 = vmul.f32 1.0, %v8848
        %vm8850 = vcmask 1024
        %8851 = vst.msk [vmem:[%s518] sm:$0x3] %vm8850, %v8849
        %p8852 = scmp.lt.s32.totalorder %s31, 8
        %s8853 = scalar_select %p8852, %s31, 8
        %s8854 = smul.addr %s8853, 2
        %s8855 = scalar_lea.vmem %s13, %s8854
        %p8856 = scmp.lt.s32.totalorder %s31, 8
        %s8857 = scalar_select %p8856, %s31, 8
        %s8858 = smul.addr %s8857, 2
        %s8859 = scalar_lea.vmem %s14, %s8858
        // Predicated region
        $region84: #{multitask_forward.1} parent=71 // pred_check
          %p8860 = pneg %p332
        $region85: #{multitask_forward.1} parent=71 // pred_check_branch
          %8862 = sbr.rel (%p8860) target = $region87
        $region86: #{multitask_forward.1} parent=71 // pred_region
          _
        $region87: #{multitask_forward.1} parent=71 // pred_fallthru
          _
        // Predicated region
        $region88: #{multitask_forward.1} parent=71 // pred_check
          %p8863 = pneg %p358
        $region89: #{multitask_forward.1} parent=71 // pred_check_branch
          %8865 = sbr.rel (%p8863) target = $region91
        $region90: #{multitask_forward.1} parent=71 // pred_region
          _
        $region91: #{multitask_forward.1} parent=71 // pred_fallthru
          _
      $region72: #{multitask_forward.1} parent=5 // pred_fallthru
        _
      %p8866 = scmp.le.s32.totalorder 2, %s26
      // Predicated region
      $region92: #{multitask_forward.1} parent=5 // pred_check
        %p8867 = pneg %p8866
      $region93: #{multitask_forward.1} parent=5 // pred_check_branch
        %8869 = sbr.rel (%p8867) target = $region95
      $region94: #{multitask_forward.1} parent=5 // pred_region
        %s8870 = ssub.s32 %s26, 2
        // Predicated region
        $region96: #{multitask_forward.1} parent=94 // pred_check
          %p8871 = pneg %p338
        $region97: #{multitask_forward.1} parent=94 // pred_check_branch
          %8873 = sbr.rel (%p8871) target = $region99
        $region98: #{multitask_forward.1} parent=94 // pred_region
          %p8874 = scmp.lt.s32.totalorder %s32, 8
          %s8875 = scalar_select %p8874, %s32, 8
          %s8876 = smul.addr %s8875, 2
          %s8877 = scalar_lea.vmem %s13, %s8876
        $region99: #{multitask_forward.1} parent=94 // pred_fallthru
          _
        // Predicated region
        $region100: #{multitask_forward.1} parent=94 // pred_check
          %p8878 = pneg %p364
        $region101: #{multitask_forward.1} parent=94 // pred_check_branch
          %8880 = sbr.rel (%p8878) target = $region103
        $region102: #{multitask_forward.1} parent=94 // pred_region
          %p8881 = scmp.lt.s32.totalorder %s32, 8
          %s8882 = scalar_select %p8881, %s32, 8
          %s8883 = smul.addr %s8882, 2
          %s8884 = scalar_lea.vmem %s14, %s8883
        $region103: #{multitask_forward.1} parent=94 // pred_fallthru
          _
      $region95: #{multitask_forward.1} parent=5 // pred_fallthru
        _
    $region6: #{multitask_forward.1} parent=1 // loop_footer
      %s30 = sadd.s32 1, %s26
    $region7: #{multitask_forward.1} parent=1 // loop_footer_branch
      %25 = sbr.rel target = $region3
    $region8: #{multitask_forward.1} parent=1 // loop_exit
      _
    %8885 = vsyncpa [#allocation4], 1
    %s8886 = scalar_lea.sflag [#allocation4], 1
    %8887 = vsyncpa %s8886, 1

</llo_original>
